<compile_context>
chip_gen: v7x
topology: tpu7x:2x2x1
jax: 0.10.0
libtpu: 0.0.40
codegen_flags: <defaults>
</compile_context>

<pallas_src>
import jax
import jax.numpy as jnp
import numpy as np
from jax.experimental import pallas as pl
from jax.experimental.pallas import tpu as pltpu

BN_EPS = 1e-5
LANE = 128
MATMUL_DTYPE = jnp.float32


def _round_up(x, m):
    return (x + m - 1) // m * m


def _vmem_budget_bytes():
    """~75% of physical VMEM, capped at 100 MiB (v5e/v6e: 128 MiB; v7x: 64 MiB/TC)."""
    cap = 128 * 1024 * 1024
    try:
        cap = int(pltpu.get_tpu_info().vmem_capacity_bytes)
    except Exception:
        pass
    return int(min(cap * 3 // 4, 100 * 1024 * 1024))


def _pass1_vmem_estimate(th, W, cin_p, cout_p):
    tb = th * W
    halo = (th + 2) * W * cin_p * 4
    return (2 * halo                        # double-buffered halo tile
            + 2 * 9 * cin_p * cout_p * 4    # pipelined packed weights
            + 2 * tb * cout_p * 4           # pipelined output block
            + 4 * halo                      # affine copy + kx-shift concat temporaries
            + 3 * tb * cout_p * 4)          # lhs slices + accumulator


def _pick_tile_h(H, W, cin_p, cout_p, budget):
    """Largest divisor of H whose row tile is sublane aligned and fits the budget."""
    row_cap = 2048 if budget <= 48 * 1024 * 1024 else 4096      # v7x vs v5e/v6e
    divisors = [d for d in range(H, 0, -1) if H % d == 0]
    fitting = [d for d in divisors
               if (d * W) % 8 == 0
               and _pass1_vmem_estimate(d, W, cin_p, cout_p) <= budget * 6 // 10]
    for th in fitting:
        if th * W <= row_cap:
            return th
    if fitting:
        return fitting[-1]
    return divisors[-1]


def _pick_tile_m(M, cout_p, budget, cap=8192):
    """Row tile for the elementwise pass: multiple of 8 dividing M, large as fits."""
    limit = max(8, min(cap, budget // (cout_p * 4 * 6)))
    d = min(M, limit)
    d -= d % 8
    while d >= 8:
        if M % d == 0:
            return d
        d -= 8
    return M


def conv3x3_pass(x_nhwc, w_oihw, in_scale=None, in_shift=None):
    """3x3 conv (stride 1, pad 1) over NHWC input, optionally fusing the producer
    layer's BatchNorm affine + ReLU into the input path (applied right after the
    halo DMA, before the conv). Emits the pre-BN output plus per-tile partial
    channel sums / sums-of-squares for exact full-batch BN statistics.

    Returns (y2d [N*H*W, Cout_p], psum [G,1,Cout_p], pssq [G,1,Cout_p])."""
    N, H, W, Cin_p = x_nhwc.shape
    Cout, Cin = w_oihw.shape[0], w_oihw.shape[1]
    assert Cin_p == _round_up(Cin, LANE) and Cin_p % LANE == 0
    Cout_p = _round_up(Cout, LANE)
    apply_act = in_scale is not None

    budget = _vmem_budget_bytes()
    TH = _pick_tile_h(H, W, Cin_p, Cout_p, budget)
    n_hb = H // TH
    TB = TH * W
    M = N * H * W
    G = N * n_hb

    # Weights -> [3, 3*Cin_p, Cout_p]: one K=3*Cin_p dot per ky row of taps,
    # kx taps concatenated along the contraction (lane) axis.
    w = jnp.transpose(w_oihw.astype(jnp.float32), (2, 3, 1, 0))          # [3,3,Cin,Cout]
    w = jnp.pad(w, ((0, 0), (0, 0), (0, Cin_p - Cin), (0, Cout_p - Cout)))
    w = w.reshape(3, 3 * Cin_p, Cout_p).astype(MATMUL_DTYPE)

    if apply_act:
        scale = in_scale.reshape(1, Cin_p).astype(jnp.float32)
        shift = in_shift.reshape(1, Cin_p).astype(jnp.float32)
    else:   # layer 1: nothing to fuse; refs are statically ignored in-kernel
        scale = jnp.ones((1, Cin_p), jnp.float32)
        shift = jnp.zeros((1, Cin_p), jnp.float32)

    def kernel(x_hbm, w_ref, scale_ref, shift_ref, y_ref, psum_ref, pssq_ref,
               xbuf, sem):
        n = pl.program_id(0)
        hb = pl.program_id(1)
        slot = hb % 2

        def tile_copies(n_, hb_, s_):
            # Three unconditional contiguous copies: 1 halo row above, TH body
            # rows, 1 halo row below. At image boundaries the halo row is fetched
            # clamped (duplicated) and zeroed after the load -> no conditional DMA.
            h0 = hb_ * TH
            top = jnp.maximum(h0 - 1, 0)
            bot = jnp.minimum(h0 + TH, H - 1)
            return (
                pltpu.make_async_copy(x_hbm.at[n_, pl.ds(top, 1)],
                                      xbuf.at[s_, pl.ds(0, 1)], sem.at[s_, 0]),
                pltpu.make_async_copy(x_hbm.at[n_, pl.ds(h0, TH)],
                                      xbuf.at[s_, pl.ds(1, TH)], sem.at[s_, 1]),
                pltpu.make_async_copy(x_hbm.at[n_, pl.ds(bot, 1)],
                                      xbuf.at[s_, pl.ds(TH + 1, 1)], sem.at[s_, 2]),
            )

        @pl.when(hb == 0)
        def _prime():                               # first tile of this image
            for cp in tile_copies(n, hb, slot):
                cp.start()

        @pl.when(hb + 1 < n_hb)
        def _prefetch():                            # hide the next tile's fetch
            for cp in tile_copies(n, hb + 1, 1 - slot):
                cp.start()

        for cp in tile_copies(n, hb, slot):         # wait for the current tile
            cp.wait()

        x = xbuf[slot]                              # (TH+2, W, Cin_p)
        if apply_act:                               # producer layer's BN affine + ReLU
            x = jnp.maximum(x * scale_ref[...].reshape(1, 1, Cin_p)
                            + shift_ref[...].reshape(1, 1, Cin_p), 0.0)
        # Zero the H-halo rows at the image top/bottom (they hold clamped
        # duplicates). Must run after the affine, otherwise padding != 0.
        row = jax.lax.broadcasted_iota(jnp.int32, (TH + 2, W, 1), 0)
        lo = jnp.where(hb == 0, 1, 0)
        hi = jnp.where(hb == n_hb - 1, TH, TH + 1)
        x = jnp.where((row >= lo) & (row <= hi), x, 0.0)

        # kx taps: left = input col w-1, mid = col w, right = col w+1 (zero W halo).
        zcol = jnp.zeros((TH + 2, 1, Cin_p), jnp.float32)
        left = jnp.concatenate([zcol, x[:, :W - 1, :]], axis=1)
        right = jnp.concatenate([x[:, 1:, :], zcol], axis=1)
        xs = jnp.concatenate([left, x, right], axis=-1)       # (TH+2, W, 3*Cin_p)
        xs = xs.reshape((TH + 2) * W, 3 * Cin_p).astype(MATMUL_DTYPE)

        acc = jnp.zeros((TB, Cout_p), jnp.float32)
        for ky in range(3):                          # 3 MXU dots, K = 3*Cin_p
            acc = acc + jnp.dot(xs[ky * W:ky * W + TB, :], w_ref[ky],
                                preferred_element_type=jnp.float32)
        # Conv bias intentionally omitted: training-mode BN subtracts the batch
        # mean, which cancels a per-channel constant exactly.
        y_ref[...] = acc
        psum_ref[...] = jnp.sum(acc, axis=0, keepdims=True)[None]
        pssq_ref[...] = jnp.sum(acc * acc, axis=0, keepdims=True)[None]

    y2d, psum, pssq = pl.pallas_call(
        kernel,
        out_shape=(
            jax.ShapeDtypeStruct((M, Cout_p), jnp.float32),      # pre-BN conv output
            jax.ShapeDtypeStruct((G, 1, Cout_p), jnp.float32),   # per-tile channel sum
            jax.ShapeDtypeStruct((G, 1, Cout_p), jnp.float32),   # per-tile channel sum sq
        ),
        grid=(N, n_hb),
        in_specs=[
            pl.BlockSpec(memory_space=pl.ANY),                              # NHWC input in HBM
            pl.BlockSpec((3, 3 * Cin_p, Cout_p), lambda n, hb: (0, 0, 0)),  # resident weights
            pl.BlockSpec((1, Cin_p), lambda n, hb: (0, 0)),                 # producer BN scale
            pl.BlockSpec((1, Cin_p), lambda n, hb: (0, 0)),                 # producer BN shift
        ],
        out_specs=(
            pl.BlockSpec((TB, Cout_p), lambda n, hb: (n * n_hb + hb, 0)),
            pl.BlockSpec((1, 1, Cout_p), lambda n, hb: (n * n_hb + hb, 0, 0)),
            pl.BlockSpec((1, 1, Cout_p), lambda n, hb: (n * n_hb + hb, 0, 0)),
        ),
        scratch_shapes=[
            pltpu.VMEM((2, TH + 2, W, Cin_p), jnp.float32),      # double-buffered halo tile
            pltpu.SemaphoreType.DMA((2, 3)),                     # [slot, {top, body, bottom}]
        ],
        compiler_params=pltpu.CompilerParams(
            # Per-tile partial stats (no cross-step scratch) keep the image axis
            # 'parallel' (v7x megacore); the row-tile axis stays 'arbitrary' so the
            # manual double-buffered halo DMA iterates in order.
            dimension_semantics=("parallel", "arbitrary"),
            vmem_limit_bytes=budget,
        ),
    )(x_nhwc, w, scale, shift)
    return y2d, psum, pssq


def _fold_bn_affine(psum, pssq, gamma, beta, count, cout_p):
    """Fold batch mean/var + gamma/beta into a single per-channel scale/shift."""
    cout = gamma.shape[0]
    s = jnp.sum(psum, axis=0)                     # (1, Cout_p)
    q = jnp.sum(pssq, axis=0)
    mean = s / count
    # Guard the E[x^2] - mean^2 form against tiny negatives from cancellation.
    var = jnp.maximum(q / count - mean * mean, 0.0)
    gp = jnp.pad(gamma.astype(jnp.float32), (0, cout_p - cout)).reshape(1, cout_p)
    bp = jnp.pad(beta.astype(jnp.float32), (0, cout_p - cout)).reshape(1, cout_p)
    scale = gp * jax.lax.rsqrt(var + BN_EPS)
    shift = bp - mean * scale
    return scale, shift


def affine_relu(y2d, scale, shift):
    """Standalone y*scale+shift, ReLU (only used for the final layer's output)."""
    M, Cp = y2d.shape
    budget = _vmem_budget_bytes()
    TM = _pick_tile_m(M, Cp, budget)

    def kernel(y_ref, scale_ref, shift_ref, o_ref):
        o_ref[...] = jnp.maximum(y_ref[...] * scale_ref[...] + shift_ref[...], 0.0)

    return pl.pallas_call(
        kernel,
        out_shape=jax.ShapeDtypeStruct((M, Cp), jnp.float32),
        grid=(M // TM,),
        in_specs=[
            pl.BlockSpec((TM, Cp), lambda i: (i, 0)),
            pl.BlockSpec((1, Cp), lambda i: (0, 0)),
            pl.BlockSpec((1, Cp), lambda i: (0, 0)),
        ],
        out_specs=pl.BlockSpec((TM, Cp), lambda i: (i, 0)),
        compiler_params=pltpu.CompilerParams(
            dimension_semantics=("parallel",),     # v7x: split across both TensorCores
            vmem_limit_bytes=budget,
        ),
    )(y2d, scale, shift)


def unet_encoding_block(x_nchw, params):
    """Forward pass of Unet_Encoding_Block. Input/output NCHW like PyTorch."""
    N, Cin, H, W = x_nchw.shape
    Cout = params["w1"].shape[0]
    Cin_p = _round_up(Cin, LANE)
    C_p = _round_up(Cout, LANE)          # layer-1 out == layer-2 in == layer-2 out
    count = jnp.float32(N * H * W)

    x = jnp.transpose(x_nchw, (0, 2, 3, 1)).astype(jnp.float32)    # NCHW -> NHWC
    x = jnp.pad(x, ((0, 0), (0, 0), (0, 0), (0, Cin_p - Cin)))     # lane-pad channels

    # Layer 1: conv + exact batch stats (pre-BN output stays in HBM).
    # Conv biases b1/b2 are unused: training-mode BN cancels them exactly.
    y1, s1, q1 = conv3x3_pass(x, params["w1"])
    scale1, shift1 = _fold_bn_affine(s1, q1, params["g1"], params["beta1"], count, C_p)

    # Layer 2: conv with layer 1's BN affine + ReLU fused into its input path.
    y2, s2, q2 = conv3x3_pass(y1.reshape(N, H, W, C_p), params["w2"],
                              in_scale=scale1, in_shift=shift1)
    scale2, shift2 = _fold_bn_affine(s2, q2, params["g2"], params["beta2"], count, C_p)

    out = affine_relu(y2, scale2, shift2)             # final BN affine + ReLU
    out = out.reshape(N, H, W, C_p)[..., :Cout]       # drop channel padding
    return jnp.transpose(out, (0, 3, 1, 2))           # NHWC -> NCHW


def init_params(features, key):
    """Deterministic synthetic parameters matching the module's shapes."""
    cout = 2 * features
    k1, k2, k3, k4 = jax.random.split(key, 4)
    scale1 = 1.0 / np.sqrt(features * 9)
    scale2 = 1.0 / np.sqrt(cout * 9)
    return {
        "w1": jax.random.normal(k1, (cout, features, 3, 3), jnp.float32) * scale1,
        "b1": jax.random.normal(k2, (cout,), jnp.float32) * 0.1,
        "g1": jnp.ones((cout,), jnp.float32),       # BatchNorm2d weight init
        "beta1": jnp.zeros((cout,), jnp.float32),   # BatchNorm2d bias init
        "w2": jax.random.normal(k3, (cout, cout, 3, 3), jnp.float32) * scale2,
        "b2": jax.random.normal(k4, (cout,), jnp.float32) * 0.1,
        "g2": jnp.ones((cout,), jnp.float32),
        "beta2": jnp.zeros((cout,), jnp.float32),
    }


def _reference(x_nchw, params):
    """Pure-JAX reference (silent correctness check); matches the PyTorch module."""
    def layer(x, w, b, g, bt):
        y = jax.lax.conv_general_dilated(
            x, w, window_strides=(1, 1), padding=((1, 1), (1, 1)),
            dimension_numbers=("NCHW", "OIHW", "NCHW"),
        ) + b[None, :, None, None]
        mean = jnp.mean(y, axis=(0, 2, 3), keepdims=True)
        var = jnp.mean((y - mean) ** 2, axis=(0, 2, 3), keepdims=True)
        y = (y - mean) * jax.lax.rsqrt(var + BN_EPS)
        y = y * g[None, :, None, None] + bt[None, :, None, None]
        return jnp.maximum(y, 0.0)

    x = layer(x_nchw, params["w1"], params["b1"], params["g1"], params["beta1"])
    x = layer(x, params["w2"], params["b2"], params["g2"], params["beta2"])
    return x


if __name__ == "__main__":
    features = 4
    key = jax.random.PRNGKey(0)
    kx_, kp = jax.random.split(key)
    x = jax.random.normal(kx_, (2, features, 16, 16), jnp.float32)   # NCHW like PyTorch
    params = init_params(features, kp)

    fwd = jax.jit(unet_encoding_block)
    out = jax.block_until_ready(fwd(x, params))

    assert out.shape == (2, 2 * features, 16, 16), out.shape
    ref = jax.block_until_ready(_reference(x, params))
    np.testing.assert_allclose(np.asarray(out), np.asarray(ref), rtol=1e-4, atol=1e-4)

    print("KERNEL_OK")
</pallas_src>

<mosaic_0001>
module attributes {stable_mosaic.version = 11 : i64} {
  func.func @kernel(%arg0: i32, %arg1: i32, %arg2: memref<2x16x16x128xf32, #tpu.memory_space<any>>, %arg3: memref<3x384x128xf32, #tpu.memory_space<vmem>>, %arg4: memref<1x128xf32, #tpu.memory_space<vmem>>, %arg5: memref<1x128xf32, #tpu.memory_space<vmem>>, %arg6: memref<256x128xf32, #tpu.memory_space<vmem>>, %arg7: memref<1x1x128xf32, #tpu.memory_space<vmem>>, %arg8: memref<1x1x128xf32, #tpu.memory_space<vmem>>, %arg9: memref<2x18x16x128xf32, #tpu.memory_space<vmem>>, %arg10: memref<2x3x!tpu.dma_semaphore, #tpu.memory_space<semaphore_mem>>) attributes {dimension_semantics = [#tpu.dimension_semantics<parallel>, #tpu.dimension_semantics<arbitrary>], iteration_bounds = array<i64: 2, 1>, scalar_prefetch = 0 : i64, scratch_operands = 2 : i64, tpu.core_type = #tpu.core_type<tc>, window_params = [{}, {pipeline_mode = #tpu.pipeline_mode<synchronous>, transform_indices = @transform_1, window_bounds = array<i64: 3, 384, 128>}, {pipeline_mode = #tpu.pipeline_mode<synchronous>, transform_indices = @transform_2, window_bounds = array<i64: 1, 128>}, {pipeline_mode = #tpu.pipeline_mode<synchronous>, transform_indices = @transform_3, window_bounds = array<i64: 1, 128>}, {transform_indices = @transform_4, window_bounds = array<i64: 256, 128>}, {transform_indices = @transform_5, window_bounds = array<i64: 1, 1, 128>}, {transform_indices = @transform_6, window_bounds = array<i64: 1, 1, 128>}]} {
    %c2_i32 = arith.constant 2 : i32
    %c0_i32 = arith.constant 0 : i32
    %0 = arith.cmpi eq, %c2_i32, %c0_i32 : i32
    %c1_i32 = arith.constant 1 : i32
    %1 = arith.select %0, %c1_i32, %c2_i32 : i32
    %2 = arith.remsi %arg1, %1 : i32
    %c0_i32_0 = arith.constant 0 : i32
    %3 = arith.cmpi ne, %2, %c0_i32_0 : i32
    %c0_i32_1 = arith.constant 0 : i32
    %4 = arith.cmpi slt, %2, %c0_i32_1 : i32
    %c0_i32_2 = arith.constant 0 : i32
    %5 = arith.cmpi slt, %1, %c0_i32_2 : i32
    %6 = arith.xori %4, %5 : i1
    %7 = arith.andi %6, %3 : i1
    %8 = arith.addi %2, %1 : i32
    %9 = arith.select %7, %8, %2 : i32
    %c0_i32_3 = arith.constant 0 : i32
    %10 = arith.cmpi eq, %arg1, %c0_i32_3 : i32
    %11 = arith.extui %10 : i1 to i32
    %c0_i32_4 = arith.constant 0 : i32
    %12 = arith.cmpi ne, %11, %c0_i32_4 : i32
    scf.if %12 {
      %c16_i32_58 = arith.constant 16 : i32
      %90 = arith.muli %arg1, %c16_i32_58 : i32
      %c1_i32_59 = arith.constant 1 : i32
      %91 = arith.subi %90, %c1_i32_59 : i32
      %c0_i32_60 = arith.constant 0 : i32
      %92 = arith.maxsi %91, %c0_i32_60 : i32
      %c16_i32_61 = arith.constant 16 : i32
      %93 = arith.addi %90, %c16_i32_61 : i32
      %c15_i32_62 = arith.constant 15 : i32
      %94 = arith.minsi %93, %c15_i32_62 : i32
      %c0_i32_63 = arith.constant 0 : i32
      %c0_i32_64 = arith.constant 0 : i32
      %c0_i32_65 = arith.constant 0 : i32
      %95 = tpu.memref_slice %arg2[%arg0, %92, %c0_i32_64, %c0_i32_65] : memref<2x16x16x128xf32, #tpu.memory_space<any>> -> memref<1x1x16x128xf32, #tpu.memory_space<any>>
      %96 = tpu.memref_squeeze %95 : memref<1x1x16x128xf32, #tpu.memory_space<any>> -> memref<1x16x128xf32, #tpu.memory_space<any>>
      %c0_i32_66 = arith.constant 0 : i32
      %c0_i32_67 = arith.constant 0 : i32
      %c0_i32_68 = arith.constant 0 : i32
      %97 = tpu.memref_slice %arg9[%9, %c0_i32_66, %c0_i32_67, %c0_i32_68] : memref<2x18x16x128xf32, #tpu.memory_space<vmem>> -> memref<1x1x16x128xf32, #tpu.memory_space<vmem>>
      %98 = tpu.memref_squeeze %97 : memref<1x1x16x128xf32, #tpu.memory_space<vmem>> -> memref<1x16x128xf32, #tpu.memory_space<vmem>>
      %99 = tpu.memref_slice %arg10[%9, %c0_i32_63] : memref<2x3x!tpu.dma_semaphore, #tpu.memory_space<semaphore_mem>> -> memref<1x1x!tpu.dma_semaphore, #tpu.memory_space<semaphore_mem>>
      %100 = tpu.memref_squeeze %99 : memref<1x1x!tpu.dma_semaphore, #tpu.memory_space<semaphore_mem>> -> memref<!tpu.dma_semaphore, #tpu.memory_space<semaphore_mem>>
      tpu.enqueue_dma source(%96 : memref<1x16x128xf32, #tpu.memory_space<any>>) target(%98 : memref<1x16x128xf32, #tpu.memory_space<vmem>>) target_semaphore(%100 : memref<!tpu.dma_semaphore, #tpu.memory_space<semaphore_mem>>)
      %c1_i32_69 = arith.constant 1 : i32
      %c0_i32_70 = arith.constant 0 : i32
      %c0_i32_71 = arith.constant 0 : i32
      %101 = tpu.memref_slice %arg2[%arg0, %90, %c0_i32_70, %c0_i32_71] : memref<2x16x16x128xf32, #tpu.memory_space<any>> -> memref<1x16x16x128xf32, #tpu.memory_space<any>>
      %102 = tpu.memref_squeeze %101 : memref<1x16x16x128xf32, #tpu.memory_space<any>> -> memref<16x16x128xf32, #tpu.memory_space<any>>
      %c1_i32_72 = arith.constant 1 : i32
      %c0_i32_73 = arith.constant 0 : i32
      %c0_i32_74 = arith.constant 0 : i32
      %103 = tpu.memref_slice %arg9[%9, %c1_i32_72, %c0_i32_73, %c0_i32_74] : memref<2x18x16x128xf32, #tpu.memory_space<vmem>> -> memref<1x16x16x128xf32, #tpu.memory_space<vmem>>
      %104 = tpu.memref_squeeze %103 : memref<1x16x16x128xf32, #tpu.memory_space<vmem>> -> memref<16x16x128xf32, #tpu.memory_space<vmem>>
      %105 = tpu.memref_slice %arg10[%9, %c1_i32_69] : memref<2x3x!tpu.dma_semaphore, #tpu.memory_space<semaphore_mem>> -> memref<1x1x!tpu.dma_semaphore, #tpu.memory_space<semaphore_mem>>
      %106 = tpu.memref_squeeze %105 : memref<1x1x!tpu.dma_semaphore, #tpu.memory_space<semaphore_mem>> -> memref<!tpu.dma_semaphore, #tpu.memory_space<semaphore_mem>>
      tpu.enqueue_dma source(%102 : memref<16x16x128xf32, #tpu.memory_space<any>>) target(%104 : memref<16x16x128xf32, #tpu.memory_space<vmem>>) target_semaphore(%106 : memref<!tpu.dma_semaphore, #tpu.memory_space<semaphore_mem>>)
      %c2_i32_75 = arith.constant 2 : i32
      %c0_i32_76 = arith.constant 0 : i32
      %c0_i32_77 = arith.constant 0 : i32
      %107 = tpu.memref_slice %arg2[%arg0, %94, %c0_i32_76, %c0_i32_77] : memref<2x16x16x128xf32, #tpu.memory_space<any>> -> memref<1x1x16x128xf32, #tpu.memory_space<any>>
      %108 = tpu.memref_squeeze %107 : memref<1x1x16x128xf32, #tpu.memory_space<any>> -> memref<1x16x128xf32, #tpu.memory_space<any>>
      %c17_i32_78 = arith.constant 17 : i32
      %c0_i32_79 = arith.constant 0 : i32
      %c0_i32_80 = arith.constant 0 : i32
      %109 = tpu.memref_slice %arg9[%9, %c17_i32_78, %c0_i32_79, %c0_i32_80] : memref<2x18x16x128xf32, #tpu.memory_space<vmem>> -> memref<1x1x16x128xf32, #tpu.memory_space<vmem>>
      %110 = tpu.memref_squeeze %109 : memref<1x1x16x128xf32, #tpu.memory_space<vmem>> -> memref<1x16x128xf32, #tpu.memory_space<vmem>>
      %111 = tpu.memref_slice %arg10[%9, %c2_i32_75] : memref<2x3x!tpu.dma_semaphore, #tpu.memory_space<semaphore_mem>> -> memref<1x1x!tpu.dma_semaphore, #tpu.memory_space<semaphore_mem>>
      %112 = tpu.memref_squeeze %111 : memref<1x1x!tpu.dma_semaphore, #tpu.memory_space<semaphore_mem>> -> memref<!tpu.dma_semaphore, #tpu.memory_space<semaphore_mem>>
      tpu.enqueue_dma source(%108 : memref<1x16x128xf32, #tpu.memory_space<any>>) target(%110 : memref<1x16x128xf32, #tpu.memory_space<vmem>>) target_semaphore(%112 : memref<!tpu.dma_semaphore, #tpu.memory_space<semaphore_mem>>)
    } else {
    }
    %c1_i32_5 = arith.constant 1 : i32
    %13 = arith.addi %arg1, %c1_i32_5 : i32
    %c1_i32_6 = arith.constant 1 : i32
    %14 = arith.cmpi slt, %13, %c1_i32_6 : i32
    %15 = arith.extui %14 : i1 to i32
    %c0_i32_7 = arith.constant 0 : i32
    %16 = arith.cmpi ne, %15, %c0_i32_7 : i32
    scf.if %16 {
      %c1_i32_58 = arith.constant 1 : i32
      %90 = arith.addi %arg1, %c1_i32_58 : i32
      %c1_i32_59 = arith.constant 1 : i32
      %91 = arith.subi %c1_i32_59, %9 : i32
      %c16_i32_60 = arith.constant 16 : i32
      %92 = arith.muli %90, %c16_i32_60 : i32
      %c1_i32_61 = arith.constant 1 : i32
      %93 = arith.subi %92, %c1_i32_61 : i32
      %c0_i32_62 = arith.constant 0 : i32
      %94 = arith.maxsi %93, %c0_i32_62 : i32
      %c16_i32_63 = arith.constant 16 : i32
      %95 = arith.addi %92, %c16_i32_63 : i32
      %c15_i32_64 = arith.constant 15 : i32
      %96 = arith.minsi %95, %c15_i32_64 : i32
      %c0_i32_65 = arith.constant 0 : i32
      %c0_i32_66 = arith.constant 0 : i32
      %c0_i32_67 = arith.constant 0 : i32
      %97 = tpu.memref_slice %arg2[%arg0, %94, %c0_i32_66, %c0_i32_67] : memref<2x16x16x128xf32, #tpu.memory_space<any>> -> memref<1x1x16x128xf32, #tpu.memory_space<any>>
      %98 = tpu.memref_squeeze %97 : memref<1x1x16x128xf32, #tpu.memory_space<any>> -> memref<1x16x128xf32, #tpu.memory_space<any>>
      %c0_i32_68 = arith.constant 0 : i32
      %c0_i32_69 = arith.constant 0 : i32
      %c0_i32_70 = arith.constant 0 : i32
      %99 = tpu.memref_slice %arg9[%91, %c0_i32_68, %c0_i32_69, %c0_i32_70] : memref<2x18x16x128xf32, #tpu.memory_space<vmem>> -> memref<1x1x16x128xf32, #tpu.memory_space<vmem>>
      %100 = tpu.memref_squeeze %99 : memref<1x1x16x128xf32, #tpu.memory_space<vmem>> -> memref<1x16x128xf32, #tpu.memory_space<vmem>>
      %101 = tpu.memref_slice %arg10[%91, %c0_i32_65] : memref<2x3x!tpu.dma_semaphore, #tpu.memory_space<semaphore_mem>> -> memref<1x1x!tpu.dma_semaphore, #tpu.memory_space<semaphore_mem>>
      %102 = tpu.memref_squeeze %101 : memref<1x1x!tpu.dma_semaphore, #tpu.memory_space<semaphore_mem>> -> memref<!tpu.dma_semaphore, #tpu.memory_space<semaphore_mem>>
      tpu.enqueue_dma source(%98 : memref<1x16x128xf32, #tpu.memory_space<any>>) target(%100 : memref<1x16x128xf32, #tpu.memory_space<vmem>>) target_semaphore(%102 : memref<!tpu.dma_semaphore, #tpu.memory_space<semaphore_mem>>)
      %c1_i32_71 = arith.constant 1 : i32
      %c0_i32_72 = arith.constant 0 : i32
      %c0_i32_73 = arith.constant 0 : i32
      %103 = tpu.memref_slice %arg2[%arg0, %92, %c0_i32_72, %c0_i32_73] : memref<2x16x16x128xf32, #tpu.memory_space<any>> -> memref<1x16x16x128xf32, #tpu.memory_space<any>>
      %104 = tpu.memref_squeeze %103 : memref<1x16x16x128xf32, #tpu.memory_space<any>> -> memref<16x16x128xf32, #tpu.memory_space<any>>
      %c1_i32_74 = arith.constant 1 : i32
      %c0_i32_75 = arith.constant 0 : i32
      %c0_i32_76 = arith.constant 0 : i32
      %105 = tpu.memref_slice %arg9[%91, %c1_i32_74, %c0_i32_75, %c0_i32_76] : memref<2x18x16x128xf32, #tpu.memory_space<vmem>> -> memref<1x16x16x128xf32, #tpu.memory_space<vmem>>
      %106 = tpu.memref_squeeze %105 : memref<1x16x16x128xf32, #tpu.memory_space<vmem>> -> memref<16x16x128xf32, #tpu.memory_space<vmem>>
      %107 = tpu.memref_slice %arg10[%91, %c1_i32_71] : memref<2x3x!tpu.dma_semaphore, #tpu.memory_space<semaphore_mem>> -> memref<1x1x!tpu.dma_semaphore, #tpu.memory_space<semaphore_mem>>
      %108 = tpu.memref_squeeze %107 : memref<1x1x!tpu.dma_semaphore, #tpu.memory_space<semaphore_mem>> -> memref<!tpu.dma_semaphore, #tpu.memory_space<semaphore_mem>>
      tpu.enqueue_dma source(%104 : memref<16x16x128xf32, #tpu.memory_space<any>>) target(%106 : memref<16x16x128xf32, #tpu.memory_space<vmem>>) target_semaphore(%108 : memref<!tpu.dma_semaphore, #tpu.memory_space<semaphore_mem>>)
      %c2_i32_77 = arith.constant 2 : i32
      %c0_i32_78 = arith.constant 0 : i32
      %c0_i32_79 = arith.constant 0 : i32
      %109 = tpu.memref_slice %arg2[%arg0, %96, %c0_i32_78, %c0_i32_79] : memref<2x16x16x128xf32, #tpu.memory_space<any>> -> memref<1x1x16x128xf32, #tpu.memory_space<any>>
      %110 = tpu.memref_squeeze %109 : memref<1x1x16x128xf32, #tpu.memory_space<any>> -> memref<1x16x128xf32, #tpu.memory_space<any>>
      %c17_i32_80 = arith.constant 17 : i32
      %c0_i32_81 = arith.constant 0 : i32
      %c0_i32_82 = arith.constant 0 : i32
      %111 = tpu.memref_slice %arg9[%91, %c17_i32_80, %c0_i32_81, %c0_i32_82] : memref<2x18x16x128xf32, #tpu.memory_space<vmem>> -> memref<1x1x16x128xf32, #tpu.memory_space<vmem>>
      %112 = tpu.memref_squeeze %111 : memref<1x1x16x128xf32, #tpu.memory_space<vmem>> -> memref<1x16x128xf32, #tpu.memory_space<vmem>>
      %113 = tpu.memref_slice %arg10[%91, %c2_i32_77] : memref<2x3x!tpu.dma_semaphore, #tpu.memory_space<semaphore_mem>> -> memref<1x1x!tpu.dma_semaphore, #tpu.memory_space<semaphore_mem>>
      %114 = tpu.memref_squeeze %113 : memref<1x1x!tpu.dma_semaphore, #tpu.memory_space<semaphore_mem>> -> memref<!tpu.dma_semaphore, #tpu.memory_space<semaphore_mem>>
      tpu.enqueue_dma source(%110 : memref<1x16x128xf32, #tpu.memory_space<any>>) target(%112 : memref<1x16x128xf32, #tpu.memory_space<vmem>>) target_semaphore(%114 : memref<!tpu.dma_semaphore, #tpu.memory_space<semaphore_mem>>)
    } else {
    }
    %c16_i32 = arith.constant 16 : i32
    %17 = arith.muli %arg1, %c16_i32 : i32
    %c1_i32_8 = arith.constant 1 : i32
    %18 = arith.subi %17, %c1_i32_8 : i32
    %c0_i32_9 = arith.constant 0 : i32
    %19 = arith.maxsi %18, %c0_i32_9 : i32
    %c16_i32_10 = arith.constant 16 : i32
    %20 = arith.addi %17, %c16_i32_10 : i32
    %c15_i32 = arith.constant 15 : i32
    %21 = arith.minsi %20, %c15_i32 : i32
    %c0_i32_11 = arith.constant 0 : i32
    %c0_i32_12 = arith.constant 0 : i32
    %c0_i32_13 = arith.constant 0 : i32
    %22 = tpu.memref_slice %arg2[%arg0, %19, %c0_i32_12, %c0_i32_13] : memref<2x16x16x128xf32, #tpu.memory_space<any>> -> memref<1x1x16x128xf32, #tpu.memory_space<any>>
    %23 = tpu.memref_squeeze %22 : memref<1x1x16x128xf32, #tpu.memory_space<any>> -> memref<1x16x128xf32, #tpu.memory_space<any>>
    %c0_i32_14 = arith.constant 0 : i32
    %c0_i32_15 = arith.constant 0 : i32
    %c0_i32_16 = arith.constant 0 : i32
    %24 = tpu.memref_slice %arg9[%9, %c0_i32_14, %c0_i32_15, %c0_i32_16] : memref<2x18x16x128xf32, #tpu.memory_space<vmem>> -> memref<1x1x16x128xf32, #tpu.memory_space<vmem>>
    %25 = tpu.memref_squeeze %24 : memref<1x1x16x128xf32, #tpu.memory_space<vmem>> -> memref<1x16x128xf32, #tpu.memory_space<vmem>>
    %26 = tpu.memref_slice %arg10[%9, %c0_i32_11] : memref<2x3x!tpu.dma_semaphore, #tpu.memory_space<semaphore_mem>> -> memref<1x1x!tpu.dma_semaphore, #tpu.memory_space<semaphore_mem>>
    %27 = tpu.memref_squeeze %26 : memref<1x1x!tpu.dma_semaphore, #tpu.memory_space<semaphore_mem>> -> memref<!tpu.dma_semaphore, #tpu.memory_space<semaphore_mem>>
    tpu.wait_dma2 semaphore(%27 : memref<!tpu.dma_semaphore, #tpu.memory_space<semaphore_mem>>) src(%23 : memref<1x16x128xf32, #tpu.memory_space<any>>) dst(%25 : memref<1x16x128xf32, #tpu.memory_space<vmem>>)
    %c1_i32_17 = arith.constant 1 : i32
    %c0_i32_18 = arith.constant 0 : i32
    %c0_i32_19 = arith.constant 0 : i32
    %28 = tpu.memref_slice %arg2[%arg0, %17, %c0_i32_18, %c0_i32_19] : memref<2x16x16x128xf32, #tpu.memory_space<any>> -> memref<1x16x16x128xf32, #tpu.memory_space<any>>
    %29 = tpu.memref_squeeze %28 : memref<1x16x16x128xf32, #tpu.memory_space<any>> -> memref<16x16x128xf32, #tpu.memory_space<any>>
    %c1_i32_20 = arith.constant 1 : i32
    %c0_i32_21 = arith.constant 0 : i32
    %c0_i32_22 = arith.constant 0 : i32
    %30 = tpu.memref_slice %arg9[%9, %c1_i32_20, %c0_i32_21, %c0_i32_22] : memref<2x18x16x128xf32, #tpu.memory_space<vmem>> -> memref<1x16x16x128xf32, #tpu.memory_space<vmem>>
    %31 = tpu.memref_squeeze %30 : memref<1x16x16x128xf32, #tpu.memory_space<vmem>> -> memref<16x16x128xf32, #tpu.memory_space<vmem>>
    %32 = tpu.memref_slice %arg10[%9, %c1_i32_17] : memref<2x3x!tpu.dma_semaphore, #tpu.memory_space<semaphore_mem>> -> memref<1x1x!tpu.dma_semaphore, #tpu.memory_space<semaphore_mem>>
    %33 = tpu.memref_squeeze %32 : memref<1x1x!tpu.dma_semaphore, #tpu.memory_space<semaphore_mem>> -> memref<!tpu.dma_semaphore, #tpu.memory_space<semaphore_mem>>
    tpu.wait_dma2 semaphore(%33 : memref<!tpu.dma_semaphore, #tpu.memory_space<semaphore_mem>>) src(%29 : memref<16x16x128xf32, #tpu.memory_space<any>>) dst(%31 : memref<16x16x128xf32, #tpu.memory_space<vmem>>)
    %c2_i32_23 = arith.constant 2 : i32
    %c0_i32_24 = arith.constant 0 : i32
    %c0_i32_25 = arith.constant 0 : i32
    %34 = tpu.memref_slice %arg2[%arg0, %21, %c0_i32_24, %c0_i32_25] : memref<2x16x16x128xf32, #tpu.memory_space<any>> -> memref<1x1x16x128xf32, #tpu.memory_space<any>>
    %35 = tpu.memref_squeeze %34 : memref<1x1x16x128xf32, #tpu.memory_space<any>> -> memref<1x16x128xf32, #tpu.memory_space<any>>
    %c17_i32 = arith.constant 17 : i32
    %c0_i32_26 = arith.constant 0 : i32
    %c0_i32_27 = arith.constant 0 : i32
    %36 = tpu.memref_slice %arg9[%9, %c17_i32, %c0_i32_26, %c0_i32_27] : memref<2x18x16x128xf32, #tpu.memory_space<vmem>> -> memref<1x1x16x128xf32, #tpu.memory_space<vmem>>
    %37 = tpu.memref_squeeze %36 : memref<1x1x16x128xf32, #tpu.memory_space<vmem>> -> memref<1x16x128xf32, #tpu.memory_space<vmem>>
    %38 = tpu.memref_slice %arg10[%9, %c2_i32_23] : memref<2x3x!tpu.dma_semaphore, #tpu.memory_space<semaphore_mem>> -> memref<1x1x!tpu.dma_semaphore, #tpu.memory_space<semaphore_mem>>
    %39 = tpu.memref_squeeze %38 : memref<1x1x!tpu.dma_semaphore, #tpu.memory_space<semaphore_mem>> -> memref<!tpu.dma_semaphore, #tpu.memory_space<semaphore_mem>>
    tpu.wait_dma2 semaphore(%39 : memref<!tpu.dma_semaphore, #tpu.memory_space<semaphore_mem>>) src(%35 : memref<1x16x128xf32, #tpu.memory_space<any>>) dst(%37 : memref<1x16x128xf32, #tpu.memory_space<vmem>>)
    %40 = arith.index_cast %9 : i32 to index
    %c0 = arith.constant 0 : index
    %c0_28 = arith.constant 0 : index
    %c0_29 = arith.constant 0 : index
    %41 = vector.load %arg9[%40, %c0, %c0_28, %c0_29] : memref<2x18x16x128xf32, #tpu.memory_space<vmem>>, vector<1x18x16x128xf32>
    %42 = vector.shape_cast %41 : vector<1x18x16x128xf32> to vector<18x16x128xf32>
    %43 = tpu.iota {dimensions = array<i32: 0>} : vector<18x16x1xi32>
    %c0_i32_30 = arith.constant 0 : i32
    %44 = arith.cmpi eq, %arg1, %c0_i32_30 : i32
    %c1_i32_31 = arith.constant 1 : i32
    %c0_i32_32 = arith.constant 0 : i32
    %45 = arith.select %44, %c1_i32_31, %c0_i32_32 : i32
    %c0_i32_33 = arith.constant 0 : i32
    %46 = arith.cmpi eq, %arg1, %c0_i32_33 : i32
    %c16_i32_34 = arith.constant 16 : i32
    %c17_i32_35 = arith.constant 17 : i32
    %47 = arith.select %46, %c16_i32_34, %c17_i32_35 : i32
    %48 = vector.broadcast %45 : i32 to vector<18x16x1xi32>
    %49 = arith.cmpi sge, %43, %48 : vector<18x16x1xi32>
    %50 = vector.broadcast %47 : i32 to vector<18x16x1xi32>
    %51 = arith.cmpi sle, %43, %50 : vector<18x16x1xi32>
    %52 = arith.andi %49, %51 : vector<18x16x1xi1>
    %cst = arith.constant 0.000000e+00 : f32
    %53 = vector.shape_cast %52 : vector<18x16x1xi1> to vector<18x16x1xi1>
    %54 = vector.broadcast %53 : vector<18x16x1xi1> to vector<18x16x128xi1>
    %55 = vector.broadcast %cst : f32 to vector<18x16x128xf32>
    %56 = arith.select %54, %42, %55 : vector<18x16x128xi1>, vector<18x16x128xf32>
    %cst_36 = arith.constant 0.000000e+00 : f32
    %57 = vector.broadcast %cst_36 : f32 to vector<18x1x128xf32>
    %58 = vector.extract_strided_slice %56 {offsets = [0, 0, 0], sizes = [18, 15, 128], strides = [1, 1, 1]} : vector<18x16x128xf32> to vector<18x15x128xf32>
    %59 = tpu.concatenate %57, %58 in 1 : vector<18x1x128xf32>, vector<18x15x128xf32> -> vector<18x16x128xf32>
    %60 = vector.extract_strided_slice %56 {offsets = [0, 1, 0], sizes = [18, 15, 128], strides = [1, 1, 1]} : vector<18x16x128xf32> to vector<18x15x128xf32>
    %61 = tpu.concatenate %60, %57 in 1 : vector<18x15x128xf32>, vector<18x1x128xf32> -> vector<18x16x128xf32>
    %62 = tpu.concatenate %59, %56, %61 in 2 : vector<18x16x128xf32>, vector<18x16x128xf32>, vector<18x16x128xf32> -> vector<18x16x384xf32>
    %63 = vector.shape_cast %62 : vector<18x16x384xf32> to vector<288x384xf32>
    %cst_37 = arith.constant 0.000000e+00 : f32
    %64 = vector.broadcast %cst_37 : f32 to vector<256x128xf32>
    %65 = vector.extract_strided_slice %63 {offsets = [0, 0], sizes = [256, 384], strides = [1, 1]} : vector<288x384xf32> to vector<256x384xf32>
    %c0_38 = arith.constant 0 : index
    %c0_39 = arith.constant 0 : index
    %c0_40 = arith.constant 0 : index
    %66 = vector.load %arg3[%c0_38, %c0_39, %c0_40] : memref<3x384x128xf32, #tpu.memory_space<vmem>>, vector<1x384x128xf32>
    %67 = vector.shape_cast %66 : vector<1x384x128xf32> to vector<384x128xf32>
    %cst_41 = arith.constant dense<0.000000e+00> : vector<256x128xf32>
    %68 = tpu.matmul %65, %67, %cst_41 {dimension_numbers = #tpu.dot_dimension_numbers<[1], [0], [0], [1], [0, 0, 1, 1], [], []>} : vector<256x384xf32>, vector<384x128xf32>, vector<256x128xf32> -> vector<256x128xf32>
    %69 = arith.addf %64, %68 : vector<256x128xf32>
    %70 = vector.extract_strided_slice %63 {offsets = [16, 0], sizes = [256, 384], strides = [1, 1]} : vector<288x384xf32> to vector<256x384xf32>
    %c1 = arith.constant 1 : index
    %c0_42 = arith.constant 0 : index
    %c0_43 = arith.constant 0 : index
    %71 = vector.load %arg3[%c1, %c0_42, %c0_43] : memref<3x384x128xf32, #tpu.memory_space<vmem>>, vector<1x384x128xf32>
    %72 = vector.shape_cast %71 : vector<1x384x128xf32> to vector<384x128xf32>
    %cst_44 = arith.constant dense<0.000000e+00> : vector<256x128xf32>
    %73 = tpu.matmul %70, %72, %cst_44 {dimension_numbers = #tpu.dot_dimension_numbers<[1], [0], [0], [1], [0, 0, 1, 1], [], []>} : vector<256x384xf32>, vector<384x128xf32>, vector<256x128xf32> -> vector<256x128xf32>
    %74 = arith.addf %69, %73 : vector<256x128xf32>
    %75 = vector.extract_strided_slice %63 {offsets = [32, 0], sizes = [256, 384], strides = [1, 1]} : vector<288x384xf32> to vector<256x384xf32>
    %c2 = arith.constant 2 : index
    %c0_45 = arith.constant 0 : index
    %c0_46 = arith.constant 0 : index
    %76 = vector.load %arg3[%c2, %c0_45, %c0_46] : memref<3x384x128xf32, #tpu.memory_space<vmem>>, vector<1x384x128xf32>
    %77 = vector.shape_cast %76 : vector<1x384x128xf32> to vector<384x128xf32>
    %cst_47 = arith.constant dense<0.000000e+00> : vector<256x128xf32>
    %78 = tpu.matmul %75, %77, %cst_47 {dimension_numbers = #tpu.dot_dimension_numbers<[1], [0], [0], [1], [0, 0, 1, 1], [], []>} : vector<256x384xf32>, vector<384x128xf32>, vector<256x128xf32> -> vector<256x128xf32>
    %79 = arith.addf %74, %78 : vector<256x128xf32>
    %c0_48 = arith.constant 0 : index
    %c0_49 = arith.constant 0 : index
    %80 = vector.load %arg6[%c0_48, %c0_49] : memref<256x128xf32, #tpu.memory_space<vmem>>, vector<256x128xf32>
    tpu.vector_store %arg6[%c0_48, %c0_49], %79 {strides = array<i32>} : memref<256x128xf32, #tpu.memory_space<vmem>>, vector<256x128xf32>,
    %cst_50 = arith.constant dense<0.000000e+00> : vector<128xf32>
    %81 = vector.multi_reduction <add>, %79, %cst_50 [0] : vector<256x128xf32> to vector<128xf32>
    %82 = vector.shape_cast %81 : vector<128xf32> to vector<1x128xf32>
    %83 = vector.shape_cast %82 : vector<1x128xf32> to vector<1x1x128xf32>
    %c0_51 = arith.constant 0 : index
    %c0_52 = arith.constant 0 : index
    %c0_53 = arith.constant 0 : index
    %84 = vector.load %arg7[%c0_51, %c0_52, %c0_53] : memref<1x1x128xf32, #tpu.memory_space<vmem>>, vector<1x1x128xf32>
    tpu.vector_store %arg7[%c0_51, %c0_52, %c0_53], %83 {strides = array<i32>} : memref<1x1x128xf32, #tpu.memory_space<vmem>>, vector<1x1x128xf32>,
    %85 = arith.mulf %79, %79 : vector<256x128xf32>
    %cst_54 = arith.constant dense<0.000000e+00> : vector<128xf32>
    %86 = vector.multi_reduction <add>, %85, %cst_54 [0] : vector<256x128xf32> to vector<128xf32>
    %87 = vector.shape_cast %86 : vector<128xf32> to vector<1x128xf32>
    %88 = vector.shape_cast %87 : vector<1x128xf32> to vector<1x1x128xf32>
    %c0_55 = arith.constant 0 : index
    %c0_56 = arith.constant 0 : index
    %c0_57 = arith.constant 0 : index
    %89 = vector.load %arg8[%c0_55, %c0_56, %c0_57] : memref<1x1x128xf32, #tpu.memory_space<vmem>>, vector<1x1x128xf32>
    tpu.vector_store %arg8[%c0_55, %c0_56, %c0_57], %88 {strides = array<i32>} : memref<1x1x128xf32, #tpu.memory_space<vmem>>, vector<1x1x128xf32>,
    return
  }
  func.func @transform_1(%arg0: i32, %arg1: i32) -> (i32, i32, i32) {
    %c0_i32 = arith.constant 0 : i32
    %c0_i32_0 = arith.constant 0 : i32
    %c0_i32_1 = arith.constant 0 : i32
    %c0_i32_2 = arith.constant 0 : i32
    return %c0_i32, %c0_i32_0, %c0_i32_1 : i32, i32, i32
  }
  func.func @transform_2(%arg0: i32, %arg1: i32) -> (i32, i32) {
    %c0_i32 = arith.constant 0 : i32
    %c0_i32_0 = arith.constant 0 : i32
    %c0_i32_1 = arith.constant 0 : i32
    return %c0_i32, %c0_i32_0 : i32, i32
  }
  func.func @transform_3(%arg0: i32, %arg1: i32) -> (i32, i32) {
    %c0_i32 = arith.constant 0 : i32
    %c0_i32_0 = arith.constant 0 : i32
    %c0_i32_1 = arith.constant 0 : i32
    return %c0_i32, %c0_i32_0 : i32, i32
  }
  func.func @transform_4(%arg0: i32, %arg1: i32) -> (i32, i32) {
    %c1_i32 = arith.constant 1 : i32
    %0 = arith.muli %arg0, %c1_i32 : i32
    %1 = arith.addi %0, %arg1 : i32
    %c0_i32 = arith.constant 0 : i32
    %c0_i32_0 = arith.constant 0 : i32
    return %1, %c0_i32 : i32, i32
  }
  func.func @transform_5(%arg0: i32, %arg1: i32) -> (i32, i32, i32) {
    %c1_i32 = arith.constant 1 : i32
    %0 = arith.muli %arg0, %c1_i32 : i32
    %1 = arith.addi %0, %arg1 : i32
    %c0_i32 = arith.constant 0 : i32
    %c0_i32_0 = arith.constant 0 : i32
    %c0_i32_1 = arith.constant 0 : i32
    return %1, %c0_i32, %c0_i32_0 : i32, i32, i32
  }
  func.func @transform_6(%arg0: i32, %arg1: i32) -> (i32, i32, i32) {
    %c1_i32 = arith.constant 1 : i32
    %0 = arith.muli %arg0, %c1_i32 : i32
    %1 = arith.addi %0, %arg1 : i32
    %c0_i32 = arith.constant 0 : i32
    %c0_i32_0 = arith.constant 0 : i32
    %c0_i32_1 = arith.constant 0 : i32
    return %1, %c0_i32, %c0_i32_0 : i32, i32, i32
  }
}

module attributes {stable_mosaic.version = 11 : i64} {
  func.func @kernel(%arg0: i32, %arg1: memref<512x128xf32, #tpu.memory_space<vmem>>, %arg2: memref<1x128xf32, #tpu.memory_space<vmem>>, %arg3: memref<1x128xf32, #tpu.memory_space<vmem>>, %arg4: memref<512x128xf32, #tpu.memory_space<vmem>>) attributes {dimension_semantics = [#tpu.dimension_semantics<parallel>], iteration_bounds = array<i64: 1>, scalar_prefetch = 0 : i64, scratch_operands = 0 : i64, tpu.core_type = #tpu.core_type<tc>, window_params = [{transform_indices = @transform_0, window_bounds = array<i64: 512, 128>}, {pipeline_mode = #tpu.pipeline_mode<synchronous>, transform_indices = @transform_1, window_bounds = array<i64: 1, 128>}, {pipeline_mode = #tpu.pipeline_mode<synchronous>, transform_indices = @transform_2, window_bounds = array<i64: 1, 128>}, {transform_indices = @transform_3, window_bounds = array<i64: 512, 128>}]} {
    %c0 = arith.constant 0 : index
    %c0_0 = arith.constant 0 : index
    %0 = vector.load %arg1[%c0, %c0_0] : memref<512x128xf32, #tpu.memory_space<vmem>>, vector<512x128xf32>
    %c0_1 = arith.constant 0 : index
    %c0_2 = arith.constant 0 : index
    %1 = vector.load %arg2[%c0_1, %c0_2] : memref<1x128xf32, #tpu.memory_space<vmem>>, vector<1x128xf32>
    %2 = vector.broadcast %1 : vector<1x128xf32> to vector<512x128xf32>
    %3 = arith.mulf %0, %2 : vector<512x128xf32>
    %c0_3 = arith.constant 0 : index
    %c0_4 = arith.constant 0 : index
    %4 = vector.load %arg3[%c0_3, %c0_4] : memref<1x128xf32, #tpu.memory_space<vmem>>, vector<1x128xf32>
    %5 = vector.broadcast %4 : vector<1x128xf32> to vector<512x128xf32>
    %6 = arith.addf %3, %5 : vector<512x128xf32>
    %cst = arith.constant 0.000000e+00 : f32
    %7 = vector.broadcast %cst : f32 to vector<512x128xf32>
    %8 = arith.maximumf %6, %7 : vector<512x128xf32>
    %c0_5 = arith.constant 0 : index
    %c0_6 = arith.constant 0 : index
    %9 = vector.load %arg4[%c0_5, %c0_6] : memref<512x128xf32, #tpu.memory_space<vmem>>, vector<512x128xf32>
    tpu.vector_store %arg4[%c0_5, %c0_6], %8 {strides = array<i32>} : memref<512x128xf32, #tpu.memory_space<vmem>>, vector<512x128xf32>,
    return
  }
  func.func @transform_0(%arg0: i32) -> (i32, i32) {
    %c0_i32 = arith.constant 0 : i32
    %c0_i32_0 = arith.constant 0 : i32
    return %arg0, %c0_i32 : i32, i32
  }
  func.func @transform_1(%arg0: i32) -> (i32, i32) {
    %c0_i32 = arith.constant 0 : i32
    %c0_i32_0 = arith.constant 0 : i32
    %c0_i32_1 = arith.constant 0 : i32
    return %c0_i32, %c0_i32_0 : i32, i32
  }
  func.func @transform_2(%arg0: i32) -> (i32, i32) {
    %c0_i32 = arith.constant 0 : i32
    %c0_i32_0 = arith.constant 0 : i32
    %c0_i32_1 = arith.constant 0 : i32
    return %c0_i32, %c0_i32_0 : i32, i32
  }
  func.func @transform_3(%arg0: i32) -> (i32, i32) {
    %c0_i32 = arith.constant 0 : i32
    %c0_i32_0 = arith.constant 0 : i32
    return %arg0, %c0_i32 : i32, i32
  }
}

module attributes {stable_mosaic.version = 11 : i64} {
  func.func @kernel(%arg0: i32, %arg1: i32, %arg2: memref<2x16x16x128xf32, #tpu.memory_space<any>>, %arg3: memref<3x384x128xf32, #tpu.memory_space<vmem>>, %arg4: memref<1x128xf32, #tpu.memory_space<vmem>>, %arg5: memref<1x128xf32, #tpu.memory_space<vmem>>, %arg6: memref<256x128xf32, #tpu.memory_space<vmem>>, %arg7: memref<1x1x128xf32, #tpu.memory_space<vmem>>, %arg8: memref<1x1x128xf32, #tpu.memory_space<vmem>>, %arg9: memref<2x18x16x128xf32, #tpu.memory_space<vmem>>, %arg10: memref<2x3x!tpu.dma_semaphore, #tpu.memory_space<semaphore_mem>>) attributes {dimension_semantics = [#tpu.dimension_semantics<parallel>, #tpu.dimension_semantics<arbitrary>], iteration_bounds = array<i64: 2, 1>, scalar_prefetch = 0 : i64, scratch_operands = 2 : i64, tpu.core_type = #tpu.core_type<tc>, window_params = [{}, {pipeline_mode = #tpu.pipeline_mode<synchronous>, transform_indices = @transform_1, window_bounds = array<i64: 3, 384, 128>}, {pipeline_mode = #tpu.pipeline_mode<synchronous>, transform_indices = @transform_2, window_bounds = array<i64: 1, 128>}, {pipeline_mode = #tpu.pipeline_mode<synchronous>, transform_indices = @transform_3, window_bounds = array<i64: 1, 128>}, {transform_indices = @transform_4, window_bounds = array<i64: 256, 128>}, {transform_indices = @transform_5, window_bounds = array<i64: 1, 1, 128>}, {transform_indices = @transform_6, window_bounds = array<i64: 1, 1, 128>}]} {
    %c2_i32 = arith.constant 2 : i32
    %c0_i32 = arith.constant 0 : i32
    %0 = arith.cmpi eq, %c2_i32, %c0_i32 : i32
    %c1_i32 = arith.constant 1 : i32
    %1 = arith.select %0, %c1_i32, %c2_i32 : i32
    %2 = arith.remsi %arg1, %1 : i32
    %c0_i32_0 = arith.constant 0 : i32
    %3 = arith.cmpi ne, %2, %c0_i32_0 : i32
    %c0_i32_1 = arith.constant 0 : i32
    %4 = arith.cmpi slt, %2, %c0_i32_1 : i32
    %c0_i32_2 = arith.constant 0 : i32
    %5 = arith.cmpi slt, %1, %c0_i32_2 : i32
    %6 = arith.xori %4, %5 : i1
    %7 = arith.andi %6, %3 : i1
    %8 = arith.addi %2, %1 : i32
    %9 = arith.select %7, %8, %2 : i32
    %c0_i32_3 = arith.constant 0 : i32
    %10 = arith.cmpi eq, %arg1, %c0_i32_3 : i32
    %11 = arith.extui %10 : i1 to i32
    %c0_i32_4 = arith.constant 0 : i32
    %12 = arith.cmpi ne, %11, %c0_i32_4 : i32
    scf.if %12 {
      %c16_i32_63 = arith.constant 16 : i32
      %100 = arith.muli %arg1, %c16_i32_63 : i32
      %c1_i32_64 = arith.constant 1 : i32
      %101 = arith.subi %100, %c1_i32_64 : i32
      %c0_i32_65 = arith.constant 0 : i32
      %102 = arith.maxsi %101, %c0_i32_65 : i32
      %c16_i32_66 = arith.constant 16 : i32
      %103 = arith.addi %100, %c16_i32_66 : i32
      %c15_i32_67 = arith.constant 15 : i32
      %104 = arith.minsi %103, %c15_i32_67 : i32
      %c0_i32_68 = arith.constant 0 : i32
      %c0_i32_69 = arith.constant 0 : i32
      %c0_i32_70 = arith.constant 0 : i32
      %105 = tpu.memref_slice %arg2[%arg0, %102, %c0_i32_69, %c0_i32_70] : memref<2x16x16x128xf32, #tpu.memory_space<any>> -> memref<1x1x16x128xf32, #tpu.memory_space<any>>
      %106 = tpu.memref_squeeze %105 : memref<1x1x16x128xf32, #tpu.memory_space<any>> -> memref<1x16x128xf32, #tpu.memory_space<any>>
      %c0_i32_71 = arith.constant 0 : i32
      %c0_i32_72 = arith.constant 0 : i32
      %c0_i32_73 = arith.constant 0 : i32
      %107 = tpu.memref_slice %arg9[%9, %c0_i32_71, %c0_i32_72, %c0_i32_73] : memref<2x18x16x128xf32, #tpu.memory_space<vmem>> -> memref<1x1x16x128xf32, #tpu.memory_space<vmem>>
      %108 = tpu.memref_squeeze %107 : memref<1x1x16x128xf32, #tpu.memory_space<vmem>> -> memref<1x16x128xf32, #tpu.memory_space<vmem>>
      %109 = tpu.memref_slice %arg10[%9, %c0_i32_68] : memref<2x3x!tpu.dma_semaphore, #tpu.memory_space<semaphore_mem>> -> memref<1x1x!tpu.dma_semaphore, #tpu.memory_space<semaphore_mem>>
      %110 = tpu.memref_squeeze %109 : memref<1x1x!tpu.dma_semaphore, #tpu.memory_space<semaphore_mem>> -> memref<!tpu.dma_semaphore, #tpu.memory_space<semaphore_mem>>
      tpu.enqueue_dma source(%106 : memref<1x16x128xf32, #tpu.memory_space<any>>) target(%108 : memref<1x16x128xf32, #tpu.memory_space<vmem>>) target_semaphore(%110 : memref<!tpu.dma_semaphore, #tpu.memory_space<semaphore_mem>>)
      %c1_i32_74 = arith.constant 1 : i32
      %c0_i32_75 = arith.constant 0 : i32
      %c0_i32_76 = arith.constant 0 : i32
      %111 = tpu.memref_slice %arg2[%arg0, %100, %c0_i32_75, %c0_i32_76] : memref<2x16x16x128xf32, #tpu.memory_space<any>> -> memref<1x16x16x128xf32, #tpu.memory_space<any>>
      %112 = tpu.memref_squeeze %111 : memref<1x16x16x128xf32, #tpu.memory_space<any>> -> memref<16x16x128xf32, #tpu.memory_space<any>>
      %c1_i32_77 = arith.constant 1 : i32
      %c0_i32_78 = arith.constant 0 : i32
      %c0_i32_79 = arith.constant 0 : i32
      %113 = tpu.memref_slice %arg9[%9, %c1_i32_77, %c0_i32_78, %c0_i32_79] : memref<2x18x16x128xf32, #tpu.memory_space<vmem>> -> memref<1x16x16x128xf32, #tpu.memory_space<vmem>>
      %114 = tpu.memref_squeeze %113 : memref<1x16x16x128xf32, #tpu.memory_space<vmem>> -> memref<16x16x128xf32, #tpu.memory_space<vmem>>
      %115 = tpu.memref_slice %arg10[%9, %c1_i32_74] : memref<2x3x!tpu.dma_semaphore, #tpu.memory_space<semaphore_mem>> -> memref<1x1x!tpu.dma_semaphore, #tpu.memory_space<semaphore_mem>>
      %116 = tpu.memref_squeeze %115 : memref<1x1x!tpu.dma_semaphore, #tpu.memory_space<semaphore_mem>> -> memref<!tpu.dma_semaphore, #tpu.memory_space<semaphore_mem>>
      tpu.enqueue_dma source(%112 : memref<16x16x128xf32, #tpu.memory_space<any>>) target(%114 : memref<16x16x128xf32, #tpu.memory_space<vmem>>) target_semaphore(%116 : memref<!tpu.dma_semaphore, #tpu.memory_space<semaphore_mem>>)
      %c2_i32_80 = arith.constant 2 : i32
      %c0_i32_81 = arith.constant 0 : i32
      %c0_i32_82 = arith.constant 0 : i32
      %117 = tpu.memref_slice %arg2[%arg0, %104, %c0_i32_81, %c0_i32_82] : memref<2x16x16x128xf32, #tpu.memory_space<any>> -> memref<1x1x16x128xf32, #tpu.memory_space<any>>
      %118 = tpu.memref_squeeze %117 : memref<1x1x16x128xf32, #tpu.memory_space<any>> -> memref<1x16x128xf32, #tpu.memory_space<any>>
      %c17_i32_83 = arith.constant 17 : i32
      %c0_i32_84 = arith.constant 0 : i32
      %c0_i32_85 = arith.constant 0 : i32
      %119 = tpu.memref_slice %arg9[%9, %c17_i32_83, %c0_i32_84, %c0_i32_85] : memref<2x18x16x128xf32, #tpu.memory_space<vmem>> -> memref<1x1x16x128xf32, #tpu.memory_space<vmem>>
      %120 = tpu.memref_squeeze %119 : memref<1x1x16x128xf32, #tpu.memory_space<vmem>> -> memref<1x16x128xf32, #tpu.memory_space<vmem>>
      %121 = tpu.memref_slice %arg10[%9, %c2_i32_80] : memref<2x3x!tpu.dma_semaphore, #tpu.memory_space<semaphore_mem>> -> memref<1x1x!tpu.dma_semaphore, #tpu.memory_space<semaphore_mem>>
      %122 = tpu.memref_squeeze %121 : memref<1x1x!tpu.dma_semaphore, #tpu.memory_space<semaphore_mem>> -> memref<!tpu.dma_semaphore, #tpu.memory_space<semaphore_mem>>
      tpu.enqueue_dma source(%118 : memref<1x16x128xf32, #tpu.memory_space<any>>) target(%120 : memref<1x16x128xf32, #tpu.memory_space<vmem>>) target_semaphore(%122 : memref<!tpu.dma_semaphore, #tpu.memory_space<semaphore_mem>>)
    } else {
    }
    %c1_i32_5 = arith.constant 1 : i32
    %13 = arith.addi %arg1, %c1_i32_5 : i32
    %c1_i32_6 = arith.constant 1 : i32
    %14 = arith.cmpi slt, %13, %c1_i32_6 : i32
    %15 = arith.extui %14 : i1 to i32
    %c0_i32_7 = arith.constant 0 : i32
    %16 = arith.cmpi ne, %15, %c0_i32_7 : i32
    scf.if %16 {
      %c1_i32_63 = arith.constant 1 : i32
      %100 = arith.addi %arg1, %c1_i32_63 : i32
      %c1_i32_64 = arith.constant 1 : i32
      %101 = arith.subi %c1_i32_64, %9 : i32
      %c16_i32_65 = arith.constant 16 : i32
      %102 = arith.muli %100, %c16_i32_65 : i32
      %c1_i32_66 = arith.constant 1 : i32
      %103 = arith.subi %102, %c1_i32_66 : i32
      %c0_i32_67 = arith.constant 0 : i32
      %104 = arith.maxsi %103, %c0_i32_67 : i32
      %c16_i32_68 = arith.constant 16 : i32
      %105 = arith.addi %102, %c16_i32_68 : i32
      %c15_i32_69 = arith.constant 15 : i32
      %106 = arith.minsi %105, %c15_i32_69 : i32
      %c0_i32_70 = arith.constant 0 : i32
      %c0_i32_71 = arith.constant 0 : i32
      %c0_i32_72 = arith.constant 0 : i32
      %107 = tpu.memref_slice %arg2[%arg0, %104, %c0_i32_71, %c0_i32_72] : memref<2x16x16x128xf32, #tpu.memory_space<any>> -> memref<1x1x16x128xf32, #tpu.memory_space<any>>
      %108 = tpu.memref_squeeze %107 : memref<1x1x16x128xf32, #tpu.memory_space<any>> -> memref<1x16x128xf32, #tpu.memory_space<any>>
      %c0_i32_73 = arith.constant 0 : i32
      %c0_i32_74 = arith.constant 0 : i32
      %c0_i32_75 = arith.constant 0 : i32
      %109 = tpu.memref_slice %arg9[%101, %c0_i32_73, %c0_i32_74, %c0_i32_75] : memref<2x18x16x128xf32, #tpu.memory_space<vmem>> -> memref<1x1x16x128xf32, #tpu.memory_space<vmem>>
      %110 = tpu.memref_squeeze %109 : memref<1x1x16x128xf32, #tpu.memory_space<vmem>> -> memref<1x16x128xf32, #tpu.memory_space<vmem>>
      %111 = tpu.memref_slice %arg10[%101, %c0_i32_70] : memref<2x3x!tpu.dma_semaphore, #tpu.memory_space<semaphore_mem>> -> memref<1x1x!tpu.dma_semaphore, #tpu.memory_space<semaphore_mem>>
      %112 = tpu.memref_squeeze %111 : memref<1x1x!tpu.dma_semaphore, #tpu.memory_space<semaphore_mem>> -> memref<!tpu.dma_semaphore, #tpu.memory_space<semaphore_mem>>
      tpu.enqueue_dma source(%108 : memref<1x16x128xf32, #tpu.memory_space<any>>) target(%110 : memref<1x16x128xf32, #tpu.memory_space<vmem>>) target_semaphore(%112 : memref<!tpu.dma_semaphore, #tpu.memory_space<semaphore_mem>>)
      %c1_i32_76 = arith.constant 1 : i32
      %c0_i32_77 = arith.constant 0 : i32
      %c0_i32_78 = arith.constant 0 : i32
      %113 = tpu.memref_slice %arg2[%arg0, %102, %c0_i32_77, %c0_i32_78] : memref<2x16x16x128xf32, #tpu.memory_space<any>> -> memref<1x16x16x128xf32, #tpu.memory_space<any>>
      %114 = tpu.memref_squeeze %113 : memref<1x16x16x128xf32, #tpu.memory_space<any>> -> memref<16x16x128xf32, #tpu.memory_space<any>>
      %c1_i32_79 = arith.constant 1 : i32
      %c0_i32_80 = arith.constant 0 : i32
      %c0_i32_81 = arith.constant 0 : i32
      %115 = tpu.memref_slice %arg9[%101, %c1_i32_79, %c0_i32_80, %c0_i32_81] : memref<2x18x16x128xf32, #tpu.memory_space<vmem>> -> memref<1x16x16x128xf32, #tpu.memory_space<vmem>>
      %116 = tpu.memref_squeeze %115 : memref<1x16x16x128xf32, #tpu.memory_space<vmem>> -> memref<16x16x128xf32, #tpu.memory_space<vmem>>
      %117 = tpu.memref_slice %arg10[%101, %c1_i32_76] : memref<2x3x!tpu.dma_semaphore, #tpu.memory_space<semaphore_mem>> -> memref<1x1x!tpu.dma_semaphore, #tpu.memory_space<semaphore_mem>>
      %118 = tpu.memref_squeeze %117 : memref<1x1x!tpu.dma_semaphore, #tpu.memory_space<semaphore_mem>> -> memref<!tpu.dma_semaphore, #tpu.memory_space<semaphore_mem>>
      tpu.enqueue_dma source(%114 : memref<16x16x128xf32, #tpu.memory_space<any>>) target(%116 : memref<16x16x128xf32, #tpu.memory_space<vmem>>) target_semaphore(%118 : memref<!tpu.dma_semaphore, #tpu.memory_space<semaphore_mem>>)
      %c2_i32_82 = arith.constant 2 : i32
      %c0_i32_83 = arith.constant 0 : i32
      %c0_i32_84 = arith.constant 0 : i32
      %119 = tpu.memref_slice %arg2[%arg0, %106, %c0_i32_83, %c0_i32_84] : memref<2x16x16x128xf32, #tpu.memory_space<any>> -> memref<1x1x16x128xf32, #tpu.memory_space<any>>
      %120 = tpu.memref_squeeze %119 : memref<1x1x16x128xf32, #tpu.memory_space<any>> -> memref<1x16x128xf32, #tpu.memory_space<any>>
      %c17_i32_85 = arith.constant 17 : i32
      %c0_i32_86 = arith.constant 0 : i32
      %c0_i32_87 = arith.constant 0 : i32
      %121 = tpu.memref_slice %arg9[%101, %c17_i32_85, %c0_i32_86, %c0_i32_87] : memref<2x18x16x128xf32, #tpu.memory_space<vmem>> -> memref<1x1x16x128xf32, #tpu.memory_space<vmem>>
      %122 = tpu.memref_squeeze %121 : memref<1x1x16x128xf32, #tpu.memory_space<vmem>> -> memref<1x16x128xf32, #tpu.memory_space<vmem>>
      %123 = tpu.memref_slice %arg10[%101, %c2_i32_82] : memref<2x3x!tpu.dma_semaphore, #tpu.memory_space<semaphore_mem>> -> memref<1x1x!tpu.dma_semaphore, #tpu.memory_space<semaphore_mem>>
      %124 = tpu.memref_squeeze %123 : memref<1x1x!tpu.dma_semaphore, #tpu.memory_space<semaphore_mem>> -> memref<!tpu.dma_semaphore, #tpu.memory_space<semaphore_mem>>
      tpu.enqueue_dma source(%120 : memref<1x16x128xf32, #tpu.memory_space<any>>) target(%122 : memref<1x16x128xf32, #tpu.memory_space<vmem>>) target_semaphore(%124 : memref<!tpu.dma_semaphore, #tpu.memory_space<semaphore_mem>>)
    } else {
    }
    %c16_i32 = arith.constant 16 : i32
    %17 = arith.muli %arg1, %c16_i32 : i32
    %c1_i32_8 = arith.constant 1 : i32
    %18 = arith.subi %17, %c1_i32_8 : i32
    %c0_i32_9 = arith.constant 0 : i32
    %19 = arith.maxsi %18, %c0_i32_9 : i32
    %c16_i32_10 = arith.constant 16 : i32
    %20 = arith.addi %17, %c16_i32_10 : i32
    %c15_i32 = arith.constant 15 : i32
    %21 = arith.minsi %20, %c15_i32 : i32
    %c0_i32_11 = arith.constant 0 : i32
    %c0_i32_12 = arith.constant 0 : i32
    %c0_i32_13 = arith.constant 0 : i32
    %22 = tpu.memref_slice %arg2[%arg0, %19, %c0_i32_12, %c0_i32_13] : memref<2x16x16x128xf32, #tpu.memory_space<any>> -> memref<1x1x16x128xf32, #tpu.memory_space<any>>
    %23 = tpu.memref_squeeze %22 : memref<1x1x16x128xf32, #tpu.memory_space<any>> -> memref<1x16x128xf32, #tpu.memory_space<any>>
    %c0_i32_14 = arith.constant 0 : i32
    %c0_i32_15 = arith.constant 0 : i32
    %c0_i32_16 = arith.constant 0 : i32
    %24 = tpu.memref_slice %arg9[%9, %c0_i32_14, %c0_i32_15, %c0_i32_16] : memref<2x18x16x128xf32, #tpu.memory_space<vmem>> -> memref<1x1x16x128xf32, #tpu.memory_space<vmem>>
    %25 = tpu.memref_squeeze %24 : memref<1x1x16x128xf32, #tpu.memory_space<vmem>> -> memref<1x16x128xf32, #tpu.memory_space<vmem>>
    %26 = tpu.memref_slice %arg10[%9, %c0_i32_11] : memref<2x3x!tpu.dma_semaphore, #tpu.memory_space<semaphore_mem>> -> memref<1x1x!tpu.dma_semaphore, #tpu.memory_space<semaphore_mem>>
    %27 = tpu.memref_squeeze %26 : memref<1x1x!tpu.dma_semaphore, #tpu.memory_space<semaphore_mem>> -> memref<!tpu.dma_semaphore, #tpu.memory_space<semaphore_mem>>
    tpu.wait_dma2 semaphore(%27 : memref<!tpu.dma_semaphore, #tpu.memory_space<semaphore_mem>>) src(%23 : memref<1x16x128xf32, #tpu.memory_space<any>>) dst(%25 : memref<1x16x128xf32, #tpu.memory_space<vmem>>)
    %c1_i32_17 = arith.constant 1 : i32
    %c0_i32_18 = arith.constant 0 : i32
    %c0_i32_19 = arith.constant 0 : i32
    %28 = tpu.memref_slice %arg2[%arg0, %17, %c0_i32_18, %c0_i32_19] : memref<2x16x16x128xf32, #tpu.memory_space<any>> -> memref<1x16x16x128xf32, #tpu.memory_space<any>>
    %29 = tpu.memref_squeeze %28 : memref<1x16x16x128xf32, #tpu.memory_space<any>> -> memref<16x16x128xf32, #tpu.memory_space<any>>
    %c1_i32_20 = arith.constant 1 : i32
    %c0_i32_21 = arith.constant 0 : i32
    %c0_i32_22 = arith.constant 0 : i32
    %30 = tpu.memref_slice %arg9[%9, %c1_i32_20, %c0_i32_21, %c0_i32_22] : memref<2x18x16x128xf32, #tpu.memory_space<vmem>> -> memref<1x16x16x128xf32, #tpu.memory_space<vmem>>
    %31 = tpu.memref_squeeze %30 : memref<1x16x16x128xf32, #tpu.memory_space<vmem>> -> memref<16x16x128xf32, #tpu.memory_space<vmem>>
    %32 = tpu.memref_slice %arg10[%9, %c1_i32_17] : memref<2x3x!tpu.dma_semaphore, #tpu.memory_space<semaphore_mem>> -> memref<1x1x!tpu.dma_semaphore, #tpu.memory_space<semaphore_mem>>
    %33 = tpu.memref_squeeze %32 : memref<1x1x!tpu.dma_semaphore, #tpu.memory_space<semaphore_mem>> -> memref<!tpu.dma_semaphore, #tpu.memory_space<semaphore_mem>>
    tpu.wait_dma2 semaphore(%33 : memref<!tpu.dma_semaphore, #tpu.memory_space<semaphore_mem>>) src(%29 : memref<16x16x128xf32, #tpu.memory_space<any>>) dst(%31 : memref<16x16x128xf32, #tpu.memory_space<vmem>>)
    %c2_i32_23 = arith.constant 2 : i32
    %c0_i32_24 = arith.constant 0 : i32
    %c0_i32_25 = arith.constant 0 : i32
    %34 = tpu.memref_slice %arg2[%arg0, %21, %c0_i32_24, %c0_i32_25] : memref<2x16x16x128xf32, #tpu.memory_space<any>> -> memref<1x1x16x128xf32, #tpu.memory_space<any>>
    %35 = tpu.memref_squeeze %34 : memref<1x1x16x128xf32, #tpu.memory_space<any>> -> memref<1x16x128xf32, #tpu.memory_space<any>>
    %c17_i32 = arith.constant 17 : i32
    %c0_i32_26 = arith.constant 0 : i32
    %c0_i32_27 = arith.constant 0 : i32
    %36 = tpu.memref_slice %arg9[%9, %c17_i32, %c0_i32_26, %c0_i32_27] : memref<2x18x16x128xf32, #tpu.memory_space<vmem>> -> memref<1x1x16x128xf32, #tpu.memory_space<vmem>>
    %37 = tpu.memref_squeeze %36 : memref<1x1x16x128xf32, #tpu.memory_space<vmem>> -> memref<1x16x128xf32, #tpu.memory_space<vmem>>
    %38 = tpu.memref_slice %arg10[%9, %c2_i32_23] : memref<2x3x!tpu.dma_semaphore, #tpu.memory_space<semaphore_mem>> -> memref<1x1x!tpu.dma_semaphore, #tpu.memory_space<semaphore_mem>>
    %39 = tpu.memref_squeeze %38 : memref<1x1x!tpu.dma_semaphore, #tpu.memory_space<semaphore_mem>> -> memref<!tpu.dma_semaphore, #tpu.memory_space<semaphore_mem>>
    tpu.wait_dma2 semaphore(%39 : memref<!tpu.dma_semaphore, #tpu.memory_space<semaphore_mem>>) src(%35 : memref<1x16x128xf32, #tpu.memory_space<any>>) dst(%37 : memref<1x16x128xf32, #tpu.memory_space<vmem>>)
    %40 = arith.index_cast %9 : i32 to index
    %c0 = arith.constant 0 : index
    %c0_28 = arith.constant 0 : index
    %c0_29 = arith.constant 0 : index
    %41 = vector.load %arg9[%40, %c0, %c0_28, %c0_29] : memref<2x18x16x128xf32, #tpu.memory_space<vmem>>, vector<1x18x16x128xf32>
    %42 = vector.shape_cast %41 : vector<1x18x16x128xf32> to vector<18x16x128xf32>
    %c0_30 = arith.constant 0 : index
    %c0_31 = arith.constant 0 : index
    %43 = vector.load %arg4[%c0_30, %c0_31] : memref<1x128xf32, #tpu.memory_space<vmem>>, vector<1x128xf32>
    %44 = vector.shape_cast %43 : vector<1x128xf32> to vector<1x1x128xf32>
    %45 = vector.broadcast %44 : vector<1x1x128xf32> to vector<18x16x128xf32>
    %46 = arith.mulf %42, %45 : vector<18x16x128xf32>
    %c0_32 = arith.constant 0 : index
    %c0_33 = arith.constant 0 : index
    %47 = vector.load %arg5[%c0_32, %c0_33] : memref<1x128xf32, #tpu.memory_space<vmem>>, vector<1x128xf32>
    %48 = vector.shape_cast %47 : vector<1x128xf32> to vector<1x1x128xf32>
    %49 = vector.broadcast %48 : vector<1x1x128xf32> to vector<18x16x128xf32>
    %50 = arith.addf %46, %49 : vector<18x16x128xf32>
    %cst = arith.constant 0.000000e+00 : f32
    %51 = vector.broadcast %cst : f32 to vector<18x16x128xf32>
    %52 = arith.maximumf %50, %51 : vector<18x16x128xf32>
    %53 = tpu.iota {dimensions = array<i32: 0>} : vector<18x16x1xi32>
    %c0_i32_34 = arith.constant 0 : i32
    %54 = arith.cmpi eq, %arg1, %c0_i32_34 : i32
    %c1_i32_35 = arith.constant 1 : i32
    %c0_i32_36 = arith.constant 0 : i32
    %55 = arith.select %54, %c1_i32_35, %c0_i32_36 : i32
    %c0_i32_37 = arith.constant 0 : i32
    %56 = arith.cmpi eq, %arg1, %c0_i32_37 : i32
    %c16_i32_38 = arith.constant 16 : i32
    %c17_i32_39 = arith.constant 17 : i32
    %57 = arith.select %56, %c16_i32_38, %c17_i32_39 : i32
    %58 = vector.broadcast %55 : i32 to vector<18x16x1xi32>
    %59 = arith.cmpi sge, %53, %58 : vector<18x16x1xi32>
    %60 = vector.broadcast %57 : i32 to vector<18x16x1xi32>
    %61 = arith.cmpi sle, %53, %60 : vector<18x16x1xi32>
    %62 = arith.andi %59, %61 : vector<18x16x1xi1>
    %cst_40 = arith.constant 0.000000e+00 : f32
    %63 = vector.shape_cast %62 : vector<18x16x1xi1> to vector<18x16x1xi1>
    %64 = vector.broadcast %63 : vector<18x16x1xi1> to vector<18x16x128xi1>
    %65 = vector.broadcast %cst_40 : f32 to vector<18x16x128xf32>
    %66 = arith.select %64, %52, %65 : vector<18x16x128xi1>, vector<18x16x128xf32>
    %cst_41 = arith.constant 0.000000e+00 : f32
    %67 = vector.broadcast %cst_41 : f32 to vector<18x1x128xf32>
    %68 = vector.extract_strided_slice %66 {offsets = [0, 0, 0], sizes = [18, 15, 128], strides = [1, 1, 1]} : vector<18x16x128xf32> to vector<18x15x128xf32>
    %69 = tpu.concatenate %67, %68 in 1 : vector<18x1x128xf32>, vector<18x15x128xf32> -> vector<18x16x128xf32>
    %70 = vector.extract_strided_slice %66 {offsets = [0, 1, 0], sizes = [18, 15, 128], strides = [1, 1, 1]} : vector<18x16x128xf32> to vector<18x15x128xf32>
    %71 = tpu.concatenate %70, %67 in 1 : vector<18x15x128xf32>, vector<18x1x128xf32> -> vector<18x16x128xf32>
    %72 = tpu.concatenate %69, %66, %71 in 2 : vector<18x16x128xf32>, vector<18x16x128xf32>, vector<18x16x128xf32> -> vector<18x16x384xf32>
    %73 = vector.shape_cast %72 : vector<18x16x384xf32> to vector<288x384xf32>
    %cst_42 = arith.constant 0.000000e+00 : f32
    %74 = vector.broadcast %cst_42 : f32 to vector<256x128xf32>
    %75 = vector.extract_strided_slice %73 {offsets = [0, 0], sizes = [256, 384], strides = [1, 1]} : vector<288x384xf32> to vector<256x384xf32>
    %c0_43 = arith.constant 0 : index
    %c0_44 = arith.constant 0 : index
    %c0_45 = arith.constant 0 : index
    %76 = vector.load %arg3[%c0_43, %c0_44, %c0_45] : memref<3x384x128xf32, #tpu.memory_space<vmem>>, vector<1x384x128xf32>
    %77 = vector.shape_cast %76 : vector<1x384x128xf32> to vector<384x128xf32>
    %cst_46 = arith.constant dense<0.000000e+00> : vector<256x128xf32>
    %78 = tpu.matmul %75, %77, %cst_46 {dimension_numbers = #tpu.dot_dimension_numbers<[1], [0], [0], [1], [0, 0, 1, 1], [], []>} : vector<256x384xf32>, vector<384x128xf32>, vector<256x128xf32> -> vector<256x128xf32>
    %79 = arith.addf %74, %78 : vector<256x128xf32>
    %80 = vector.extract_strided_slice %73 {offsets = [16, 0], sizes = [256, 384], strides = [1, 1]} : vector<288x384xf32> to vector<256x384xf32>
    %c1 = arith.constant 1 : index
    %c0_47 = arith.constant 0 : index
    %c0_48 = arith.constant 0 : index
    %81 = vector.load %arg3[%c1, %c0_47, %c0_48] : memref<3x384x128xf32, #tpu.memory_space<vmem>>, vector<1x384x128xf32>
    %82 = vector.shape_cast %81 : vector<1x384x128xf32> to vector<384x128xf32>
    %cst_49 = arith.constant dense<0.000000e+00> : vector<256x128xf32>
    %83 = tpu.matmul %80, %82, %cst_49 {dimension_numbers = #tpu.dot_dimension_numbers<[1], [0], [0], [1], [0, 0, 1, 1], [], []>} : vector<256x384xf32>, vector<384x128xf32>, vector<256x128xf32> -> vector<256x128xf32>
    %84 = arith.addf %79, %83 : vector<256x128xf32>
    %85 = vector.extract_strided_slice %73 {offsets = [32, 0], sizes = [256, 384], strides = [1, 1]} : vector<288x384xf32> to vector<256x384xf32>
    %c2 = arith.constant 2 : index
    %c0_50 = arith.constant 0 : index
    %c0_51 = arith.constant 0 : index
    %86 = vector.load %arg3[%c2, %c0_50, %c0_51] : memref<3x384x128xf32, #tpu.memory_space<vmem>>, vector<1x384x128xf32>
    %87 = vector.shape_cast %86 : vector<1x384x128xf32> to vector<384x128xf32>
    %cst_52 = arith.constant dense<0.000000e+00> : vector<256x128xf32>
    %88 = tpu.matmul %85, %87, %cst_52 {dimension_numbers = #tpu.dot_dimension_numbers<[1], [0], [0], [1], [0, 0, 1, 1], [], []>} : vector<256x384xf32>, vector<384x128xf32>, vector<256x128xf32> -> vector<256x128xf32>
    %89 = arith.addf %84, %88 : vector<256x128xf32>
    %c0_53 = arith.constant 0 : index
    %c0_54 = arith.constant 0 : index
    %90 = vector.load %arg6[%c0_53, %c0_54] : memref<256x128xf32, #tpu.memory_space<vmem>>, vector<256x128xf32>
    tpu.vector_store %arg6[%c0_53, %c0_54], %89 {strides = array<i32>} : memref<256x128xf32, #tpu.memory_space<vmem>>, vector<256x128xf32>,
    %cst_55 = arith.constant dense<0.000000e+00> : vector<128xf32>
    %91 = vector.multi_reduction <add>, %89, %cst_55 [0] : vector<256x128xf32> to vector<128xf32>
    %92 = vector.shape_cast %91 : vector<128xf32> to vector<1x128xf32>
    %93 = vector.shape_cast %92 : vector<1x128xf32> to vector<1x1x128xf32>
    %c0_56 = arith.constant 0 : index
    %c0_57 = arith.constant 0 : index
    %c0_58 = arith.constant 0 : index
    %94 = vector.load %arg7[%c0_56, %c0_57, %c0_58] : memref<1x1x128xf32, #tpu.memory_space<vmem>>, vector<1x1x128xf32>
    tpu.vector_store %arg7[%c0_56, %c0_57, %c0_58], %93 {strides = array<i32>} : memref<1x1x128xf32, #tpu.memory_space<vmem>>, vector<1x1x128xf32>,
    %95 = arith.mulf %89, %89 : vector<256x128xf32>
    %cst_59 = arith.constant dense<0.000000e+00> : vector<128xf32>
    %96 = vector.multi_reduction <add>, %95, %cst_59 [0] : vector<256x128xf32> to vector<128xf32>
    %97 = vector.shape_cast %96 : vector<128xf32> to vector<1x128xf32>
    %98 = vector.shape_cast %97 : vector<1x128xf32> to vector<1x1x128xf32>
    %c0_60 = arith.constant 0 : index
    %c0_61 = arith.constant 0 : index
    %c0_62 = arith.constant 0 : index
    %99 = vector.load %arg8[%c0_60, %c0_61, %c0_62] : memref<1x1x128xf32, #tpu.memory_space<vmem>>, vector<1x1x128xf32>
    tpu.vector_store %arg8[%c0_60, %c0_61, %c0_62], %98 {strides = array<i32>} : memref<1x1x128xf32, #tpu.memory_space<vmem>>, vector<1x1x128xf32>,
    return
  }
  func.func @transform_1(%arg0: i32, %arg1: i32) -> (i32, i32, i32) {
    %c0_i32 = arith.constant 0 : i32
    %c0_i32_0 = arith.constant 0 : i32
    %c0_i32_1 = arith.constant 0 : i32
    %c0_i32_2 = arith.constant 0 : i32
    return %c0_i32, %c0_i32_0, %c0_i32_1 : i32, i32, i32
  }
  func.func @transform_2(%arg0: i32, %arg1: i32) -> (i32, i32) {
    %c0_i32 = arith.constant 0 : i32
    %c0_i32_0 = arith.constant 0 : i32
    %c0_i32_1 = arith.constant 0 : i32
    return %c0_i32, %c0_i32_0 : i32, i32
  }
  func.func @transform_3(%arg0: i32, %arg1: i32) -> (i32, i32) {
    %c0_i32 = arith.constant 0 : i32
    %c0_i32_0 = arith.constant 0 : i32
    %c0_i32_1 = arith.constant 0 : i32
    return %c0_i32, %c0_i32_0 : i32, i32
  }
  func.func @transform_4(%arg0: i32, %arg1: i32) -> (i32, i32) {
    %c1_i32 = arith.constant 1 : i32
    %0 = arith.muli %arg0, %c1_i32 : i32
    %1 = arith.addi %0, %arg1 : i32
    %c0_i32 = arith.constant 0 : i32
    %c0_i32_0 = arith.constant 0 : i32
    return %1, %c0_i32 : i32, i32
  }
  func.func @transform_5(%arg0: i32, %arg1: i32) -> (i32, i32, i32) {
    %c1_i32 = arith.constant 1 : i32
    %0 = arith.muli %arg0, %c1_i32 : i32
    %1 = arith.addi %0, %arg1 : i32
    %c0_i32 = arith.constant 0 : i32
    %c0_i32_0 = arith.constant 0 : i32
    %c0_i32_1 = arith.constant 0 : i32
    return %1, %c0_i32, %c0_i32_0 : i32, i32, i32
  }
  func.func @transform_6(%arg0: i32, %arg1: i32) -> (i32, i32, i32) {
    %c1_i32 = arith.constant 1 : i32
    %0 = arith.muli %arg0, %c1_i32 : i32
    %1 = arith.addi %0, %arg1 : i32
    %c0_i32 = arith.constant 0 : i32
    %c0_i32_0 = arith.constant 0 : i32
    %c0_i32_1 = arith.constant 0 : i32
    return %1, %c0_i32, %c0_i32_0 : i32, i32, i32
  }
}

</mosaic_0001>

<llo_original>
// kernel: unet_encoding_block.5
$region0: #{unet_encoding_block.5}
  #allocation0 [shape = 'u32[]', space=smem, size = 0x4, offset = 0x4, fixed_abs, tag = 'smem constant byte address 0x4 - core index']
  #allocation1 [shape = 'u32[144,128]{1,0:T(1,128)}', space=vmem, size = 0x12000, scoped, tag = 'internal scratch']
  %s0 = inlined_call_operand.hbm [shape: f32[512,128], index: 0, kind: input, shape index: {}]
  %s1 = inlined_call_operand.hbm [shape: f32[1,128], index: 1, kind: input, shape index: {}]
  %s2 = inlined_call_operand.hbm [shape: f32[1,128], index: 2, kind: input, shape index: {}]
  %s3 = inlined_call_operand.hbm [shape: f32[512,128], index: 3, kind: output, shape index: {}]
  %s4 = sld [smem:[#allocation0]]
  $region34: #{unet_encoding_block.5} parent=0
    _
  %s6 = ssub.s32 1, %s4
  %s7 = scalar_select 0, %s6, %s4
  $region1: #{unet_encoding_block.5} parent=0
    #allocation2 [shape = 'u8[262144]{0}', space=vmem, size = 0x40000, scoped, tag = 'input window, operand 0, single buffered']
    #allocation3 [shape = 's32[1]{0}', space=sflag, size = 0x4, scoped, tag = 'scoped memory for unet_encoding_block.5']
    #allocation4 [shape = 's32[1]{0}', space=sflag, size = 0x4, scoped, tag = 'scoped memory for unet_encoding_block.5']
    #allocation5 [shape = 'u8[512]{0}', space=vmem, size = 0x400, scoped, tag = 'input window, operand 1, single buffered']
    #allocation6 [shape = 's32[1]{0}', space=sflag, size = 0x4, scoped, tag = 'scoped memory for unet_encoding_block.5']
    #allocation7 [shape = 'u8[512]{0}', space=vmem, size = 0x400, scoped, tag = 'input window, operand 2, single buffered']
    #allocation8 [shape = 'u8[262144]{0}', space=vmem, size = 0x40000, scoped, tag = 'output window, operand 0, single buffered']
    %8 = vsyncpa [#allocation3], 0
    %9 = vsyncpa [#allocation6], 0
    %10 = vsyncpa [#allocation4], 0
    // Predicated region
    $region2: #{unet_encoding_block.5} parent=1 // pred_check
      _
    $region3: #{unet_encoding_block.5} parent=1 // pred_check_branch
      %12 = sbr.rel (0) target = $region5
    $region4: #{unet_encoding_block.5} parent=1 // pred_region
      %s14 = ssub.s32 8192, 8192
      %15 = vsyncadd [#allocation3], %s14
      %s16 = sshll.u32 [#allocation2], 4
      %s17 = int_to_ptr.vmem [resolvable:$true] %s16
      %22 = dma.hbm_to_vmem [thread:$0]  %s0, 8192, %s17, [#allocation3], 128, 128, 8
    $region5: #{unet_encoding_block.5} parent=1 // pred_fallthru
      _
    // Predicated region
    $region6: #{unet_encoding_block.5} parent=1 // pred_check
      _
    $region7: #{unet_encoding_block.5} parent=1 // pred_check_branch
      %24 = sbr.rel (0) target = $region9
    $region8: #{unet_encoding_block.5} parent=1 // pred_region
      %s26 = ssub.s32 16, 16
      %27 = vsyncadd [#allocation6], %s26
      %s29 = sshll.u32 [#allocation5], 4
      %s30 = int_to_ptr.vmem [resolvable:$true] %s29
      %32 = dma.hbm_to_vmem [thread:$0]  %s1, 16, %s30, [#allocation6]
    $region9: #{unet_encoding_block.5} parent=1 // pred_fallthru
      _
    // Predicated region
    $region10: #{unet_encoding_block.5} parent=1 // pred_check
      _
    $region11: #{unet_encoding_block.5} parent=1 // pred_check_branch
      %34 = sbr.rel (0) target = $region13
    $region12: #{unet_encoding_block.5} parent=1 // pred_region
      %s36 = ssub.s32 16, 16
      %37 = vsyncadd [#allocation6], %s36
      %s39 = sshll.u32 [#allocation7], 4
      %s40 = int_to_ptr.vmem [resolvable:$true] %s39
      %42 = dma.hbm_to_vmem [thread:$0]  %s2, 16, %s40, [#allocation6]
    $region13: #{unet_encoding_block.5} parent=1 // pred_fallthru
      _
    // Predicated region
    $region14: #{unet_encoding_block.5} parent=1 // pred_check
      _
    $region15: #{unet_encoding_block.5} parent=1 // pred_check_branch
      %44 = sbr.rel (0) target = $region17
    $region16: #{unet_encoding_block.5} parent=1 // pred_region
      %45 = dma.done [#allocation3], 8192
    $region17: #{unet_encoding_block.5} parent=1 // pred_fallthru
      _
    // Predicated region
    $region18: #{unet_encoding_block.5} parent=1 // pred_check
      _
    $region19: #{unet_encoding_block.5} parent=1 // pred_check_branch
      %47 = sbr.rel (0) target = $region21
    $region20: #{unet_encoding_block.5} parent=1 // pred_region
      %48 = dma.done [#allocation6], 16
    $region21: #{unet_encoding_block.5} parent=1 // pred_fallthru
      _
    // Predicated region
    $region22: #{unet_encoding_block.5} parent=1 // pred_check
      _
    $region23: #{unet_encoding_block.5} parent=1 // pred_check_branch
      %50 = sbr.rel (0) target = $region25
    $region24: #{unet_encoding_block.5} parent=1 // pred_region
      %51 = dma.done [#allocation6], 16
    $region25: #{unet_encoding_block.5} parent=1 // pred_fallthru
      _
    %v52 = vld [vmem:[#allocation2] sm:$0xff]
    %v53 = vld [vmem:[#allocation2 + $0x8] sm:$0xff]
    %v54 = vld [vmem:[#allocation2 + $0x10] sm:$0xff]
    %v55 = vld [vmem:[#allocation2 + $0x18] sm:$0xff]
    %v56 = vld [vmem:[#allocation2 + $0x20] sm:$0xff]
    %v57 = vld [vmem:[#allocation2 + $0x28] sm:$0xff]
    %v58 = vld [vmem:[#allocation2 + $0x30] sm:$0xff]
    %v59 = vld [vmem:[#allocation2 + $0x38] sm:$0xff]
    %v60 = vld [vmem:[#allocation2 + $0x40] sm:$0xff]
    %v61 = vld [vmem:[#allocation2 + $0x48] sm:$0xff]
    %v62 = vld [vmem:[#allocation2 + $0x50] sm:$0xff]
    %v63 = vld [vmem:[#allocation2 + $0x58] sm:$0xff]
    %v64 = vld [vmem:[#allocation2 + $0x60] sm:$0xff]
    %v65 = vld [vmem:[#allocation2 + $0x68] sm:$0xff]
    %v66 = vld [vmem:[#allocation2 + $0x70] sm:$0xff]
    %v67 = vld [vmem:[#allocation2 + $0x78] sm:$0xff]
    %v68 = vld [vmem:[#allocation2 + $0x80] sm:$0xff]
    %v69 = vld [vmem:[#allocation2 + $0x88] sm:$0xff]
    %v70 = vld [vmem:[#allocation2 + $0x90] sm:$0xff]
    %v71 = vld [vmem:[#allocation2 + $0x98] sm:$0xff]
    %v72 = vld [vmem:[#allocation2 + $0xa0] sm:$0xff]
    %v73 = vld [vmem:[#allocation2 + $0xa8] sm:$0xff]
    %v74 = vld [vmem:[#allocation2 + $0xb0] sm:$0xff]
    %v75 = vld [vmem:[#allocation2 + $0xb8] sm:$0xff]
    %v76 = vld [vmem:[#allocation2 + $0xc0] sm:$0xff]
    %v77 = vld [vmem:[#allocation2 + $0xc8] sm:$0xff]
    %v78 = vld [vmem:[#allocation2 + $0xd0] sm:$0xff]
    %v79 = vld [vmem:[#allocation2 + $0xd8] sm:$0xff]
    %v80 = vld [vmem:[#allocation2 + $0xe0] sm:$0xff]
    %v81 = vld [vmem:[#allocation2 + $0xe8] sm:$0xff]
    %v82 = vld [vmem:[#allocation2 + $0xf0] sm:$0xff]
    %v83 = vld [vmem:[#allocation2 + $0xf8] sm:$0xff]
    %v84 = vld [vmem:[#allocation2 + $0x100] sm:$0xff]
    %v85 = vld [vmem:[#allocation2 + $0x108] sm:$0xff]
    %v86 = vld [vmem:[#allocation2 + $0x110] sm:$0xff]
    %v87 = vld [vmem:[#allocation2 + $0x118] sm:$0xff]
    %v88 = vld [vmem:[#allocation2 + $0x120] sm:$0xff]
    %v89 = vld [vmem:[#allocation2 + $0x128] sm:$0xff]
    %v90 = vld [vmem:[#allocation2 + $0x130] sm:$0xff]
    %v91 = vld [vmem:[#allocation2 + $0x138] sm:$0xff]
    %v92 = vld [vmem:[#allocation2 + $0x140] sm:$0xff]
    %v93 = vld [vmem:[#allocation2 + $0x148] sm:$0xff]
    %v94 = vld [vmem:[#allocation2 + $0x150] sm:$0xff]
    %v95 = vld [vmem:[#allocation2 + $0x158] sm:$0xff]
    %v96 = vld [vmem:[#allocation2 + $0x160] sm:$0xff]
    %v97 = vld [vmem:[#allocation2 + $0x168] sm:$0xff]
    %v98 = vld [vmem:[#allocation2 + $0x170] sm:$0xff]
    %v99 = vld [vmem:[#allocation2 + $0x178] sm:$0xff]
    %v100 = vld [vmem:[#allocation2 + $0x180] sm:$0xff]
    %v101 = vld [vmem:[#allocation2 + $0x188] sm:$0xff]
    %v102 = vld [vmem:[#allocation2 + $0x190] sm:$0xff]
    %v103 = vld [vmem:[#allocation2 + $0x198] sm:$0xff]
    %v104 = vld [vmem:[#allocation2 + $0x1a0] sm:$0xff]
    %v105 = vld [vmem:[#allocation2 + $0x1a8] sm:$0xff]
    %v106 = vld [vmem:[#allocation2 + $0x1b0] sm:$0xff]
    %v107 = vld [vmem:[#allocation2 + $0x1b8] sm:$0xff]
    %v108 = vld [vmem:[#allocation2 + $0x1c0] sm:$0xff]
    %v109 = vld [vmem:[#allocation2 + $0x1c8] sm:$0xff]
    %v110 = vld [vmem:[#allocation2 + $0x1d0] sm:$0xff]
    %v111 = vld [vmem:[#allocation2 + $0x1d8] sm:$0xff]
    %v112 = vld [vmem:[#allocation2 + $0x1e0] sm:$0xff]
    %v113 = vld [vmem:[#allocation2 + $0x1e8] sm:$0xff]
    %v114 = vld [vmem:[#allocation2 + $0x1f0] sm:$0xff]
    %v115 = vld [vmem:[#allocation2 + $0x1f8] sm:$0xff]
    %v116 = vld [vmem:[#allocation5] sm:$0x1]
    %v118 = vlaneseq
    %v119 = vshrl.u32 %v118, 7
    %v120 = vsub.s32 0, %v119
    %v121 = vrot.slane %v116, %v120
    %v123 = vmul.f32 %v52, %v121
    %v124 = vmul.f32 %v53, %v121
    %v125 = vmul.f32 %v54, %v121
    %v126 = vmul.f32 %v55, %v121
    %v127 = vmul.f32 %v56, %v121
    %v128 = vmul.f32 %v57, %v121
    %v129 = vmul.f32 %v58, %v121
    %v130 = vmul.f32 %v59, %v121
    %v131 = vmul.f32 %v60, %v121
    %v132 = vmul.f32 %v61, %v121
    %v133 = vmul.f32 %v62, %v121
    %v134 = vmul.f32 %v63, %v121
    %v135 = vmul.f32 %v64, %v121
    %v136 = vmul.f32 %v65, %v121
    %v137 = vmul.f32 %v66, %v121
    %v138 = vmul.f32 %v67, %v121
    %v139 = vmul.f32 %v68, %v121
    %v140 = vmul.f32 %v69, %v121
    %v141 = vmul.f32 %v70, %v121
    %v142 = vmul.f32 %v71, %v121
    %v143 = vmul.f32 %v72, %v121
    %v144 = vmul.f32 %v73, %v121
    %v145 = vmul.f32 %v74, %v121
    %v146 = vmul.f32 %v75, %v121
    %v147 = vmul.f32 %v76, %v121
    %v148 = vmul.f32 %v77, %v121
    %v149 = vmul.f32 %v78, %v121
    %v150 = vmul.f32 %v79, %v121
    %v151 = vmul.f32 %v80, %v121
    %v152 = vmul.f32 %v81, %v121
    %v153 = vmul.f32 %v82, %v121
    %v154 = vmul.f32 %v83, %v121
    %v155 = vmul.f32 %v84, %v121
    %v156 = vmul.f32 %v85, %v121
    %v157 = vmul.f32 %v86, %v121
    %v158 = vmul.f32 %v87, %v121
    %v159 = vmul.f32 %v88, %v121
    %v160 = vmul.f32 %v89, %v121
    %v161 = vmul.f32 %v90, %v121
    %v162 = vmul.f32 %v91, %v121
    %v163 = vmul.f32 %v92, %v121
    %v164 = vmul.f32 %v93, %v121
    %v165 = vmul.f32 %v94, %v121
    %v166 = vmul.f32 %v95, %v121
    %v167 = vmul.f32 %v96, %v121
    %v168 = vmul.f32 %v97, %v121
    %v169 = vmul.f32 %v98, %v121
    %v170 = vmul.f32 %v99, %v121
    %v171 = vmul.f32 %v100, %v121
    %v172 = vmul.f32 %v101, %v121
    %v173 = vmul.f32 %v102, %v121
    %v174 = vmul.f32 %v103, %v121
    %v175 = vmul.f32 %v104, %v121
    %v176 = vmul.f32 %v105, %v121
    %v177 = vmul.f32 %v106, %v121
    %v178 = vmul.f32 %v107, %v121
    %v179 = vmul.f32 %v108, %v121
    %v180 = vmul.f32 %v109, %v121
    %v181 = vmul.f32 %v110, %v121
    %v182 = vmul.f32 %v111, %v121
    %v183 = vmul.f32 %v112, %v121
    %v184 = vmul.f32 %v113, %v121
    %v185 = vmul.f32 %v114, %v121
    %v186 = vmul.f32 %v115, %v121
    %v187 = vld [vmem:[#allocation7] sm:$0x1]
    %v189 = vlaneseq
    %v190 = vshrl.u32 %v189, 7
    %v191 = vsub.s32 0, %v190
    %v192 = vrot.slane %v187, %v191
    %v194 = vadd.f32 %v123, %v192
    %v195 = vadd.f32 %v124, %v192
    %v196 = vadd.f32 %v125, %v192
    %v197 = vadd.f32 %v126, %v192
    %v198 = vadd.f32 %v127, %v192
    %v199 = vadd.f32 %v128, %v192
    %v200 = vadd.f32 %v129, %v192
    %v201 = vadd.f32 %v130, %v192
    %v202 = vadd.f32 %v131, %v192
    %v203 = vadd.f32 %v132, %v192
    %v204 = vadd.f32 %v133, %v192
    %v205 = vadd.f32 %v134, %v192
    %v206 = vadd.f32 %v135, %v192
    %v207 = vadd.f32 %v136, %v192
    %v208 = vadd.f32 %v137, %v192
    %v209 = vadd.f32 %v138, %v192
    %v210 = vadd.f32 %v139, %v192
    %v211 = vadd.f32 %v140, %v192
    %v212 = vadd.f32 %v141, %v192
    %v213 = vadd.f32 %v142, %v192
    %v214 = vadd.f32 %v143, %v192
    %v215 = vadd.f32 %v144, %v192
    %v216 = vadd.f32 %v145, %v192
    %v217 = vadd.f32 %v146, %v192
    %v218 = vadd.f32 %v147, %v192
    %v219 = vadd.f32 %v148, %v192
    %v220 = vadd.f32 %v149, %v192
    %v221 = vadd.f32 %v150, %v192
    %v222 = vadd.f32 %v151, %v192
    %v223 = vadd.f32 %v152, %v192
    %v224 = vadd.f32 %v153, %v192
    %v225 = vadd.f32 %v154, %v192
    %v226 = vadd.f32 %v155, %v192
    %v227 = vadd.f32 %v156, %v192
    %v228 = vadd.f32 %v157, %v192
    %v229 = vadd.f32 %v158, %v192
    %v230 = vadd.f32 %v159, %v192
    %v231 = vadd.f32 %v160, %v192
    %v232 = vadd.f32 %v161, %v192
    %v233 = vadd.f32 %v162, %v192
    %v234 = vadd.f32 %v163, %v192
    %v235 = vadd.f32 %v164, %v192
    %v236 = vadd.f32 %v165, %v192
    %v237 = vadd.f32 %v166, %v192
    %v238 = vadd.f32 %v167, %v192
    %v239 = vadd.f32 %v168, %v192
    %v240 = vadd.f32 %v169, %v192
    %v241 = vadd.f32 %v170, %v192
    %v242 = vadd.f32 %v171, %v192
    %v243 = vadd.f32 %v172, %v192
    %v244 = vadd.f32 %v173, %v192
    %v245 = vadd.f32 %v174, %v192
    %v246 = vadd.f32 %v175, %v192
    %v247 = vadd.f32 %v176, %v192
    %v248 = vadd.f32 %v177, %v192
    %v249 = vadd.f32 %v178, %v192
    %v250 = vadd.f32 %v179, %v192
    %v251 = vadd.f32 %v180, %v192
    %v252 = vadd.f32 %v181, %v192
    %v253 = vadd.f32 %v182, %v192
    %v254 = vadd.f32 %v183, %v192
    %v255 = vadd.f32 %v184, %v192
    %v256 = vadd.f32 %v185, %v192
    %v257 = vadd.f32 %v186, %v192
    %v258 = vmax.f32 %v194, 0.0
    %v259 = vmax.f32 %v195, 0.0
    %v260 = vmax.f32 %v196, 0.0
    %v261 = vmax.f32 %v197, 0.0
    %v262 = vmax.f32 %v198, 0.0
    %v263 = vmax.f32 %v199, 0.0
    %v264 = vmax.f32 %v200, 0.0
    %v265 = vmax.f32 %v201, 0.0
    %v266 = vmax.f32 %v202, 0.0
    %v267 = vmax.f32 %v203, 0.0
    %v268 = vmax.f32 %v204, 0.0
    %v269 = vmax.f32 %v205, 0.0
    %v270 = vmax.f32 %v206, 0.0
    %v271 = vmax.f32 %v207, 0.0
    %v272 = vmax.f32 %v208, 0.0
    %v273 = vmax.f32 %v209, 0.0
    %v274 = vmax.f32 %v210, 0.0
    %v275 = vmax.f32 %v211, 0.0
    %v276 = vmax.f32 %v212, 0.0
    %v277 = vmax.f32 %v213, 0.0
    %v278 = vmax.f32 %v214, 0.0
    %v279 = vmax.f32 %v215, 0.0
    %v280 = vmax.f32 %v216, 0.0
    %v281 = vmax.f32 %v217, 0.0
    %v282 = vmax.f32 %v218, 0.0
    %v283 = vmax.f32 %v219, 0.0
    %v284 = vmax.f32 %v220, 0.0
    %v285 = vmax.f32 %v221, 0.0
    %v286 = vmax.f32 %v222, 0.0
    %v287 = vmax.f32 %v223, 0.0
    %v288 = vmax.f32 %v224, 0.0
    %v289 = vmax.f32 %v225, 0.0
    %v290 = vmax.f32 %v226, 0.0
    %v291 = vmax.f32 %v227, 0.0
    %v292 = vmax.f32 %v228, 0.0
    %v293 = vmax.f32 %v229, 0.0
    %v294 = vmax.f32 %v230, 0.0
    %v295 = vmax.f32 %v231, 0.0
    %v296 = vmax.f32 %v232, 0.0
    %v297 = vmax.f32 %v233, 0.0
    %v298 = vmax.f32 %v234, 0.0
    %v299 = vmax.f32 %v235, 0.0
    %v300 = vmax.f32 %v236, 0.0
    %v301 = vmax.f32 %v237, 0.0
    %v302 = vmax.f32 %v238, 0.0
    %v303 = vmax.f32 %v239, 0.0
    %v304 = vmax.f32 %v240, 0.0
    %v305 = vmax.f32 %v241, 0.0
    %v306 = vmax.f32 %v242, 0.0
    %v307 = vmax.f32 %v243, 0.0
    %v308 = vmax.f32 %v244, 0.0
    %v309 = vmax.f32 %v245, 0.0
    %v310 = vmax.f32 %v246, 0.0
    %v311 = vmax.f32 %v247, 0.0
    %v312 = vmax.f32 %v248, 0.0
    %v313 = vmax.f32 %v249, 0.0
    %v314 = vmax.f32 %v250, 0.0
    %v315 = vmax.f32 %v251, 0.0
    %v316 = vmax.f32 %v252, 0.0
    %v317 = vmax.f32 %v253, 0.0
    %v318 = vmax.f32 %v254, 0.0
    %v319 = vmax.f32 %v255, 0.0
    %v320 = vmax.f32 %v256, 0.0
    %v321 = vmax.f32 %v257, 0.0
    %322 = vst [vmem:[#allocation8] sm:$0xff] %v258
    %323 = vst [vmem:[#allocation8 + $0x8] sm:$0xff] %v259
    %324 = vst [vmem:[#allocation8 + $0x10] sm:$0xff] %v260
    %325 = vst [vmem:[#allocation8 + $0x18] sm:$0xff] %v261
    %326 = vst [vmem:[#allocation8 + $0x20] sm:$0xff] %v262
    %327 = vst [vmem:[#allocation8 + $0x28] sm:$0xff] %v263
    %328 = vst [vmem:[#allocation8 + $0x30] sm:$0xff] %v264
    %329 = vst [vmem:[#allocation8 + $0x38] sm:$0xff] %v265
    %330 = vst [vmem:[#allocation8 + $0x40] sm:$0xff] %v266
    %331 = vst [vmem:[#allocation8 + $0x48] sm:$0xff] %v267
    %332 = vst [vmem:[#allocation8 + $0x50] sm:$0xff] %v268
    %333 = vst [vmem:[#allocation8 + $0x58] sm:$0xff] %v269
    %334 = vst [vmem:[#allocation8 + $0x60] sm:$0xff] %v270
    %335 = vst [vmem:[#allocation8 + $0x68] sm:$0xff] %v271
    %336 = vst [vmem:[#allocation8 + $0x70] sm:$0xff] %v272
    %337 = vst [vmem:[#allocation8 + $0x78] sm:$0xff] %v273
    %338 = vst [vmem:[#allocation8 + $0x80] sm:$0xff] %v274
    %339 = vst [vmem:[#allocation8 + $0x88] sm:$0xff] %v275
    %340 = vst [vmem:[#allocation8 + $0x90] sm:$0xff] %v276
    %341 = vst [vmem:[#allocation8 + $0x98] sm:$0xff] %v277
    %342 = vst [vmem:[#allocation8 + $0xa0] sm:$0xff] %v278
    %343 = vst [vmem:[#allocation8 + $0xa8] sm:$0xff] %v279
    %344 = vst [vmem:[#allocation8 + $0xb0] sm:$0xff] %v280
    %345 = vst [vmem:[#allocation8 + $0xb8] sm:$0xff] %v281
    %346 = vst [vmem:[#allocation8 + $0xc0] sm:$0xff] %v282
    %347 = vst [vmem:[#allocation8 + $0xc8] sm:$0xff] %v283
    %348 = vst [vmem:[#allocation8 + $0xd0] sm:$0xff] %v284
    %349 = vst [vmem:[#allocation8 + $0xd8] sm:$0xff] %v285
    %350 = vst [vmem:[#allocation8 + $0xe0] sm:$0xff] %v286
    %351 = vst [vmem:[#allocation8 + $0xe8] sm:$0xff] %v287
    %352 = vst [vmem:[#allocation8 + $0xf0] sm:$0xff] %v288
    %353 = vst [vmem:[#allocation8 + $0xf8] sm:$0xff] %v289
    %354 = vst [vmem:[#allocation8 + $0x100] sm:$0xff] %v290
    %355 = vst [vmem:[#allocation8 + $0x108] sm:$0xff] %v291
    %356 = vst [vmem:[#allocation8 + $0x110] sm:$0xff] %v292
    %357 = vst [vmem:[#allocation8 + $0x118] sm:$0xff] %v293
    %358 = vst [vmem:[#allocation8 + $0x120] sm:$0xff] %v294
    %359 = vst [vmem:[#allocation8 + $0x128] sm:$0xff] %v295
    %360 = vst [vmem:[#allocation8 + $0x130] sm:$0xff] %v296
    %361 = vst [vmem:[#allocation8 + $0x138] sm:$0xff] %v297
    %362 = vst [vmem:[#allocation8 + $0x140] sm:$0xff] %v298
    %363 = vst [vmem:[#allocation8 + $0x148] sm:$0xff] %v299
    %364 = vst [vmem:[#allocation8 + $0x150] sm:$0xff] %v300
    %365 = vst [vmem:[#allocation8 + $0x158] sm:$0xff] %v301
    %366 = vst [vmem:[#allocation8 + $0x160] sm:$0xff] %v302
    %367 = vst [vmem:[#allocation8 + $0x168] sm:$0xff] %v303
    %368 = vst [vmem:[#allocation8 + $0x170] sm:$0xff] %v304
    %369 = vst [vmem:[#allocation8 + $0x178] sm:$0xff] %v305
    %370 = vst [vmem:[#allocation8 + $0x180] sm:$0xff] %v306
    %371 = vst [vmem:[#allocation8 + $0x188] sm:$0xff] %v307
    %372 = vst [vmem:[#allocation8 + $0x190] sm:$0xff] %v308
    %373 = vst [vmem:[#allocation8 + $0x198] sm:$0xff] %v309
    %374 = vst [vmem:[#allocation8 + $0x1a0] sm:$0xff] %v310
    %375 = vst [vmem:[#allocation8 + $0x1a8] sm:$0xff] %v311
    %376 = vst [vmem:[#allocation8 + $0x1b0] sm:$0xff] %v312
    %377 = vst [vmem:[#allocation8 + $0x1b8] sm:$0xff] %v313
    %378 = vst [vmem:[#allocation8 + $0x1c0] sm:$0xff] %v314
    %379 = vst [vmem:[#allocation8 + $0x1c8] sm:$0xff] %v315
    %380 = vst [vmem:[#allocation8 + $0x1d0] sm:$0xff] %v316
    %381 = vst [vmem:[#allocation8 + $0x1d8] sm:$0xff] %v317
    %382 = vst [vmem:[#allocation8 + $0x1e0] sm:$0xff] %v318
    %383 = vst [vmem:[#allocation8 + $0x1e8] sm:$0xff] %v319
    %384 = vst [vmem:[#allocation8 + $0x1f0] sm:$0xff] %v320
    %385 = vst [vmem:[#allocation8 + $0x1f8] sm:$0xff] %v321
    // Predicated region
    $region26: #{unet_encoding_block.5} parent=1 // pred_check
      _
    $region27: #{unet_encoding_block.5} parent=1 // pred_check_branch
      %387 = sbr.rel (0) target = $region29
    $region28: #{unet_encoding_block.5} parent=1 // pred_region
      %s389 = ssub.s32 8192, 8192
      %390 = vsyncadd [#allocation4], %s389
      %s391 = sshll.u32 [#allocation8], 4
      %s392 = int_to_ptr.vmem [resolvable:$true] %s391
      %397 = dma.vmem_to_hbm [thread:$0]  %s392, 8192, %s3, [#allocation4], 128, 128, 8
    $region29: #{unet_encoding_block.5} parent=1 // pred_fallthru
      _
    // Predicated region
    $region30: #{unet_encoding_block.5} parent=1 // pred_check
      _
    $region31: #{unet_encoding_block.5} parent=1 // pred_check_branch
      %399 = sbr.rel (0) target = $region33
    $region32: #{unet_encoding_block.5} parent=1 // pred_region
      %400 = dma.done [#allocation4], 8192
    $region33: #{unet_encoding_block.5} parent=1 // pred_fallthru
      _
    %401 = vsyncpa [#allocation3], 1
    %402 = vsyncpa [#allocation6], 1
    %403 = vsyncpa [#allocation4], 1

// kernel: unet_encoding_block.3
$region0: #{unet_encoding_block.3}
  #allocation0 [shape = 'u32[]', space=smem, size = 0x4, offset = 0x4, fixed_abs, tag = 'smem constant byte address 0x4 - core index']
  #allocation1 [shape = 'u32[144,128]{1,0:T(1,128)}', space=vmem, size = 0x12000, scoped, tag = 'internal scratch']
  #allocation2 [shape = 'f32[2,18,16,128]{3,2,1,0:T(8,128)}', space=vmem, size = 0x48000, scoped, tag = 'scratch operand']
  #allocation3 [shape = 's32[6]{0}', space=sflag, size = 0x18, scoped, tag = 'scratch operand']
  #allocation14 [shape = 's32[]', space=sflag, size = 0x4, offset = 0, fixed_abs, tag = 'sflag constant byte address 0x0 - dummy sync flag']
  #allocation15 [shape = 's32[]', space=sflag, size = 0x4, offset = 0, fixed_abs, tag = 'sflag constant byte address 0x0 - dummy sync flag']
  #allocation16 [shape = 'u32[]', space=smem, size = 0x4, offset = 0x44, fixed_abs, tag = 'smem constant byte address 0x44 - assertion arg 0']
  #allocation17 [shape = 'u32[]', space=smem, size = 0x4, offset = 0x48, fixed_abs, tag = 'smem constant byte address 0x48 - assertion arg 1']
  #allocation18 [shape = 's32[]', space=sflag, size = 0x4, offset = 0, fixed_abs, tag = 'sflag constant byte address 0x0 - dummy sync flag']
  #allocation19 [shape = 's32[]', space=sflag, size = 0x4, offset = 0, fixed_abs, tag = 'sflag constant byte address 0x0 - dummy sync flag']
  #allocation20 [shape = 's32[]', space=sflag, size = 0x4, offset = 0, fixed_abs, tag = 'sflag constant byte address 0x0 - dummy sync flag']
  #allocation21 [shape = 's32[]', space=sflag, size = 0x4, offset = 0, fixed_abs, tag = 'sflag constant byte address 0x0 - dummy sync flag']
  #allocation22 [shape = 's32[]', space=sflag, size = 0x4, offset = 0, fixed_abs, tag = 'sflag constant byte address 0x0 - dummy sync flag']
  #allocation23 [shape = 's32[]', space=sflag, size = 0x4, offset = 0, fixed_abs, tag = 'sflag constant byte address 0x0 - dummy sync flag']
  #allocation24 [shape = 's32[]', space=sflag, size = 0x4, offset = 0, fixed_abs, tag = 'sflag constant byte address 0x0 - dummy sync flag']
  #allocation25 [shape = 's32[]', space=sflag, size = 0x4, offset = 0, fixed_abs, tag = 'sflag constant byte address 0x0 - dummy sync flag']
  #allocation26 [shape = 's32[]', space=sflag, size = 0x4, offset = 0, fixed_abs, tag = 'sflag constant byte address 0x0 - dummy sync flag']
  #allocation27 [shape = 's32[]', space=sflag, size = 0x4, offset = 0, fixed_abs, tag = 'sflag constant byte address 0x0 - dummy sync flag']
  %s0 = inlined_call_operand.hbm [shape: f32[2,16,16,128], index: 0, kind: input, shape index: {}]
  %s1 = inlined_call_operand.hbm [shape: f32[3,384,128], index: 1, kind: input, shape index: {}]
  %s2 = inlined_call_operand.hbm [shape: f32[1,128], index: 2, kind: input, shape index: {}]
  %s3 = inlined_call_operand.hbm [shape: f32[1,128], index: 3, kind: input, shape index: {}]
  %s4 = inlined_call_operand.hbm [shape: f32[512,128], index: 4, kind: output, shape index: {0}]
  %s5 = inlined_call_operand.hbm [shape: f32[2,1,128], index: 5, kind: output, shape index: {1}]
  %s6 = inlined_call_operand.hbm [shape: f32[2,1,128], index: 6, kind: output, shape index: {2}]
  %7 = xla_tuple %s4, %s5, %s6
  %s8 = sld [smem:[#allocation0]]
  $region105: #{unet_encoding_block.3} parent=0
    _
  %s10 = ssub.s32 1, %s8
  %s11 = scalar_select 0, %s10, %s8
  $region1: #{unet_encoding_block.3} parent=0
    #allocation4 [shape = 'u8[589824]{0}', space=vmem, size = 0x90000, scoped, tag = 'input window, operand 1, single buffered']
    #allocation5 [shape = 's32[2]{0}', space=sflag, size = 0x8, scoped, tag = 'scoped memory for unet_encoding_block.3']
    #allocation6 [shape = 's32[2]{0}', space=sflag, size = 0x8, scoped, tag = 'scoped memory for unet_encoding_block.3']
    #allocation7 [shape = 'u8[512]{0}', space=vmem, size = 0x400, scoped, tag = 'input window, operand 2, single buffered']
    #allocation8 [shape = 's32[1]{0}', space=sflag, size = 0x4, scoped, tag = 'scoped memory for unet_encoding_block.3']
    #allocation9 [shape = 'u8[512]{0}', space=vmem, size = 0x400, scoped, tag = 'input window, operand 3, single buffered']
    #allocation10 [shape = 'u8[262144]{0}', space=vmem, size = 0x40000, scoped, tag = 'output window, operand 0']
    #allocation11 [shape = 'u8[1024]{0}', space=vmem, size = 0x400, scoped, tag = 'output window, operand 1']
    #allocation12 [shape = 's32[2]{0}', space=sflag, size = 0x8, scoped, tag = 'scoped memory for unet_encoding_block.3']
    #allocation13 [shape = 'u8[1024]{0}', space=vmem, size = 0x400, scoped, tag = 'output window, operand 2']
    %12 = vsyncpa [#allocation5], 0
    %13 = vsyncpa [#allocation8], 0
    %14 = vsyncpa [#allocation6], 0
    %s15 = scalar_lea.sflag [#allocation6], 1
    %16 = vsyncpa %s15, 0
    %17 = vsyncpa [#allocation12], 0
    %s18 = scalar_lea.sflag [#allocation12], 1
    %19 = vsyncpa %s18, 0
    loop: start=0, step=1, limit=4
    $region2: #{unet_encoding_block.3} parent=1 // loop_pre_header
      _
    $region3: #{unet_encoding_block.3} parent=1 // loop_header
      %s21 = sphi 0, %s25
      %p22 = scmp.ge.s32.totalorder %s21, 4
      %s28 = sphi 0, %s40
      %s29 = sphi 0, %s36
      %s30 = sphi 0, %s28
      %s31 = sphi 0, %s29
      %s32 = sphi 0, %s30
      %s33 = sphi 0, %s31
      %s41 = sphi 0, %s41
      %s43 = sphi 0, %s41
      %s44 = sphi 0, %s43
      %s58 = sphi 0, %s44
      %s62 = sphi 0, %s62
      %s64 = sphi 0, %s62
      %s65 = sphi 0, %s64
      %s79 = sphi 0, %s65
      %s83 = sphi 0, %s83
      %s85 = sphi 0, %s83
      %s86 = sphi 0, %s85
      %s100 = sphi 0, %s86
      %s108 = sphi 0, %s110
      %s111 = sphi 0, %s108
      %s112 = sphi 0, %s111
      %s128 = sphi 0, %s112
      %s136 = sphi 0, %s138
      %s139 = sphi 0, %s136
      %s140 = sphi 0, %s139
      %s156 = sphi 0, %s140
      %s164 = sphi 0, %s166
      %s167 = sphi 0, %s164
      %s168 = sphi 0, %s167
      %s184 = sphi 0, %s168
    $region4: #{unet_encoding_block.3} parent=1 // loop_header_branch
      %24 = sbr.rel (%p22) target = $region8
    $region5: #{unet_encoding_block.3} parent=1 // loop_body
      %s26 = ssub.s32 %s21, 1
      %s27 = ssub.s32 %s21, 2
      %s34 = sadd.s32 1, %s29
      %p35 = scmp.ge.s32.totalorder %s34, 1
      %s36 = scalar_select %p35, 0, %s34
      %s37 = sadd.s32 1, %s28
      %s38 = scalar_select %p35, %s37, %s28
      %p39 = scmp.ge.s32.totalorder %s38, 2
      %s40 = scalar_select %p39, 0, %s38
      %s42 = sadd.s32 %s41, 1
      %p45 = scmp.eq.s32.totalorder %s21, 1
      %p46 = scmp.ne.s32.totalorder %s41, %s43
      %p47 = scmp.eq.s32.totalorder %s21, 0
      %p48 = por %p46, %p47
      %p49 = scmp.ne.s32.totalorder %s41, %s43
      %p50 = scmp.eq.s32.totalorder %s26, 1
      %p51 = por %p49, %p50
      %p52 = scmp.ne.s32.totalorder %s43, %s44
      %p53 = scmp.eq.s32.totalorder %s26, 0
      %p54 = por %p52, %p53
      %p55 = scmp.ne.s32.totalorder %s43, %s44
      %p56 = scmp.eq.s32.totalorder %s27, 1
      %p57 = por %p55, %p56
      %p59 = scmp.ne.s32.totalorder %s44, %s58
      %p60 = scmp.eq.s32.totalorder %s27, 0
      %p61 = por %p59, %p60
      %s63 = sadd.s32 %s62, 1
      %p66 = scmp.eq.s32.totalorder %s21, 1
      %p67 = scmp.ne.s32.totalorder %s62, %s64
      %p68 = scmp.eq.s32.totalorder %s21, 0
      %p69 = por %p67, %p68
      %p70 = scmp.ne.s32.totalorder %s62, %s64
      %p71 = scmp.eq.s32.totalorder %s26, 1
      %p72 = por %p70, %p71
      %p73 = scmp.ne.s32.totalorder %s64, %s65
      %p74 = scmp.eq.s32.totalorder %s26, 0
      %p75 = por %p73, %p74
      %p76 = scmp.ne.s32.totalorder %s64, %s65
      %p77 = scmp.eq.s32.totalorder %s27, 1
      %p78 = por %p76, %p77
      %p80 = scmp.ne.s32.totalorder %s65, %s79
      %p81 = scmp.eq.s32.totalorder %s27, 0
      %p82 = por %p80, %p81
      %s84 = sadd.s32 %s83, 1
      %p87 = scmp.eq.s32.totalorder %s21, 1
      %p88 = scmp.ne.s32.totalorder %s83, %s85
      %p89 = scmp.eq.s32.totalorder %s21, 0
      %p90 = por %p88, %p89
      %p91 = scmp.ne.s32.totalorder %s83, %s85
      %p92 = scmp.eq.s32.totalorder %s26, 1
      %p93 = por %p91, %p92
      %p94 = scmp.ne.s32.totalorder %s85, %s86
      %p95 = scmp.eq.s32.totalorder %s26, 0
      %p96 = por %p94, %p95
      %p97 = scmp.ne.s32.totalorder %s85, %s86
      %p98 = scmp.eq.s32.totalorder %s27, 1
      %p99 = por %p97, %p98
      %p101 = scmp.ne.s32.totalorder %s86, %s100
      %p102 = scmp.eq.s32.totalorder %s27, 0
      %p103 = por %p101, %p102
      %s104 = sadd.s32 %s28, %s29
      %s105 = sadd.s32 %s40, %s36
      %s106 = ssub.s32 %s104, %s105
      %p107 = scmp.eq.s32.totalorder %s106, 0
      %s109 = sadd.s32 %s108, 1
      %s110 = scalar_select %p107, %s108, %s109
      %p113 = pneg %p107
      %p114 = scmp.eq.s32.totalorder %s21, 1
      %p115 = por %p113, %p114
      %p116 = scmp.ne.s32.totalorder %s108, %s111
      %p117 = scmp.eq.s32.totalorder %s21, 0
      %p118 = por %p116, %p117
      %p119 = scmp.ne.s32.totalorder %s108, %s111
      %p120 = scmp.eq.s32.totalorder %s26, 1
      %p121 = por %p119, %p120
      %p122 = scmp.ne.s32.totalorder %s111, %s112
      %p123 = scmp.eq.s32.totalorder %s26, 0
      %p124 = por %p122, %p123
      %p125 = scmp.ne.s32.totalorder %s111, %s112
      %p126 = scmp.eq.s32.totalorder %s27, 1
      %p127 = por %p125, %p126
      %p129 = scmp.ne.s32.totalorder %s112, %s128
      %p130 = scmp.eq.s32.totalorder %s27, 0
      %p131 = por %p129, %p130
      %s132 = sadd.s32 %s28, %s29
      %s133 = sadd.s32 %s40, %s36
      %s134 = ssub.s32 %s132, %s133
      %p135 = scmp.eq.s32.totalorder %s134, 0
      %s137 = sadd.s32 %s136, 1
      %s138 = scalar_select %p135, %s136, %s137
      %p141 = pneg %p135
      %p142 = scmp.eq.s32.totalorder %s21, 1
      %p143 = por %p141, %p142
      %p144 = scmp.ne.s32.totalorder %s136, %s139
      %p145 = scmp.eq.s32.totalorder %s21, 0
      %p146 = por %p144, %p145
      %p147 = scmp.ne.s32.totalorder %s136, %s139
      %p148 = scmp.eq.s32.totalorder %s26, 1
      %p149 = por %p147, %p148
      %p150 = scmp.ne.s32.totalorder %s139, %s140
      %p151 = scmp.eq.s32.totalorder %s26, 0
      %p152 = por %p150, %p151
      %p153 = scmp.ne.s32.totalorder %s139, %s140
      %p154 = scmp.eq.s32.totalorder %s27, 1
      %p155 = por %p153, %p154
      %p157 = scmp.ne.s32.totalorder %s140, %s156
      %p158 = scmp.eq.s32.totalorder %s27, 0
      %p159 = por %p157, %p158
      %s160 = sadd.s32 %s28, %s29
      %s161 = sadd.s32 %s40, %s36
      %s162 = ssub.s32 %s160, %s161
      %p163 = scmp.eq.s32.totalorder %s162, 0
      %s165 = sadd.s32 %s164, 1
      %s166 = scalar_select %p163, %s164, %s165
      %p169 = pneg %p163
      %p170 = scmp.eq.s32.totalorder %s21, 1
      %p171 = por %p169, %p170
      %p172 = scmp.ne.s32.totalorder %s164, %s167
      %p173 = scmp.eq.s32.totalorder %s21, 0
      %p174 = por %p172, %p173
      %p175 = scmp.ne.s32.totalorder %s164, %s167
      %p176 = scmp.eq.s32.totalorder %s26, 1
      %p177 = por %p175, %p176
      %p178 = scmp.ne.s32.totalorder %s167, %s168
      %p179 = scmp.eq.s32.totalorder %s26, 0
      %p180 = por %p178, %p179
      %p181 = scmp.ne.s32.totalorder %s167, %s168
      %p182 = scmp.eq.s32.totalorder %s27, 1
      %p183 = por %p181, %p182
      %p185 = scmp.ne.s32.totalorder %s168, %s184
      %p186 = scmp.eq.s32.totalorder %s27, 0
      %p187 = por %p185, %p186
      %p188 = scmp.le.s32.totalorder 1, %s21
      %p189 = scmp.lt.s32.totalorder %s21, 3
      %p190 = pnand %p188, %p189
      %p191 = pneg %p190
      // Predicated region
      $region9: #{unet_encoding_block.3} parent=5 // pred_check
        _
      $region10: #{unet_encoding_block.3} parent=5 // pred_check_branch
        %193 = sbr.rel (%p190) target = $region12
      $region11: #{unet_encoding_block.3} parent=5 // pred_region
        %s194 = ssub.s32 %s21, 1
        // Predicated region
        $region13: #{unet_encoding_block.3} parent=11 // pred_check
          %p195 = pneg %p54
        $region14: #{unet_encoding_block.3} parent=11 // pred_check_branch
          %197 = sbr.rel (%p195) target = $region16
        $region15: #{unet_encoding_block.3} parent=11 // pred_region
          %s199 = ssub.s32 18432, 18432
          %200 = vsyncadd [#allocation5], %s199
          %s201 = sshll.u32 [#allocation4], 4
          %s202 = int_to_ptr.vmem [resolvable:$true] %s201
          %207 = dma.hbm_to_vmem [thread:$0]  %s1, 18432, %s202, [#allocation5], 128, 128, 8
        $region16: #{unet_encoding_block.3} parent=11 // pred_fallthru
          _
        // Predicated region
        $region17: #{unet_encoding_block.3} parent=11 // pred_check
          %p208 = pneg %p75
        $region18: #{unet_encoding_block.3} parent=11 // pred_check_branch
          %210 = sbr.rel (%p208) target = $region20
        $region19: #{unet_encoding_block.3} parent=11 // pred_region
          %s212 = ssub.s32 16, 16
          %213 = vsyncadd [#allocation8], %s212
          %s215 = sshll.u32 [#allocation7], 4
          %s216 = int_to_ptr.vmem [resolvable:$true] %s215
          %218 = dma.hbm_to_vmem [thread:$0]  %s2, 16, %s216, [#allocation8]
        $region20: #{unet_encoding_block.3} parent=11 // pred_fallthru
          _
        // Predicated region
        $region21: #{unet_encoding_block.3} parent=11 // pred_check
          %p219 = pneg %p96
        $region22: #{unet_encoding_block.3} parent=11 // pred_check_branch
          %221 = sbr.rel (%p219) target = $region24
        $region23: #{unet_encoding_block.3} parent=11 // pred_region
          %s223 = ssub.s32 16, 16
          %224 = vsyncadd [#allocation8], %s223
          %s226 = sshll.u32 [#allocation9], 4
          %s227 = int_to_ptr.vmem [resolvable:$true] %s226
          %229 = dma.hbm_to_vmem [thread:$0]  %s3, 16, %s227, [#allocation8]
        $region24: #{unet_encoding_block.3} parent=11 // pred_fallthru
          _
      $region12: #{unet_encoding_block.3} parent=5 // pred_fallthru
        _
      %p230 = scmp.lt.s32.totalorder %s21, 2
      // Predicated region
      $region25: #{unet_encoding_block.3} parent=5 // pred_check
        %p231 = pneg %p230
      $region26: #{unet_encoding_block.3} parent=5 // pred_check_branch
        %233 = sbr.rel (%p231) target = $region28
      $region27: #{unet_encoding_block.3} parent=5 // pred_region
        _
      $region28: #{unet_encoding_block.3} parent=5 // pred_fallthru
        _
      %p234 = scmp.le.s32.totalorder 1, %s21
      %p235 = scmp.lt.s32.totalorder %s21, 3
      %p236 = pnand %p234, %p235
      %p237 = pneg %p236
      // Predicated region
      $region29: #{unet_encoding_block.3} parent=5 // pred_check
        _
      $region30: #{unet_encoding_block.3} parent=5 // pred_check_branch
        %239 = sbr.rel (%p236) target = $region32
      $region31: #{unet_encoding_block.3} parent=5 // pred_region
        %s240 = ssub.s32 %s21, 1
        // Predicated region
        $region33: #{unet_encoding_block.3} parent=31 // pred_check
          %p241 = pneg %p54
        $region34: #{unet_encoding_block.3} parent=31 // pred_check_branch
          %243 = sbr.rel (%p241) target = $region36
        $region35: #{unet_encoding_block.3} parent=31 // pred_region
          %244 = dma.done [#allocation5], 18432
        $region36: #{unet_encoding_block.3} parent=31 // pred_fallthru
          _
        // Predicated region
        $region37: #{unet_encoding_block.3} parent=31 // pred_check
          %p245 = pneg %p75
        $region38: #{unet_encoding_block.3} parent=31 // pred_check_branch
          %247 = sbr.rel (%p245) target = $region40
        $region39: #{unet_encoding_block.3} parent=31 // pred_region
          %248 = dma.done [#allocation8], 16
        $region40: #{unet_encoding_block.3} parent=31 // pred_fallthru
          _
        // Predicated region
        $region41: #{unet_encoding_block.3} parent=31 // pred_check
          %p249 = pneg %p96
        $region42: #{unet_encoding_block.3} parent=31 // pred_check_branch
          %251 = sbr.rel (%p249) target = $region44
        $region43: #{unet_encoding_block.3} parent=31 // pred_region
          %252 = dma.done [#allocation8], 16
        $region44: #{unet_encoding_block.3} parent=31 // pred_fallthru
          _
        %p253 = pneg %p54
        %p254 = pneg %p51
        %p255 = pneg %p75
        %p256 = pneg %p72
        %p257 = pneg %p96
        %p258 = pneg %p93
        %p259 = pneg %p124
        %p260 = pneg %p121
        %s261 = sand.u32 %s111, 1
        %s262 = scalar_lea.sflag [#allocation6], %s261
        %s263 = sand.u32 %s111, 1
        %s264 = smul.addr %s263, 256
        %s265 = scalar_lea.vmem [#allocation10], %s264
        %p266 = pneg %p152
        %p267 = pneg %p149
        %s268 = sand.u32 %s26, 1
        %s269 = scalar_lea.sflag [#allocation12], %s268
        %s270 = sand.u32 %s139, 1
        %s271 = scalar_lea.vmem [#allocation11], %s270
        %p272 = pneg %p180
        %p273 = pneg %p177
        %s274 = sand.u32 %s26, 1
        %s275 = scalar_lea.sflag [#allocation12], %s274
        %s276 = sand.u32 %s167, 1
        %s277 = scalar_lea.vmem [#allocation13], %s276
        %s278 = sadd.s32 %s30, %s31
        %s279 = smul.u32 32, %s278
        %s280 = sadd.s32 %s30, %s31
        %s281 = sadd.s32 %s30, %s31
        %p282 = scmp.lt.s32.totalorder %s31, 0
        %s283 = ssub.s32 0, %s31
        %s284 = scalar_select %p282, %s283, %s31
        %s285 = sand.u32 %s284, 1
        %s286 = ssub.s32 0, %s285
        %s287 = scalar_select %p282, %s286, %s285
        %p288 = scmp.ne.s32.totalorder %s287, 0
        %p289 = scmp.lt.s32.totalorder %s287, 0
        %p290 = pnand %p289, %p288
        %p291 = pneg %p290
        %s292 = sadd.s32 %s287, 2
        %s293 = scalar_select %p291, %s292, %s287
        %p294 = scmp.eq.s32.totalorder %s31, 0
        // Predicated region
        $region45: #{unet_encoding_block.3} parent=31 // pred_check
          %p295 = pneg %p294
        $region46: #{unet_encoding_block.3} parent=31 // pred_check_branch
          %297 = sbr.rel (%p295) target = $region48
        $region47: #{unet_encoding_block.3} parent=31 // pred_region
          %s298 = smul.u32 %s31, 16
          %s299 = ssub.s32 %s298, 1
          %p300 = scmp.gt.s32.totalorder %s299, 0
          %s301 = scalar_select %p300, %s299, 0
          %s302 = sadd.s32 %s298, 16
          %p303 = scmp.lt.s32.totalorder %s302, 15
          %s304 = scalar_select %p303, %s302, 15
          %s305 = smul.u32 %s301, 16
          %s306 = smul.u32 %s30, 256
          %s307 = sadd.s32 %s305, %s306
          %s308 = smul.addr %s307, 16
          %s309 = scalar_lea.hbm %s0, %s308
          %s310 = smul.u32 %s293, 288
          %s311 = scalar_lea.vmem [#allocation2], %s310
          %s312 = smul.u32 %s293, 3
          %s313 = scalar_lea.sflag [#allocation3], %s312
          // Predicated region
          $region49: #{unet_encoding_block.3} parent=47 // pred_check
            _
          $region50: #{unet_encoding_block.3} parent=47 // pred_check_branch
            %315 = sbr.rel target = $region52
          $region51: #{unet_encoding_block.3} parent=47 // pred_region
            %316 = sst [smem:[#allocation16]] [#allocation15]
            %317 = sst [smem:[#allocation17]] [#allocation14]
          $region52: #{unet_encoding_block.3} parent=47 // pred_fallthru
            _
          %319 = shalt.err (0)
          %s321 = sshll.u32 %s311, 4
          %s322 = int_to_ptr.vmem [resolvable:$true] %s321
          %324 = dma.hbm_to_vmem [thread:$0]  %s309, 256, %s322, %s313
          %s325 = smul.u32 %s298, 16
          %s326 = sadd.s32 %s325, %s306
          %s327 = smul.addr %s326, 16
          %s328 = scalar_lea.hbm %s0, %s327
          %s329 = sadd.s32 16, %s310
          %s330 = scalar_lea.vmem [#allocation2], %s329
          %s331 = sadd.s32 1, %s312
          %s332 = scalar_lea.sflag [#allocation3], %s331
          // Predicated region
          $region53: #{unet_encoding_block.3} parent=47 // pred_check
            _
          $region54: #{unet_encoding_block.3} parent=47 // pred_check_branch
            %334 = sbr.rel target = $region56
          $region55: #{unet_encoding_block.3} parent=47 // pred_region
            %335 = sst [smem:[#allocation16]] [#allocation19]
            %336 = sst [smem:[#allocation17]] [#allocation18]
          $region56: #{unet_encoding_block.3} parent=47 // pred_fallthru
            _
          %338 = shalt.err (0)
          %s340 = sshll.u32 %s330, 4
          %s341 = int_to_ptr.vmem [resolvable:$true] %s340
          %343 = dma.hbm_to_vmem [thread:$0]  %s328, 4096, %s341, %s332
          %s344 = smul.u32 %s304, 16
          %s345 = sadd.s32 %s344, %s306
          %s346 = smul.addr %s345, 16
          %s347 = scalar_lea.hbm %s0, %s346
          %s348 = sadd.s32 272, %s310
          %s349 = scalar_lea.vmem [#allocation2], %s348
          %s350 = sadd.s32 2, %s312
          %s351 = scalar_lea.sflag [#allocation3], %s350
          // Predicated region
          $region57: #{unet_encoding_block.3} parent=47 // pred_check
            _
          $region58: #{unet_encoding_block.3} parent=47 // pred_check_branch
            %353 = sbr.rel target = $region60
          $region59: #{unet_encoding_block.3} parent=47 // pred_region
            %354 = sst [smem:[#allocation16]] [#allocation21]
            %355 = sst [smem:[#allocation17]] [#allocation20]
          $region60: #{unet_encoding_block.3} parent=47 // pred_fallthru
            _
          %357 = shalt.err (0)
          %s359 = sshll.u32 %s349, 4
          %s360 = int_to_ptr.vmem [resolvable:$true] %s359
          %362 = dma.hbm_to_vmem [thread:$0]  %s347, 256, %s360, %s351
        $region48: #{unet_encoding_block.3} parent=31 // pred_fallthru
          _
        %s363 = sadd.s32 %s31, 1
        %p364 = scmp.lt.s32.totalorder %s363, 1
        // Predicated region
        $region61: #{unet_encoding_block.3} parent=31 // pred_check
          %p365 = pneg %p364
        $region62: #{unet_encoding_block.3} parent=31 // pred_check_branch
          %367 = sbr.rel (%p365) target = $region64
        $region63: #{unet_encoding_block.3} parent=31 // pred_region
          %s368 = ssub.s32 1, %s293
          %s369 = smul.u32 %s363, 16
          %s370 = ssub.s32 %s369, 1
          %p371 = scmp.gt.s32.totalorder %s370, 0
          %s372 = scalar_select %p371, %s370, 0
          %s373 = sadd.s32 %s369, 16
          %p374 = scmp.lt.s32.totalorder %s373, 15
          %s375 = scalar_select %p374, %s373, 15
          %s376 = smul.u32 %s372, 16
          %s377 = smul.u32 %s30, 256
          %s378 = sadd.s32 %s376, %s377
          %s379 = smul.addr %s378, 16
          %s380 = scalar_lea.hbm %s0, %s379
          %s381 = smul.u32 %s368, 288
          %s382 = scalar_lea.vmem [#allocation2], %s381
          %s383 = smul.u32 %s368, 3
          %s384 = scalar_lea.sflag [#allocation3], %s383
          // Predicated region
          $region65: #{unet_encoding_block.3} parent=63 // pred_check
            _
          $region66: #{unet_encoding_block.3} parent=63 // pred_check_branch
            %386 = sbr.rel target = $region68
          $region67: #{unet_encoding_block.3} parent=63 // pred_region
            %387 = sst [smem:[#allocation16]] [#allocation23]
            %388 = sst [smem:[#allocation17]] [#allocation22]
          $region68: #{unet_encoding_block.3} parent=63 // pred_fallthru
            _
          %390 = shalt.err (0)
          %s392 = sshll.u32 %s382, 4
          %s393 = int_to_ptr.vmem [resolvable:$true] %s392
          %395 = dma.hbm_to_vmem [thread:$0]  %s380, 256, %s393, %s384
          %s396 = smul.u32 %s369, 16
          %s397 = sadd.s32 %s396, %s377
          %s398 = smul.addr %s397, 16
          %s399 = scalar_lea.hbm %s0, %s398
          %s400 = sadd.s32 16, %s381
          %s401 = scalar_lea.vmem [#allocation2], %s400
          %s402 = sadd.s32 1, %s383
          %s403 = scalar_lea.sflag [#allocation3], %s402
          // Predicated region
          $region69: #{unet_encoding_block.3} parent=63 // pred_check
            _
          $region70: #{unet_encoding_block.3} parent=63 // pred_check_branch
            %405 = sbr.rel target = $region72
          $region71: #{unet_encoding_block.3} parent=63 // pred_region
            %406 = sst [smem:[#allocation16]] [#allocation25]
            %407 = sst [smem:[#allocation17]] [#allocation24]
          $region72: #{unet_encoding_block.3} parent=63 // pred_fallthru
            _
          %409 = shalt.err (0)
          %s411 = sshll.u32 %s401, 4
          %s412 = int_to_ptr.vmem [resolvable:$true] %s411
          %414 = dma.hbm_to_vmem [thread:$0]  %s399, 4096, %s412, %s403
          %s415 = smul.u32 %s375, 16
          %s416 = sadd.s32 %s415, %s377
          %s417 = smul.addr %s416, 16
          %s418 = scalar_lea.hbm %s0, %s417
          %s419 = sadd.s32 272, %s381
          %s420 = scalar_lea.vmem [#allocation2], %s419
          %s421 = sadd.s32 2, %s383
          %s422 = scalar_lea.sflag [#allocation3], %s421
          // Predicated region
          $region73: #{unet_encoding_block.3} parent=63 // pred_check
            _
          $region74: #{unet_encoding_block.3} parent=63 // pred_check_branch
            %424 = sbr.rel target = $region76
          $region75: #{unet_encoding_block.3} parent=63 // pred_region
            %425 = sst [smem:[#allocation16]] [#allocation27]
            %426 = sst [smem:[#allocation17]] [#allocation26]
          $region76: #{unet_encoding_block.3} parent=63 // pred_fallthru
            _
          %428 = shalt.err (0)
          %s430 = sshll.u32 %s420, 4
          %s431 = int_to_ptr.vmem [resolvable:$true] %s430
          %433 = dma.hbm_to_vmem [thread:$0]  %s418, 256, %s431, %s422
        $region64: #{unet_encoding_block.3} parent=31 // pred_fallthru
          _
        %s434 = smul.u32 %s293, 3
        %s435 = scalar_lea.sflag [#allocation3], %s434
        %s436 = smul.u32 1, 16
        %s437 = smul.u32 %s436, 1
        %s438 = sshll.u32 %s437, 4
        %439 = dma.done %s435, %s438
        %s440 = sadd.s32 1, %s434
        %s441 = scalar_lea.sflag [#allocation3], %s440
        %s442 = smul.u32 16, 16
        %s443 = smul.u32 %s442, 1
        %s444 = sshll.u32 %s443, 4
        %445 = dma.done %s441, %s444
        %s446 = sadd.s32 2, %s434
        %s447 = scalar_lea.sflag [#allocation3], %s446
        %s448 = sshll.u32 %s437, 4
        %449 = dma.done %s447, %s448
        %s450 = smul.u32 %s293, 288
        %s451 = scalar_lea.vmem [#allocation2], %s450
        %v452 = vld [vmem:[%s451] sm:$0xff]
        %v453 = vld [vmem:[%s451 + $0x8] sm:$0xff]
        %v454 = vld [vmem:[%s451 + $0x10] sm:$0xff]
        %v455 = vld [vmem:[%s451 + $0x18] sm:$0xff]
        %v456 = vld [vmem:[%s451 + $0x20] sm:$0xff]
        %v457 = vld [vmem:[%s451 + $0x28] sm:$0xff]
        %v458 = vld [vmem:[%s451 + $0x30] sm:$0xff]
        %v459 = vld [vmem:[%s451 + $0x38] sm:$0xff]
        %v460 = vld [vmem:[%s451 + $0x40] sm:$0xff]
        %v461 = vld [vmem:[%s451 + $0x48] sm:$0xff]
        %v462 = vld [vmem:[%s451 + $0x50] sm:$0xff]
        %v463 = vld [vmem:[%s451 + $0x58] sm:$0xff]
        %v464 = vld [vmem:[%s451 + $0x60] sm:$0xff]
        %v465 = vld [vmem:[%s451 + $0x68] sm:$0xff]
        %v466 = vld [vmem:[%s451 + $0x70] sm:$0xff]
        %v467 = vld [vmem:[%s451 + $0x78] sm:$0xff]
        %v468 = vld [vmem:[%s451 + $0x80] sm:$0xff]
        %v469 = vld [vmem:[%s451 + $0x88] sm:$0xff]
        %v470 = vld [vmem:[%s451 + $0x90] sm:$0xff]
        %v471 = vld [vmem:[%s451 + $0x98] sm:$0xff]
        %v472 = vld [vmem:[%s451 + $0xa0] sm:$0xff]
        %v473 = vld [vmem:[%s451 + $0xa8] sm:$0xff]
        %v474 = vld [vmem:[%s451 + $0xb0] sm:$0xff]
        %v475 = vld [vmem:[%s451 + $0xb8] sm:$0xff]
        %v476 = vld [vmem:[%s451 + $0xc0] sm:$0xff]
        %v477 = vld [vmem:[%s451 + $0xc8] sm:$0xff]
        %v478 = vld [vmem:[%s451 + $0xd0] sm:$0xff]
        %v479 = vld [vmem:[%s451 + $0xd8] sm:$0xff]
        %v480 = vld [vmem:[%s451 + $0xe0] sm:$0xff]
        %v481 = vld [vmem:[%s451 + $0xe8] sm:$0xff]
        %v482 = vld [vmem:[%s451 + $0xf0] sm:$0xff]
        %v483 = vld [vmem:[%s451 + $0xf8] sm:$0xff]
        %v484 = vld [vmem:[%s451 + $0x100] sm:$0xff]
        %v485 = vld [vmem:[%s451 + $0x108] sm:$0xff]
        %v486 = vld [vmem:[%s451 + $0x110] sm:$0xff]
        %v487 = vld [vmem:[%s451 + $0x118] sm:$0xff]
        %s488 = scalar_select %p294, 1, 0
        %s489 = scalar_select %p294, 16, 17
        %v490 = vstv %s488
        %vm491 = vcmp.le.s32.totalorder %v490, 0
        %vm492 = vcmp.le.s32.totalorder %v490, 1
        %vm493 = vcmp.le.s32.totalorder %v490, 2
        %vm494 = vcmp.le.s32.totalorder %v490, 3
        %vm495 = vcmp.le.s32.totalorder %v490, 4
        %vm496 = vcmp.le.s32.totalorder %v490, 5
        %vm497 = vcmp.le.s32.totalorder %v490, 6
        %vm498 = vcmp.le.s32.totalorder %v490, 7
        %vm499 = vcmp.le.s32.totalorder %v490, 8
        %vm500 = vcmp.le.s32.totalorder %v490, 9
        %vm501 = vcmp.le.s32.totalorder %v490, 10
        %vm502 = vcmp.le.s32.totalorder %v490, 11
        %vm503 = vcmp.le.s32.totalorder %v490, 12
        %vm504 = vcmp.le.s32.totalorder %v490, 13
        %vm505 = vcmp.le.s32.totalorder %v490, 14
        %vm506 = vcmp.le.s32.totalorder %v490, 15
        %vm507 = vcmp.le.s32.totalorder %v490, 16
        %vm508 = vcmp.le.s32.totalorder %v490, 17
        %v509 = vstv %s489
        %vm510 = vcmp.ge.s32.totalorder %v509, 0
        %vm511 = vcmp.ge.s32.totalorder %v509, 1
        %vm512 = vcmp.ge.s32.totalorder %v509, 2
        %vm513 = vcmp.ge.s32.totalorder %v509, 3
        %vm514 = vcmp.ge.s32.totalorder %v509, 4
        %vm515 = vcmp.ge.s32.totalorder %v509, 5
        %vm516 = vcmp.ge.s32.totalorder %v509, 6
        %vm517 = vcmp.ge.s32.totalorder %v509, 7
        %vm518 = vcmp.ge.s32.totalorder %v509, 8
        %vm519 = vcmp.ge.s32.totalorder %v509, 9
        %vm520 = vcmp.ge.s32.totalorder %v509, 10
        %vm521 = vcmp.ge.s32.totalorder %v509, 11
        %vm522 = vcmp.ge.s32.totalorder %v509, 12
        %vm523 = vcmp.ge.s32.totalorder %v509, 13
        %vm524 = vcmp.ge.s32.totalorder %v509, 14
        %vm525 = vcmp.ge.s32.totalorder %v509, 15
        %vm526 = vcmp.ge.s32.totalorder %v509, 16
        %vm527 = vcmp.ge.s32.totalorder %v509, 17
        %vm528 = vmand %vm491, %vm510
        %vm529 = vmand %vm492, %vm511
        %vm530 = vmand %vm493, %vm512
        %vm531 = vmand %vm494, %vm513
        %vm532 = vmand %vm495, %vm514
        %vm533 = vmand %vm496, %vm515
        %vm534 = vmand %vm497, %vm516
        %vm535 = vmand %vm498, %vm517
        %vm536 = vmand %vm499, %vm518
        %vm537 = vmand %vm500, %vm519
        %vm538 = vmand %vm501, %vm520
        %vm539 = vmand %vm502, %vm521
        %vm540 = vmand %vm503, %vm522
        %vm541 = vmand %vm504, %vm523
        %vm542 = vmand %vm505, %vm524
        %vm543 = vmand %vm506, %vm525
        %vm544 = vmand %vm507, %vm526
        %vm545 = vmand %vm508, %vm527
        %v546 = vsel %vm528, 1, 0
        %v547 = vsel %vm529, 1, 0
        %v548 = vsel %vm530, 1, 0
        %v549 = vsel %vm531, 1, 0
        %v550 = vsel %vm532, 1, 0
        %v551 = vsel %vm533, 1, 0
        %v552 = vsel %vm534, 1, 0
        %v553 = vsel %vm535, 1, 0
        %v554 = vsel %vm536, 1, 0
        %v555 = vsel %vm537, 1, 0
        %v556 = vsel %vm538, 1, 0
        %v557 = vsel %vm539, 1, 0
        %v558 = vsel %vm540, 1, 0
        %v559 = vsel %vm541, 1, 0
        %v560 = vsel %vm542, 1, 0
        %v561 = vsel %vm543, 1, 0
        %v562 = vsel %vm544, 1, 0
        %v563 = vsel %vm545, 1, 0
        %vm564 = vcmp.eq.s32.totalorder %v546, 1
        %vm565 = vcmp.eq.s32.totalorder %v547, 1
        %vm566 = vcmp.eq.s32.totalorder %v548, 1
        %vm567 = vcmp.eq.s32.totalorder %v549, 1
        %vm568 = vcmp.eq.s32.totalorder %v550, 1
        %vm569 = vcmp.eq.s32.totalorder %v551, 1
        %vm570 = vcmp.eq.s32.totalorder %v552, 1
        %vm571 = vcmp.eq.s32.totalorder %v553, 1
        %vm572 = vcmp.eq.s32.totalorder %v554, 1
        %vm573 = vcmp.eq.s32.totalorder %v555, 1
        %vm574 = vcmp.eq.s32.totalorder %v556, 1
        %vm575 = vcmp.eq.s32.totalorder %v557, 1
        %vm576 = vcmp.eq.s32.totalorder %v558, 1
        %vm577 = vcmp.eq.s32.totalorder %v559, 1
        %vm578 = vcmp.eq.s32.totalorder %v560, 1
        %vm579 = vcmp.eq.s32.totalorder %v561, 1
        %vm580 = vcmp.eq.s32.totalorder %v562, 1
        %vm581 = vcmp.eq.s32.totalorder %v563, 1
        %v582 = vsel %vm564, %v452, 0.0
        %v583 = vsel %vm564, %v453, 0.0
        %v584 = vsel %vm565, %v454, 0.0
        %v585 = vsel %vm565, %v455, 0.0
        %v586 = vsel %vm566, %v456, 0.0
        %v587 = vsel %vm566, %v457, 0.0
        %v588 = vsel %vm567, %v458, 0.0
        %v589 = vsel %vm567, %v459, 0.0
        %v590 = vsel %vm568, %v460, 0.0
        %v591 = vsel %vm568, %v461, 0.0
        %v592 = vsel %vm569, %v462, 0.0
        %v593 = vsel %vm569, %v463, 0.0
        %v594 = vsel %vm570, %v464, 0.0
        %v595 = vsel %vm570, %v465, 0.0
        %v596 = vsel %vm571, %v466, 0.0
        %v597 = vsel %vm571, %v467, 0.0
        %v598 = vsel %vm572, %v468, 0.0
        %v599 = vsel %vm572, %v469, 0.0
        %v600 = vsel %vm573, %v470, 0.0
        %v601 = vsel %vm573, %v471, 0.0
        %v602 = vsel %vm574, %v472, 0.0
        %v603 = vsel %vm574, %v473, 0.0
        %v604 = vsel %vm575, %v474, 0.0
        %v605 = vsel %vm575, %v475, 0.0
        %v606 = vsel %vm576, %v476, 0.0
        %v607 = vsel %vm576, %v477, 0.0
        %v608 = vsel %vm577, %v478, 0.0
        %v609 = vsel %vm577, %v479, 0.0
        %v610 = vsel %vm578, %v480, 0.0
        %v611 = vsel %vm578, %v481, 0.0
        %v612 = vsel %vm579, %v482, 0.0
        %v613 = vsel %vm579, %v483, 0.0
        %v614 = vsel %vm580, %v484, 0.0
        %v615 = vsel %vm580, %v485, 0.0
        %v616 = vsel %vm581, %v486, 0.0
        %v617 = vsel %vm581, %v487, 0.0
        %vm654 = vcmask 1040384
        %v655 = vrot.slane %v582, 7
        %v656 = vrot.slane %v583, 7
        %v657 = vsel %vm654, %v655, %v656
        %v658 = vrot.slane %v584, 7
        %v659 = vrot.slane %v585, 7
        %v660 = vsel %vm654, %v658, %v659
        %v661 = vrot.slane %v586, 7
        %v662 = vrot.slane %v587, 7
        %v663 = vsel %vm654, %v661, %v662
        %v664 = vrot.slane %v588, 7
        %v665 = vrot.slane %v589, 7
        %v666 = vsel %vm654, %v664, %v665
        %v667 = vrot.slane %v590, 7
        %v668 = vrot.slane %v591, 7
        %v669 = vsel %vm654, %v667, %v668
        %v670 = vrot.slane %v592, 7
        %v671 = vrot.slane %v593, 7
        %v672 = vsel %vm654, %v670, %v671
        %v673 = vrot.slane %v594, 7
        %v674 = vrot.slane %v595, 7
        %v675 = vsel %vm654, %v673, %v674
        %v676 = vrot.slane %v596, 7
        %v677 = vrot.slane %v597, 7
        %v678 = vsel %vm654, %v676, %v677
        %v679 = vrot.slane %v598, 7
        %v680 = vrot.slane %v599, 7
        %v681 = vsel %vm654, %v679, %v680
        %v682 = vrot.slane %v600, 7
        %v683 = vrot.slane %v601, 7
        %v684 = vsel %vm654, %v682, %v683
        %v685 = vrot.slane %v602, 7
        %v686 = vrot.slane %v603, 7
        %v687 = vsel %vm654, %v685, %v686
        %v688 = vrot.slane %v604, 7
        %v689 = vrot.slane %v605, 7
        %v690 = vsel %vm654, %v688, %v689
        %v691 = vrot.slane %v606, 7
        %v692 = vrot.slane %v607, 7
        %v693 = vsel %vm654, %v691, %v692
        %v694 = vrot.slane %v608, 7
        %v695 = vrot.slane %v609, 7
        %v696 = vsel %vm654, %v694, %v695
        %v697 = vrot.slane %v610, 7
        %v698 = vrot.slane %v611, 7
        %v699 = vsel %vm654, %v697, %v698
        %v700 = vrot.slane %v612, 7
        %v701 = vrot.slane %v613, 7
        %v702 = vsel %vm654, %v700, %v701
        %v703 = vrot.slane %v614, 7
        %v704 = vrot.slane %v615, 7
        %v705 = vsel %vm654, %v703, %v704
        %v706 = vrot.slane %v616, 7
        %v707 = vrot.slane %v617, 7
        %v708 = vsel %vm654, %v706, %v707
        %v745 = vsel %vm654, 0.0, %v655
        %v746 = vsel %vm654, 0.0, %v658
        %v747 = vsel %vm654, 0.0, %v661
        %v748 = vsel %vm654, 0.0, %v664
        %v749 = vsel %vm654, 0.0, %v667
        %v750 = vsel %vm654, 0.0, %v670
        %v751 = vsel %vm654, 0.0, %v673
        %v752 = vsel %vm654, 0.0, %v676
        %v753 = vsel %vm654, 0.0, %v679
        %v754 = vsel %vm654, 0.0, %v682
        %v755 = vsel %vm654, 0.0, %v685
        %v756 = vsel %vm654, 0.0, %v688
        %v757 = vsel %vm654, 0.0, %v691
        %v758 = vsel %vm654, 0.0, %v694
        %v759 = vsel %vm654, 0.0, %v697
        %v760 = vsel %vm654, 0.0, %v700
        %v761 = vsel %vm654, 0.0, %v703
        %v762 = vsel %vm654, 0.0, %v706
        %vm763 = vcmask 1046528
        %v764 = vrot.slane %v582, 1
        %v765 = vrot.slane %v583, 1
        %v766 = vsel %vm763, %v764, %v765
        %v767 = vrot.slane %v584, 1
        %v768 = vrot.slane %v585, 1
        %v769 = vsel %vm763, %v767, %v768
        %v770 = vrot.slane %v586, 1
        %v771 = vrot.slane %v587, 1
        %v772 = vsel %vm763, %v770, %v771
        %v773 = vrot.slane %v588, 1
        %v774 = vrot.slane %v589, 1
        %v775 = vsel %vm763, %v773, %v774
        %v776 = vrot.slane %v590, 1
        %v777 = vrot.slane %v591, 1
        %v778 = vsel %vm763, %v776, %v777
        %v779 = vrot.slane %v592, 1
        %v780 = vrot.slane %v593, 1
        %v781 = vsel %vm763, %v779, %v780
        %v782 = vrot.slane %v594, 1
        %v783 = vrot.slane %v595, 1
        %v784 = vsel %vm763, %v782, %v783
        %v785 = vrot.slane %v596, 1
        %v786 = vrot.slane %v597, 1
        %v787 = vsel %vm763, %v785, %v786
        %v788 = vrot.slane %v598, 1
        %v789 = vrot.slane %v599, 1
        %v790 = vsel %vm763, %v788, %v789
        %v791 = vrot.slane %v600, 1
        %v792 = vrot.slane %v601, 1
        %v793 = vsel %vm763, %v791, %v792
        %v794 = vrot.slane %v602, 1
        %v795 = vrot.slane %v603, 1
        %v796 = vsel %vm763, %v794, %v795
        %v797 = vrot.slane %v604, 1
        %v798 = vrot.slane %v605, 1
        %v799 = vsel %vm763, %v797, %v798
        %v800 = vrot.slane %v606, 1
        %v801 = vrot.slane %v607, 1
        %v802 = vsel %vm763, %v800, %v801
        %v803 = vrot.slane %v608, 1
        %v804 = vrot.slane %v609, 1
        %v805 = vsel %vm763, %v803, %v804
        %v806 = vrot.slane %v610, 1
        %v807 = vrot.slane %v611, 1
        %v808 = vsel %vm763, %v806, %v807
        %v809 = vrot.slane %v612, 1
        %v810 = vrot.slane %v613, 1
        %v811 = vsel %vm763, %v809, %v810
        %v812 = vrot.slane %v614, 1
        %v813 = vrot.slane %v615, 1
        %v814 = vsel %vm763, %v812, %v813
        %v815 = vrot.slane %v616, 1
        %v816 = vrot.slane %v617, 1
        %v817 = vsel %vm763, %v815, %v816
        %v854 = vsel %vm763, %v765, 0.0
        %v855 = vsel %vm763, %v768, 0.0
        %v856 = vsel %vm763, %v771, 0.0
        %v857 = vsel %vm763, %v774, 0.0
        %v858 = vsel %vm763, %v777, 0.0
        %v859 = vsel %vm763, %v780, 0.0
        %v860 = vsel %vm763, %v783, 0.0
        %v861 = vsel %vm763, %v786, 0.0
        %v862 = vsel %vm763, %v789, 0.0
        %v863 = vsel %vm763, %v792, 0.0
        %v864 = vsel %vm763, %v795, 0.0
        %v865 = vsel %vm763, %v798, 0.0
        %v866 = vsel %vm763, %v801, 0.0
        %v867 = vsel %vm763, %v804, 0.0
        %v868 = vsel %vm763, %v807, 0.0
        %v869 = vsel %vm763, %v810, 0.0
        %v870 = vsel %vm763, %v813, 0.0
        %v871 = vsel %vm763, %v816, 0.0
        %v872 = vld [vmem:[#allocation4] sm:$0xff]
        %v873 = vld [vmem:[#allocation4 + $0x8] sm:$0xff]
        %v874 = vld [vmem:[#allocation4 + $0x10] sm:$0xff]
        %v875 = vld [vmem:[#allocation4 + $0x18] sm:$0xff]
        %v876 = vld [vmem:[#allocation4 + $0x20] sm:$0xff]
        %v877 = vld [vmem:[#allocation4 + $0x28] sm:$0xff]
        %v878 = vld [vmem:[#allocation4 + $0x30] sm:$0xff]
        %v879 = vld [vmem:[#allocation4 + $0x38] sm:$0xff]
        %v880 = vld [vmem:[#allocation4 + $0x40] sm:$0xff]
        %v881 = vld [vmem:[#allocation4 + $0x48] sm:$0xff]
        %v882 = vld [vmem:[#allocation4 + $0x50] sm:$0xff]
        %v883 = vld [vmem:[#allocation4 + $0x58] sm:$0xff]
        %v884 = vld [vmem:[#allocation4 + $0x60] sm:$0xff]
        %v885 = vld [vmem:[#allocation4 + $0x68] sm:$0xff]
        %v886 = vld [vmem:[#allocation4 + $0x70] sm:$0xff]
        %v887 = vld [vmem:[#allocation4 + $0x78] sm:$0xff]
        %v888 = vld [vmem:[#allocation4 + $0x80] sm:$0xff]
        %v889 = vld [vmem:[#allocation4 + $0x88] sm:$0xff]
        %v890 = vld [vmem:[#allocation4 + $0x90] sm:$0xff]
        %v891 = vld [vmem:[#allocation4 + $0x98] sm:$0xff]
        %v892 = vld [vmem:[#allocation4 + $0xa0] sm:$0xff]
        %v893 = vld [vmem:[#allocation4 + $0xa8] sm:$0xff]
        %v894 = vld [vmem:[#allocation4 + $0xb0] sm:$0xff]
        %v895 = vld [vmem:[#allocation4 + $0xb8] sm:$0xff]
        %v896 = vld [vmem:[#allocation4 + $0xc0] sm:$0xff]
        %v897 = vld [vmem:[#allocation4 + $0xc8] sm:$0xff]
        %v898 = vld [vmem:[#allocation4 + $0xd0] sm:$0xff]
        %v899 = vld [vmem:[#allocation4 + $0xd8] sm:$0xff]
        %v900 = vld [vmem:[#allocation4 + $0xe0] sm:$0xff]
        %v901 = vld [vmem:[#allocation4 + $0xe8] sm:$0xff]
        %v902 = vld [vmem:[#allocation4 + $0xf0] sm:$0xff]
        %v903 = vld [vmem:[#allocation4 + $0xf8] sm:$0xff]
        %v904 = vld [vmem:[#allocation4 + $0x100] sm:$0xff]
        %v905 = vld [vmem:[#allocation4 + $0x108] sm:$0xff]
        %v906 = vld [vmem:[#allocation4 + $0x110] sm:$0xff]
        %v907 = vld [vmem:[#allocation4 + $0x118] sm:$0xff]
        %v908 = vld [vmem:[#allocation4 + $0x120] sm:$0xff]
        %v909 = vld [vmem:[#allocation4 + $0x128] sm:$0xff]
        %v910 = vld [vmem:[#allocation4 + $0x130] sm:$0xff]
        %v911 = vld [vmem:[#allocation4 + $0x138] sm:$0xff]
        %v912 = vld [vmem:[#allocation4 + $0x140] sm:$0xff]
        %v913 = vld [vmem:[#allocation4 + $0x148] sm:$0xff]
        %v914 = vld [vmem:[#allocation4 + $0x150] sm:$0xff]
        %v915 = vld [vmem:[#allocation4 + $0x158] sm:$0xff]
        %v916 = vld [vmem:[#allocation4 + $0x160] sm:$0xff]
        %v917 = vld [vmem:[#allocation4 + $0x168] sm:$0xff]
        %v918 = vld [vmem:[#allocation4 + $0x170] sm:$0xff]
        %v919 = vld [vmem:[#allocation4 + $0x178] sm:$0xff]
        %s920 = scalar_lea.vmem [#allocation4], 384
        %v921 = vld [vmem:[%s920] sm:$0xff]
        %v922 = vld [vmem:[%s920 + $0x8] sm:$0xff]
        %v923 = vld [vmem:[%s920 + $0x10] sm:$0xff]
        %v924 = vld [vmem:[%s920 + $0x18] sm:$0xff]
        %v925 = vld [vmem:[%s920 + $0x20] sm:$0xff]
        %v926 = vld [vmem:[%s920 + $0x28] sm:$0xff]
        %v927 = vld [vmem:[%s920 + $0x30] sm:$0xff]
        %v928 = vld [vmem:[%s920 + $0x38] sm:$0xff]
        %v929 = vld [vmem:[%s920 + $0x40] sm:$0xff]
        %v930 = vld [vmem:[%s920 + $0x48] sm:$0xff]
        %v931 = vld [vmem:[%s920 + $0x50] sm:$0xff]
        %v932 = vld [vmem:[%s920 + $0x58] sm:$0xff]
        %v933 = vld [vmem:[%s920 + $0x60] sm:$0xff]
        %v934 = vld [vmem:[%s920 + $0x68] sm:$0xff]
        %v935 = vld [vmem:[%s920 + $0x70] sm:$0xff]
        %v936 = vld [vmem:[%s920 + $0x78] sm:$0xff]
        %v937 = vld [vmem:[%s920 + $0x80] sm:$0xff]
        %v938 = vld [vmem:[%s920 + $0x88] sm:$0xff]
        %v939 = vld [vmem:[%s920 + $0x90] sm:$0xff]
        %v940 = vld [vmem:[%s920 + $0x98] sm:$0xff]
        %v941 = vld [vmem:[%s920 + $0xa0] sm:$0xff]
        %v942 = vld [vmem:[%s920 + $0xa8] sm:$0xff]
        %v943 = vld [vmem:[%s920 + $0xb0] sm:$0xff]
        %v944 = vld [vmem:[%s920 + $0xb8] sm:$0xff]
        %v945 = vld [vmem:[%s920 + $0xc0] sm:$0xff]
        %v946 = vld [vmem:[%s920 + $0xc8] sm:$0xff]
        %v947 = vld [vmem:[%s920 + $0xd0] sm:$0xff]
        %v948 = vld [vmem:[%s920 + $0xd8] sm:$0xff]
        %v949 = vld [vmem:[%s920 + $0xe0] sm:$0xff]
        %v950 = vld [vmem:[%s920 + $0xe8] sm:$0xff]
        %v951 = vld [vmem:[%s920 + $0xf0] sm:$0xff]
        %v952 = vld [vmem:[%s920 + $0xf8] sm:$0xff]
        %v953 = vld [vmem:[%s920 + $0x100] sm:$0xff]
        %v954 = vld [vmem:[%s920 + $0x108] sm:$0xff]
        %v955 = vld [vmem:[%s920 + $0x110] sm:$0xff]
        %v956 = vld [vmem:[%s920 + $0x118] sm:$0xff]
        %v957 = vld [vmem:[%s920 + $0x120] sm:$0xff]
        %v958 = vld [vmem:[%s920 + $0x128] sm:$0xff]
        %v959 = vld [vmem:[%s920 + $0x130] sm:$0xff]
        %v960 = vld [vmem:[%s920 + $0x138] sm:$0xff]
        %v961 = vld [vmem:[%s920 + $0x140] sm:$0xff]
        %v962 = vld [vmem:[%s920 + $0x148] sm:$0xff]
        %v963 = vld [vmem:[%s920 + $0x150] sm:$0xff]
        %v964 = vld [vmem:[%s920 + $0x158] sm:$0xff]
        %v965 = vld [vmem:[%s920 + $0x160] sm:$0xff]
        %v966 = vld [vmem:[%s920 + $0x168] sm:$0xff]
        %v967 = vld [vmem:[%s920 + $0x170] sm:$0xff]
        %v968 = vld [vmem:[%s920 + $0x178] sm:$0xff]
        %969 = vmatprep.subr.mxu0 0.0
        %970 = vmatpush1.msra.mxu0 %v921
        %971 = vmatprep.subr.mxu0 0.0
        %972 = vmatpush1.msra.mxu0 %v922
        %973 = vmatprep.subr.mxu0 0.0
        %974 = vmatpush1.msra.mxu0 %v923
        %975 = vmatprep.subr.mxu0 0.0
        %976 = vmatpush1.msra.mxu0 %v924
        %977 = vmatprep.subr.mxu0 0.0
        %978 = vmatpush1.msra.mxu0 %v925
        %979 = vmatprep.subr.mxu0 0.0
        %980 = vmatpush1.msra.mxu0 %v926
        %981 = vmatprep.subr.mxu0 0.0
        %982 = vmatpush1.msra.mxu0 %v927
        %983 = vmatprep.subr.mxu0 0.0
        %984 = vmatpush1.msra.mxu0 %v928
        %985 = vmatprep.subr.mxu0 0.0
        %986 = vmatpush1.msra.mxu0 %v929
        %987 = vmatprep.subr.mxu0 0.0
        %988 = vmatpush1.msra.mxu0 %v930
        %989 = vmatprep.subr.mxu0 0.0
        %990 = vmatpush1.msra.mxu0 %v931
        %991 = vmatprep.subr.mxu0 0.0
        %992 = vmatpush1.msra.mxu0 %v932
        %993 = vmatprep.subr.mxu0 0.0
        %994 = vmatpush1.msra.mxu0 %v933
        %995 = vmatprep.subr.mxu0 0.0
        %996 = vmatpush1.msra.mxu0 %v934
        %997 = vmatprep.subr.mxu0 0.0
        %998 = vmatpush1.msra.mxu0 %v935
        %999 = vmatprep.subr.mxu0 0.0
        %1000 = vmatpush1.msra.mxu0 %v936
        %1001 = vmatprep.subr.mxu0 0.0
        %1002 = vmatpush1.msra.mxu0 %v937
        %1003 = vmatprep.subr.mxu0 0.0
        %1004 = vmatpush1.msra.mxu0 %v938
        %1005 = vmatprep.subr.mxu0 0.0
        %1006 = vmatpush1.msra.mxu0 %v939
        %1007 = vmatprep.subr.mxu0 0.0
        %1008 = vmatpush1.msra.mxu0 %v940
        %1009 = vmatprep.subr.mxu0 0.0
        %1010 = vmatpush1.msra.mxu0 %v941
        %1011 = vmatprep.subr.mxu0 0.0
        %1012 = vmatpush1.msra.mxu0 %v942
        %1013 = vmatprep.subr.mxu0 0.0
        %1014 = vmatpush1.msra.mxu0 %v943
        %1015 = vmatprep.subr.mxu0 0.0
        %1016 = vmatpush1.msra.mxu0 %v944
        %1017 = vmatprep.subr.mxu0 0.0
        %1018 = vmatpush1.msra.mxu0 %v945
        %1019 = vmatprep.subr.mxu0 0.0
        %1020 = vmatpush1.msra.mxu0 %v946
        %1021 = vmatprep.subr.mxu0 0.0
        %1022 = vmatpush1.msra.mxu0 %v947
        %1023 = vmatprep.subr.mxu0 0.0
        %1024 = vmatpush1.msra.mxu0 %v948
        %1025 = vmatprep.subr.mxu0 0.0
        %1026 = vmatpush1.msra.mxu0 %v949
        %1027 = vmatprep.subr.mxu0 0.0
        %1028 = vmatpush1.msra.mxu0 %v950
        %1029 = vmatprep.subr.mxu0 0.0
        %1030 = vmatpush1.msra.mxu0 %v951
        %1031 = vmatprep.subr.mxu0 0.0
        %1032 = vmatpush1.msra.mxu0 %v952
        %1033 = vmatprep.mubr.f32.mxu0 %v584
        %1034 = vmatmul.mubr.f32.gmra.mrb[0].mxu0 %v746
        %v1035 = vpop.f32.mrb[0].mxu0
        %v1036 = vadd.f32 0.0, %v1035
        %v1037 = vpop.f32.mrb[0].mxu0
        %1038 = vmatprep.mubr.f32.mxu0 %v585
        %1039 = vmatmul.mubr.f32.gmra.mrb[0].mxu0 %v660
        %v1040 = vpop.f32.mrb[0].mxu0
        %v1041 = vadd.f32 0.0, %v1040
        %v1042 = vpop.f32.mrb[0].mxu0
        %1043 = vmatprep.mubr.f32.mxu0 %v586
        %1044 = vmatmul.mubr.f32.gmra.mrb[0].mxu0 %v747
        %v1045 = vpop.f32.mrb[0].mxu0
        %v1046 = vadd.f32 0.0, %v1045
        %v1047 = vpop.f32.mrb[0].mxu0
        %1048 = vmatprep.mubr.f32.mxu0 %v587
        %1049 = vmatmul.mubr.f32.gmra.mrb[0].mxu0 %v663
        %v1050 = vpop.f32.mrb[0].mxu0
        %v1051 = vadd.f32 0.0, %v1050
        %v1052 = vpop.f32.mrb[0].mxu0
        %1053 = vmatprep.mubr.f32.mxu0 %v588
        %1054 = vmatmul.mubr.f32.gmra.mrb[0].mxu0 %v748
        %v1055 = vpop.f32.mrb[0].mxu0
        %v1056 = vadd.f32 0.0, %v1055
        %v1057 = vpop.f32.mrb[0].mxu0
        %1058 = vmatprep.mubr.f32.mxu0 %v589
        %1059 = vmatmul.mubr.f32.gmra.mrb[0].mxu0 %v666
        %v1060 = vpop.f32.mrb[0].mxu0
        %v1061 = vadd.f32 0.0, %v1060
        %v1062 = vpop.f32.mrb[0].mxu0
        %1063 = vmatprep.mubr.f32.mxu0 %v590
        %1064 = vmatmul.mubr.f32.gmra.mrb[0].mxu0 %v749
        %v1065 = vpop.f32.mrb[0].mxu0
        %v1066 = vadd.f32 0.0, %v1065
        %v1067 = vpop.f32.mrb[0].mxu0
        %1068 = vmatprep.mubr.f32.mxu0 %v591
        %1069 = vmatmul.mubr.f32.gmra.mrb[0].mxu0 %v669
        %v1070 = vpop.f32.mrb[0].mxu0
        %v1071 = vadd.f32 0.0, %v1070
        %v1072 = vpop.f32.mrb[0].mxu0
        %1073 = vmatprep.mubr.f32.mxu0 %v592
        %1074 = vmatmul.mubr.f32.gmra.mrb[0].mxu0 %v750
        %v1075 = vpop.f32.mrb[0].mxu0
        %v1076 = vadd.f32 0.0, %v1075
        %v1077 = vpop.f32.mrb[0].mxu0
        %1078 = vmatprep.mubr.f32.mxu0 %v593
        %1079 = vmatmul.mubr.f32.gmra.mrb[0].mxu0 %v672
        %v1080 = vpop.f32.mrb[0].mxu0
        %v1081 = vadd.f32 0.0, %v1080
        %v1082 = vpop.f32.mrb[0].mxu0
        %1083 = vmatprep.mubr.f32.mxu0 %v594
        %1084 = vmatmul.mubr.f32.gmra.mrb[0].mxu0 %v751
        %v1085 = vpop.f32.mrb[0].mxu0
        %v1086 = vadd.f32 0.0, %v1085
        %v1087 = vpop.f32.mrb[0].mxu0
        %1088 = vmatprep.mubr.f32.mxu0 %v595
        %1089 = vmatmul.mubr.f32.gmra.mrb[0].mxu0 %v675
        %v1090 = vpop.f32.mrb[0].mxu0
        %v1091 = vadd.f32 0.0, %v1090
        %v1092 = vpop.f32.mrb[0].mxu0
        %1093 = vmatprep.mubr.f32.mxu0 %v596
        %1094 = vmatmul.mubr.f32.gmra.mrb[0].mxu0 %v752
        %v1095 = vpop.f32.mrb[0].mxu0
        %v1096 = vadd.f32 0.0, %v1095
        %v1097 = vpop.f32.mrb[0].mxu0
        %1098 = vmatprep.mubr.f32.mxu0 %v597
        %1099 = vmatmul.mubr.f32.gmra.mrb[0].mxu0 %v678
        %v1100 = vpop.f32.mrb[0].mxu0
        %v1101 = vadd.f32 0.0, %v1100
        %v1102 = vpop.f32.mrb[0].mxu0
        %1103 = vmatprep.mubr.f32.mxu0 %v598
        %1104 = vmatmul.mubr.f32.gmra.mrb[0].mxu0 %v753
        %v1105 = vpop.f32.mrb[0].mxu0
        %v1106 = vadd.f32 0.0, %v1105
        %v1107 = vpop.f32.mrb[0].mxu0
        %1108 = vmatprep.mubr.f32.mxu0 %v599
        %1109 = vmatmul.mubr.f32.gmra.mrb[0].mxu0 %v681
        %v1110 = vpop.f32.mrb[0].mxu0
        %v1111 = vadd.f32 0.0, %v1110
        %v1112 = vpop.f32.mrb[0].mxu0
        %1113 = vmatprep.mubr.f32.mxu0 %v600
        %1114 = vmatmul.mubr.f32.gmra.mrb[0].mxu0 %v754
        %v1115 = vpop.f32.mrb[0].mxu0
        %v1116 = vadd.f32 0.0, %v1115
        %v1117 = vpop.f32.mrb[0].mxu0
        %1118 = vmatprep.mubr.f32.mxu0 %v601
        %1119 = vmatmul.mubr.f32.gmra.mrb[0].mxu0 %v684
        %v1120 = vpop.f32.mrb[0].mxu0
        %v1121 = vadd.f32 0.0, %v1120
        %v1122 = vpop.f32.mrb[0].mxu0
        %1123 = vmatprep.mubr.f32.mxu0 %v602
        %1124 = vmatmul.mubr.f32.gmra.mrb[0].mxu0 %v755
        %v1125 = vpop.f32.mrb[0].mxu0
        %v1126 = vadd.f32 0.0, %v1125
        %v1127 = vpop.f32.mrb[0].mxu0
        %1128 = vmatprep.mubr.f32.mxu0 %v603
        %1129 = vmatmul.mubr.f32.gmra.mrb[0].mxu0 %v687
        %v1130 = vpop.f32.mrb[0].mxu0
        %v1131 = vadd.f32 0.0, %v1130
        %v1132 = vpop.f32.mrb[0].mxu0
        %1133 = vmatprep.mubr.f32.mxu0 %v604
        %1134 = vmatmul.mubr.f32.gmra.mrb[0].mxu0 %v756
        %v1135 = vpop.f32.mrb[0].mxu0
        %v1136 = vadd.f32 0.0, %v1135
        %v1137 = vpop.f32.mrb[0].mxu0
        %1138 = vmatprep.mubr.f32.mxu0 %v605
        %1139 = vmatmul.mubr.f32.gmra.mrb[0].mxu0 %v690
        %v1140 = vpop.f32.mrb[0].mxu0
        %v1141 = vadd.f32 0.0, %v1140
        %v1142 = vpop.f32.mrb[0].mxu0
        %1143 = vmatprep.mubr.f32.mxu0 %v606
        %1144 = vmatmul.mubr.f32.gmra.mrb[0].mxu0 %v757
        %v1145 = vpop.f32.mrb[0].mxu0
        %v1146 = vadd.f32 0.0, %v1145
        %v1147 = vpop.f32.mrb[0].mxu0
        %1148 = vmatprep.mubr.f32.mxu0 %v607
        %1149 = vmatmul.mubr.f32.gmra.mrb[0].mxu0 %v693
        %v1150 = vpop.f32.mrb[0].mxu0
        %v1151 = vadd.f32 0.0, %v1150
        %v1152 = vpop.f32.mrb[0].mxu0
        %1153 = vmatprep.mubr.f32.mxu0 %v608
        %1154 = vmatmul.mubr.f32.gmra.mrb[0].mxu0 %v758
        %v1155 = vpop.f32.mrb[0].mxu0
        %v1156 = vadd.f32 0.0, %v1155
        %v1157 = vpop.f32.mrb[0].mxu0
        %1158 = vmatprep.mubr.f32.mxu0 %v609
        %1159 = vmatmul.mubr.f32.gmra.mrb[0].mxu0 %v696
        %v1160 = vpop.f32.mrb[0].mxu0
        %v1161 = vadd.f32 0.0, %v1160
        %v1162 = vpop.f32.mrb[0].mxu0
        %1163 = vmatprep.mubr.f32.mxu0 %v610
        %1164 = vmatmul.mubr.f32.gmra.mrb[0].mxu0 %v759
        %v1165 = vpop.f32.mrb[0].mxu0
        %v1166 = vadd.f32 0.0, %v1165
        %v1167 = vpop.f32.mrb[0].mxu0
        %1168 = vmatprep.mubr.f32.mxu0 %v611
        %1169 = vmatmul.mubr.f32.gmra.mrb[0].mxu0 %v699
        %v1170 = vpop.f32.mrb[0].mxu0
        %v1171 = vadd.f32 0.0, %v1170
        %v1172 = vpop.f32.mrb[0].mxu0
        %1173 = vmatprep.mubr.f32.mxu0 %v612
        %1174 = vmatmul.mubr.f32.gmra.mrb[0].mxu0 %v760
        %v1175 = vpop.f32.mrb[0].mxu0
        %v1176 = vadd.f32 0.0, %v1175
        %v1177 = vpop.f32.mrb[0].mxu0
        %1178 = vmatprep.mubr.f32.mxu0 %v613
        %1179 = vmatmul.mubr.f32.gmra.mrb[0].mxu0 %v702
        %v1180 = vpop.f32.mrb[0].mxu0
        %v1181 = vadd.f32 0.0, %v1180
        %v1182 = vpop.f32.mrb[0].mxu0
        %1183 = vmatprep.mubr.f32.mxu0 %v614
        %1184 = vmatmul.mubr.f32.gmra.mrb[0].mxu0 %v761
        %v1185 = vpop.f32.mrb[0].mxu0
        %v1186 = vadd.f32 0.0, %v1185
        %v1187 = vpop.f32.mrb[0].mxu0
        %1188 = vmatprep.mubr.f32.mxu0 %v615
        %1189 = vmatmul.mubr.f32.gmra.mrb[0].mxu0 %v705
        %v1190 = vpop.f32.mrb[0].mxu0
        %v1191 = vadd.f32 0.0, %v1190
        %v1192 = vpop.f32.mrb[0].mxu0
        %1193 = vdwg.mxu0
        %1194 = vmatprep.subr.mxu0 0.0
        %1195 = vmatpush1.msra.mxu0 %v953
        %1196 = vmatprep.subr.mxu0 0.0
        %1197 = vmatpush1.msra.mxu0 %v954
        %1198 = vmatprep.subr.mxu0 0.0
        %1199 = vmatpush1.msra.mxu0 %v955
        %1200 = vmatprep.subr.mxu0 0.0
        %1201 = vmatpush1.msra.mxu0 %v956
        %1202 = vmatprep.subr.mxu0 0.0
        %1203 = vmatpush1.msra.mxu0 %v957
        %1204 = vmatprep.subr.mxu0 0.0
        %1205 = vmatpush1.msra.mxu0 %v958
        %1206 = vmatprep.subr.mxu0 0.0
        %1207 = vmatpush1.msra.mxu0 %v959
        %1208 = vmatprep.subr.mxu0 0.0
        %1209 = vmatpush1.msra.mxu0 %v960
        %1210 = vmatprep.subr.mxu0 0.0
        %1211 = vmatpush1.msra.mxu0 %v961
        %1212 = vmatprep.subr.mxu0 0.0
        %1213 = vmatpush1.msra.mxu0 %v962
        %1214 = vmatprep.subr.mxu0 0.0
        %1215 = vmatpush1.msra.mxu0 %v963
        %1216 = vmatprep.subr.mxu0 0.0
        %1217 = vmatpush1.msra.mxu0 %v964
        %1218 = vmatprep.subr.mxu0 0.0
        %1219 = vmatpush1.msra.mxu0 %v965
        %1220 = vmatprep.subr.mxu0 0.0
        %1221 = vmatpush1.msra.mxu0 %v966
        %1222 = vmatprep.subr.mxu0 0.0
        %1223 = vmatpush1.msra.mxu0 %v967
        %1224 = vmatprep.subr.mxu0 0.0
        %1225 = vmatpush1.msra.mxu0 %v968
        %1226 = vmatprep.subr.mxu0 0.0
        %1227 = vmatpush1.msra.mxu0 0.0
        %1228 = vmatprep.subr.mxu0 0.0
        %1229 = vmatpush1.msra.mxu0 0.0
        %1230 = vmatprep.subr.mxu0 0.0
        %1231 = vmatpush1.msra.mxu0 0.0
        %1232 = vmatprep.subr.mxu0 0.0
        %1233 = vmatpush1.msra.mxu0 0.0
        %1234 = vmatprep.subr.mxu0 0.0
        %1235 = vmatpush1.msra.mxu0 0.0
        %1236 = vmatprep.subr.mxu0 0.0
        %1237 = vmatpush1.msra.mxu0 0.0
        %1238 = vmatprep.subr.mxu0 0.0
        %1239 = vmatpush1.msra.mxu0 0.0
        %1240 = vmatprep.subr.mxu0 0.0
        %1241 = vmatpush1.msra.mxu0 0.0
        %1242 = vmatprep.subr.mxu0 0.0
        %1243 = vmatpush1.msra.mxu0 0.0
        %1244 = vmatprep.subr.mxu0 0.0
        %1245 = vmatpush1.msra.mxu0 0.0
        %1246 = vmatprep.subr.mxu0 0.0
        %1247 = vmatpush1.msra.mxu0 0.0
        %1248 = vmatprep.subr.mxu0 0.0
        %1249 = vmatpush1.msra.mxu0 0.0
        %1250 = vmatprep.subr.mxu0 0.0
        %1251 = vmatpush1.msra.mxu0 0.0
        %1252 = vmatprep.subr.mxu0 0.0
        %1253 = vmatpush1.msra.mxu0 0.0
        %1254 = vmatprep.subr.mxu0 0.0
        %1255 = vmatpush1.msra.mxu0 0.0
        %1256 = vmatprep.subr.mxu0 0.0
        %1257 = vmatpush1.msra.mxu0 0.0
        %1258 = vmatprep.mubr.f32.mxu0 0.0
        %1259 = vmatmul.mubr.f32.gmra.mrb[0].mxu0 %v769
        %v1260 = vpop.f32.mrb[0].mxu0
        %v1261 = vadd.f32 %v1036, %v1260
        %v1262 = vpop.f32.mrb[0].mxu0
        %1263 = vmatprep.mubr.f32.mxu0 0.0
        %1264 = vmatmul.mubr.f32.gmra.mrb[0].mxu0 %v855
        %v1265 = vpop.f32.mrb[0].mxu0
        %v1266 = vadd.f32 %v1041, %v1265
        %v1267 = vpop.f32.mrb[0].mxu0
        %1268 = vmatprep.mubr.f32.mxu0 0.0
        %1269 = vmatmul.mubr.f32.gmra.mrb[0].mxu0 %v772
        %v1270 = vpop.f32.mrb[0].mxu0
        %v1271 = vadd.f32 %v1046, %v1270
        %v1272 = vpop.f32.mrb[0].mxu0
        %1273 = vmatprep.mubr.f32.mxu0 0.0
        %1274 = vmatmul.mubr.f32.gmra.mrb[0].mxu0 %v856
        %v1275 = vpop.f32.mrb[0].mxu0
        %v1276 = vadd.f32 %v1051, %v1275
        %v1277 = vpop.f32.mrb[0].mxu0
        %1278 = vmatprep.mubr.f32.mxu0 0.0
        %1279 = vmatmul.mubr.f32.gmra.mrb[0].mxu0 %v775
        %v1280 = vpop.f32.mrb[0].mxu0
        %v1281 = vadd.f32 %v1056, %v1280
        %v1282 = vpop.f32.mrb[0].mxu0
        %1283 = vmatprep.mubr.f32.mxu0 0.0
        %1284 = vmatmul.mubr.f32.gmra.mrb[0].mxu0 %v857
        %v1285 = vpop.f32.mrb[0].mxu0
        %v1286 = vadd.f32 %v1061, %v1285
        %v1287 = vpop.f32.mrb[0].mxu0
        %1288 = vmatprep.mubr.f32.mxu0 0.0
        %1289 = vmatmul.mubr.f32.gmra.mrb[0].mxu0 %v778
        %v1290 = vpop.f32.mrb[0].mxu0
        %v1291 = vadd.f32 %v1066, %v1290
        %v1292 = vpop.f32.mrb[0].mxu0
        %1293 = vmatprep.mubr.f32.mxu0 0.0
        %1294 = vmatmul.mubr.f32.gmra.mrb[0].mxu0 %v858
        %v1295 = vpop.f32.mrb[0].mxu0
        %v1296 = vadd.f32 %v1071, %v1295
        %v1297 = vpop.f32.mrb[0].mxu0
        %1298 = vmatprep.mubr.f32.mxu0 0.0
        %1299 = vmatmul.mubr.f32.gmra.mrb[0].mxu0 %v781
        %v1300 = vpop.f32.mrb[0].mxu0
        %v1301 = vadd.f32 %v1076, %v1300
        %v1302 = vpop.f32.mrb[0].mxu0
        %1303 = vmatprep.mubr.f32.mxu0 0.0
        %1304 = vmatmul.mubr.f32.gmra.mrb[0].mxu0 %v859
        %v1305 = vpop.f32.mrb[0].mxu0
        %v1306 = vadd.f32 %v1081, %v1305
        %v1307 = vpop.f32.mrb[0].mxu0
        %1308 = vmatprep.mubr.f32.mxu0 0.0
        %1309 = vmatmul.mubr.f32.gmra.mrb[0].mxu0 %v784
        %v1310 = vpop.f32.mrb[0].mxu0
        %v1311 = vadd.f32 %v1086, %v1310
        %v1312 = vpop.f32.mrb[0].mxu0
        %1313 = vmatprep.mubr.f32.mxu0 0.0
        %1314 = vmatmul.mubr.f32.gmra.mrb[0].mxu0 %v860
        %v1315 = vpop.f32.mrb[0].mxu0
        %v1316 = vadd.f32 %v1091, %v1315
        %v1317 = vpop.f32.mrb[0].mxu0
        %1318 = vmatprep.mubr.f32.mxu0 0.0
        %1319 = vmatmul.mubr.f32.gmra.mrb[0].mxu0 %v787
        %v1320 = vpop.f32.mrb[0].mxu0
        %v1321 = vadd.f32 %v1096, %v1320
        %v1322 = vpop.f32.mrb[0].mxu0
        %1323 = vmatprep.mubr.f32.mxu0 0.0
        %1324 = vmatmul.mubr.f32.gmra.mrb[0].mxu0 %v861
        %v1325 = vpop.f32.mrb[0].mxu0
        %v1326 = vadd.f32 %v1101, %v1325
        %v1327 = vpop.f32.mrb[0].mxu0
        %1328 = vmatprep.mubr.f32.mxu0 0.0
        %1329 = vmatmul.mubr.f32.gmra.mrb[0].mxu0 %v790
        %v1330 = vpop.f32.mrb[0].mxu0
        %v1331 = vadd.f32 %v1106, %v1330
        %v1332 = vpop.f32.mrb[0].mxu0
        %1333 = vmatprep.mubr.f32.mxu0 0.0
        %1334 = vmatmul.mubr.f32.gmra.mrb[0].mxu0 %v862
        %v1335 = vpop.f32.mrb[0].mxu0
        %v1336 = vadd.f32 %v1111, %v1335
        %v1337 = vpop.f32.mrb[0].mxu0
        %1338 = vmatprep.mubr.f32.mxu0 0.0
        %1339 = vmatmul.mubr.f32.gmra.mrb[0].mxu0 %v793
        %v1340 = vpop.f32.mrb[0].mxu0
        %v1341 = vadd.f32 %v1116, %v1340
        %v1342 = vpop.f32.mrb[0].mxu0
        %1343 = vmatprep.mubr.f32.mxu0 0.0
        %1344 = vmatmul.mubr.f32.gmra.mrb[0].mxu0 %v863
        %v1345 = vpop.f32.mrb[0].mxu0
        %v1346 = vadd.f32 %v1121, %v1345
        %v1347 = vpop.f32.mrb[0].mxu0
        %1348 = vmatprep.mubr.f32.mxu0 0.0
        %1349 = vmatmul.mubr.f32.gmra.mrb[0].mxu0 %v796
        %v1350 = vpop.f32.mrb[0].mxu0
        %v1351 = vadd.f32 %v1126, %v1350
        %v1352 = vpop.f32.mrb[0].mxu0
        %1353 = vmatprep.mubr.f32.mxu0 0.0
        %1354 = vmatmul.mubr.f32.gmra.mrb[0].mxu0 %v864
        %v1355 = vpop.f32.mrb[0].mxu0
        %v1356 = vadd.f32 %v1131, %v1355
        %v1357 = vpop.f32.mrb[0].mxu0
        %1358 = vmatprep.mubr.f32.mxu0 0.0
        %1359 = vmatmul.mubr.f32.gmra.mrb[0].mxu0 %v799
        %v1360 = vpop.f32.mrb[0].mxu0
        %v1361 = vadd.f32 %v1136, %v1360
        %v1362 = vpop.f32.mrb[0].mxu0
        %1363 = vmatprep.mubr.f32.mxu0 0.0
        %1364 = vmatmul.mubr.f32.gmra.mrb[0].mxu0 %v865
        %v1365 = vpop.f32.mrb[0].mxu0
        %v1366 = vadd.f32 %v1141, %v1365
        %v1367 = vpop.f32.mrb[0].mxu0
        %1368 = vmatprep.mubr.f32.mxu0 0.0
        %1369 = vmatmul.mubr.f32.gmra.mrb[0].mxu0 %v802
        %v1370 = vpop.f32.mrb[0].mxu0
        %v1371 = vadd.f32 %v1146, %v1370
        %v1372 = vpop.f32.mrb[0].mxu0
        %1373 = vmatprep.mubr.f32.mxu0 0.0
        %1374 = vmatmul.mubr.f32.gmra.mrb[0].mxu0 %v866
        %v1375 = vpop.f32.mrb[0].mxu0
        %v1376 = vadd.f32 %v1151, %v1375
        %v1377 = vpop.f32.mrb[0].mxu0
        %1378 = vmatprep.mubr.f32.mxu0 0.0
        %1379 = vmatmul.mubr.f32.gmra.mrb[0].mxu0 %v805
        %v1380 = vpop.f32.mrb[0].mxu0
        %v1381 = vadd.f32 %v1156, %v1380
        %v1382 = vpop.f32.mrb[0].mxu0
        %1383 = vmatprep.mubr.f32.mxu0 0.0
        %1384 = vmatmul.mubr.f32.gmra.mrb[0].mxu0 %v867
        %v1385 = vpop.f32.mrb[0].mxu0
        %v1386 = vadd.f32 %v1161, %v1385
        %v1387 = vpop.f32.mrb[0].mxu0
        %1388 = vmatprep.mubr.f32.mxu0 0.0
        %1389 = vmatmul.mubr.f32.gmra.mrb[0].mxu0 %v808
        %v1390 = vpop.f32.mrb[0].mxu0
        %v1391 = vadd.f32 %v1166, %v1390
        %v1392 = vpop.f32.mrb[0].mxu0
        %1393 = vmatprep.mubr.f32.mxu0 0.0
        %1394 = vmatmul.mubr.f32.gmra.mrb[0].mxu0 %v868
        %v1395 = vpop.f32.mrb[0].mxu0
        %v1396 = vadd.f32 %v1171, %v1395
        %v1397 = vpop.f32.mrb[0].mxu0
        %1398 = vmatprep.mubr.f32.mxu0 0.0
        %1399 = vmatmul.mubr.f32.gmra.mrb[0].mxu0 %v811
        %v1400 = vpop.f32.mrb[0].mxu0
        %v1401 = vadd.f32 %v1176, %v1400
        %v1402 = vpop.f32.mrb[0].mxu0
        %1403 = vmatprep.mubr.f32.mxu0 0.0
        %1404 = vmatmul.mubr.f32.gmra.mrb[0].mxu0 %v869
        %v1405 = vpop.f32.mrb[0].mxu0
        %v1406 = vadd.f32 %v1181, %v1405
        %v1407 = vpop.f32.mrb[0].mxu0
        %1408 = vmatprep.mubr.f32.mxu0 0.0
        %1409 = vmatmul.mubr.f32.gmra.mrb[0].mxu0 %v814
        %v1410 = vpop.f32.mrb[0].mxu0
        %v1411 = vadd.f32 %v1186, %v1410
        %v1412 = vpop.f32.mrb[0].mxu0
        %1413 = vmatprep.mubr.f32.mxu0 0.0
        %1414 = vmatmul.mubr.f32.gmra.mrb[0].mxu0 %v870
        %v1415 = vpop.f32.mrb[0].mxu0
        %v1416 = vadd.f32 %v1191, %v1415
        %v1417 = vpop.f32.mrb[0].mxu0
        %1418 = vdwg.mxu0
        %1419 = vmatprep.subr.mxu0 0.0
        %1420 = vmatpush1.msra.mxu0 %v872
        %1421 = vmatprep.subr.mxu0 0.0
        %1422 = vmatpush1.msra.mxu0 %v873
        %1423 = vmatprep.subr.mxu0 0.0
        %1424 = vmatpush1.msra.mxu0 %v874
        %1425 = vmatprep.subr.mxu0 0.0
        %1426 = vmatpush1.msra.mxu0 %v875
        %1427 = vmatprep.subr.mxu0 0.0
        %1428 = vmatpush1.msra.mxu0 %v876
        %1429 = vmatprep.subr.mxu0 0.0
        %1430 = vmatpush1.msra.mxu0 %v877
        %1431 = vmatprep.subr.mxu0 0.0
        %1432 = vmatpush1.msra.mxu0 %v878
        %1433 = vmatprep.subr.mxu0 0.0
        %1434 = vmatpush1.msra.mxu0 %v879
        %1435 = vmatprep.subr.mxu0 0.0
        %1436 = vmatpush1.msra.mxu0 %v880
        %1437 = vmatprep.subr.mxu0 0.0
        %1438 = vmatpush1.msra.mxu0 %v881
        %1439 = vmatprep.subr.mxu0 0.0
        %1440 = vmatpush1.msra.mxu0 %v882
        %1441 = vmatprep.subr.mxu0 0.0
        %1442 = vmatpush1.msra.mxu0 %v883
        %1443 = vmatprep.subr.mxu0 0.0
        %1444 = vmatpush1.msra.mxu0 %v884
        %1445 = vmatprep.subr.mxu0 0.0
        %1446 = vmatpush1.msra.mxu0 %v885
        %1447 = vmatprep.subr.mxu0 0.0
        %1448 = vmatpush1.msra.mxu0 %v886
        %1449 = vmatprep.subr.mxu0 0.0
        %1450 = vmatpush1.msra.mxu0 %v887
        %1451 = vmatprep.subr.mxu0 0.0
        %1452 = vmatpush1.msra.mxu0 %v888
        %1453 = vmatprep.subr.mxu0 0.0
        %1454 = vmatpush1.msra.mxu0 %v889
        %1455 = vmatprep.subr.mxu0 0.0
        %1456 = vmatpush1.msra.mxu0 %v890
        %1457 = vmatprep.subr.mxu0 0.0
        %1458 = vmatpush1.msra.mxu0 %v891
        %1459 = vmatprep.subr.mxu0 0.0
        %1460 = vmatpush1.msra.mxu0 %v892
        %1461 = vmatprep.subr.mxu0 0.0
        %1462 = vmatpush1.msra.mxu0 %v893
        %1463 = vmatprep.subr.mxu0 0.0
        %1464 = vmatpush1.msra.mxu0 %v894
        %1465 = vmatprep.subr.mxu0 0.0
        %1466 = vmatpush1.msra.mxu0 %v895
        %1467 = vmatprep.subr.mxu0 0.0
        %1468 = vmatpush1.msra.mxu0 %v896
        %1469 = vmatprep.subr.mxu0 0.0
        %1470 = vmatpush1.msra.mxu0 %v897
        %1471 = vmatprep.subr.mxu0 0.0
        %1472 = vmatpush1.msra.mxu0 %v898
        %1473 = vmatprep.subr.mxu0 0.0
        %1474 = vmatpush1.msra.mxu0 %v899
        %1475 = vmatprep.subr.mxu0 0.0
        %1476 = vmatpush1.msra.mxu0 %v900
        %1477 = vmatprep.subr.mxu0 0.0
        %1478 = vmatpush1.msra.mxu0 %v901
        %1479 = vmatprep.subr.mxu0 0.0
        %1480 = vmatpush1.msra.mxu0 %v902
        %1481 = vmatprep.subr.mxu0 0.0
        %1482 = vmatpush1.msra.mxu0 %v903
        %1483 = vmatprep.mubr.f32.mxu0 %v582
        %1484 = vmatmul.mubr.f32.gmra.mrb[0].mxu0 %v745
        %v1485 = vpop.f32.mrb[0].mxu0
        %v1486 = vadd.f32 %v1261, %v1485
        %v1487 = vpop.f32.mrb[0].mxu0
        %1488 = vmatprep.mubr.f32.mxu0 %v583
        %1489 = vmatmul.mubr.f32.gmra.mrb[0].mxu0 %v657
        %v1490 = vpop.f32.mrb[0].mxu0
        %v1491 = vadd.f32 %v1266, %v1490
        %v1492 = vpop.f32.mrb[0].mxu0
        %1493 = vmatprep.mubr.f32.mxu0 %v584
        %1494 = vmatmul.mubr.f32.gmra.mrb[0].mxu0 %v746
        %v1495 = vpop.f32.mrb[0].mxu0
        %v1496 = vadd.f32 %v1271, %v1495
        %v1497 = vpop.f32.mrb[0].mxu0
        %1498 = vmatprep.mubr.f32.mxu0 %v585
        %1499 = vmatmul.mubr.f32.gmra.mrb[0].mxu0 %v660
        %v1500 = vpop.f32.mrb[0].mxu0
        %v1501 = vadd.f32 %v1276, %v1500
        %v1502 = vpop.f32.mrb[0].mxu0
        %1503 = vmatprep.mubr.f32.mxu0 %v586
        %1504 = vmatmul.mubr.f32.gmra.mrb[0].mxu0 %v747
        %v1505 = vpop.f32.mrb[0].mxu0
        %v1506 = vadd.f32 %v1281, %v1505
        %v1507 = vpop.f32.mrb[0].mxu0
        %1508 = vmatprep.mubr.f32.mxu0 %v587
        %1509 = vmatmul.mubr.f32.gmra.mrb[0].mxu0 %v663
        %v1510 = vpop.f32.mrb[0].mxu0
        %v1511 = vadd.f32 %v1286, %v1510
        %v1512 = vpop.f32.mrb[0].mxu0
        %1513 = vmatprep.mubr.f32.mxu0 %v588
        %1514 = vmatmul.mubr.f32.gmra.mrb[0].mxu0 %v748
        %v1515 = vpop.f32.mrb[0].mxu0
        %v1516 = vadd.f32 %v1291, %v1515
        %v1517 = vpop.f32.mrb[0].mxu0
        %1518 = vmatprep.mubr.f32.mxu0 %v589
        %1519 = vmatmul.mubr.f32.gmra.mrb[0].mxu0 %v666
        %v1520 = vpop.f32.mrb[0].mxu0
        %v1521 = vadd.f32 %v1296, %v1520
        %v1522 = vpop.f32.mrb[0].mxu0
        %1523 = vmatprep.mubr.f32.mxu0 %v590
        %1524 = vmatmul.mubr.f32.gmra.mrb[0].mxu0 %v749
        %v1525 = vpop.f32.mrb[0].mxu0
        %v1526 = vadd.f32 %v1301, %v1525
        %v1527 = vpop.f32.mrb[0].mxu0
        %1528 = vmatprep.mubr.f32.mxu0 %v591
        %1529 = vmatmul.mubr.f32.gmra.mrb[0].mxu0 %v669
        %v1530 = vpop.f32.mrb[0].mxu0
        %v1531 = vadd.f32 %v1306, %v1530
        %v1532 = vpop.f32.mrb[0].mxu0
        %1533 = vmatprep.mubr.f32.mxu0 %v592
        %1534 = vmatmul.mubr.f32.gmra.mrb[0].mxu0 %v750
        %v1535 = vpop.f32.mrb[0].mxu0
        %v1536 = vadd.f32 %v1311, %v1535
        %v1537 = vpop.f32.mrb[0].mxu0
        %1538 = vmatprep.mubr.f32.mxu0 %v593
        %1539 = vmatmul.mubr.f32.gmra.mrb[0].mxu0 %v672
        %v1540 = vpop.f32.mrb[0].mxu0
        %v1541 = vadd.f32 %v1316, %v1540
        %v1542 = vpop.f32.mrb[0].mxu0
        %1543 = vmatprep.mubr.f32.mxu0 %v594
        %1544 = vmatmul.mubr.f32.gmra.mrb[0].mxu0 %v751
        %v1545 = vpop.f32.mrb[0].mxu0
        %v1546 = vadd.f32 %v1321, %v1545
        %v1547 = vpop.f32.mrb[0].mxu0
        %1548 = vmatprep.mubr.f32.mxu0 %v595
        %1549 = vmatmul.mubr.f32.gmra.mrb[0].mxu0 %v675
        %v1550 = vpop.f32.mrb[0].mxu0
        %v1551 = vadd.f32 %v1326, %v1550
        %v1552 = vpop.f32.mrb[0].mxu0
        %1553 = vmatprep.mubr.f32.mxu0 %v596
        %1554 = vmatmul.mubr.f32.gmra.mrb[0].mxu0 %v752
        %v1555 = vpop.f32.mrb[0].mxu0
        %v1556 = vadd.f32 %v1331, %v1555
        %v1557 = vpop.f32.mrb[0].mxu0
        %1558 = vmatprep.mubr.f32.mxu0 %v597
        %1559 = vmatmul.mubr.f32.gmra.mrb[0].mxu0 %v678
        %v1560 = vpop.f32.mrb[0].mxu0
        %v1561 = vadd.f32 %v1336, %v1560
        %v1562 = vpop.f32.mrb[0].mxu0
        %1563 = vmatprep.mubr.f32.mxu0 %v598
        %1564 = vmatmul.mubr.f32.gmra.mrb[0].mxu0 %v753
        %v1565 = vpop.f32.mrb[0].mxu0
        %v1566 = vadd.f32 %v1341, %v1565
        %v1567 = vpop.f32.mrb[0].mxu0
        %1568 = vmatprep.mubr.f32.mxu0 %v599
        %1569 = vmatmul.mubr.f32.gmra.mrb[0].mxu0 %v681
        %v1570 = vpop.f32.mrb[0].mxu0
        %v1571 = vadd.f32 %v1346, %v1570
        %v1572 = vpop.f32.mrb[0].mxu0
        %1573 = vmatprep.mubr.f32.mxu0 %v600
        %1574 = vmatmul.mubr.f32.gmra.mrb[0].mxu0 %v754
        %v1575 = vpop.f32.mrb[0].mxu0
        %v1576 = vadd.f32 %v1351, %v1575
        %v1577 = vpop.f32.mrb[0].mxu0
        %1578 = vmatprep.mubr.f32.mxu0 %v601
        %1579 = vmatmul.mubr.f32.gmra.mrb[0].mxu0 %v684
        %v1580 = vpop.f32.mrb[0].mxu0
        %v1581 = vadd.f32 %v1356, %v1580
        %v1582 = vpop.f32.mrb[0].mxu0
        %1583 = vmatprep.mubr.f32.mxu0 %v602
        %1584 = vmatmul.mubr.f32.gmra.mrb[0].mxu0 %v755
        %v1585 = vpop.f32.mrb[0].mxu0
        %v1586 = vadd.f32 %v1361, %v1585
        %v1587 = vpop.f32.mrb[0].mxu0
        %1588 = vmatprep.mubr.f32.mxu0 %v603
        %1589 = vmatmul.mubr.f32.gmra.mrb[0].mxu0 %v687
        %v1590 = vpop.f32.mrb[0].mxu0
        %v1591 = vadd.f32 %v1366, %v1590
        %v1592 = vpop.f32.mrb[0].mxu0
        %1593 = vmatprep.mubr.f32.mxu0 %v604
        %1594 = vmatmul.mubr.f32.gmra.mrb[0].mxu0 %v756
        %v1595 = vpop.f32.mrb[0].mxu0
        %v1596 = vadd.f32 %v1371, %v1595
        %v1597 = vpop.f32.mrb[0].mxu0
        %1598 = vmatprep.mubr.f32.mxu0 %v605
        %1599 = vmatmul.mubr.f32.gmra.mrb[0].mxu0 %v690
        %v1600 = vpop.f32.mrb[0].mxu0
        %v1601 = vadd.f32 %v1376, %v1600
        %v1602 = vpop.f32.mrb[0].mxu0
        %1603 = vmatprep.mubr.f32.mxu0 %v606
        %1604 = vmatmul.mubr.f32.gmra.mrb[0].mxu0 %v757
        %v1605 = vpop.f32.mrb[0].mxu0
        %v1606 = vadd.f32 %v1381, %v1605
        %v1607 = vpop.f32.mrb[0].mxu0
        %1608 = vmatprep.mubr.f32.mxu0 %v607
        %1609 = vmatmul.mubr.f32.gmra.mrb[0].mxu0 %v693
        %v1610 = vpop.f32.mrb[0].mxu0
        %v1611 = vadd.f32 %v1386, %v1610
        %v1612 = vpop.f32.mrb[0].mxu0
        %1613 = vmatprep.mubr.f32.mxu0 %v608
        %1614 = vmatmul.mubr.f32.gmra.mrb[0].mxu0 %v758
        %v1615 = vpop.f32.mrb[0].mxu0
        %v1616 = vadd.f32 %v1391, %v1615
        %v1617 = vpop.f32.mrb[0].mxu0
        %1618 = vmatprep.mubr.f32.mxu0 %v609
        %1619 = vmatmul.mubr.f32.gmra.mrb[0].mxu0 %v696
        %v1620 = vpop.f32.mrb[0].mxu0
        %v1621 = vadd.f32 %v1396, %v1620
        %v1622 = vpop.f32.mrb[0].mxu0
        %1623 = vmatprep.mubr.f32.mxu0 %v610
        %1624 = vmatmul.mubr.f32.gmra.mrb[0].mxu0 %v759
        %v1625 = vpop.f32.mrb[0].mxu0
        %v1626 = vadd.f32 %v1401, %v1625
        %v1627 = vpop.f32.mrb[0].mxu0
        %1628 = vmatprep.mubr.f32.mxu0 %v611
        %1629 = vmatmul.mubr.f32.gmra.mrb[0].mxu0 %v699
        %v1630 = vpop.f32.mrb[0].mxu0
        %v1631 = vadd.f32 %v1406, %v1630
        %v1632 = vpop.f32.mrb[0].mxu0
        %1633 = vmatprep.mubr.f32.mxu0 %v612
        %1634 = vmatmul.mubr.f32.gmra.mrb[0].mxu0 %v760
        %v1635 = vpop.f32.mrb[0].mxu0
        %v1636 = vadd.f32 %v1411, %v1635
        %v1637 = vpop.f32.mrb[0].mxu0
        %1638 = vmatprep.mubr.f32.mxu0 %v613
        %1639 = vmatmul.mubr.f32.gmra.mrb[0].mxu0 %v702
        %v1640 = vpop.f32.mrb[0].mxu0
        %v1641 = vadd.f32 %v1416, %v1640
        %v1642 = vpop.f32.mrb[0].mxu0
        %1643 = vdwg.mxu0
        %1644 = vmatprep.subr.mxu0 0.0
        %1645 = vmatpush1.msra.mxu0 %v904
        %1646 = vmatprep.subr.mxu0 0.0
        %1647 = vmatpush1.msra.mxu0 %v905
        %1648 = vmatprep.subr.mxu0 0.0
        %1649 = vmatpush1.msra.mxu0 %v906
        %1650 = vmatprep.subr.mxu0 0.0
        %1651 = vmatpush1.msra.mxu0 %v907
        %1652 = vmatprep.subr.mxu0 0.0
        %1653 = vmatpush1.msra.mxu0 %v908
        %1654 = vmatprep.subr.mxu0 0.0
        %1655 = vmatpush1.msra.mxu0 %v909
        %1656 = vmatprep.subr.mxu0 0.0
        %1657 = vmatpush1.msra.mxu0 %v910
        %1658 = vmatprep.subr.mxu0 0.0
        %1659 = vmatpush1.msra.mxu0 %v911
        %1660 = vmatprep.subr.mxu0 0.0
        %1661 = vmatpush1.msra.mxu0 %v912
        %1662 = vmatprep.subr.mxu0 0.0
        %1663 = vmatpush1.msra.mxu0 %v913
        %1664 = vmatprep.subr.mxu0 0.0
        %1665 = vmatpush1.msra.mxu0 %v914
        %1666 = vmatprep.subr.mxu0 0.0
        %1667 = vmatpush1.msra.mxu0 %v915
        %1668 = vmatprep.subr.mxu0 0.0
        %1669 = vmatpush1.msra.mxu0 %v916
        %1670 = vmatprep.subr.mxu0 0.0
        %1671 = vmatpush1.msra.mxu0 %v917
        %1672 = vmatprep.subr.mxu0 0.0
        %1673 = vmatpush1.msra.mxu0 %v918
        %1674 = vmatprep.subr.mxu0 0.0
        %1675 = vmatpush1.msra.mxu0 %v919
        %1676 = vmatprep.subr.mxu0 0.0
        %1677 = vmatpush1.msra.mxu0 0.0
        %1678 = vmatprep.subr.mxu0 0.0
        %1679 = vmatpush1.msra.mxu0 0.0
        %1680 = vmatprep.subr.mxu0 0.0
        %1681 = vmatpush1.msra.mxu0 0.0
        %1682 = vmatprep.subr.mxu0 0.0
        %1683 = vmatpush1.msra.mxu0 0.0
        %1684 = vmatprep.subr.mxu0 0.0
        %1685 = vmatpush1.msra.mxu0 0.0
        %1686 = vmatprep.subr.mxu0 0.0
        %1687 = vmatpush1.msra.mxu0 0.0
        %1688 = vmatprep.subr.mxu0 0.0
        %1689 = vmatpush1.msra.mxu0 0.0
        %1690 = vmatprep.subr.mxu0 0.0
        %1691 = vmatpush1.msra.mxu0 0.0
        %1692 = vmatprep.subr.mxu0 0.0
        %1693 = vmatpush1.msra.mxu0 0.0
        %1694 = vmatprep.subr.mxu0 0.0
        %1695 = vmatpush1.msra.mxu0 0.0
        %1696 = vmatprep.subr.mxu0 0.0
        %1697 = vmatpush1.msra.mxu0 0.0
        %1698 = vmatprep.subr.mxu0 0.0
        %1699 = vmatpush1.msra.mxu0 0.0
        %1700 = vmatprep.subr.mxu0 0.0
        %1701 = vmatpush1.msra.mxu0 0.0
        %1702 = vmatprep.subr.mxu0 0.0
        %1703 = vmatpush1.msra.mxu0 0.0
        %1704 = vmatprep.subr.mxu0 0.0
        %1705 = vmatpush1.msra.mxu0 0.0
        %1706 = vmatprep.subr.mxu0 0.0
        %1707 = vmatpush1.msra.mxu0 0.0
        %1708 = vmatprep.mubr.f32.mxu0 0.0
        %1709 = vmatmul.mubr.f32.gmra.mrb[0].mxu0 %v766
        %v1710 = vpop.f32.mrb[0].mxu0
        %v1711 = vadd.f32 %v1486, %v1710
        %v1712 = vpop.f32.mrb[0].mxu0
        %1713 = vmatprep.mubr.f32.mxu0 0.0
        %1714 = vmatmul.mubr.f32.gmra.mrb[0].mxu0 %v854
        %v1715 = vpop.f32.mrb[0].mxu0
        %v1716 = vadd.f32 %v1491, %v1715
        %v1717 = vpop.f32.mrb[0].mxu0
        %1718 = vmatprep.mubr.f32.mxu0 0.0
        %1719 = vmatmul.mubr.f32.gmra.mrb[0].mxu0 %v769
        %v1720 = vpop.f32.mrb[0].mxu0
        %v1721 = vadd.f32 %v1496, %v1720
        %v1722 = vpop.f32.mrb[0].mxu0
        %1723 = vmatprep.mubr.f32.mxu0 0.0
        %1724 = vmatmul.mubr.f32.gmra.mrb[0].mxu0 %v855
        %v1725 = vpop.f32.mrb[0].mxu0
        %v1726 = vadd.f32 %v1501, %v1725
        %v1727 = vpop.f32.mrb[0].mxu0
        %1728 = vmatprep.mubr.f32.mxu0 0.0
        %1729 = vmatmul.mubr.f32.gmra.mrb[0].mxu0 %v772
        %v1730 = vpop.f32.mrb[0].mxu0
        %v1731 = vadd.f32 %v1506, %v1730
        %v1732 = vpop.f32.mrb[0].mxu0
        %1733 = vmatprep.mubr.f32.mxu0 0.0
        %1734 = vmatmul.mubr.f32.gmra.mrb[0].mxu0 %v856
        %v1735 = vpop.f32.mrb[0].mxu0
        %v1736 = vadd.f32 %v1511, %v1735
        %v1737 = vpop.f32.mrb[0].mxu0
        %1738 = vmatprep.mubr.f32.mxu0 0.0
        %1739 = vmatmul.mubr.f32.gmra.mrb[0].mxu0 %v775
        %v1740 = vpop.f32.mrb[0].mxu0
        %v1741 = vadd.f32 %v1516, %v1740
        %v1742 = vpop.f32.mrb[0].mxu0
        %1743 = vmatprep.mubr.f32.mxu0 0.0
        %1744 = vmatmul.mubr.f32.gmra.mrb[0].mxu0 %v857
        %v1745 = vpop.f32.mrb[0].mxu0
        %v1746 = vadd.f32 %v1521, %v1745
        %v1747 = vpop.f32.mrb[0].mxu0
        %1748 = vmatprep.mubr.f32.mxu0 0.0
        %1749 = vmatmul.mubr.f32.gmra.mrb[0].mxu0 %v778
        %v1750 = vpop.f32.mrb[0].mxu0
        %v1751 = vadd.f32 %v1526, %v1750
        %v1752 = vpop.f32.mrb[0].mxu0
        %1753 = vmatprep.mubr.f32.mxu0 0.0
        %1754 = vmatmul.mubr.f32.gmra.mrb[0].mxu0 %v858
        %v1755 = vpop.f32.mrb[0].mxu0
        %v1756 = vadd.f32 %v1531, %v1755
        %v1757 = vpop.f32.mrb[0].mxu0
        %1758 = vmatprep.mubr.f32.mxu0 0.0
        %1759 = vmatmul.mubr.f32.gmra.mrb[0].mxu0 %v781
        %v1760 = vpop.f32.mrb[0].mxu0
        %v1761 = vadd.f32 %v1536, %v1760
        %v1762 = vpop.f32.mrb[0].mxu0
        %1763 = vmatprep.mubr.f32.mxu0 0.0
        %1764 = vmatmul.mubr.f32.gmra.mrb[0].mxu0 %v859
        %v1765 = vpop.f32.mrb[0].mxu0
        %v1766 = vadd.f32 %v1541, %v1765
        %v1767 = vpop.f32.mrb[0].mxu0
        %1768 = vmatprep.mubr.f32.mxu0 0.0
        %1769 = vmatmul.mubr.f32.gmra.mrb[0].mxu0 %v784
        %v1770 = vpop.f32.mrb[0].mxu0
        %v1771 = vadd.f32 %v1546, %v1770
        %v1772 = vpop.f32.mrb[0].mxu0
        %1773 = vmatprep.mubr.f32.mxu0 0.0
        %1774 = vmatmul.mubr.f32.gmra.mrb[0].mxu0 %v860
        %v1775 = vpop.f32.mrb[0].mxu0
        %v1776 = vadd.f32 %v1551, %v1775
        %v1777 = vpop.f32.mrb[0].mxu0
        %1778 = vmatprep.mubr.f32.mxu0 0.0
        %1779 = vmatmul.mubr.f32.gmra.mrb[0].mxu0 %v787
        %v1780 = vpop.f32.mrb[0].mxu0
        %v1781 = vadd.f32 %v1556, %v1780
        %v1782 = vpop.f32.mrb[0].mxu0
        %1783 = vmatprep.mubr.f32.mxu0 0.0
        %1784 = vmatmul.mubr.f32.gmra.mrb[0].mxu0 %v861
        %v1785 = vpop.f32.mrb[0].mxu0
        %v1786 = vadd.f32 %v1561, %v1785
        %v1787 = vpop.f32.mrb[0].mxu0
        %1788 = vmatprep.mubr.f32.mxu0 0.0
        %1789 = vmatmul.mubr.f32.gmra.mrb[0].mxu0 %v790
        %v1790 = vpop.f32.mrb[0].mxu0
        %v1791 = vadd.f32 %v1566, %v1790
        %v1792 = vpop.f32.mrb[0].mxu0
        %1793 = vmatprep.mubr.f32.mxu0 0.0
        %1794 = vmatmul.mubr.f32.gmra.mrb[0].mxu0 %v862
        %v1795 = vpop.f32.mrb[0].mxu0
        %v1796 = vadd.f32 %v1571, %v1795
        %v1797 = vpop.f32.mrb[0].mxu0
        %1798 = vmatprep.mubr.f32.mxu0 0.0
        %1799 = vmatmul.mubr.f32.gmra.mrb[0].mxu0 %v793
        %v1800 = vpop.f32.mrb[0].mxu0
        %v1801 = vadd.f32 %v1576, %v1800
        %v1802 = vpop.f32.mrb[0].mxu0
        %1803 = vmatprep.mubr.f32.mxu0 0.0
        %1804 = vmatmul.mubr.f32.gmra.mrb[0].mxu0 %v863
        %v1805 = vpop.f32.mrb[0].mxu0
        %v1806 = vadd.f32 %v1581, %v1805
        %v1807 = vpop.f32.mrb[0].mxu0
        %1808 = vmatprep.mubr.f32.mxu0 0.0
        %1809 = vmatmul.mubr.f32.gmra.mrb[0].mxu0 %v796
        %v1810 = vpop.f32.mrb[0].mxu0
        %v1811 = vadd.f32 %v1586, %v1810
        %v1812 = vpop.f32.mrb[0].mxu0
        %1813 = vmatprep.mubr.f32.mxu0 0.0
        %1814 = vmatmul.mubr.f32.gmra.mrb[0].mxu0 %v864
        %v1815 = vpop.f32.mrb[0].mxu0
        %v1816 = vadd.f32 %v1591, %v1815
        %v1817 = vpop.f32.mrb[0].mxu0
        %1818 = vmatprep.mubr.f32.mxu0 0.0
        %1819 = vmatmul.mubr.f32.gmra.mrb[0].mxu0 %v799
        %v1820 = vpop.f32.mrb[0].mxu0
        %v1821 = vadd.f32 %v1596, %v1820
        %v1822 = vpop.f32.mrb[0].mxu0
        %1823 = vmatprep.mubr.f32.mxu0 0.0
        %1824 = vmatmul.mubr.f32.gmra.mrb[0].mxu0 %v865
        %v1825 = vpop.f32.mrb[0].mxu0
        %v1826 = vadd.f32 %v1601, %v1825
        %v1827 = vpop.f32.mrb[0].mxu0
        %1828 = vmatprep.mubr.f32.mxu0 0.0
        %1829 = vmatmul.mubr.f32.gmra.mrb[0].mxu0 %v802
        %v1830 = vpop.f32.mrb[0].mxu0
        %v1831 = vadd.f32 %v1606, %v1830
        %v1832 = vpop.f32.mrb[0].mxu0
        %1833 = vmatprep.mubr.f32.mxu0 0.0
        %1834 = vmatmul.mubr.f32.gmra.mrb[0].mxu0 %v866
        %v1835 = vpop.f32.mrb[0].mxu0
        %v1836 = vadd.f32 %v1611, %v1835
        %v1837 = vpop.f32.mrb[0].mxu0
        %1838 = vmatprep.mubr.f32.mxu0 0.0
        %1839 = vmatmul.mubr.f32.gmra.mrb[0].mxu0 %v805
        %v1840 = vpop.f32.mrb[0].mxu0
        %v1841 = vadd.f32 %v1616, %v1840
        %v1842 = vpop.f32.mrb[0].mxu0
        %1843 = vmatprep.mubr.f32.mxu0 0.0
        %1844 = vmatmul.mubr.f32.gmra.mrb[0].mxu0 %v867
        %v1845 = vpop.f32.mrb[0].mxu0
        %v1846 = vadd.f32 %v1621, %v1845
        %v1847 = vpop.f32.mrb[0].mxu0
        %1848 = vmatprep.mubr.f32.mxu0 0.0
        %1849 = vmatmul.mubr.f32.gmra.mrb[0].mxu0 %v808
        %v1850 = vpop.f32.mrb[0].mxu0
        %v1851 = vadd.f32 %v1626, %v1850
        %v1852 = vpop.f32.mrb[0].mxu0
        %1853 = vmatprep.mubr.f32.mxu0 0.0
        %1854 = vmatmul.mubr.f32.gmra.mrb[0].mxu0 %v868
        %v1855 = vpop.f32.mrb[0].mxu0
        %v1856 = vadd.f32 %v1631, %v1855
        %v1857 = vpop.f32.mrb[0].mxu0
        %1858 = vmatprep.mubr.f32.mxu0 0.0
        %1859 = vmatmul.mubr.f32.gmra.mrb[0].mxu0 %v811
        %v1860 = vpop.f32.mrb[0].mxu0
        %v1861 = vadd.f32 %v1636, %v1860
        %v1862 = vpop.f32.mrb[0].mxu0
        %1863 = vmatprep.mubr.f32.mxu0 0.0
        %1864 = vmatmul.mubr.f32.gmra.mrb[0].mxu0 %v869
        %v1865 = vpop.f32.mrb[0].mxu0
        %v1866 = vadd.f32 %v1641, %v1865
        %v1867 = vpop.f32.mrb[0].mxu0
        %1868 = vdwg.mxu0
        %s1869 = scalar_lea.vmem [#allocation4], 768
        %v1870 = vld [vmem:[%s1869] sm:$0xff]
        %v1871 = vld [vmem:[%s1869 + $0x8] sm:$0xff]
        %v1872 = vld [vmem:[%s1869 + $0x10] sm:$0xff]
        %v1873 = vld [vmem:[%s1869 + $0x18] sm:$0xff]
        %v1874 = vld [vmem:[%s1869 + $0x20] sm:$0xff]
        %v1875 = vld [vmem:[%s1869 + $0x28] sm:$0xff]
        %v1876 = vld [vmem:[%s1869 + $0x30] sm:$0xff]
        %v1877 = vld [vmem:[%s1869 + $0x38] sm:$0xff]
        %v1878 = vld [vmem:[%s1869 + $0x40] sm:$0xff]
        %v1879 = vld [vmem:[%s1869 + $0x48] sm:$0xff]
        %v1880 = vld [vmem:[%s1869 + $0x50] sm:$0xff]
        %v1881 = vld [vmem:[%s1869 + $0x58] sm:$0xff]
        %v1882 = vld [vmem:[%s1869 + $0x60] sm:$0xff]
        %v1883 = vld [vmem:[%s1869 + $0x68] sm:$0xff]
        %v1884 = vld [vmem:[%s1869 + $0x70] sm:$0xff]
        %v1885 = vld [vmem:[%s1869 + $0x78] sm:$0xff]
        %v1886 = vld [vmem:[%s1869 + $0x80] sm:$0xff]
        %v1887 = vld [vmem:[%s1869 + $0x88] sm:$0xff]
        %v1888 = vld [vmem:[%s1869 + $0x90] sm:$0xff]
        %v1889 = vld [vmem:[%s1869 + $0x98] sm:$0xff]
        %v1890 = vld [vmem:[%s1869 + $0xa0] sm:$0xff]
        %v1891 = vld [vmem:[%s1869 + $0xa8] sm:$0xff]
        %v1892 = vld [vmem:[%s1869 + $0xb0] sm:$0xff]
        %v1893 = vld [vmem:[%s1869 + $0xb8] sm:$0xff]
        %v1894 = vld [vmem:[%s1869 + $0xc0] sm:$0xff]
        %v1895 = vld [vmem:[%s1869 + $0xc8] sm:$0xff]
        %v1896 = vld [vmem:[%s1869 + $0xd0] sm:$0xff]
        %v1897 = vld [vmem:[%s1869 + $0xd8] sm:$0xff]
        %v1898 = vld [vmem:[%s1869 + $0xe0] sm:$0xff]
        %v1899 = vld [vmem:[%s1869 + $0xe8] sm:$0xff]
        %v1900 = vld [vmem:[%s1869 + $0xf0] sm:$0xff]
        %v1901 = vld [vmem:[%s1869 + $0xf8] sm:$0xff]
        %v1902 = vld [vmem:[%s1869 + $0x100] sm:$0xff]
        %v1903 = vld [vmem:[%s1869 + $0x108] sm:$0xff]
        %v1904 = vld [vmem:[%s1869 + $0x110] sm:$0xff]
        %v1905 = vld [vmem:[%s1869 + $0x118] sm:$0xff]
        %v1906 = vld [vmem:[%s1869 + $0x120] sm:$0xff]
        %v1907 = vld [vmem:[%s1869 + $0x128] sm:$0xff]
        %v1908 = vld [vmem:[%s1869 + $0x130] sm:$0xff]
        %v1909 = vld [vmem:[%s1869 + $0x138] sm:$0xff]
        %v1910 = vld [vmem:[%s1869 + $0x140] sm:$0xff]
        %v1911 = vld [vmem:[%s1869 + $0x148] sm:$0xff]
        %v1912 = vld [vmem:[%s1869 + $0x150] sm:$0xff]
        %v1913 = vld [vmem:[%s1869 + $0x158] sm:$0xff]
        %v1914 = vld [vmem:[%s1869 + $0x160] sm:$0xff]
        %v1915 = vld [vmem:[%s1869 + $0x168] sm:$0xff]
        %v1916 = vld [vmem:[%s1869 + $0x170] sm:$0xff]
        %v1917 = vld [vmem:[%s1869 + $0x178] sm:$0xff]
        %1918 = vmatprep.subr.mxu0 0.0
        %1919 = vmatpush1.msra.mxu0 %v1870
        %1920 = vmatprep.subr.mxu0 0.0
        %1921 = vmatpush1.msra.mxu0 %v1871
        %1922 = vmatprep.subr.mxu0 0.0
        %1923 = vmatpush1.msra.mxu0 %v1872
        %1924 = vmatprep.subr.mxu0 0.0
        %1925 = vmatpush1.msra.mxu0 %v1873
        %1926 = vmatprep.subr.mxu0 0.0
        %1927 = vmatpush1.msra.mxu0 %v1874
        %1928 = vmatprep.subr.mxu0 0.0
        %1929 = vmatpush1.msra.mxu0 %v1875
        %1930 = vmatprep.subr.mxu0 0.0
        %1931 = vmatpush1.msra.mxu0 %v1876
        %1932 = vmatprep.subr.mxu0 0.0
        %1933 = vmatpush1.msra.mxu0 %v1877
        %1934 = vmatprep.subr.mxu0 0.0
        %1935 = vmatpush1.msra.mxu0 %v1878
        %1936 = vmatprep.subr.mxu0 0.0
        %1937 = vmatpush1.msra.mxu0 %v1879
        %1938 = vmatprep.subr.mxu0 0.0
        %1939 = vmatpush1.msra.mxu0 %v1880
        %1940 = vmatprep.subr.mxu0 0.0
        %1941 = vmatpush1.msra.mxu0 %v1881
        %1942 = vmatprep.subr.mxu0 0.0
        %1943 = vmatpush1.msra.mxu0 %v1882
        %1944 = vmatprep.subr.mxu0 0.0
        %1945 = vmatpush1.msra.mxu0 %v1883
        %1946 = vmatprep.subr.mxu0 0.0
        %1947 = vmatpush1.msra.mxu0 %v1884
        %1948 = vmatprep.subr.mxu0 0.0
        %1949 = vmatpush1.msra.mxu0 %v1885
        %1950 = vmatprep.subr.mxu0 0.0
        %1951 = vmatpush1.msra.mxu0 %v1886
        %1952 = vmatprep.subr.mxu0 0.0
        %1953 = vmatpush1.msra.mxu0 %v1887
        %1954 = vmatprep.subr.mxu0 0.0
        %1955 = vmatpush1.msra.mxu0 %v1888
        %1956 = vmatprep.subr.mxu0 0.0
        %1957 = vmatpush1.msra.mxu0 %v1889
        %1958 = vmatprep.subr.mxu0 0.0
        %1959 = vmatpush1.msra.mxu0 %v1890
        %1960 = vmatprep.subr.mxu0 0.0
        %1961 = vmatpush1.msra.mxu0 %v1891
        %1962 = vmatprep.subr.mxu0 0.0
        %1963 = vmatpush1.msra.mxu0 %v1892
        %1964 = vmatprep.subr.mxu0 0.0
        %1965 = vmatpush1.msra.mxu0 %v1893
        %1966 = vmatprep.subr.mxu0 0.0
        %1967 = vmatpush1.msra.mxu0 %v1894
        %1968 = vmatprep.subr.mxu0 0.0
        %1969 = vmatpush1.msra.mxu0 %v1895
        %1970 = vmatprep.subr.mxu0 0.0
        %1971 = vmatpush1.msra.mxu0 %v1896
        %1972 = vmatprep.subr.mxu0 0.0
        %1973 = vmatpush1.msra.mxu0 %v1897
        %1974 = vmatprep.subr.mxu0 0.0
        %1975 = vmatpush1.msra.mxu0 %v1898
        %1976 = vmatprep.subr.mxu0 0.0
        %1977 = vmatpush1.msra.mxu0 %v1899
        %1978 = vmatprep.subr.mxu0 0.0
        %1979 = vmatpush1.msra.mxu0 %v1900
        %1980 = vmatprep.subr.mxu0 0.0
        %1981 = vmatpush1.msra.mxu0 %v1901
        %1982 = vmatprep.mubr.f32.mxu0 %v586
        %1983 = vmatmul.mubr.f32.gmra.mrb[0].mxu0 %v747
        %v1984 = vpop.f32.mrb[0].mxu0
        %v1985 = vadd.f32 0.0, %v1984
        %v1986 = vpop.f32.mrb[0].mxu0
        %1987 = vmatprep.mubr.f32.mxu0 %v587
        %1988 = vmatmul.mubr.f32.gmra.mrb[0].mxu0 %v663
        %v1989 = vpop.f32.mrb[0].mxu0
        %v1990 = vadd.f32 0.0, %v1989
        %v1991 = vpop.f32.mrb[0].mxu0
        %1992 = vmatprep.mubr.f32.mxu0 %v588
        %1993 = vmatmul.mubr.f32.gmra.mrb[0].mxu0 %v748
        %v1994 = vpop.f32.mrb[0].mxu0
        %v1995 = vadd.f32 0.0, %v1994
        %v1996 = vpop.f32.mrb[0].mxu0
        %1997 = vmatprep.mubr.f32.mxu0 %v589
        %1998 = vmatmul.mubr.f32.gmra.mrb[0].mxu0 %v666
        %v1999 = vpop.f32.mrb[0].mxu0
        %v2000 = vadd.f32 0.0, %v1999
        %v2001 = vpop.f32.mrb[0].mxu0
        %2002 = vmatprep.mubr.f32.mxu0 %v590
        %2003 = vmatmul.mubr.f32.gmra.mrb[0].mxu0 %v749
        %v2004 = vpop.f32.mrb[0].mxu0
        %v2005 = vadd.f32 0.0, %v2004
        %v2006 = vpop.f32.mrb[0].mxu0
        %2007 = vmatprep.mubr.f32.mxu0 %v591
        %2008 = vmatmul.mubr.f32.gmra.mrb[0].mxu0 %v669
        %v2009 = vpop.f32.mrb[0].mxu0
        %v2010 = vadd.f32 0.0, %v2009
        %v2011 = vpop.f32.mrb[0].mxu0
        %2012 = vmatprep.mubr.f32.mxu0 %v592
        %2013 = vmatmul.mubr.f32.gmra.mrb[0].mxu0 %v750
        %v2014 = vpop.f32.mrb[0].mxu0
        %v2015 = vadd.f32 0.0, %v2014
        %v2016 = vpop.f32.mrb[0].mxu0
        %2017 = vmatprep.mubr.f32.mxu0 %v593
        %2018 = vmatmul.mubr.f32.gmra.mrb[0].mxu0 %v672
        %v2019 = vpop.f32.mrb[0].mxu0
        %v2020 = vadd.f32 0.0, %v2019
        %v2021 = vpop.f32.mrb[0].mxu0
        %2022 = vmatprep.mubr.f32.mxu0 %v594
        %2023 = vmatmul.mubr.f32.gmra.mrb[0].mxu0 %v751
        %v2024 = vpop.f32.mrb[0].mxu0
        %v2025 = vadd.f32 0.0, %v2024
        %v2026 = vpop.f32.mrb[0].mxu0
        %2027 = vmatprep.mubr.f32.mxu0 %v595
        %2028 = vmatmul.mubr.f32.gmra.mrb[0].mxu0 %v675
        %v2029 = vpop.f32.mrb[0].mxu0
        %v2030 = vadd.f32 0.0, %v2029
        %v2031 = vpop.f32.mrb[0].mxu0
        %2032 = vmatprep.mubr.f32.mxu0 %v596
        %2033 = vmatmul.mubr.f32.gmra.mrb[0].mxu0 %v752
        %v2034 = vpop.f32.mrb[0].mxu0
        %v2035 = vadd.f32 0.0, %v2034
        %v2036 = vpop.f32.mrb[0].mxu0
        %2037 = vmatprep.mubr.f32.mxu0 %v597
        %2038 = vmatmul.mubr.f32.gmra.mrb[0].mxu0 %v678
        %v2039 = vpop.f32.mrb[0].mxu0
        %v2040 = vadd.f32 0.0, %v2039
        %v2041 = vpop.f32.mrb[0].mxu0
        %2042 = vmatprep.mubr.f32.mxu0 %v598
        %2043 = vmatmul.mubr.f32.gmra.mrb[0].mxu0 %v753
        %v2044 = vpop.f32.mrb[0].mxu0
        %v2045 = vadd.f32 0.0, %v2044
        %v2046 = vpop.f32.mrb[0].mxu0
        %2047 = vmatprep.mubr.f32.mxu0 %v599
        %2048 = vmatmul.mubr.f32.gmra.mrb[0].mxu0 %v681
        %v2049 = vpop.f32.mrb[0].mxu0
        %v2050 = vadd.f32 0.0, %v2049
        %v2051 = vpop.f32.mrb[0].mxu0
        %2052 = vmatprep.mubr.f32.mxu0 %v600
        %2053 = vmatmul.mubr.f32.gmra.mrb[0].mxu0 %v754
        %v2054 = vpop.f32.mrb[0].mxu0
        %v2055 = vadd.f32 0.0, %v2054
        %v2056 = vpop.f32.mrb[0].mxu0
        %2057 = vmatprep.mubr.f32.mxu0 %v601
        %2058 = vmatmul.mubr.f32.gmra.mrb[0].mxu0 %v684
        %v2059 = vpop.f32.mrb[0].mxu0
        %v2060 = vadd.f32 0.0, %v2059
        %v2061 = vpop.f32.mrb[0].mxu0
        %2062 = vmatprep.mubr.f32.mxu0 %v602
        %2063 = vmatmul.mubr.f32.gmra.mrb[0].mxu0 %v755
        %v2064 = vpop.f32.mrb[0].mxu0
        %v2065 = vadd.f32 0.0, %v2064
        %v2066 = vpop.f32.mrb[0].mxu0
        %2067 = vmatprep.mubr.f32.mxu0 %v603
        %2068 = vmatmul.mubr.f32.gmra.mrb[0].mxu0 %v687
        %v2069 = vpop.f32.mrb[0].mxu0
        %v2070 = vadd.f32 0.0, %v2069
        %v2071 = vpop.f32.mrb[0].mxu0
        %2072 = vmatprep.mubr.f32.mxu0 %v604
        %2073 = vmatmul.mubr.f32.gmra.mrb[0].mxu0 %v756
        %v2074 = vpop.f32.mrb[0].mxu0
        %v2075 = vadd.f32 0.0, %v2074
        %v2076 = vpop.f32.mrb[0].mxu0
        %2077 = vmatprep.mubr.f32.mxu0 %v605
        %2078 = vmatmul.mubr.f32.gmra.mrb[0].mxu0 %v690
        %v2079 = vpop.f32.mrb[0].mxu0
        %v2080 = vadd.f32 0.0, %v2079
        %v2081 = vpop.f32.mrb[0].mxu0
        %2082 = vmatprep.mubr.f32.mxu0 %v606
        %2083 = vmatmul.mubr.f32.gmra.mrb[0].mxu0 %v757
        %v2084 = vpop.f32.mrb[0].mxu0
        %v2085 = vadd.f32 0.0, %v2084
        %v2086 = vpop.f32.mrb[0].mxu0
        %2087 = vmatprep.mubr.f32.mxu0 %v607
        %2088 = vmatmul.mubr.f32.gmra.mrb[0].mxu0 %v693
        %v2089 = vpop.f32.mrb[0].mxu0
        %v2090 = vadd.f32 0.0, %v2089
        %v2091 = vpop.f32.mrb[0].mxu0
        %2092 = vmatprep.mubr.f32.mxu0 %v608
        %2093 = vmatmul.mubr.f32.gmra.mrb[0].mxu0 %v758
        %v2094 = vpop.f32.mrb[0].mxu0
        %v2095 = vadd.f32 0.0, %v2094
        %v2096 = vpop.f32.mrb[0].mxu0
        %2097 = vmatprep.mubr.f32.mxu0 %v609
        %2098 = vmatmul.mubr.f32.gmra.mrb[0].mxu0 %v696
        %v2099 = vpop.f32.mrb[0].mxu0
        %v2100 = vadd.f32 0.0, %v2099
        %v2101 = vpop.f32.mrb[0].mxu0
        %2102 = vmatprep.mubr.f32.mxu0 %v610
        %2103 = vmatmul.mubr.f32.gmra.mrb[0].mxu0 %v759
        %v2104 = vpop.f32.mrb[0].mxu0
        %v2105 = vadd.f32 0.0, %v2104
        %v2106 = vpop.f32.mrb[0].mxu0
        %2107 = vmatprep.mubr.f32.mxu0 %v611
        %2108 = vmatmul.mubr.f32.gmra.mrb[0].mxu0 %v699
        %v2109 = vpop.f32.mrb[0].mxu0
        %v2110 = vadd.f32 0.0, %v2109
        %v2111 = vpop.f32.mrb[0].mxu0
        %2112 = vmatprep.mubr.f32.mxu0 %v612
        %2113 = vmatmul.mubr.f32.gmra.mrb[0].mxu0 %v760
        %v2114 = vpop.f32.mrb[0].mxu0
        %v2115 = vadd.f32 0.0, %v2114
        %v2116 = vpop.f32.mrb[0].mxu0
        %2117 = vmatprep.mubr.f32.mxu0 %v613
        %2118 = vmatmul.mubr.f32.gmra.mrb[0].mxu0 %v702
        %v2119 = vpop.f32.mrb[0].mxu0
        %v2120 = vadd.f32 0.0, %v2119
        %v2121 = vpop.f32.mrb[0].mxu0
        %2122 = vmatprep.mubr.f32.mxu0 %v614
        %2123 = vmatmul.mubr.f32.gmra.mrb[0].mxu0 %v761
        %v2124 = vpop.f32.mrb[0].mxu0
        %v2125 = vadd.f32 0.0, %v2124
        %v2126 = vpop.f32.mrb[0].mxu0
        %2127 = vmatprep.mubr.f32.mxu0 %v615
        %2128 = vmatmul.mubr.f32.gmra.mrb[0].mxu0 %v705
        %v2129 = vpop.f32.mrb[0].mxu0
        %v2130 = vadd.f32 0.0, %v2129
        %v2131 = vpop.f32.mrb[0].mxu0
        %2132 = vmatprep.mubr.f32.mxu0 %v616
        %2133 = vmatmul.mubr.f32.gmra.mrb[0].mxu0 %v762
        %v2134 = vpop.f32.mrb[0].mxu0
        %v2135 = vadd.f32 0.0, %v2134
        %v2136 = vpop.f32.mrb[0].mxu0
        %2137 = vmatprep.mubr.f32.mxu0 %v617
        %2138 = vmatmul.mubr.f32.gmra.mrb[0].mxu0 %v708
        %v2139 = vpop.f32.mrb[0].mxu0
        %v2140 = vadd.f32 0.0, %v2139
        %v2141 = vpop.f32.mrb[0].mxu0
        %2142 = vdwg.mxu0
        %2143 = vmatprep.subr.mxu0 0.0
        %2144 = vmatpush1.msra.mxu0 %v1902
        %2145 = vmatprep.subr.mxu0 0.0
        %2146 = vmatpush1.msra.mxu0 %v1903
        %2147 = vmatprep.subr.mxu0 0.0
        %2148 = vmatpush1.msra.mxu0 %v1904
        %2149 = vmatprep.subr.mxu0 0.0
        %2150 = vmatpush1.msra.mxu0 %v1905
        %2151 = vmatprep.subr.mxu0 0.0
        %2152 = vmatpush1.msra.mxu0 %v1906
        %2153 = vmatprep.subr.mxu0 0.0
        %2154 = vmatpush1.msra.mxu0 %v1907
        %2155 = vmatprep.subr.mxu0 0.0
        %2156 = vmatpush1.msra.mxu0 %v1908
        %2157 = vmatprep.subr.mxu0 0.0
        %2158 = vmatpush1.msra.mxu0 %v1909
        %2159 = vmatprep.subr.mxu0 0.0
        %2160 = vmatpush1.msra.mxu0 %v1910
        %2161 = vmatprep.subr.mxu0 0.0
        %2162 = vmatpush1.msra.mxu0 %v1911
        %2163 = vmatprep.subr.mxu0 0.0
        %2164 = vmatpush1.msra.mxu0 %v1912
        %2165 = vmatprep.subr.mxu0 0.0
        %2166 = vmatpush1.msra.mxu0 %v1913
        %2167 = vmatprep.subr.mxu0 0.0
        %2168 = vmatpush1.msra.mxu0 %v1914
        %2169 = vmatprep.subr.mxu0 0.0
        %2170 = vmatpush1.msra.mxu0 %v1915
        %2171 = vmatprep.subr.mxu0 0.0
        %2172 = vmatpush1.msra.mxu0 %v1916
        %2173 = vmatprep.subr.mxu0 0.0
        %2174 = vmatpush1.msra.mxu0 %v1917
        %2175 = vmatprep.subr.mxu0 0.0
        %2176 = vmatpush1.msra.mxu0 0.0
        %2177 = vmatprep.subr.mxu0 0.0
        %2178 = vmatpush1.msra.mxu0 0.0
        %2179 = vmatprep.subr.mxu0 0.0
        %2180 = vmatpush1.msra.mxu0 0.0
        %2181 = vmatprep.subr.mxu0 0.0
        %2182 = vmatpush1.msra.mxu0 0.0
        %2183 = vmatprep.subr.mxu0 0.0
        %2184 = vmatpush1.msra.mxu0 0.0
        %2185 = vmatprep.subr.mxu0 0.0
        %2186 = vmatpush1.msra.mxu0 0.0
        %2187 = vmatprep.subr.mxu0 0.0
        %2188 = vmatpush1.msra.mxu0 0.0
        %2189 = vmatprep.subr.mxu0 0.0
        %2190 = vmatpush1.msra.mxu0 0.0
        %2191 = vmatprep.subr.mxu0 0.0
        %2192 = vmatpush1.msra.mxu0 0.0
        %2193 = vmatprep.subr.mxu0 0.0
        %2194 = vmatpush1.msra.mxu0 0.0
        %2195 = vmatprep.subr.mxu0 0.0
        %2196 = vmatpush1.msra.mxu0 0.0
        %2197 = vmatprep.subr.mxu0 0.0
        %2198 = vmatpush1.msra.mxu0 0.0
        %2199 = vmatprep.subr.mxu0 0.0
        %2200 = vmatpush1.msra.mxu0 0.0
        %2201 = vmatprep.subr.mxu0 0.0
        %2202 = vmatpush1.msra.mxu0 0.0
        %2203 = vmatprep.subr.mxu0 0.0
        %2204 = vmatpush1.msra.mxu0 0.0
        %2205 = vmatprep.subr.mxu0 0.0
        %2206 = vmatpush1.msra.mxu0 0.0
        %2207 = vmatprep.mubr.f32.mxu0 0.0
        %2208 = vmatmul.mubr.f32.gmra.mrb[0].mxu0 %v772
        %v2209 = vpop.f32.mrb[0].mxu0
        %v2210 = vadd.f32 %v1985, %v2209
        %v2211 = vpop.f32.mrb[0].mxu0
        %2212 = vmatprep.mubr.f32.mxu0 0.0
        %2213 = vmatmul.mubr.f32.gmra.mrb[0].mxu0 %v856
        %v2214 = vpop.f32.mrb[0].mxu0
        %v2215 = vadd.f32 %v1990, %v2214
        %v2216 = vpop.f32.mrb[0].mxu0
        %2217 = vmatprep.mubr.f32.mxu0 0.0
        %2218 = vmatmul.mubr.f32.gmra.mrb[0].mxu0 %v775
        %v2219 = vpop.f32.mrb[0].mxu0
        %v2220 = vadd.f32 %v1995, %v2219
        %v2221 = vpop.f32.mrb[0].mxu0
        %2222 = vmatprep.mubr.f32.mxu0 0.0
        %2223 = vmatmul.mubr.f32.gmra.mrb[0].mxu0 %v857
        %v2224 = vpop.f32.mrb[0].mxu0
        %v2225 = vadd.f32 %v2000, %v2224
        %v2226 = vpop.f32.mrb[0].mxu0
        %2227 = vmatprep.mubr.f32.mxu0 0.0
        %2228 = vmatmul.mubr.f32.gmra.mrb[0].mxu0 %v778
        %v2229 = vpop.f32.mrb[0].mxu0
        %v2230 = vadd.f32 %v2005, %v2229
        %v2231 = vpop.f32.mrb[0].mxu0
        %2232 = vmatprep.mubr.f32.mxu0 0.0
        %2233 = vmatmul.mubr.f32.gmra.mrb[0].mxu0 %v858
        %v2234 = vpop.f32.mrb[0].mxu0
        %v2235 = vadd.f32 %v2010, %v2234
        %v2236 = vpop.f32.mrb[0].mxu0
        %2237 = vmatprep.mubr.f32.mxu0 0.0
        %2238 = vmatmul.mubr.f32.gmra.mrb[0].mxu0 %v781
        %v2239 = vpop.f32.mrb[0].mxu0
        %v2240 = vadd.f32 %v2015, %v2239
        %v2241 = vpop.f32.mrb[0].mxu0
        %2242 = vmatprep.mubr.f32.mxu0 0.0
        %2243 = vmatmul.mubr.f32.gmra.mrb[0].mxu0 %v859
        %v2244 = vpop.f32.mrb[0].mxu0
        %v2245 = vadd.f32 %v2020, %v2244
        %v2246 = vpop.f32.mrb[0].mxu0
        %2247 = vmatprep.mubr.f32.mxu0 0.0
        %2248 = vmatmul.mubr.f32.gmra.mrb[0].mxu0 %v784
        %v2249 = vpop.f32.mrb[0].mxu0
        %v2250 = vadd.f32 %v2025, %v2249
        %v2251 = vpop.f32.mrb[0].mxu0
        %2252 = vmatprep.mubr.f32.mxu0 0.0
        %2253 = vmatmul.mubr.f32.gmra.mrb[0].mxu0 %v860
        %v2254 = vpop.f32.mrb[0].mxu0
        %v2255 = vadd.f32 %v2030, %v2254
        %v2256 = vpop.f32.mrb[0].mxu0
        %2257 = vmatprep.mubr.f32.mxu0 0.0
        %2258 = vmatmul.mubr.f32.gmra.mrb[0].mxu0 %v787
        %v2259 = vpop.f32.mrb[0].mxu0
        %v2260 = vadd.f32 %v2035, %v2259
        %v2261 = vpop.f32.mrb[0].mxu0
        %2262 = vmatprep.mubr.f32.mxu0 0.0
        %2263 = vmatmul.mubr.f32.gmra.mrb[0].mxu0 %v861
        %v2264 = vpop.f32.mrb[0].mxu0
        %v2265 = vadd.f32 %v2040, %v2264
        %v2266 = vpop.f32.mrb[0].mxu0
        %2267 = vmatprep.mubr.f32.mxu0 0.0
        %2268 = vmatmul.mubr.f32.gmra.mrb[0].mxu0 %v790
        %v2269 = vpop.f32.mrb[0].mxu0
        %v2270 = vadd.f32 %v2045, %v2269
        %v2271 = vpop.f32.mrb[0].mxu0
        %2272 = vmatprep.mubr.f32.mxu0 0.0
        %2273 = vmatmul.mubr.f32.gmra.mrb[0].mxu0 %v862
        %v2274 = vpop.f32.mrb[0].mxu0
        %v2275 = vadd.f32 %v2050, %v2274
        %v2276 = vpop.f32.mrb[0].mxu0
        %2277 = vmatprep.mubr.f32.mxu0 0.0
        %2278 = vmatmul.mubr.f32.gmra.mrb[0].mxu0 %v793
        %v2279 = vpop.f32.mrb[0].mxu0
        %v2280 = vadd.f32 %v2055, %v2279
        %v2281 = vpop.f32.mrb[0].mxu0
        %2282 = vmatprep.mubr.f32.mxu0 0.0
        %2283 = vmatmul.mubr.f32.gmra.mrb[0].mxu0 %v863
        %v2284 = vpop.f32.mrb[0].mxu0
        %v2285 = vadd.f32 %v2060, %v2284
        %v2286 = vpop.f32.mrb[0].mxu0
        %2287 = vmatprep.mubr.f32.mxu0 0.0
        %2288 = vmatmul.mubr.f32.gmra.mrb[0].mxu0 %v796
        %v2289 = vpop.f32.mrb[0].mxu0
        %v2290 = vadd.f32 %v2065, %v2289
        %v2291 = vpop.f32.mrb[0].mxu0
        %2292 = vmatprep.mubr.f32.mxu0 0.0
        %2293 = vmatmul.mubr.f32.gmra.mrb[0].mxu0 %v864
        %v2294 = vpop.f32.mrb[0].mxu0
        %v2295 = vadd.f32 %v2070, %v2294
        %v2296 = vpop.f32.mrb[0].mxu0
        %2297 = vmatprep.mubr.f32.mxu0 0.0
        %2298 = vmatmul.mubr.f32.gmra.mrb[0].mxu0 %v799
        %v2299 = vpop.f32.mrb[0].mxu0
        %v2300 = vadd.f32 %v2075, %v2299
        %v2301 = vpop.f32.mrb[0].mxu0
        %2302 = vmatprep.mubr.f32.mxu0 0.0
        %2303 = vmatmul.mubr.f32.gmra.mrb[0].mxu0 %v865
        %v2304 = vpop.f32.mrb[0].mxu0
        %v2305 = vadd.f32 %v2080, %v2304
        %v2306 = vpop.f32.mrb[0].mxu0
        %2307 = vmatprep.mubr.f32.mxu0 0.0
        %2308 = vmatmul.mubr.f32.gmra.mrb[0].mxu0 %v802
        %v2309 = vpop.f32.mrb[0].mxu0
        %v2310 = vadd.f32 %v2085, %v2309
        %v2311 = vpop.f32.mrb[0].mxu0
        %2312 = vmatprep.mubr.f32.mxu0 0.0
        %2313 = vmatmul.mubr.f32.gmra.mrb[0].mxu0 %v866
        %v2314 = vpop.f32.mrb[0].mxu0
        %v2315 = vadd.f32 %v2090, %v2314
        %v2316 = vpop.f32.mrb[0].mxu0
        %2317 = vmatprep.mubr.f32.mxu0 0.0
        %2318 = vmatmul.mubr.f32.gmra.mrb[0].mxu0 %v805
        %v2319 = vpop.f32.mrb[0].mxu0
        %v2320 = vadd.f32 %v2095, %v2319
        %v2321 = vpop.f32.mrb[0].mxu0
        %2322 = vmatprep.mubr.f32.mxu0 0.0
        %2323 = vmatmul.mubr.f32.gmra.mrb[0].mxu0 %v867
        %v2324 = vpop.f32.mrb[0].mxu0
        %v2325 = vadd.f32 %v2100, %v2324
        %v2326 = vpop.f32.mrb[0].mxu0
        %2327 = vmatprep.mubr.f32.mxu0 0.0
        %2328 = vmatmul.mubr.f32.gmra.mrb[0].mxu0 %v808
        %v2329 = vpop.f32.mrb[0].mxu0
        %v2330 = vadd.f32 %v2105, %v2329
        %v2331 = vpop.f32.mrb[0].mxu0
        %2332 = vmatprep.mubr.f32.mxu0 0.0
        %2333 = vmatmul.mubr.f32.gmra.mrb[0].mxu0 %v868
        %v2334 = vpop.f32.mrb[0].mxu0
        %v2335 = vadd.f32 %v2110, %v2334
        %v2336 = vpop.f32.mrb[0].mxu0
        %2337 = vmatprep.mubr.f32.mxu0 0.0
        %2338 = vmatmul.mubr.f32.gmra.mrb[0].mxu0 %v811
        %v2339 = vpop.f32.mrb[0].mxu0
        %v2340 = vadd.f32 %v2115, %v2339
        %v2341 = vpop.f32.mrb[0].mxu0
        %2342 = vmatprep.mubr.f32.mxu0 0.0
        %2343 = vmatmul.mubr.f32.gmra.mrb[0].mxu0 %v869
        %v2344 = vpop.f32.mrb[0].mxu0
        %v2345 = vadd.f32 %v2120, %v2344
        %v2346 = vpop.f32.mrb[0].mxu0
        %2347 = vmatprep.mubr.f32.mxu0 0.0
        %2348 = vmatmul.mubr.f32.gmra.mrb[0].mxu0 %v814
        %v2349 = vpop.f32.mrb[0].mxu0
        %v2350 = vadd.f32 %v2125, %v2349
        %v2351 = vpop.f32.mrb[0].mxu0
        %2352 = vmatprep.mubr.f32.mxu0 0.0
        %2353 = vmatmul.mubr.f32.gmra.mrb[0].mxu0 %v870
        %v2354 = vpop.f32.mrb[0].mxu0
        %v2355 = vadd.f32 %v2130, %v2354
        %v2356 = vpop.f32.mrb[0].mxu0
        %2357 = vmatprep.mubr.f32.mxu0 0.0
        %2358 = vmatmul.mubr.f32.gmra.mrb[0].mxu0 %v817
        %v2359 = vpop.f32.mrb[0].mxu0
        %v2360 = vadd.f32 %v2135, %v2359
        %v2361 = vpop.f32.mrb[0].mxu0
        %2362 = vmatprep.mubr.f32.mxu0 0.0
        %2363 = vmatmul.mubr.f32.gmra.mrb[0].mxu0 %v871
        %v2364 = vpop.f32.mrb[0].mxu0
        %v2365 = vadd.f32 %v2140, %v2364
        %v2366 = vpop.f32.mrb[0].mxu0
        %2367 = vdwg.mxu0
        %v2368 = vadd.f32 %v1711, %v2210
        %v2369 = vadd.f32 %v1716, %v2215
        %v2370 = vadd.f32 %v1721, %v2220
        %v2371 = vadd.f32 %v1726, %v2225
        %v2372 = vadd.f32 %v1731, %v2230
        %v2373 = vadd.f32 %v1736, %v2235
        %v2374 = vadd.f32 %v1741, %v2240
        %v2375 = vadd.f32 %v1746, %v2245
        %v2376 = vadd.f32 %v1751, %v2250
        %v2377 = vadd.f32 %v1756, %v2255
        %v2378 = vadd.f32 %v1761, %v2260
        %v2379 = vadd.f32 %v1766, %v2265
        %v2380 = vadd.f32 %v1771, %v2270
        %v2381 = vadd.f32 %v1776, %v2275
        %v2382 = vadd.f32 %v1781, %v2280
        %v2383 = vadd.f32 %v1786, %v2285
        %v2384 = vadd.f32 %v1791, %v2290
        %v2385 = vadd.f32 %v1796, %v2295
        %v2386 = vadd.f32 %v1801, %v2300
        %v2387 = vadd.f32 %v1806, %v2305
        %v2388 = vadd.f32 %v1811, %v2310
        %v2389 = vadd.f32 %v1816, %v2315
        %v2390 = vadd.f32 %v1821, %v2320
        %v2391 = vadd.f32 %v1826, %v2325
        %v2392 = vadd.f32 %v1831, %v2330
        %v2393 = vadd.f32 %v1836, %v2335
        %v2394 = vadd.f32 %v1841, %v2340
        %v2395 = vadd.f32 %v1846, %v2345
        %v2396 = vadd.f32 %v1851, %v2350
        %v2397 = vadd.f32 %v1856, %v2355
        %v2398 = vadd.f32 %v1861, %v2360
        %v2399 = vadd.f32 %v1866, %v2365
        %2400 = vst [vmem:[%s265] sm:$0xff] %v2368
        %2401 = vst [vmem:[%s265 + $0x8] sm:$0xff] %v2369
        %2402 = vst [vmem:[%s265 + $0x10] sm:$0xff] %v2370
        %2403 = vst [vmem:[%s265 + $0x18] sm:$0xff] %v2371
        %2404 = vst [vmem:[%s265 + $0x20] sm:$0xff] %v2372
        %2405 = vst [vmem:[%s265 + $0x28] sm:$0xff] %v2373
        %2406 = vst [vmem:[%s265 + $0x30] sm:$0xff] %v2374
        %2407 = vst [vmem:[%s265 + $0x38] sm:$0xff] %v2375
        %2408 = vst [vmem:[%s265 + $0x40] sm:$0xff] %v2376
        %2409 = vst [vmem:[%s265 + $0x48] sm:$0xff] %v2377
        %2410 = vst [vmem:[%s265 + $0x50] sm:$0xff] %v2378
        %2411 = vst [vmem:[%s265 + $0x58] sm:$0xff] %v2379
        %2412 = vst [vmem:[%s265 + $0x60] sm:$0xff] %v2380
        %2413 = vst [vmem:[%s265 + $0x68] sm:$0xff] %v2381
        %2414 = vst [vmem:[%s265 + $0x70] sm:$0xff] %v2382
        %2415 = vst [vmem:[%s265 + $0x78] sm:$0xff] %v2383
        %2416 = vst [vmem:[%s265 + $0x80] sm:$0xff] %v2384
        %2417 = vst [vmem:[%s265 + $0x88] sm:$0xff] %v2385
        %2418 = vst [vmem:[%s265 + $0x90] sm:$0xff] %v2386
        %2419 = vst [vmem:[%s265 + $0x98] sm:$0xff] %v2387
        %2420 = vst [vmem:[%s265 + $0xa0] sm:$0xff] %v2388
        %2421 = vst [vmem:[%s265 + $0xa8] sm:$0xff] %v2389
        %2422 = vst [vmem:[%s265 + $0xb0] sm:$0xff] %v2390
        %2423 = vst [vmem:[%s265 + $0xb8] sm:$0xff] %v2391
        %2424 = vst [vmem:[%s265 + $0xc0] sm:$0xff] %v2392
        %2425 = vst [vmem:[%s265 + $0xc8] sm:$0xff] %v2393
        %2426 = vst [vmem:[%s265 + $0xd0] sm:$0xff] %v2394
        %2427 = vst [vmem:[%s265 + $0xd8] sm:$0xff] %v2395
        %2428 = vst [vmem:[%s265 + $0xe0] sm:$0xff] %v2396
        %2429 = vst [vmem:[%s265 + $0xe8] sm:$0xff] %v2397
        %2430 = vst [vmem:[%s265 + $0xf0] sm:$0xff] %v2398
        %2431 = vst [vmem:[%s265 + $0xf8] sm:$0xff] %v2399
        %v2432 = vadd.f32 %v2368, %v2369
        %v2433 = vadd.f32 %v2432, %v2370
        %v2434 = vadd.f32 %v2433, %v2371
        %v2435 = vadd.f32 %v2434, %v2372
        %v2436 = vadd.f32 %v2435, %v2373
        %v2437 = vadd.f32 %v2436, %v2374
        %v2438 = vadd.f32 %v2437, %v2375
        %v2439 = vadd.f32 %v2438, %v2376
        %v2440 = vadd.f32 %v2439, %v2377
        %v2441 = vadd.f32 %v2440, %v2378
        %v2442 = vadd.f32 %v2441, %v2379
        %v2443 = vadd.f32 %v2442, %v2380
        %v2444 = vadd.f32 %v2443, %v2381
        %v2445 = vadd.f32 %v2444, %v2382
        %v2446 = vadd.f32 %v2445, %v2383
        %v2447 = vadd.f32 %v2446, %v2384
        %v2448 = vadd.f32 %v2447, %v2385
        %v2449 = vadd.f32 %v2448, %v2386
        %v2450 = vadd.f32 %v2449, %v2387
        %v2451 = vadd.f32 %v2450, %v2388
        %v2452 = vadd.f32 %v2451, %v2389
        %v2453 = vadd.f32 %v2452, %v2390
        %v2454 = vadd.f32 %v2453, %v2391
        %v2455 = vadd.f32 %v2454, %v2392
        %v2456 = vadd.f32 %v2455, %v2393
        %v2457 = vadd.f32 %v2456, %v2394
        %v2458 = vadd.f32 %v2457, %v2395
        %v2459 = vadd.f32 %v2458, %v2396
        %v2460 = vadd.f32 %v2459, %v2397
        %v2461 = vadd.f32 %v2460, %v2398
        %v2462 = vadd.f32 %v2461, %v2399
        %v2463 = vrot.slane %v2462, 4
        %v2464 = vadd.f32 %v2462, %v2463
        %v2465 = vrot.slane %v2464, 2
        %v2466 = vadd.f32 %v2464, %v2465
        %v2467 = vrot.slane %v2466, 1
        %v2468 = vadd.f32 %v2466, %v2467
        %2469 = vst [vmem:[%s271] sm:$0x1] %v2468
        %v2470 = vmul.f32 %v2368, %v2368
        %v2471 = vmul.f32 %v2369, %v2369
        %v2472 = vmul.f32 %v2370, %v2370
        %v2473 = vmul.f32 %v2371, %v2371
        %v2474 = vmul.f32 %v2372, %v2372
        %v2475 = vmul.f32 %v2373, %v2373
        %v2476 = vmul.f32 %v2374, %v2374
        %v2477 = vmul.f32 %v2375, %v2375
        %v2478 = vmul.f32 %v2376, %v2376
        %v2479 = vmul.f32 %v2377, %v2377
        %v2480 = vmul.f32 %v2378, %v2378
        %v2481 = vmul.f32 %v2379, %v2379
        %v2482 = vmul.f32 %v2380, %v2380
        %v2483 = vmul.f32 %v2381, %v2381
        %v2484 = vmul.f32 %v2382, %v2382
        %v2485 = vmul.f32 %v2383, %v2383
        %v2486 = vmul.f32 %v2384, %v2384
        %v2487 = vmul.f32 %v2385, %v2385
        %v2488 = vmul.f32 %v2386, %v2386
        %v2489 = vmul.f32 %v2387, %v2387
        %v2490 = vmul.f32 %v2388, %v2388
        %v2491 = vmul.f32 %v2389, %v2389
        %v2492 = vmul.f32 %v2390, %v2390
        %v2493 = vmul.f32 %v2391, %v2391
        %v2494 = vmul.f32 %v2392, %v2392
        %v2495 = vmul.f32 %v2393, %v2393
        %v2496 = vmul.f32 %v2394, %v2394
        %v2497 = vmul.f32 %v2395, %v2395
        %v2498 = vmul.f32 %v2396, %v2396
        %v2499 = vmul.f32 %v2397, %v2397
        %v2500 = vmul.f32 %v2398, %v2398
        %v2501 = vmul.f32 %v2399, %v2399
        %v2502 = vadd.f32 %v2470, %v2471
        %v2503 = vadd.f32 %v2502, %v2472
        %v2504 = vadd.f32 %v2503, %v2473
        %v2505 = vadd.f32 %v2504, %v2474
        %v2506 = vadd.f32 %v2505, %v2475
        %v2507 = vadd.f32 %v2506, %v2476
        %v2508 = vadd.f32 %v2507, %v2477
        %v2509 = vadd.f32 %v2508, %v2478
        %v2510 = vadd.f32 %v2509, %v2479
        %v2511 = vadd.f32 %v2510, %v2480
        %v2512 = vadd.f32 %v2511, %v2481
        %v2513 = vadd.f32 %v2512, %v2482
        %v2514 = vadd.f32 %v2513, %v2483
        %v2515 = vadd.f32 %v2514, %v2484
        %v2516 = vadd.f32 %v2515, %v2485
        %v2517 = vadd.f32 %v2516, %v2486
        %v2518 = vadd.f32 %v2517, %v2487
        %v2519 = vadd.f32 %v2518, %v2488
        %v2520 = vadd.f32 %v2519, %v2489
        %v2521 = vadd.f32 %v2520, %v2490
        %v2522 = vadd.f32 %v2521, %v2491
        %v2523 = vadd.f32 %v2522, %v2492
        %v2524 = vadd.f32 %v2523, %v2493
        %v2525 = vadd.f32 %v2524, %v2494
        %v2526 = vadd.f32 %v2525, %v2495
        %v2527 = vadd.f32 %v2526, %v2496
        %v2528 = vadd.f32 %v2527, %v2497
        %v2529 = vadd.f32 %v2528, %v2498
        %v2530 = vadd.f32 %v2529, %v2499
        %v2531 = vadd.f32 %v2530, %v2500
        %v2532 = vadd.f32 %v2531, %v2501
        %v2533 = vrot.slane %v2532, 4
        %v2534 = vadd.f32 %v2532, %v2533
        %v2535 = vrot.slane %v2534, 2
        %v2536 = vadd.f32 %v2534, %v2535
        %v2537 = vrot.slane %v2536, 1
        %v2538 = vadd.f32 %v2536, %v2537
        %2539 = vst [vmem:[%s277] sm:$0x1] %v2538
        %s2540 = sand.u32 %s111, 1
        %s2541 = scalar_lea.sflag [#allocation6], %s2540
        %s2542 = sand.u32 %s111, 1
        %s2543 = smul.addr %s2542, 256
        %s2544 = scalar_lea.vmem [#allocation10], %s2543
        %s2545 = sand.u32 %s26, 1
        %s2546 = scalar_lea.sflag [#allocation12], %s2545
        %s2547 = sand.u32 %s139, 1
        %s2548 = scalar_lea.vmem [#allocation11], %s2547
        %s2549 = sand.u32 %s26, 1
        %s2550 = scalar_lea.sflag [#allocation12], %s2549
        %s2551 = sand.u32 %s167, 1
        %s2552 = scalar_lea.vmem [#allocation13], %s2551
        // Predicated region
        $region77: #{unet_encoding_block.3} parent=31 // pred_check
          %p2553 = pneg %p121
        $region78: #{unet_encoding_block.3} parent=31 // pred_check_branch
          %2555 = sbr.rel (%p2553) target = $region80
        $region79: #{unet_encoding_block.3} parent=31 // pred_region
          %s2556 = sadd.s32 %s30, %s31
          %s2557 = smul.u32 32, %s2556
          %s2559 = ssub.s32 4096, 4096
          %2560 = vsyncadd %s2541, %s2559
          %s2561 = smul.addr %s2557, 128
          %s2562 = scalar_lea.hbm %s4, %s2561
          %s2563 = sshll.u32 %s2544, 4
          %s2564 = int_to_ptr.vmem [resolvable:$true] %s2563
          %2569 = dma.vmem_to_hbm [thread:$0]  %s2564, 4096, %s2562, %s2541, 128, 128, 8
        $region80: #{unet_encoding_block.3} parent=31 // pred_fallthru
          _
        // Predicated region
        $region81: #{unet_encoding_block.3} parent=31 // pred_check
          %p2570 = pneg %p149
        $region82: #{unet_encoding_block.3} parent=31 // pred_check_branch
          %2572 = sbr.rel (%p2570) target = $region84
        $region83: #{unet_encoding_block.3} parent=31 // pred_region
          %s2573 = sadd.s32 %s30, %s31
          %s2575 = ssub.s32 16, 16
          %2576 = vsyncadd %s2546, %s2575
          %s2577 = smul.addr %s2573, 16
          %s2578 = scalar_lea.hbm %s5, %s2577
          %s2580 = sshll.u32 %s2548, 4
          %s2581 = int_to_ptr.vmem [resolvable:$true] %s2580
          %2583 = dma.vmem_to_hbm [thread:$0]  %s2581, 16, %s2578, %s2546
        $region84: #{unet_encoding_block.3} parent=31 // pred_fallthru
          _
        // Predicated region
        $region85: #{unet_encoding_block.3} parent=31 // pred_check
          %p2584 = pneg %p177
        $region86: #{unet_encoding_block.3} parent=31 // pred_check_branch
          %2586 = sbr.rel (%p2584) target = $region88
        $region87: #{unet_encoding_block.3} parent=31 // pred_region
          %s2587 = sadd.s32 %s30, %s31
          %s2589 = ssub.s32 16, 16
          %2590 = vsyncadd %s2550, %s2589
          %s2591 = smul.addr %s2587, 16
          %s2592 = scalar_lea.hbm %s6, %s2591
          %s2594 = sshll.u32 %s2552, 4
          %s2595 = int_to_ptr.vmem [resolvable:$true] %s2594
          %2597 = dma.vmem_to_hbm [thread:$0]  %s2595, 16, %s2592, %s2550
        $region88: #{unet_encoding_block.3} parent=31 // pred_fallthru
          _
      $region32: #{unet_encoding_block.3} parent=5 // pred_fallthru
        _
      %p2598 = scmp.le.s32.totalorder 2, %s21
      // Predicated region
      $region89: #{unet_encoding_block.3} parent=5 // pred_check
        %p2599 = pneg %p2598
      $region90: #{unet_encoding_block.3} parent=5 // pred_check_branch
        %2601 = sbr.rel (%p2599) target = $region92
      $region91: #{unet_encoding_block.3} parent=5 // pred_region
        %s2602 = ssub.s32 %s21, 2
        // Predicated region
        $region93: #{unet_encoding_block.3} parent=91 // pred_check
          %p2603 = pneg %p127
        $region94: #{unet_encoding_block.3} parent=91 // pred_check_branch
          %2605 = sbr.rel (%p2603) target = $region96
        $region95: #{unet_encoding_block.3} parent=91 // pred_region
          %s2606 = sand.u32 %s112, 1
          %s2607 = scalar_lea.sflag [#allocation6], %s2606
          %s2608 = sand.u32 %s112, 1
          %s2609 = smul.addr %s2608, 256
          %s2610 = scalar_lea.vmem [#allocation10], %s2609
          %2611 = dma.done %s2607, 4096
        $region96: #{unet_encoding_block.3} parent=91 // pred_fallthru
          _
        // Predicated region
        $region97: #{unet_encoding_block.3} parent=91 // pred_check
          %p2612 = pneg %p155
        $region98: #{unet_encoding_block.3} parent=91 // pred_check_branch
          %2614 = sbr.rel (%p2612) target = $region100
        $region99: #{unet_encoding_block.3} parent=91 // pred_region
          %s2615 = sand.u32 %s27, 1
          %s2616 = scalar_lea.sflag [#allocation12], %s2615
          %s2617 = sand.u32 %s140, 1
          %s2618 = scalar_lea.vmem [#allocation11], %s2617
          %2619 = dma.done %s2616, 16
        $region100: #{unet_encoding_block.3} parent=91 // pred_fallthru
          _
        // Predicated region
        $region101: #{unet_encoding_block.3} parent=91 // pred_check
          %p2620 = pneg %p183
        $region102: #{unet_encoding_block.3} parent=91 // pred_check_branch
          %2622 = sbr.rel (%p2620) target = $region104
        $region103: #{unet_encoding_block.3} parent=91 // pred_region
          %s2623 = sand.u32 %s27, 1
          %s2624 = scalar_lea.sflag [#allocation12], %s2623
          %s2625 = sand.u32 %s168, 1
          %s2626 = scalar_lea.vmem [#allocation13], %s2625
          %2627 = dma.done %s2624, 16
        $region104: #{unet_encoding_block.3} parent=91 // pred_fallthru
          _
      $region92: #{unet_encoding_block.3} parent=5 // pred_fallthru
        _
    $region6: #{unet_encoding_block.3} parent=1 // loop_footer
      %s25 = sadd.s32 1, %s21
    $region7: #{unet_encoding_block.3} parent=1 // loop_footer_branch
      %20 = sbr.rel target = $region3
    $region8: #{unet_encoding_block.3} parent=1 // loop_exit
      _
    %2628 = vsyncpa [#allocation5], 1
    %s2629 = scalar_lea.sflag [#allocation5], 1
    %2630 = vsyncpa %s2629, 1
    %2631 = vsyncpa [#allocation8], 1
    %2632 = vsyncpa [#allocation6], 1
    %s2633 = scalar_lea.sflag [#allocation6], 1
    %2634 = vsyncpa %s2633, 1
    %2635 = vsyncpa [#allocation12], 1
    %s2636 = scalar_lea.sflag [#allocation12], 1
    %2637 = vsyncpa %s2636, 1
  %2638 = vsyncmov [#allocation3]
  %s2639 = vpop.sfrf %2638
  %p2640 = scmp.eq.s32.totalorder %s2639, 0
  %p2641 = pneg %p2640
  %2643 = shalt.err (%p2641)
  %s2644 = scalar_lea.sflag [#allocation3], 1
  %2645 = vsyncmov %s2644
  %s2646 = vpop.sfrf %2645
  %p2647 = scmp.eq.s32.totalorder %s2646, 0
  %p2648 = pneg %p2647
  %2650 = shalt.err (%p2648)
  %s2651 = scalar_lea.sflag [#allocation3], 2
  %2652 = vsyncmov %s2651
  %s2653 = vpop.sfrf %2652
  %p2654 = scmp.eq.s32.totalorder %s2653, 0
  %p2655 = pneg %p2654
  %2657 = shalt.err (%p2655)
  %s2658 = scalar_lea.sflag [#allocation3], 3
  %2659 = vsyncmov %s2658
  %s2660 = vpop.sfrf %2659
  %p2661 = scmp.eq.s32.totalorder %s2660, 0
  %p2662 = pneg %p2661
  %2664 = shalt.err (%p2662)
  %s2665 = scalar_lea.sflag [#allocation3], 4
  %2666 = vsyncmov %s2665
  %s2667 = vpop.sfrf %2666
  %p2668 = scmp.eq.s32.totalorder %s2667, 0
  %p2669 = pneg %p2668
  %2671 = shalt.err (%p2669)
  %s2672 = scalar_lea.sflag [#allocation3], 5
  %2673 = vsyncmov %s2672
  %s2674 = vpop.sfrf %2673
  %p2675 = scmp.eq.s32.totalorder %s2674, 0
  %p2676 = pneg %p2675
  %2678 = shalt.err (%p2676)

// kernel: unet_encoding_block.4
$region0: #{unet_encoding_block.4}
  #allocation0 [shape = 'u32[]', space=smem, size = 0x4, offset = 0x4, fixed_abs, tag = 'smem constant byte address 0x4 - core index']
  #allocation1 [shape = 'u32[144,128]{1,0:T(1,128)}', space=vmem, size = 0x12000, scoped, tag = 'internal scratch']
  #allocation2 [shape = 'f32[2,18,16,128]{3,2,1,0:T(8,128)}', space=vmem, size = 0x48000, scoped, tag = 'scratch operand']
  #allocation3 [shape = 's32[6]{0}', space=sflag, size = 0x18, scoped, tag = 'scratch operand']
  #allocation14 [shape = 's32[]', space=sflag, size = 0x4, offset = 0, fixed_abs, tag = 'sflag constant byte address 0x0 - dummy sync flag']
  #allocation15 [shape = 's32[]', space=sflag, size = 0x4, offset = 0, fixed_abs, tag = 'sflag constant byte address 0x0 - dummy sync flag']
  #allocation16 [shape = 'u32[]', space=smem, size = 0x4, offset = 0x44, fixed_abs, tag = 'smem constant byte address 0x44 - assertion arg 0']
  #allocation17 [shape = 'u32[]', space=smem, size = 0x4, offset = 0x48, fixed_abs, tag = 'smem constant byte address 0x48 - assertion arg 1']
  #allocation18 [shape = 's32[]', space=sflag, size = 0x4, offset = 0, fixed_abs, tag = 'sflag constant byte address 0x0 - dummy sync flag']
  #allocation19 [shape = 's32[]', space=sflag, size = 0x4, offset = 0, fixed_abs, tag = 'sflag constant byte address 0x0 - dummy sync flag']
  #allocation20 [shape = 's32[]', space=sflag, size = 0x4, offset = 0, fixed_abs, tag = 'sflag constant byte address 0x0 - dummy sync flag']
  #allocation21 [shape = 's32[]', space=sflag, size = 0x4, offset = 0, fixed_abs, tag = 'sflag constant byte address 0x0 - dummy sync flag']
  #allocation22 [shape = 's32[]', space=sflag, size = 0x4, offset = 0, fixed_abs, tag = 'sflag constant byte address 0x0 - dummy sync flag']
  #allocation23 [shape = 's32[]', space=sflag, size = 0x4, offset = 0, fixed_abs, tag = 'sflag constant byte address 0x0 - dummy sync flag']
  #allocation24 [shape = 's32[]', space=sflag, size = 0x4, offset = 0, fixed_abs, tag = 'sflag constant byte address 0x0 - dummy sync flag']
  #allocation25 [shape = 's32[]', space=sflag, size = 0x4, offset = 0, fixed_abs, tag = 'sflag constant byte address 0x0 - dummy sync flag']
  #allocation26 [shape = 's32[]', space=sflag, size = 0x4, offset = 0, fixed_abs, tag = 'sflag constant byte address 0x0 - dummy sync flag']
  #allocation27 [shape = 's32[]', space=sflag, size = 0x4, offset = 0, fixed_abs, tag = 'sflag constant byte address 0x0 - dummy sync flag']
  %s0 = inlined_call_operand.hbm [shape: f32[2,16,16,128], index: 0, kind: input, shape index: {}]
  %s1 = inlined_call_operand.hbm [shape: f32[3,384,128], index: 1, kind: input, shape index: {}]
  %s2 = inlined_call_operand.hbm [shape: f32[1,128], index: 2, kind: input, shape index: {}]
  %s3 = inlined_call_operand.hbm [shape: f32[1,128], index: 3, kind: input, shape index: {}]
  %s4 = inlined_call_operand.hbm [shape: f32[512,128], index: 4, kind: output, shape index: {0}]
  %s5 = inlined_call_operand.hbm [shape: f32[2,1,128], index: 5, kind: output, shape index: {1}]
  %s6 = inlined_call_operand.hbm [shape: f32[2,1,128], index: 6, kind: output, shape index: {2}]
  %7 = xla_tuple %s4, %s5, %s6
  %s8 = sld [smem:[#allocation0]]
  $region105: #{unet_encoding_block.4} parent=0
    _
  %s10 = ssub.s32 1, %s8
  %s11 = scalar_select 0, %s10, %s8
  $region1: #{unet_encoding_block.4} parent=0
    #allocation4 [shape = 'u8[589824]{0}', space=vmem, size = 0x90000, scoped, tag = 'input window, operand 1, single buffered']
    #allocation5 [shape = 's32[2]{0}', space=sflag, size = 0x8, scoped, tag = 'scoped memory for unet_encoding_block.4']
    #allocation6 [shape = 's32[2]{0}', space=sflag, size = 0x8, scoped, tag = 'scoped memory for unet_encoding_block.4']
    #allocation7 [shape = 'u8[512]{0}', space=vmem, size = 0x400, scoped, tag = 'input window, operand 2, single buffered']
    #allocation8 [shape = 's32[1]{0}', space=sflag, size = 0x4, scoped, tag = 'scoped memory for unet_encoding_block.4']
    #allocation9 [shape = 'u8[512]{0}', space=vmem, size = 0x400, scoped, tag = 'input window, operand 3, single buffered']
    #allocation10 [shape = 'u8[262144]{0}', space=vmem, size = 0x40000, scoped, tag = 'output window, operand 0']
    #allocation11 [shape = 'u8[1024]{0}', space=vmem, size = 0x400, scoped, tag = 'output window, operand 1']
    #allocation12 [shape = 's32[2]{0}', space=sflag, size = 0x8, scoped, tag = 'scoped memory for unet_encoding_block.4']
    #allocation13 [shape = 'u8[1024]{0}', space=vmem, size = 0x400, scoped, tag = 'output window, operand 2']
    %12 = vsyncpa [#allocation5], 0
    %13 = vsyncpa [#allocation8], 0
    %14 = vsyncpa [#allocation6], 0
    %s15 = scalar_lea.sflag [#allocation6], 1
    %16 = vsyncpa %s15, 0
    %17 = vsyncpa [#allocation12], 0
    %s18 = scalar_lea.sflag [#allocation12], 1
    %19 = vsyncpa %s18, 0
    loop: start=0, step=1, limit=4
    $region2: #{unet_encoding_block.4} parent=1 // loop_pre_header
      _
    $region3: #{unet_encoding_block.4} parent=1 // loop_header
      %s21 = sphi 0, %s25
      %p22 = scmp.ge.s32.totalorder %s21, 4
      %s28 = sphi 0, %s40
      %s29 = sphi 0, %s36
      %s30 = sphi 0, %s28
      %s31 = sphi 0, %s29
      %s32 = sphi 0, %s30
      %s33 = sphi 0, %s31
      %s41 = sphi 0, %s41
      %s43 = sphi 0, %s41
      %s44 = sphi 0, %s43
      %s58 = sphi 0, %s44
      %s62 = sphi 0, %s62
      %s64 = sphi 0, %s62
      %s65 = sphi 0, %s64
      %s79 = sphi 0, %s65
      %s83 = sphi 0, %s83
      %s85 = sphi 0, %s83
      %s86 = sphi 0, %s85
      %s100 = sphi 0, %s86
      %s108 = sphi 0, %s110
      %s111 = sphi 0, %s108
      %s112 = sphi 0, %s111
      %s128 = sphi 0, %s112
      %s136 = sphi 0, %s138
      %s139 = sphi 0, %s136
      %s140 = sphi 0, %s139
      %s156 = sphi 0, %s140
      %s164 = sphi 0, %s166
      %s167 = sphi 0, %s164
      %s168 = sphi 0, %s167
      %s184 = sphi 0, %s168
    $region4: #{unet_encoding_block.4} parent=1 // loop_header_branch
      %24 = sbr.rel (%p22) target = $region8
    $region5: #{unet_encoding_block.4} parent=1 // loop_body
      %s26 = ssub.s32 %s21, 1
      %s27 = ssub.s32 %s21, 2
      %s34 = sadd.s32 1, %s29
      %p35 = scmp.ge.s32.totalorder %s34, 1
      %s36 = scalar_select %p35, 0, %s34
      %s37 = sadd.s32 1, %s28
      %s38 = scalar_select %p35, %s37, %s28
      %p39 = scmp.ge.s32.totalorder %s38, 2
      %s40 = scalar_select %p39, 0, %s38
      %s42 = sadd.s32 %s41, 1
      %p45 = scmp.eq.s32.totalorder %s21, 1
      %p46 = scmp.ne.s32.totalorder %s41, %s43
      %p47 = scmp.eq.s32.totalorder %s21, 0
      %p48 = por %p46, %p47
      %p49 = scmp.ne.s32.totalorder %s41, %s43
      %p50 = scmp.eq.s32.totalorder %s26, 1
      %p51 = por %p49, %p50
      %p52 = scmp.ne.s32.totalorder %s43, %s44
      %p53 = scmp.eq.s32.totalorder %s26, 0
      %p54 = por %p52, %p53
      %p55 = scmp.ne.s32.totalorder %s43, %s44
      %p56 = scmp.eq.s32.totalorder %s27, 1
      %p57 = por %p55, %p56
      %p59 = scmp.ne.s32.totalorder %s44, %s58
      %p60 = scmp.eq.s32.totalorder %s27, 0
      %p61 = por %p59, %p60
      %s63 = sadd.s32 %s62, 1
      %p66 = scmp.eq.s32.totalorder %s21, 1
      %p67 = scmp.ne.s32.totalorder %s62, %s64
      %p68 = scmp.eq.s32.totalorder %s21, 0
      %p69 = por %p67, %p68
      %p70 = scmp.ne.s32.totalorder %s62, %s64
      %p71 = scmp.eq.s32.totalorder %s26, 1
      %p72 = por %p70, %p71
      %p73 = scmp.ne.s32.totalorder %s64, %s65
      %p74 = scmp.eq.s32.totalorder %s26, 0
      %p75 = por %p73, %p74
      %p76 = scmp.ne.s32.totalorder %s64, %s65
      %p77 = scmp.eq.s32.totalorder %s27, 1
      %p78 = por %p76, %p77
      %p80 = scmp.ne.s32.totalorder %s65, %s79
      %p81 = scmp.eq.s32.totalorder %s27, 0
      %p82 = por %p80, %p81
      %s84 = sadd.s32 %s83, 1
      %p87 = scmp.eq.s32.totalorder %s21, 1
      %p88 = scmp.ne.s32.totalorder %s83, %s85
      %p89 = scmp.eq.s32.totalorder %s21, 0
      %p90 = por %p88, %p89
      %p91 = scmp.ne.s32.totalorder %s83, %s85
      %p92 = scmp.eq.s32.totalorder %s26, 1
      %p93 = por %p91, %p92
      %p94 = scmp.ne.s32.totalorder %s85, %s86
      %p95 = scmp.eq.s32.totalorder %s26, 0
      %p96 = por %p94, %p95
      %p97 = scmp.ne.s32.totalorder %s85, %s86
      %p98 = scmp.eq.s32.totalorder %s27, 1
      %p99 = por %p97, %p98
      %p101 = scmp.ne.s32.totalorder %s86, %s100
      %p102 = scmp.eq.s32.totalorder %s27, 0
      %p103 = por %p101, %p102
      %s104 = sadd.s32 %s28, %s29
      %s105 = sadd.s32 %s40, %s36
      %s106 = ssub.s32 %s104, %s105
      %p107 = scmp.eq.s32.totalorder %s106, 0
      %s109 = sadd.s32 %s108, 1
      %s110 = scalar_select %p107, %s108, %s109
      %p113 = pneg %p107
      %p114 = scmp.eq.s32.totalorder %s21, 1
      %p115 = por %p113, %p114
      %p116 = scmp.ne.s32.totalorder %s108, %s111
      %p117 = scmp.eq.s32.totalorder %s21, 0
      %p118 = por %p116, %p117
      %p119 = scmp.ne.s32.totalorder %s108, %s111
      %p120 = scmp.eq.s32.totalorder %s26, 1
      %p121 = por %p119, %p120
      %p122 = scmp.ne.s32.totalorder %s111, %s112
      %p123 = scmp.eq.s32.totalorder %s26, 0
      %p124 = por %p122, %p123
      %p125 = scmp.ne.s32.totalorder %s111, %s112
      %p126 = scmp.eq.s32.totalorder %s27, 1
      %p127 = por %p125, %p126
      %p129 = scmp.ne.s32.totalorder %s112, %s128
      %p130 = scmp.eq.s32.totalorder %s27, 0
      %p131 = por %p129, %p130
      %s132 = sadd.s32 %s28, %s29
      %s133 = sadd.s32 %s40, %s36
      %s134 = ssub.s32 %s132, %s133
      %p135 = scmp.eq.s32.totalorder %s134, 0
      %s137 = sadd.s32 %s136, 1
      %s138 = scalar_select %p135, %s136, %s137
      %p141 = pneg %p135
      %p142 = scmp.eq.s32.totalorder %s21, 1
      %p143 = por %p141, %p142
      %p144 = scmp.ne.s32.totalorder %s136, %s139
      %p145 = scmp.eq.s32.totalorder %s21, 0
      %p146 = por %p144, %p145
      %p147 = scmp.ne.s32.totalorder %s136, %s139
      %p148 = scmp.eq.s32.totalorder %s26, 1
      %p149 = por %p147, %p148
      %p150 = scmp.ne.s32.totalorder %s139, %s140
      %p151 = scmp.eq.s32.totalorder %s26, 0
      %p152 = por %p150, %p151
      %p153 = scmp.ne.s32.totalorder %s139, %s140
      %p154 = scmp.eq.s32.totalorder %s27, 1
      %p155 = por %p153, %p154
      %p157 = scmp.ne.s32.totalorder %s140, %s156
      %p158 = scmp.eq.s32.totalorder %s27, 0
      %p159 = por %p157, %p158
      %s160 = sadd.s32 %s28, %s29
      %s161 = sadd.s32 %s40, %s36
      %s162 = ssub.s32 %s160, %s161
      %p163 = scmp.eq.s32.totalorder %s162, 0
      %s165 = sadd.s32 %s164, 1
      %s166 = scalar_select %p163, %s164, %s165
      %p169 = pneg %p163
      %p170 = scmp.eq.s32.totalorder %s21, 1
      %p171 = por %p169, %p170
      %p172 = scmp.ne.s32.totalorder %s164, %s167
      %p173 = scmp.eq.s32.totalorder %s21, 0
      %p174 = por %p172, %p173
      %p175 = scmp.ne.s32.totalorder %s164, %s167
      %p176 = scmp.eq.s32.totalorder %s26, 1
      %p177 = por %p175, %p176
      %p178 = scmp.ne.s32.totalorder %s167, %s168
      %p179 = scmp.eq.s32.totalorder %s26, 0
      %p180 = por %p178, %p179
      %p181 = scmp.ne.s32.totalorder %s167, %s168
      %p182 = scmp.eq.s32.totalorder %s27, 1
      %p183 = por %p181, %p182
      %p185 = scmp.ne.s32.totalorder %s168, %s184
      %p186 = scmp.eq.s32.totalorder %s27, 0
      %p187 = por %p185, %p186
      %p188 = scmp.le.s32.totalorder 1, %s21
      %p189 = scmp.lt.s32.totalorder %s21, 3
      %p190 = pnand %p188, %p189
      %p191 = pneg %p190
      // Predicated region
      $region9: #{unet_encoding_block.4} parent=5 // pred_check
        _
      $region10: #{unet_encoding_block.4} parent=5 // pred_check_branch
        %193 = sbr.rel (%p190) target = $region12
      $region11: #{unet_encoding_block.4} parent=5 // pred_region
        %s194 = ssub.s32 %s21, 1
        // Predicated region
        $region13: #{unet_encoding_block.4} parent=11 // pred_check
          %p195 = pneg %p54
        $region14: #{unet_encoding_block.4} parent=11 // pred_check_branch
          %197 = sbr.rel (%p195) target = $region16
        $region15: #{unet_encoding_block.4} parent=11 // pred_region
          %s199 = ssub.s32 18432, 18432
          %200 = vsyncadd [#allocation5], %s199
          %s201 = sshll.u32 [#allocation4], 4
          %s202 = int_to_ptr.vmem [resolvable:$true] %s201
          %207 = dma.hbm_to_vmem [thread:$0]  %s1, 18432, %s202, [#allocation5], 128, 128, 8
        $region16: #{unet_encoding_block.4} parent=11 // pred_fallthru
          _
        // Predicated region
        $region17: #{unet_encoding_block.4} parent=11 // pred_check
          %p208 = pneg %p75
        $region18: #{unet_encoding_block.4} parent=11 // pred_check_branch
          %210 = sbr.rel (%p208) target = $region20
        $region19: #{unet_encoding_block.4} parent=11 // pred_region
          %s212 = ssub.s32 16, 16
          %213 = vsyncadd [#allocation8], %s212
          %s215 = sshll.u32 [#allocation7], 4
          %s216 = int_to_ptr.vmem [resolvable:$true] %s215
          %218 = dma.hbm_to_vmem [thread:$0]  %s2, 16, %s216, [#allocation8]
        $region20: #{unet_encoding_block.4} parent=11 // pred_fallthru
          _
        // Predicated region
        $region21: #{unet_encoding_block.4} parent=11 // pred_check
          %p219 = pneg %p96
        $region22: #{unet_encoding_block.4} parent=11 // pred_check_branch
          %221 = sbr.rel (%p219) target = $region24
        $region23: #{unet_encoding_block.4} parent=11 // pred_region
          %s223 = ssub.s32 16, 16
          %224 = vsyncadd [#allocation8], %s223
          %s226 = sshll.u32 [#allocation9], 4
          %s227 = int_to_ptr.vmem [resolvable:$true] %s226
          %229 = dma.hbm_to_vmem [thread:$0]  %s3, 16, %s227, [#allocation8]
        $region24: #{unet_encoding_block.4} parent=11 // pred_fallthru
          _
      $region12: #{unet_encoding_block.4} parent=5 // pred_fallthru
        _
      %p230 = scmp.lt.s32.totalorder %s21, 2
      // Predicated region
      $region25: #{unet_encoding_block.4} parent=5 // pred_check
        %p231 = pneg %p230
      $region26: #{unet_encoding_block.4} parent=5 // pred_check_branch
        %233 = sbr.rel (%p231) target = $region28
      $region27: #{unet_encoding_block.4} parent=5 // pred_region
        _
      $region28: #{unet_encoding_block.4} parent=5 // pred_fallthru
        _
      %p234 = scmp.le.s32.totalorder 1, %s21
      %p235 = scmp.lt.s32.totalorder %s21, 3
      %p236 = pnand %p234, %p235
      %p237 = pneg %p236
      // Predicated region
      $region29: #{unet_encoding_block.4} parent=5 // pred_check
        _
      $region30: #{unet_encoding_block.4} parent=5 // pred_check_branch
        %239 = sbr.rel (%p236) target = $region32
      $region31: #{unet_encoding_block.4} parent=5 // pred_region
        %s240 = ssub.s32 %s21, 1
        // Predicated region
        $region33: #{unet_encoding_block.4} parent=31 // pred_check
          %p241 = pneg %p54
        $region34: #{unet_encoding_block.4} parent=31 // pred_check_branch
          %243 = sbr.rel (%p241) target = $region36
        $region35: #{unet_encoding_block.4} parent=31 // pred_region
          %244 = dma.done [#allocation5], 18432
        $region36: #{unet_encoding_block.4} parent=31 // pred_fallthru
          _
        // Predicated region
        $region37: #{unet_encoding_block.4} parent=31 // pred_check
          %p245 = pneg %p75
        $region38: #{unet_encoding_block.4} parent=31 // pred_check_branch
          %247 = sbr.rel (%p245) target = $region40
        $region39: #{unet_encoding_block.4} parent=31 // pred_region
          %248 = dma.done [#allocation8], 16
        $region40: #{unet_encoding_block.4} parent=31 // pred_fallthru
          _
        // Predicated region
        $region41: #{unet_encoding_block.4} parent=31 // pred_check
          %p249 = pneg %p96
        $region42: #{unet_encoding_block.4} parent=31 // pred_check_branch
          %251 = sbr.rel (%p249) target = $region44
        $region43: #{unet_encoding_block.4} parent=31 // pred_region
          %252 = dma.done [#allocation8], 16
        $region44: #{unet_encoding_block.4} parent=31 // pred_fallthru
          _
        %p253 = pneg %p54
        %p254 = pneg %p51
        %p255 = pneg %p75
        %p256 = pneg %p72
        %p257 = pneg %p96
        %p258 = pneg %p93
        %p259 = pneg %p124
        %p260 = pneg %p121
        %s261 = sand.u32 %s111, 1
        %s262 = scalar_lea.sflag [#allocation6], %s261
        %s263 = sand.u32 %s111, 1
        %s264 = smul.addr %s263, 256
        %s265 = scalar_lea.vmem [#allocation10], %s264
        %p266 = pneg %p152
        %p267 = pneg %p149
        %s268 = sand.u32 %s26, 1
        %s269 = scalar_lea.sflag [#allocation12], %s268
        %s270 = sand.u32 %s139, 1
        %s271 = scalar_lea.vmem [#allocation11], %s270
        %p272 = pneg %p180
        %p273 = pneg %p177
        %s274 = sand.u32 %s26, 1
        %s275 = scalar_lea.sflag [#allocation12], %s274
        %s276 = sand.u32 %s167, 1
        %s277 = scalar_lea.vmem [#allocation13], %s276
        %s278 = sadd.s32 %s30, %s31
        %s279 = smul.u32 32, %s278
        %s280 = sadd.s32 %s30, %s31
        %s281 = sadd.s32 %s30, %s31
        %p282 = scmp.lt.s32.totalorder %s31, 0
        %s283 = ssub.s32 0, %s31
        %s284 = scalar_select %p282, %s283, %s31
        %s285 = sand.u32 %s284, 1
        %s286 = ssub.s32 0, %s285
        %s287 = scalar_select %p282, %s286, %s285
        %p288 = scmp.ne.s32.totalorder %s287, 0
        %p289 = scmp.lt.s32.totalorder %s287, 0
        %p290 = pnand %p289, %p288
        %p291 = pneg %p290
        %s292 = sadd.s32 %s287, 2
        %s293 = scalar_select %p291, %s292, %s287
        %p294 = scmp.eq.s32.totalorder %s31, 0
        // Predicated region
        $region45: #{unet_encoding_block.4} parent=31 // pred_check
          %p295 = pneg %p294
        $region46: #{unet_encoding_block.4} parent=31 // pred_check_branch
          %297 = sbr.rel (%p295) target = $region48
        $region47: #{unet_encoding_block.4} parent=31 // pred_region
          %s298 = smul.u32 %s31, 16
          %s299 = ssub.s32 %s298, 1
          %p300 = scmp.gt.s32.totalorder %s299, 0
          %s301 = scalar_select %p300, %s299, 0
          %s302 = sadd.s32 %s298, 16
          %p303 = scmp.lt.s32.totalorder %s302, 15
          %s304 = scalar_select %p303, %s302, 15
          %s305 = smul.u32 %s301, 16
          %s306 = smul.u32 %s30, 256
          %s307 = sadd.s32 %s305, %s306
          %s308 = smul.addr %s307, 16
          %s309 = scalar_lea.hbm %s0, %s308
          %s310 = smul.u32 %s293, 288
          %s311 = scalar_lea.vmem [#allocation2], %s310
          %s312 = smul.u32 %s293, 3
          %s313 = scalar_lea.sflag [#allocation3], %s312
          // Predicated region
          $region49: #{unet_encoding_block.4} parent=47 // pred_check
            _
          $region50: #{unet_encoding_block.4} parent=47 // pred_check_branch
            %315 = sbr.rel target = $region52
          $region51: #{unet_encoding_block.4} parent=47 // pred_region
            %316 = sst [smem:[#allocation16]] [#allocation15]
            %317 = sst [smem:[#allocation17]] [#allocation14]
          $region52: #{unet_encoding_block.4} parent=47 // pred_fallthru
            _
          %319 = shalt.err (0)
          %s321 = sshll.u32 %s311, 4
          %s322 = int_to_ptr.vmem [resolvable:$true] %s321
          %324 = dma.hbm_to_vmem [thread:$0]  %s309, 256, %s322, %s313
          %s325 = smul.u32 %s298, 16
          %s326 = sadd.s32 %s325, %s306
          %s327 = smul.addr %s326, 16
          %s328 = scalar_lea.hbm %s0, %s327
          %s329 = sadd.s32 16, %s310
          %s330 = scalar_lea.vmem [#allocation2], %s329
          %s331 = sadd.s32 1, %s312
          %s332 = scalar_lea.sflag [#allocation3], %s331
          // Predicated region
          $region53: #{unet_encoding_block.4} parent=47 // pred_check
            _
          $region54: #{unet_encoding_block.4} parent=47 // pred_check_branch
            %334 = sbr.rel target = $region56
          $region55: #{unet_encoding_block.4} parent=47 // pred_region
            %335 = sst [smem:[#allocation16]] [#allocation19]
            %336 = sst [smem:[#allocation17]] [#allocation18]
          $region56: #{unet_encoding_block.4} parent=47 // pred_fallthru
            _
          %338 = shalt.err (0)
          %s340 = sshll.u32 %s330, 4
          %s341 = int_to_ptr.vmem [resolvable:$true] %s340
          %343 = dma.hbm_to_vmem [thread:$0]  %s328, 4096, %s341, %s332
          %s344 = smul.u32 %s304, 16
          %s345 = sadd.s32 %s344, %s306
          %s346 = smul.addr %s345, 16
          %s347 = scalar_lea.hbm %s0, %s346
          %s348 = sadd.s32 272, %s310
          %s349 = scalar_lea.vmem [#allocation2], %s348
          %s350 = sadd.s32 2, %s312
          %s351 = scalar_lea.sflag [#allocation3], %s350
          // Predicated region
          $region57: #{unet_encoding_block.4} parent=47 // pred_check
            _
          $region58: #{unet_encoding_block.4} parent=47 // pred_check_branch
            %353 = sbr.rel target = $region60
          $region59: #{unet_encoding_block.4} parent=47 // pred_region
            %354 = sst [smem:[#allocation16]] [#allocation21]
            %355 = sst [smem:[#allocation17]] [#allocation20]
          $region60: #{unet_encoding_block.4} parent=47 // pred_fallthru
            _
          %357 = shalt.err (0)
          %s359 = sshll.u32 %s349, 4
          %s360 = int_to_ptr.vmem [resolvable:$true] %s359
          %362 = dma.hbm_to_vmem [thread:$0]  %s347, 256, %s360, %s351
        $region48: #{unet_encoding_block.4} parent=31 // pred_fallthru
          _
        %s363 = sadd.s32 %s31, 1
        %p364 = scmp.lt.s32.totalorder %s363, 1
        // Predicated region
        $region61: #{unet_encoding_block.4} parent=31 // pred_check
          %p365 = pneg %p364
        $region62: #{unet_encoding_block.4} parent=31 // pred_check_branch
          %367 = sbr.rel (%p365) target = $region64
        $region63: #{unet_encoding_block.4} parent=31 // pred_region
          %s368 = ssub.s32 1, %s293
          %s369 = smul.u32 %s363, 16
          %s370 = ssub.s32 %s369, 1
          %p371 = scmp.gt.s32.totalorder %s370, 0
          %s372 = scalar_select %p371, %s370, 0
          %s373 = sadd.s32 %s369, 16
          %p374 = scmp.lt.s32.totalorder %s373, 15
          %s375 = scalar_select %p374, %s373, 15
          %s376 = smul.u32 %s372, 16
          %s377 = smul.u32 %s30, 256
          %s378 = sadd.s32 %s376, %s377
          %s379 = smul.addr %s378, 16
          %s380 = scalar_lea.hbm %s0, %s379
          %s381 = smul.u32 %s368, 288
          %s382 = scalar_lea.vmem [#allocation2], %s381
          %s383 = smul.u32 %s368, 3
          %s384 = scalar_lea.sflag [#allocation3], %s383
          // Predicated region
          $region65: #{unet_encoding_block.4} parent=63 // pred_check
            _
          $region66: #{unet_encoding_block.4} parent=63 // pred_check_branch
            %386 = sbr.rel target = $region68
          $region67: #{unet_encoding_block.4} parent=63 // pred_region
            %387 = sst [smem:[#allocation16]] [#allocation23]
            %388 = sst [smem:[#allocation17]] [#allocation22]
          $region68: #{unet_encoding_block.4} parent=63 // pred_fallthru
            _
          %390 = shalt.err (0)
          %s392 = sshll.u32 %s382, 4
          %s393 = int_to_ptr.vmem [resolvable:$true] %s392
          %395 = dma.hbm_to_vmem [thread:$0]  %s380, 256, %s393, %s384
          %s396 = smul.u32 %s369, 16
          %s397 = sadd.s32 %s396, %s377
          %s398 = smul.addr %s397, 16
          %s399 = scalar_lea.hbm %s0, %s398
          %s400 = sadd.s32 16, %s381
          %s401 = scalar_lea.vmem [#allocation2], %s400
          %s402 = sadd.s32 1, %s383
          %s403 = scalar_lea.sflag [#allocation3], %s402
          // Predicated region
          $region69: #{unet_encoding_block.4} parent=63 // pred_check
            _
          $region70: #{unet_encoding_block.4} parent=63 // pred_check_branch
            %405 = sbr.rel target = $region72
          $region71: #{unet_encoding_block.4} parent=63 // pred_region
            %406 = sst [smem:[#allocation16]] [#allocation25]
            %407 = sst [smem:[#allocation17]] [#allocation24]
          $region72: #{unet_encoding_block.4} parent=63 // pred_fallthru
            _
          %409 = shalt.err (0)
          %s411 = sshll.u32 %s401, 4
          %s412 = int_to_ptr.vmem [resolvable:$true] %s411
          %414 = dma.hbm_to_vmem [thread:$0]  %s399, 4096, %s412, %s403
          %s415 = smul.u32 %s375, 16
          %s416 = sadd.s32 %s415, %s377
          %s417 = smul.addr %s416, 16
          %s418 = scalar_lea.hbm %s0, %s417
          %s419 = sadd.s32 272, %s381
          %s420 = scalar_lea.vmem [#allocation2], %s419
          %s421 = sadd.s32 2, %s383
          %s422 = scalar_lea.sflag [#allocation3], %s421
          // Predicated region
          $region73: #{unet_encoding_block.4} parent=63 // pred_check
            _
          $region74: #{unet_encoding_block.4} parent=63 // pred_check_branch
            %424 = sbr.rel target = $region76
          $region75: #{unet_encoding_block.4} parent=63 // pred_region
            %425 = sst [smem:[#allocation16]] [#allocation27]
            %426 = sst [smem:[#allocation17]] [#allocation26]
          $region76: #{unet_encoding_block.4} parent=63 // pred_fallthru
            _
          %428 = shalt.err (0)
          %s430 = sshll.u32 %s420, 4
          %s431 = int_to_ptr.vmem [resolvable:$true] %s430
          %433 = dma.hbm_to_vmem [thread:$0]  %s418, 256, %s431, %s422
        $region64: #{unet_encoding_block.4} parent=31 // pred_fallthru
          _
        %s434 = smul.u32 %s293, 3
        %s435 = scalar_lea.sflag [#allocation3], %s434
        %s436 = smul.u32 1, 16
        %s437 = smul.u32 %s436, 1
        %s438 = sshll.u32 %s437, 4
        %439 = dma.done %s435, %s438
        %s440 = sadd.s32 1, %s434
        %s441 = scalar_lea.sflag [#allocation3], %s440
        %s442 = smul.u32 16, 16
        %s443 = smul.u32 %s442, 1
        %s444 = sshll.u32 %s443, 4
        %445 = dma.done %s441, %s444
        %s446 = sadd.s32 2, %s434
        %s447 = scalar_lea.sflag [#allocation3], %s446
        %s448 = sshll.u32 %s437, 4
        %449 = dma.done %s447, %s448
        %s450 = smul.u32 %s293, 288
        %s451 = scalar_lea.vmem [#allocation2], %s450
        %v452 = vld [vmem:[%s451] sm:$0xff]
        %v453 = vld [vmem:[%s451 + $0x8] sm:$0xff]
        %v454 = vld [vmem:[%s451 + $0x10] sm:$0xff]
        %v455 = vld [vmem:[%s451 + $0x18] sm:$0xff]
        %v456 = vld [vmem:[%s451 + $0x20] sm:$0xff]
        %v457 = vld [vmem:[%s451 + $0x28] sm:$0xff]
        %v458 = vld [vmem:[%s451 + $0x30] sm:$0xff]
        %v459 = vld [vmem:[%s451 + $0x38] sm:$0xff]
        %v460 = vld [vmem:[%s451 + $0x40] sm:$0xff]
        %v461 = vld [vmem:[%s451 + $0x48] sm:$0xff]
        %v462 = vld [vmem:[%s451 + $0x50] sm:$0xff]
        %v463 = vld [vmem:[%s451 + $0x58] sm:$0xff]
        %v464 = vld [vmem:[%s451 + $0x60] sm:$0xff]
        %v465 = vld [vmem:[%s451 + $0x68] sm:$0xff]
        %v466 = vld [vmem:[%s451 + $0x70] sm:$0xff]
        %v467 = vld [vmem:[%s451 + $0x78] sm:$0xff]
        %v468 = vld [vmem:[%s451 + $0x80] sm:$0xff]
        %v469 = vld [vmem:[%s451 + $0x88] sm:$0xff]
        %v470 = vld [vmem:[%s451 + $0x90] sm:$0xff]
        %v471 = vld [vmem:[%s451 + $0x98] sm:$0xff]
        %v472 = vld [vmem:[%s451 + $0xa0] sm:$0xff]
        %v473 = vld [vmem:[%s451 + $0xa8] sm:$0xff]
        %v474 = vld [vmem:[%s451 + $0xb0] sm:$0xff]
        %v475 = vld [vmem:[%s451 + $0xb8] sm:$0xff]
        %v476 = vld [vmem:[%s451 + $0xc0] sm:$0xff]
        %v477 = vld [vmem:[%s451 + $0xc8] sm:$0xff]
        %v478 = vld [vmem:[%s451 + $0xd0] sm:$0xff]
        %v479 = vld [vmem:[%s451 + $0xd8] sm:$0xff]
        %v480 = vld [vmem:[%s451 + $0xe0] sm:$0xff]
        %v481 = vld [vmem:[%s451 + $0xe8] sm:$0xff]
        %v482 = vld [vmem:[%s451 + $0xf0] sm:$0xff]
        %v483 = vld [vmem:[%s451 + $0xf8] sm:$0xff]
        %v484 = vld [vmem:[%s451 + $0x100] sm:$0xff]
        %v485 = vld [vmem:[%s451 + $0x108] sm:$0xff]
        %v486 = vld [vmem:[%s451 + $0x110] sm:$0xff]
        %v487 = vld [vmem:[%s451 + $0x118] sm:$0xff]
        %v488 = vld [vmem:[#allocation7] sm:$0x1]
        %v490 = vlaneseq
        %v491 = vshrl.u32 %v490, 7
        %v492 = vsub.s32 0, %v491
        %v493 = vrot.slane %v488, %v492
        %v495 = vmul.f32 %v452, %v493
        %v496 = vmul.f32 %v453, %v493
        %v497 = vmul.f32 %v454, %v493
        %v498 = vmul.f32 %v455, %v493
        %v499 = vmul.f32 %v456, %v493
        %v500 = vmul.f32 %v457, %v493
        %v501 = vmul.f32 %v458, %v493
        %v502 = vmul.f32 %v459, %v493
        %v503 = vmul.f32 %v460, %v493
        %v504 = vmul.f32 %v461, %v493
        %v505 = vmul.f32 %v462, %v493
        %v506 = vmul.f32 %v463, %v493
        %v507 = vmul.f32 %v464, %v493
        %v508 = vmul.f32 %v465, %v493
        %v509 = vmul.f32 %v466, %v493
        %v510 = vmul.f32 %v467, %v493
        %v511 = vmul.f32 %v468, %v493
        %v512 = vmul.f32 %v469, %v493
        %v513 = vmul.f32 %v470, %v493
        %v514 = vmul.f32 %v471, %v493
        %v515 = vmul.f32 %v472, %v493
        %v516 = vmul.f32 %v473, %v493
        %v517 = vmul.f32 %v474, %v493
        %v518 = vmul.f32 %v475, %v493
        %v519 = vmul.f32 %v476, %v493
        %v520 = vmul.f32 %v477, %v493
        %v521 = vmul.f32 %v478, %v493
        %v522 = vmul.f32 %v479, %v493
        %v523 = vmul.f32 %v480, %v493
        %v524 = vmul.f32 %v481, %v493
        %v525 = vmul.f32 %v482, %v493
        %v526 = vmul.f32 %v483, %v493
        %v527 = vmul.f32 %v484, %v493
        %v528 = vmul.f32 %v485, %v493
        %v529 = vmul.f32 %v486, %v493
        %v530 = vmul.f32 %v487, %v493
        %v531 = vld [vmem:[#allocation9] sm:$0x1]
        %v533 = vlaneseq
        %v534 = vshrl.u32 %v533, 7
        %v535 = vsub.s32 0, %v534
        %v536 = vrot.slane %v531, %v535
        %v538 = vadd.f32 %v495, %v536
        %v539 = vadd.f32 %v496, %v536
        %v540 = vadd.f32 %v497, %v536
        %v541 = vadd.f32 %v498, %v536
        %v542 = vadd.f32 %v499, %v536
        %v543 = vadd.f32 %v500, %v536
        %v544 = vadd.f32 %v501, %v536
        %v545 = vadd.f32 %v502, %v536
        %v546 = vadd.f32 %v503, %v536
        %v547 = vadd.f32 %v504, %v536
        %v548 = vadd.f32 %v505, %v536
        %v549 = vadd.f32 %v506, %v536
        %v550 = vadd.f32 %v507, %v536
        %v551 = vadd.f32 %v508, %v536
        %v552 = vadd.f32 %v509, %v536
        %v553 = vadd.f32 %v510, %v536
        %v554 = vadd.f32 %v511, %v536
        %v555 = vadd.f32 %v512, %v536
        %v556 = vadd.f32 %v513, %v536
        %v557 = vadd.f32 %v514, %v536
        %v558 = vadd.f32 %v515, %v536
        %v559 = vadd.f32 %v516, %v536
        %v560 = vadd.f32 %v517, %v536
        %v561 = vadd.f32 %v518, %v536
        %v562 = vadd.f32 %v519, %v536
        %v563 = vadd.f32 %v520, %v536
        %v564 = vadd.f32 %v521, %v536
        %v565 = vadd.f32 %v522, %v536
        %v566 = vadd.f32 %v523, %v536
        %v567 = vadd.f32 %v524, %v536
        %v568 = vadd.f32 %v525, %v536
        %v569 = vadd.f32 %v526, %v536
        %v570 = vadd.f32 %v527, %v536
        %v571 = vadd.f32 %v528, %v536
        %v572 = vadd.f32 %v529, %v536
        %v573 = vadd.f32 %v530, %v536
        %v574 = vmax.f32 %v538, 0.0
        %v575 = vmax.f32 %v539, 0.0
        %v576 = vmax.f32 %v540, 0.0
        %v577 = vmax.f32 %v541, 0.0
        %v578 = vmax.f32 %v542, 0.0
        %v579 = vmax.f32 %v543, 0.0
        %v580 = vmax.f32 %v544, 0.0
        %v581 = vmax.f32 %v545, 0.0
        %v582 = vmax.f32 %v546, 0.0
        %v583 = vmax.f32 %v547, 0.0
        %v584 = vmax.f32 %v548, 0.0
        %v585 = vmax.f32 %v549, 0.0
        %v586 = vmax.f32 %v550, 0.0
        %v587 = vmax.f32 %v551, 0.0
        %v588 = vmax.f32 %v552, 0.0
        %v589 = vmax.f32 %v553, 0.0
        %v590 = vmax.f32 %v554, 0.0
        %v591 = vmax.f32 %v555, 0.0
        %v592 = vmax.f32 %v556, 0.0
        %v593 = vmax.f32 %v557, 0.0
        %v594 = vmax.f32 %v558, 0.0
        %v595 = vmax.f32 %v559, 0.0
        %v596 = vmax.f32 %v560, 0.0
        %v597 = vmax.f32 %v561, 0.0
        %v598 = vmax.f32 %v562, 0.0
        %v599 = vmax.f32 %v563, 0.0
        %v600 = vmax.f32 %v564, 0.0
        %v601 = vmax.f32 %v565, 0.0
        %v602 = vmax.f32 %v566, 0.0
        %v603 = vmax.f32 %v567, 0.0
        %v604 = vmax.f32 %v568, 0.0
        %v605 = vmax.f32 %v569, 0.0
        %v606 = vmax.f32 %v570, 0.0
        %v607 = vmax.f32 %v571, 0.0
        %v608 = vmax.f32 %v572, 0.0
        %v609 = vmax.f32 %v573, 0.0
        %s610 = scalar_select %p294, 1, 0
        %s611 = scalar_select %p294, 16, 17
        %v612 = vstv %s610
        %vm613 = vcmp.le.s32.totalorder %v612, 0
        %vm614 = vcmp.le.s32.totalorder %v612, 1
        %vm615 = vcmp.le.s32.totalorder %v612, 2
        %vm616 = vcmp.le.s32.totalorder %v612, 3
        %vm617 = vcmp.le.s32.totalorder %v612, 4
        %vm618 = vcmp.le.s32.totalorder %v612, 5
        %vm619 = vcmp.le.s32.totalorder %v612, 6
        %vm620 = vcmp.le.s32.totalorder %v612, 7
        %vm621 = vcmp.le.s32.totalorder %v612, 8
        %vm622 = vcmp.le.s32.totalorder %v612, 9
        %vm623 = vcmp.le.s32.totalorder %v612, 10
        %vm624 = vcmp.le.s32.totalorder %v612, 11
        %vm625 = vcmp.le.s32.totalorder %v612, 12
        %vm626 = vcmp.le.s32.totalorder %v612, 13
        %vm627 = vcmp.le.s32.totalorder %v612, 14
        %vm628 = vcmp.le.s32.totalorder %v612, 15
        %vm629 = vcmp.le.s32.totalorder %v612, 16
        %vm630 = vcmp.le.s32.totalorder %v612, 17
        %v631 = vstv %s611
        %vm632 = vcmp.ge.s32.totalorder %v631, 0
        %vm633 = vcmp.ge.s32.totalorder %v631, 1
        %vm634 = vcmp.ge.s32.totalorder %v631, 2
        %vm635 = vcmp.ge.s32.totalorder %v631, 3
        %vm636 = vcmp.ge.s32.totalorder %v631, 4
        %vm637 = vcmp.ge.s32.totalorder %v631, 5
        %vm638 = vcmp.ge.s32.totalorder %v631, 6
        %vm639 = vcmp.ge.s32.totalorder %v631, 7
        %vm640 = vcmp.ge.s32.totalorder %v631, 8
        %vm641 = vcmp.ge.s32.totalorder %v631, 9
        %vm642 = vcmp.ge.s32.totalorder %v631, 10
        %vm643 = vcmp.ge.s32.totalorder %v631, 11
        %vm644 = vcmp.ge.s32.totalorder %v631, 12
        %vm645 = vcmp.ge.s32.totalorder %v631, 13
        %vm646 = vcmp.ge.s32.totalorder %v631, 14
        %vm647 = vcmp.ge.s32.totalorder %v631, 15
        %vm648 = vcmp.ge.s32.totalorder %v631, 16
        %vm649 = vcmp.ge.s32.totalorder %v631, 17
        %vm650 = vmand %vm613, %vm632
        %vm651 = vmand %vm614, %vm633
        %vm652 = vmand %vm615, %vm634
        %vm653 = vmand %vm616, %vm635
        %vm654 = vmand %vm617, %vm636
        %vm655 = vmand %vm618, %vm637
        %vm656 = vmand %vm619, %vm638
        %vm657 = vmand %vm620, %vm639
        %vm658 = vmand %vm621, %vm640
        %vm659 = vmand %vm622, %vm641
        %vm660 = vmand %vm623, %vm642
        %vm661 = vmand %vm624, %vm643
        %vm662 = vmand %vm625, %vm644
        %vm663 = vmand %vm626, %vm645
        %vm664 = vmand %vm627, %vm646
        %vm665 = vmand %vm628, %vm647
        %vm666 = vmand %vm629, %vm648
        %vm667 = vmand %vm630, %vm649
        %v668 = vsel %vm650, 1, 0
        %v669 = vsel %vm651, 1, 0
        %v670 = vsel %vm652, 1, 0
        %v671 = vsel %vm653, 1, 0
        %v672 = vsel %vm654, 1, 0
        %v673 = vsel %vm655, 1, 0
        %v674 = vsel %vm656, 1, 0
        %v675 = vsel %vm657, 1, 0
        %v676 = vsel %vm658, 1, 0
        %v677 = vsel %vm659, 1, 0
        %v678 = vsel %vm660, 1, 0
        %v679 = vsel %vm661, 1, 0
        %v680 = vsel %vm662, 1, 0
        %v681 = vsel %vm663, 1, 0
        %v682 = vsel %vm664, 1, 0
        %v683 = vsel %vm665, 1, 0
        %v684 = vsel %vm666, 1, 0
        %v685 = vsel %vm667, 1, 0
        %vm686 = vcmp.eq.s32.totalorder %v668, 1
        %vm687 = vcmp.eq.s32.totalorder %v669, 1
        %vm688 = vcmp.eq.s32.totalorder %v670, 1
        %vm689 = vcmp.eq.s32.totalorder %v671, 1
        %vm690 = vcmp.eq.s32.totalorder %v672, 1
        %vm691 = vcmp.eq.s32.totalorder %v673, 1
        %vm692 = vcmp.eq.s32.totalorder %v674, 1
        %vm693 = vcmp.eq.s32.totalorder %v675, 1
        %vm694 = vcmp.eq.s32.totalorder %v676, 1
        %vm695 = vcmp.eq.s32.totalorder %v677, 1
        %vm696 = vcmp.eq.s32.totalorder %v678, 1
        %vm697 = vcmp.eq.s32.totalorder %v679, 1
        %vm698 = vcmp.eq.s32.totalorder %v680, 1
        %vm699 = vcmp.eq.s32.totalorder %v681, 1
        %vm700 = vcmp.eq.s32.totalorder %v682, 1
        %vm701 = vcmp.eq.s32.totalorder %v683, 1
        %vm702 = vcmp.eq.s32.totalorder %v684, 1
        %vm703 = vcmp.eq.s32.totalorder %v685, 1
        %v704 = vsel %vm686, %v574, 0.0
        %v705 = vsel %vm686, %v575, 0.0
        %v706 = vsel %vm687, %v576, 0.0
        %v707 = vsel %vm687, %v577, 0.0
        %v708 = vsel %vm688, %v578, 0.0
        %v709 = vsel %vm688, %v579, 0.0
        %v710 = vsel %vm689, %v580, 0.0
        %v711 = vsel %vm689, %v581, 0.0
        %v712 = vsel %vm690, %v582, 0.0
        %v713 = vsel %vm690, %v583, 0.0
        %v714 = vsel %vm691, %v584, 0.0
        %v715 = vsel %vm691, %v585, 0.0
        %v716 = vsel %vm692, %v586, 0.0
        %v717 = vsel %vm692, %v587, 0.0
        %v718 = vsel %vm693, %v588, 0.0
        %v719 = vsel %vm693, %v589, 0.0
        %v720 = vsel %vm694, %v590, 0.0
        %v721 = vsel %vm694, %v591, 0.0
        %v722 = vsel %vm695, %v592, 0.0
        %v723 = vsel %vm695, %v593, 0.0
        %v724 = vsel %vm696, %v594, 0.0
        %v725 = vsel %vm696, %v595, 0.0
        %v726 = vsel %vm697, %v596, 0.0
        %v727 = vsel %vm697, %v597, 0.0
        %v728 = vsel %vm698, %v598, 0.0
        %v729 = vsel %vm698, %v599, 0.0
        %v730 = vsel %vm699, %v600, 0.0
        %v731 = vsel %vm699, %v601, 0.0
        %v732 = vsel %vm700, %v602, 0.0
        %v733 = vsel %vm700, %v603, 0.0
        %v734 = vsel %vm701, %v604, 0.0
        %v735 = vsel %vm701, %v605, 0.0
        %v736 = vsel %vm702, %v606, 0.0
        %v737 = vsel %vm702, %v607, 0.0
        %v738 = vsel %vm703, %v608, 0.0
        %v739 = vsel %vm703, %v609, 0.0
        %vm776 = vcmask 1040384
        %v777 = vrot.slane %v704, 7
        %v778 = vrot.slane %v705, 7
        %v779 = vsel %vm776, %v777, %v778
        %v780 = vrot.slane %v706, 7
        %v781 = vrot.slane %v707, 7
        %v782 = vsel %vm776, %v780, %v781
        %v783 = vrot.slane %v708, 7
        %v784 = vrot.slane %v709, 7
        %v785 = vsel %vm776, %v783, %v784
        %v786 = vrot.slane %v710, 7
        %v787 = vrot.slane %v711, 7
        %v788 = vsel %vm776, %v786, %v787
        %v789 = vrot.slane %v712, 7
        %v790 = vrot.slane %v713, 7
        %v791 = vsel %vm776, %v789, %v790
        %v792 = vrot.slane %v714, 7
        %v793 = vrot.slane %v715, 7
        %v794 = vsel %vm776, %v792, %v793
        %v795 = vrot.slane %v716, 7
        %v796 = vrot.slane %v717, 7
        %v797 = vsel %vm776, %v795, %v796
        %v798 = vrot.slane %v718, 7
        %v799 = vrot.slane %v719, 7
        %v800 = vsel %vm776, %v798, %v799
        %v801 = vrot.slane %v720, 7
        %v802 = vrot.slane %v721, 7
        %v803 = vsel %vm776, %v801, %v802
        %v804 = vrot.slane %v722, 7
        %v805 = vrot.slane %v723, 7
        %v806 = vsel %vm776, %v804, %v805
        %v807 = vrot.slane %v724, 7
        %v808 = vrot.slane %v725, 7
        %v809 = vsel %vm776, %v807, %v808
        %v810 = vrot.slane %v726, 7
        %v811 = vrot.slane %v727, 7
        %v812 = vsel %vm776, %v810, %v811
        %v813 = vrot.slane %v728, 7
        %v814 = vrot.slane %v729, 7
        %v815 = vsel %vm776, %v813, %v814
        %v816 = vrot.slane %v730, 7
        %v817 = vrot.slane %v731, 7
        %v818 = vsel %vm776, %v816, %v817
        %v819 = vrot.slane %v732, 7
        %v820 = vrot.slane %v733, 7
        %v821 = vsel %vm776, %v819, %v820
        %v822 = vrot.slane %v734, 7
        %v823 = vrot.slane %v735, 7
        %v824 = vsel %vm776, %v822, %v823
        %v825 = vrot.slane %v736, 7
        %v826 = vrot.slane %v737, 7
        %v827 = vsel %vm776, %v825, %v826
        %v828 = vrot.slane %v738, 7
        %v829 = vrot.slane %v739, 7
        %v830 = vsel %vm776, %v828, %v829
        %v867 = vsel %vm776, 0.0, %v777
        %v868 = vsel %vm776, 0.0, %v780
        %v869 = vsel %vm776, 0.0, %v783
        %v870 = vsel %vm776, 0.0, %v786
        %v871 = vsel %vm776, 0.0, %v789
        %v872 = vsel %vm776, 0.0, %v792
        %v873 = vsel %vm776, 0.0, %v795
        %v874 = vsel %vm776, 0.0, %v798
        %v875 = vsel %vm776, 0.0, %v801
        %v876 = vsel %vm776, 0.0, %v804
        %v877 = vsel %vm776, 0.0, %v807
        %v878 = vsel %vm776, 0.0, %v810
        %v879 = vsel %vm776, 0.0, %v813
        %v880 = vsel %vm776, 0.0, %v816
        %v881 = vsel %vm776, 0.0, %v819
        %v882 = vsel %vm776, 0.0, %v822
        %v883 = vsel %vm776, 0.0, %v825
        %v884 = vsel %vm776, 0.0, %v828
        %vm885 = vcmask 1046528
        %v886 = vrot.slane %v704, 1
        %v887 = vrot.slane %v705, 1
        %v888 = vsel %vm885, %v886, %v887
        %v889 = vrot.slane %v706, 1
        %v890 = vrot.slane %v707, 1
        %v891 = vsel %vm885, %v889, %v890
        %v892 = vrot.slane %v708, 1
        %v893 = vrot.slane %v709, 1
        %v894 = vsel %vm885, %v892, %v893
        %v895 = vrot.slane %v710, 1
        %v896 = vrot.slane %v711, 1
        %v897 = vsel %vm885, %v895, %v896
        %v898 = vrot.slane %v712, 1
        %v899 = vrot.slane %v713, 1
        %v900 = vsel %vm885, %v898, %v899
        %v901 = vrot.slane %v714, 1
        %v902 = vrot.slane %v715, 1
        %v903 = vsel %vm885, %v901, %v902
        %v904 = vrot.slane %v716, 1
        %v905 = vrot.slane %v717, 1
        %v906 = vsel %vm885, %v904, %v905
        %v907 = vrot.slane %v718, 1
        %v908 = vrot.slane %v719, 1
        %v909 = vsel %vm885, %v907, %v908
        %v910 = vrot.slane %v720, 1
        %v911 = vrot.slane %v721, 1
        %v912 = vsel %vm885, %v910, %v911
        %v913 = vrot.slane %v722, 1
        %v914 = vrot.slane %v723, 1
        %v915 = vsel %vm885, %v913, %v914
        %v916 = vrot.slane %v724, 1
        %v917 = vrot.slane %v725, 1
        %v918 = vsel %vm885, %v916, %v917
        %v919 = vrot.slane %v726, 1
        %v920 = vrot.slane %v727, 1
        %v921 = vsel %vm885, %v919, %v920
        %v922 = vrot.slane %v728, 1
        %v923 = vrot.slane %v729, 1
        %v924 = vsel %vm885, %v922, %v923
        %v925 = vrot.slane %v730, 1
        %v926 = vrot.slane %v731, 1
        %v927 = vsel %vm885, %v925, %v926
        %v928 = vrot.slane %v732, 1
        %v929 = vrot.slane %v733, 1
        %v930 = vsel %vm885, %v928, %v929
        %v931 = vrot.slane %v734, 1
        %v932 = vrot.slane %v735, 1
        %v933 = vsel %vm885, %v931, %v932
        %v934 = vrot.slane %v736, 1
        %v935 = vrot.slane %v737, 1
        %v936 = vsel %vm885, %v934, %v935
        %v937 = vrot.slane %v738, 1
        %v938 = vrot.slane %v739, 1
        %v939 = vsel %vm885, %v937, %v938
        %v976 = vsel %vm885, %v887, 0.0
        %v977 = vsel %vm885, %v890, 0.0
        %v978 = vsel %vm885, %v893, 0.0
        %v979 = vsel %vm885, %v896, 0.0
        %v980 = vsel %vm885, %v899, 0.0
        %v981 = vsel %vm885, %v902, 0.0
        %v982 = vsel %vm885, %v905, 0.0
        %v983 = vsel %vm885, %v908, 0.0
        %v984 = vsel %vm885, %v911, 0.0
        %v985 = vsel %vm885, %v914, 0.0
        %v986 = vsel %vm885, %v917, 0.0
        %v987 = vsel %vm885, %v920, 0.0
        %v988 = vsel %vm885, %v923, 0.0
        %v989 = vsel %vm885, %v926, 0.0
        %v990 = vsel %vm885, %v929, 0.0
        %v991 = vsel %vm885, %v932, 0.0
        %v992 = vsel %vm885, %v935, 0.0
        %v993 = vsel %vm885, %v938, 0.0
        %v994 = vld [vmem:[#allocation4] sm:$0xff]
        %v995 = vld [vmem:[#allocation4 + $0x8] sm:$0xff]
        %v996 = vld [vmem:[#allocation4 + $0x10] sm:$0xff]
        %v997 = vld [vmem:[#allocation4 + $0x18] sm:$0xff]
        %v998 = vld [vmem:[#allocation4 + $0x20] sm:$0xff]
        %v999 = vld [vmem:[#allocation4 + $0x28] sm:$0xff]
        %v1000 = vld [vmem:[#allocation4 + $0x30] sm:$0xff]
        %v1001 = vld [vmem:[#allocation4 + $0x38] sm:$0xff]
        %v1002 = vld [vmem:[#allocation4 + $0x40] sm:$0xff]
        %v1003 = vld [vmem:[#allocation4 + $0x48] sm:$0xff]
        %v1004 = vld [vmem:[#allocation4 + $0x50] sm:$0xff]
        %v1005 = vld [vmem:[#allocation4 + $0x58] sm:$0xff]
        %v1006 = vld [vmem:[#allocation4 + $0x60] sm:$0xff]
        %v1007 = vld [vmem:[#allocation4 + $0x68] sm:$0xff]
        %v1008 = vld [vmem:[#allocation4 + $0x70] sm:$0xff]
        %v1009 = vld [vmem:[#allocation4 + $0x78] sm:$0xff]
        %v1010 = vld [vmem:[#allocation4 + $0x80] sm:$0xff]
        %v1011 = vld [vmem:[#allocation4 + $0x88] sm:$0xff]
        %v1012 = vld [vmem:[#allocation4 + $0x90] sm:$0xff]
        %v1013 = vld [vmem:[#allocation4 + $0x98] sm:$0xff]
        %v1014 = vld [vmem:[#allocation4 + $0xa0] sm:$0xff]
        %v1015 = vld [vmem:[#allocation4 + $0xa8] sm:$0xff]
        %v1016 = vld [vmem:[#allocation4 + $0xb0] sm:$0xff]
        %v1017 = vld [vmem:[#allocation4 + $0xb8] sm:$0xff]
        %v1018 = vld [vmem:[#allocation4 + $0xc0] sm:$0xff]
        %v1019 = vld [vmem:[#allocation4 + $0xc8] sm:$0xff]
        %v1020 = vld [vmem:[#allocation4 + $0xd0] sm:$0xff]
        %v1021 = vld [vmem:[#allocation4 + $0xd8] sm:$0xff]
        %v1022 = vld [vmem:[#allocation4 + $0xe0] sm:$0xff]
        %v1023 = vld [vmem:[#allocation4 + $0xe8] sm:$0xff]
        %v1024 = vld [vmem:[#allocation4 + $0xf0] sm:$0xff]
        %v1025 = vld [vmem:[#allocation4 + $0xf8] sm:$0xff]
        %v1026 = vld [vmem:[#allocation4 + $0x100] sm:$0xff]
        %v1027 = vld [vmem:[#allocation4 + $0x108] sm:$0xff]
        %v1028 = vld [vmem:[#allocation4 + $0x110] sm:$0xff]
        %v1029 = vld [vmem:[#allocation4 + $0x118] sm:$0xff]
        %v1030 = vld [vmem:[#allocation4 + $0x120] sm:$0xff]
        %v1031 = vld [vmem:[#allocation4 + $0x128] sm:$0xff]
        %v1032 = vld [vmem:[#allocation4 + $0x130] sm:$0xff]
        %v1033 = vld [vmem:[#allocation4 + $0x138] sm:$0xff]
        %v1034 = vld [vmem:[#allocation4 + $0x140] sm:$0xff]
        %v1035 = vld [vmem:[#allocation4 + $0x148] sm:$0xff]
        %v1036 = vld [vmem:[#allocation4 + $0x150] sm:$0xff]
        %v1037 = vld [vmem:[#allocation4 + $0x158] sm:$0xff]
        %v1038 = vld [vmem:[#allocation4 + $0x160] sm:$0xff]
        %v1039 = vld [vmem:[#allocation4 + $0x168] sm:$0xff]
        %v1040 = vld [vmem:[#allocation4 + $0x170] sm:$0xff]
        %v1041 = vld [vmem:[#allocation4 + $0x178] sm:$0xff]
        %s1042 = scalar_lea.vmem [#allocation4], 384
        %v1043 = vld [vmem:[%s1042] sm:$0xff]
        %v1044 = vld [vmem:[%s1042 + $0x8] sm:$0xff]
        %v1045 = vld [vmem:[%s1042 + $0x10] sm:$0xff]
        %v1046 = vld [vmem:[%s1042 + $0x18] sm:$0xff]
        %v1047 = vld [vmem:[%s1042 + $0x20] sm:$0xff]
        %v1048 = vld [vmem:[%s1042 + $0x28] sm:$0xff]
        %v1049 = vld [vmem:[%s1042 + $0x30] sm:$0xff]
        %v1050 = vld [vmem:[%s1042 + $0x38] sm:$0xff]
        %v1051 = vld [vmem:[%s1042 + $0x40] sm:$0xff]
        %v1052 = vld [vmem:[%s1042 + $0x48] sm:$0xff]
        %v1053 = vld [vmem:[%s1042 + $0x50] sm:$0xff]
        %v1054 = vld [vmem:[%s1042 + $0x58] sm:$0xff]
        %v1055 = vld [vmem:[%s1042 + $0x60] sm:$0xff]
        %v1056 = vld [vmem:[%s1042 + $0x68] sm:$0xff]
        %v1057 = vld [vmem:[%s1042 + $0x70] sm:$0xff]
        %v1058 = vld [vmem:[%s1042 + $0x78] sm:$0xff]
        %v1059 = vld [vmem:[%s1042 + $0x80] sm:$0xff]
        %v1060 = vld [vmem:[%s1042 + $0x88] sm:$0xff]
        %v1061 = vld [vmem:[%s1042 + $0x90] sm:$0xff]
        %v1062 = vld [vmem:[%s1042 + $0x98] sm:$0xff]
        %v1063 = vld [vmem:[%s1042 + $0xa0] sm:$0xff]
        %v1064 = vld [vmem:[%s1042 + $0xa8] sm:$0xff]
        %v1065 = vld [vmem:[%s1042 + $0xb0] sm:$0xff]
        %v1066 = vld [vmem:[%s1042 + $0xb8] sm:$0xff]
        %v1067 = vld [vmem:[%s1042 + $0xc0] sm:$0xff]
        %v1068 = vld [vmem:[%s1042 + $0xc8] sm:$0xff]
        %v1069 = vld [vmem:[%s1042 + $0xd0] sm:$0xff]
        %v1070 = vld [vmem:[%s1042 + $0xd8] sm:$0xff]
        %v1071 = vld [vmem:[%s1042 + $0xe0] sm:$0xff]
        %v1072 = vld [vmem:[%s1042 + $0xe8] sm:$0xff]
        %v1073 = vld [vmem:[%s1042 + $0xf0] sm:$0xff]
        %v1074 = vld [vmem:[%s1042 + $0xf8] sm:$0xff]
        %v1075 = vld [vmem:[%s1042 + $0x100] sm:$0xff]
        %v1076 = vld [vmem:[%s1042 + $0x108] sm:$0xff]
        %v1077 = vld [vmem:[%s1042 + $0x110] sm:$0xff]
        %v1078 = vld [vmem:[%s1042 + $0x118] sm:$0xff]
        %v1079 = vld [vmem:[%s1042 + $0x120] sm:$0xff]
        %v1080 = vld [vmem:[%s1042 + $0x128] sm:$0xff]
        %v1081 = vld [vmem:[%s1042 + $0x130] sm:$0xff]
        %v1082 = vld [vmem:[%s1042 + $0x138] sm:$0xff]
        %v1083 = vld [vmem:[%s1042 + $0x140] sm:$0xff]
        %v1084 = vld [vmem:[%s1042 + $0x148] sm:$0xff]
        %v1085 = vld [vmem:[%s1042 + $0x150] sm:$0xff]
        %v1086 = vld [vmem:[%s1042 + $0x158] sm:$0xff]
        %v1087 = vld [vmem:[%s1042 + $0x160] sm:$0xff]
        %v1088 = vld [vmem:[%s1042 + $0x168] sm:$0xff]
        %v1089 = vld [vmem:[%s1042 + $0x170] sm:$0xff]
        %v1090 = vld [vmem:[%s1042 + $0x178] sm:$0xff]
        %1091 = vmatprep.subr.mxu0 0.0
        %1092 = vmatpush1.msra.mxu0 %v1043
        %1093 = vmatprep.subr.mxu0 0.0
        %1094 = vmatpush1.msra.mxu0 %v1044
        %1095 = vmatprep.subr.mxu0 0.0
        %1096 = vmatpush1.msra.mxu0 %v1045
        %1097 = vmatprep.subr.mxu0 0.0
        %1098 = vmatpush1.msra.mxu0 %v1046
        %1099 = vmatprep.subr.mxu0 0.0
        %1100 = vmatpush1.msra.mxu0 %v1047
        %1101 = vmatprep.subr.mxu0 0.0
        %1102 = vmatpush1.msra.mxu0 %v1048
        %1103 = vmatprep.subr.mxu0 0.0
        %1104 = vmatpush1.msra.mxu0 %v1049
        %1105 = vmatprep.subr.mxu0 0.0
        %1106 = vmatpush1.msra.mxu0 %v1050
        %1107 = vmatprep.subr.mxu0 0.0
        %1108 = vmatpush1.msra.mxu0 %v1051
        %1109 = vmatprep.subr.mxu0 0.0
        %1110 = vmatpush1.msra.mxu0 %v1052
        %1111 = vmatprep.subr.mxu0 0.0
        %1112 = vmatpush1.msra.mxu0 %v1053
        %1113 = vmatprep.subr.mxu0 0.0
        %1114 = vmatpush1.msra.mxu0 %v1054
        %1115 = vmatprep.subr.mxu0 0.0
        %1116 = vmatpush1.msra.mxu0 %v1055
        %1117 = vmatprep.subr.mxu0 0.0
        %1118 = vmatpush1.msra.mxu0 %v1056
        %1119 = vmatprep.subr.mxu0 0.0
        %1120 = vmatpush1.msra.mxu0 %v1057
        %1121 = vmatprep.subr.mxu0 0.0
        %1122 = vmatpush1.msra.mxu0 %v1058
        %1123 = vmatprep.subr.mxu0 0.0
        %1124 = vmatpush1.msra.mxu0 %v1059
        %1125 = vmatprep.subr.mxu0 0.0
        %1126 = vmatpush1.msra.mxu0 %v1060
        %1127 = vmatprep.subr.mxu0 0.0
        %1128 = vmatpush1.msra.mxu0 %v1061
        %1129 = vmatprep.subr.mxu0 0.0
        %1130 = vmatpush1.msra.mxu0 %v1062
        %1131 = vmatprep.subr.mxu0 0.0
        %1132 = vmatpush1.msra.mxu0 %v1063
        %1133 = vmatprep.subr.mxu0 0.0
        %1134 = vmatpush1.msra.mxu0 %v1064
        %1135 = vmatprep.subr.mxu0 0.0
        %1136 = vmatpush1.msra.mxu0 %v1065
        %1137 = vmatprep.subr.mxu0 0.0
        %1138 = vmatpush1.msra.mxu0 %v1066
        %1139 = vmatprep.subr.mxu0 0.0
        %1140 = vmatpush1.msra.mxu0 %v1067
        %1141 = vmatprep.subr.mxu0 0.0
        %1142 = vmatpush1.msra.mxu0 %v1068
        %1143 = vmatprep.subr.mxu0 0.0
        %1144 = vmatpush1.msra.mxu0 %v1069
        %1145 = vmatprep.subr.mxu0 0.0
        %1146 = vmatpush1.msra.mxu0 %v1070
        %1147 = vmatprep.subr.mxu0 0.0
        %1148 = vmatpush1.msra.mxu0 %v1071
        %1149 = vmatprep.subr.mxu0 0.0
        %1150 = vmatpush1.msra.mxu0 %v1072
        %1151 = vmatprep.subr.mxu0 0.0
        %1152 = vmatpush1.msra.mxu0 %v1073
        %1153 = vmatprep.subr.mxu0 0.0
        %1154 = vmatpush1.msra.mxu0 %v1074
        %1155 = vmatprep.mubr.f32.mxu0 %v706
        %1156 = vmatmul.mubr.f32.gmra.mrb[0].mxu0 %v868
        %v1157 = vpop.f32.mrb[0].mxu0
        %v1158 = vadd.f32 0.0, %v1157
        %v1159 = vpop.f32.mrb[0].mxu0
        %1160 = vmatprep.mubr.f32.mxu0 %v707
        %1161 = vmatmul.mubr.f32.gmra.mrb[0].mxu0 %v782
        %v1162 = vpop.f32.mrb[0].mxu0
        %v1163 = vadd.f32 0.0, %v1162
        %v1164 = vpop.f32.mrb[0].mxu0
        %1165 = vmatprep.mubr.f32.mxu0 %v708
        %1166 = vmatmul.mubr.f32.gmra.mrb[0].mxu0 %v869
        %v1167 = vpop.f32.mrb[0].mxu0
        %v1168 = vadd.f32 0.0, %v1167
        %v1169 = vpop.f32.mrb[0].mxu0
        %1170 = vmatprep.mubr.f32.mxu0 %v709
        %1171 = vmatmul.mubr.f32.gmra.mrb[0].mxu0 %v785
        %v1172 = vpop.f32.mrb[0].mxu0
        %v1173 = vadd.f32 0.0, %v1172
        %v1174 = vpop.f32.mrb[0].mxu0
        %1175 = vmatprep.mubr.f32.mxu0 %v710
        %1176 = vmatmul.mubr.f32.gmra.mrb[0].mxu0 %v870
        %v1177 = vpop.f32.mrb[0].mxu0
        %v1178 = vadd.f32 0.0, %v1177
        %v1179 = vpop.f32.mrb[0].mxu0
        %1180 = vmatprep.mubr.f32.mxu0 %v711
        %1181 = vmatmul.mubr.f32.gmra.mrb[0].mxu0 %v788
        %v1182 = vpop.f32.mrb[0].mxu0
        %v1183 = vadd.f32 0.0, %v1182
        %v1184 = vpop.f32.mrb[0].mxu0
        %1185 = vmatprep.mubr.f32.mxu0 %v712
        %1186 = vmatmul.mubr.f32.gmra.mrb[0].mxu0 %v871
        %v1187 = vpop.f32.mrb[0].mxu0
        %v1188 = vadd.f32 0.0, %v1187
        %v1189 = vpop.f32.mrb[0].mxu0
        %1190 = vmatprep.mubr.f32.mxu0 %v713
        %1191 = vmatmul.mubr.f32.gmra.mrb[0].mxu0 %v791
        %v1192 = vpop.f32.mrb[0].mxu0
        %v1193 = vadd.f32 0.0, %v1192
        %v1194 = vpop.f32.mrb[0].mxu0
        %1195 = vmatprep.mubr.f32.mxu0 %v714
        %1196 = vmatmul.mubr.f32.gmra.mrb[0].mxu0 %v872
        %v1197 = vpop.f32.mrb[0].mxu0
        %v1198 = vadd.f32 0.0, %v1197
        %v1199 = vpop.f32.mrb[0].mxu0
        %1200 = vmatprep.mubr.f32.mxu0 %v715
        %1201 = vmatmul.mubr.f32.gmra.mrb[0].mxu0 %v794
        %v1202 = vpop.f32.mrb[0].mxu0
        %v1203 = vadd.f32 0.0, %v1202
        %v1204 = vpop.f32.mrb[0].mxu0
        %1205 = vmatprep.mubr.f32.mxu0 %v716
        %1206 = vmatmul.mubr.f32.gmra.mrb[0].mxu0 %v873
        %v1207 = vpop.f32.mrb[0].mxu0
        %v1208 = vadd.f32 0.0, %v1207
        %v1209 = vpop.f32.mrb[0].mxu0
        %1210 = vmatprep.mubr.f32.mxu0 %v717
        %1211 = vmatmul.mubr.f32.gmra.mrb[0].mxu0 %v797
        %v1212 = vpop.f32.mrb[0].mxu0
        %v1213 = vadd.f32 0.0, %v1212
        %v1214 = vpop.f32.mrb[0].mxu0
        %1215 = vmatprep.mubr.f32.mxu0 %v718
        %1216 = vmatmul.mubr.f32.gmra.mrb[0].mxu0 %v874
        %v1217 = vpop.f32.mrb[0].mxu0
        %v1218 = vadd.f32 0.0, %v1217
        %v1219 = vpop.f32.mrb[0].mxu0
        %1220 = vmatprep.mubr.f32.mxu0 %v719
        %1221 = vmatmul.mubr.f32.gmra.mrb[0].mxu0 %v800
        %v1222 = vpop.f32.mrb[0].mxu0
        %v1223 = vadd.f32 0.0, %v1222
        %v1224 = vpop.f32.mrb[0].mxu0
        %1225 = vmatprep.mubr.f32.mxu0 %v720
        %1226 = vmatmul.mubr.f32.gmra.mrb[0].mxu0 %v875
        %v1227 = vpop.f32.mrb[0].mxu0
        %v1228 = vadd.f32 0.0, %v1227
        %v1229 = vpop.f32.mrb[0].mxu0
        %1230 = vmatprep.mubr.f32.mxu0 %v721
        %1231 = vmatmul.mubr.f32.gmra.mrb[0].mxu0 %v803
        %v1232 = vpop.f32.mrb[0].mxu0
        %v1233 = vadd.f32 0.0, %v1232
        %v1234 = vpop.f32.mrb[0].mxu0
        %1235 = vmatprep.mubr.f32.mxu0 %v722
        %1236 = vmatmul.mubr.f32.gmra.mrb[0].mxu0 %v876
        %v1237 = vpop.f32.mrb[0].mxu0
        %v1238 = vadd.f32 0.0, %v1237
        %v1239 = vpop.f32.mrb[0].mxu0
        %1240 = vmatprep.mubr.f32.mxu0 %v723
        %1241 = vmatmul.mubr.f32.gmra.mrb[0].mxu0 %v806
        %v1242 = vpop.f32.mrb[0].mxu0
        %v1243 = vadd.f32 0.0, %v1242
        %v1244 = vpop.f32.mrb[0].mxu0
        %1245 = vmatprep.mubr.f32.mxu0 %v724
        %1246 = vmatmul.mubr.f32.gmra.mrb[0].mxu0 %v877
        %v1247 = vpop.f32.mrb[0].mxu0
        %v1248 = vadd.f32 0.0, %v1247
        %v1249 = vpop.f32.mrb[0].mxu0
        %1250 = vmatprep.mubr.f32.mxu0 %v725
        %1251 = vmatmul.mubr.f32.gmra.mrb[0].mxu0 %v809
        %v1252 = vpop.f32.mrb[0].mxu0
        %v1253 = vadd.f32 0.0, %v1252
        %v1254 = vpop.f32.mrb[0].mxu0
        %1255 = vmatprep.mubr.f32.mxu0 %v726
        %1256 = vmatmul.mubr.f32.gmra.mrb[0].mxu0 %v878
        %v1257 = vpop.f32.mrb[0].mxu0
        %v1258 = vadd.f32 0.0, %v1257
        %v1259 = vpop.f32.mrb[0].mxu0
        %1260 = vmatprep.mubr.f32.mxu0 %v727
        %1261 = vmatmul.mubr.f32.gmra.mrb[0].mxu0 %v812
        %v1262 = vpop.f32.mrb[0].mxu0
        %v1263 = vadd.f32 0.0, %v1262
        %v1264 = vpop.f32.mrb[0].mxu0
        %1265 = vmatprep.mubr.f32.mxu0 %v728
        %1266 = vmatmul.mubr.f32.gmra.mrb[0].mxu0 %v879
        %v1267 = vpop.f32.mrb[0].mxu0
        %v1268 = vadd.f32 0.0, %v1267
        %v1269 = vpop.f32.mrb[0].mxu0
        %1270 = vmatprep.mubr.f32.mxu0 %v729
        %1271 = vmatmul.mubr.f32.gmra.mrb[0].mxu0 %v815
        %v1272 = vpop.f32.mrb[0].mxu0
        %v1273 = vadd.f32 0.0, %v1272
        %v1274 = vpop.f32.mrb[0].mxu0
        %1275 = vmatprep.mubr.f32.mxu0 %v730
        %1276 = vmatmul.mubr.f32.gmra.mrb[0].mxu0 %v880
        %v1277 = vpop.f32.mrb[0].mxu0
        %v1278 = vadd.f32 0.0, %v1277
        %v1279 = vpop.f32.mrb[0].mxu0
        %1280 = vmatprep.mubr.f32.mxu0 %v731
        %1281 = vmatmul.mubr.f32.gmra.mrb[0].mxu0 %v818
        %v1282 = vpop.f32.mrb[0].mxu0
        %v1283 = vadd.f32 0.0, %v1282
        %v1284 = vpop.f32.mrb[0].mxu0
        %1285 = vmatprep.mubr.f32.mxu0 %v732
        %1286 = vmatmul.mubr.f32.gmra.mrb[0].mxu0 %v881
        %v1287 = vpop.f32.mrb[0].mxu0
        %v1288 = vadd.f32 0.0, %v1287
        %v1289 = vpop.f32.mrb[0].mxu0
        %1290 = vmatprep.mubr.f32.mxu0 %v733
        %1291 = vmatmul.mubr.f32.gmra.mrb[0].mxu0 %v821
        %v1292 = vpop.f32.mrb[0].mxu0
        %v1293 = vadd.f32 0.0, %v1292
        %v1294 = vpop.f32.mrb[0].mxu0
        %1295 = vmatprep.mubr.f32.mxu0 %v734
        %1296 = vmatmul.mubr.f32.gmra.mrb[0].mxu0 %v882
        %v1297 = vpop.f32.mrb[0].mxu0
        %v1298 = vadd.f32 0.0, %v1297
        %v1299 = vpop.f32.mrb[0].mxu0
        %1300 = vmatprep.mubr.f32.mxu0 %v735
        %1301 = vmatmul.mubr.f32.gmra.mrb[0].mxu0 %v824
        %v1302 = vpop.f32.mrb[0].mxu0
        %v1303 = vadd.f32 0.0, %v1302
        %v1304 = vpop.f32.mrb[0].mxu0
        %1305 = vmatprep.mubr.f32.mxu0 %v736
        %1306 = vmatmul.mubr.f32.gmra.mrb[0].mxu0 %v883
        %v1307 = vpop.f32.mrb[0].mxu0
        %v1308 = vadd.f32 0.0, %v1307
        %v1309 = vpop.f32.mrb[0].mxu0
        %1310 = vmatprep.mubr.f32.mxu0 %v737
        %1311 = vmatmul.mubr.f32.gmra.mrb[0].mxu0 %v827
        %v1312 = vpop.f32.mrb[0].mxu0
        %v1313 = vadd.f32 0.0, %v1312
        %v1314 = vpop.f32.mrb[0].mxu0
        %1315 = vdwg.mxu0
        %1316 = vmatprep.subr.mxu0 0.0
        %1317 = vmatpush1.msra.mxu0 %v1075
        %1318 = vmatprep.subr.mxu0 0.0
        %1319 = vmatpush1.msra.mxu0 %v1076
        %1320 = vmatprep.subr.mxu0 0.0
        %1321 = vmatpush1.msra.mxu0 %v1077
        %1322 = vmatprep.subr.mxu0 0.0
        %1323 = vmatpush1.msra.mxu0 %v1078
        %1324 = vmatprep.subr.mxu0 0.0
        %1325 = vmatpush1.msra.mxu0 %v1079
        %1326 = vmatprep.subr.mxu0 0.0
        %1327 = vmatpush1.msra.mxu0 %v1080
        %1328 = vmatprep.subr.mxu0 0.0
        %1329 = vmatpush1.msra.mxu0 %v1081
        %1330 = vmatprep.subr.mxu0 0.0
        %1331 = vmatpush1.msra.mxu0 %v1082
        %1332 = vmatprep.subr.mxu0 0.0
        %1333 = vmatpush1.msra.mxu0 %v1083
        %1334 = vmatprep.subr.mxu0 0.0
        %1335 = vmatpush1.msra.mxu0 %v1084
        %1336 = vmatprep.subr.mxu0 0.0
        %1337 = vmatpush1.msra.mxu0 %v1085
        %1338 = vmatprep.subr.mxu0 0.0
        %1339 = vmatpush1.msra.mxu0 %v1086
        %1340 = vmatprep.subr.mxu0 0.0
        %1341 = vmatpush1.msra.mxu0 %v1087
        %1342 = vmatprep.subr.mxu0 0.0
        %1343 = vmatpush1.msra.mxu0 %v1088
        %1344 = vmatprep.subr.mxu0 0.0
        %1345 = vmatpush1.msra.mxu0 %v1089
        %1346 = vmatprep.subr.mxu0 0.0
        %1347 = vmatpush1.msra.mxu0 %v1090
        %1348 = vmatprep.subr.mxu0 0.0
        %1349 = vmatpush1.msra.mxu0 0.0
        %1350 = vmatprep.subr.mxu0 0.0
        %1351 = vmatpush1.msra.mxu0 0.0
        %1352 = vmatprep.subr.mxu0 0.0
        %1353 = vmatpush1.msra.mxu0 0.0
        %1354 = vmatprep.subr.mxu0 0.0
        %1355 = vmatpush1.msra.mxu0 0.0
        %1356 = vmatprep.subr.mxu0 0.0
        %1357 = vmatpush1.msra.mxu0 0.0
        %1358 = vmatprep.subr.mxu0 0.0
        %1359 = vmatpush1.msra.mxu0 0.0
        %1360 = vmatprep.subr.mxu0 0.0
        %1361 = vmatpush1.msra.mxu0 0.0
        %1362 = vmatprep.subr.mxu0 0.0
        %1363 = vmatpush1.msra.mxu0 0.0
        %1364 = vmatprep.subr.mxu0 0.0
        %1365 = vmatpush1.msra.mxu0 0.0
        %1366 = vmatprep.subr.mxu0 0.0
        %1367 = vmatpush1.msra.mxu0 0.0
        %1368 = vmatprep.subr.mxu0 0.0
        %1369 = vmatpush1.msra.mxu0 0.0
        %1370 = vmatprep.subr.mxu0 0.0
        %1371 = vmatpush1.msra.mxu0 0.0
        %1372 = vmatprep.subr.mxu0 0.0
        %1373 = vmatpush1.msra.mxu0 0.0
        %1374 = vmatprep.subr.mxu0 0.0
        %1375 = vmatpush1.msra.mxu0 0.0
        %1376 = vmatprep.subr.mxu0 0.0
        %1377 = vmatpush1.msra.mxu0 0.0
        %1378 = vmatprep.subr.mxu0 0.0
        %1379 = vmatpush1.msra.mxu0 0.0
        %1380 = vmatprep.mubr.f32.mxu0 0.0
        %1381 = vmatmul.mubr.f32.gmra.mrb[0].mxu0 %v891
        %v1382 = vpop.f32.mrb[0].mxu0
        %v1383 = vadd.f32 %v1158, %v1382
        %v1384 = vpop.f32.mrb[0].mxu0
        %1385 = vmatprep.mubr.f32.mxu0 0.0
        %1386 = vmatmul.mubr.f32.gmra.mrb[0].mxu0 %v977
        %v1387 = vpop.f32.mrb[0].mxu0
        %v1388 = vadd.f32 %v1163, %v1387
        %v1389 = vpop.f32.mrb[0].mxu0
        %1390 = vmatprep.mubr.f32.mxu0 0.0
        %1391 = vmatmul.mubr.f32.gmra.mrb[0].mxu0 %v894
        %v1392 = vpop.f32.mrb[0].mxu0
        %v1393 = vadd.f32 %v1168, %v1392
        %v1394 = vpop.f32.mrb[0].mxu0
        %1395 = vmatprep.mubr.f32.mxu0 0.0
        %1396 = vmatmul.mubr.f32.gmra.mrb[0].mxu0 %v978
        %v1397 = vpop.f32.mrb[0].mxu0
        %v1398 = vadd.f32 %v1173, %v1397
        %v1399 = vpop.f32.mrb[0].mxu0
        %1400 = vmatprep.mubr.f32.mxu0 0.0
        %1401 = vmatmul.mubr.f32.gmra.mrb[0].mxu0 %v897
        %v1402 = vpop.f32.mrb[0].mxu0
        %v1403 = vadd.f32 %v1178, %v1402
        %v1404 = vpop.f32.mrb[0].mxu0
        %1405 = vmatprep.mubr.f32.mxu0 0.0
        %1406 = vmatmul.mubr.f32.gmra.mrb[0].mxu0 %v979
        %v1407 = vpop.f32.mrb[0].mxu0
        %v1408 = vadd.f32 %v1183, %v1407
        %v1409 = vpop.f32.mrb[0].mxu0
        %1410 = vmatprep.mubr.f32.mxu0 0.0
        %1411 = vmatmul.mubr.f32.gmra.mrb[0].mxu0 %v900
        %v1412 = vpop.f32.mrb[0].mxu0
        %v1413 = vadd.f32 %v1188, %v1412
        %v1414 = vpop.f32.mrb[0].mxu0
        %1415 = vmatprep.mubr.f32.mxu0 0.0
        %1416 = vmatmul.mubr.f32.gmra.mrb[0].mxu0 %v980
        %v1417 = vpop.f32.mrb[0].mxu0
        %v1418 = vadd.f32 %v1193, %v1417
        %v1419 = vpop.f32.mrb[0].mxu0
        %1420 = vmatprep.mubr.f32.mxu0 0.0
        %1421 = vmatmul.mubr.f32.gmra.mrb[0].mxu0 %v903
        %v1422 = vpop.f32.mrb[0].mxu0
        %v1423 = vadd.f32 %v1198, %v1422
        %v1424 = vpop.f32.mrb[0].mxu0
        %1425 = vmatprep.mubr.f32.mxu0 0.0
        %1426 = vmatmul.mubr.f32.gmra.mrb[0].mxu0 %v981
        %v1427 = vpop.f32.mrb[0].mxu0
        %v1428 = vadd.f32 %v1203, %v1427
        %v1429 = vpop.f32.mrb[0].mxu0
        %1430 = vmatprep.mubr.f32.mxu0 0.0
        %1431 = vmatmul.mubr.f32.gmra.mrb[0].mxu0 %v906
        %v1432 = vpop.f32.mrb[0].mxu0
        %v1433 = vadd.f32 %v1208, %v1432
        %v1434 = vpop.f32.mrb[0].mxu0
        %1435 = vmatprep.mubr.f32.mxu0 0.0
        %1436 = vmatmul.mubr.f32.gmra.mrb[0].mxu0 %v982
        %v1437 = vpop.f32.mrb[0].mxu0
        %v1438 = vadd.f32 %v1213, %v1437
        %v1439 = vpop.f32.mrb[0].mxu0
        %1440 = vmatprep.mubr.f32.mxu0 0.0
        %1441 = vmatmul.mubr.f32.gmra.mrb[0].mxu0 %v909
        %v1442 = vpop.f32.mrb[0].mxu0
        %v1443 = vadd.f32 %v1218, %v1442
        %v1444 = vpop.f32.mrb[0].mxu0
        %1445 = vmatprep.mubr.f32.mxu0 0.0
        %1446 = vmatmul.mubr.f32.gmra.mrb[0].mxu0 %v983
        %v1447 = vpop.f32.mrb[0].mxu0
        %v1448 = vadd.f32 %v1223, %v1447
        %v1449 = vpop.f32.mrb[0].mxu0
        %1450 = vmatprep.mubr.f32.mxu0 0.0
        %1451 = vmatmul.mubr.f32.gmra.mrb[0].mxu0 %v912
        %v1452 = vpop.f32.mrb[0].mxu0
        %v1453 = vadd.f32 %v1228, %v1452
        %v1454 = vpop.f32.mrb[0].mxu0
        %1455 = vmatprep.mubr.f32.mxu0 0.0
        %1456 = vmatmul.mubr.f32.gmra.mrb[0].mxu0 %v984
        %v1457 = vpop.f32.mrb[0].mxu0
        %v1458 = vadd.f32 %v1233, %v1457
        %v1459 = vpop.f32.mrb[0].mxu0
        %1460 = vmatprep.mubr.f32.mxu0 0.0
        %1461 = vmatmul.mubr.f32.gmra.mrb[0].mxu0 %v915
        %v1462 = vpop.f32.mrb[0].mxu0
        %v1463 = vadd.f32 %v1238, %v1462
        %v1464 = vpop.f32.mrb[0].mxu0
        %1465 = vmatprep.mubr.f32.mxu0 0.0
        %1466 = vmatmul.mubr.f32.gmra.mrb[0].mxu0 %v985
        %v1467 = vpop.f32.mrb[0].mxu0
        %v1468 = vadd.f32 %v1243, %v1467
        %v1469 = vpop.f32.mrb[0].mxu0
        %1470 = vmatprep.mubr.f32.mxu0 0.0
        %1471 = vmatmul.mubr.f32.gmra.mrb[0].mxu0 %v918
        %v1472 = vpop.f32.mrb[0].mxu0
        %v1473 = vadd.f32 %v1248, %v1472
        %v1474 = vpop.f32.mrb[0].mxu0
        %1475 = vmatprep.mubr.f32.mxu0 0.0
        %1476 = vmatmul.mubr.f32.gmra.mrb[0].mxu0 %v986
        %v1477 = vpop.f32.mrb[0].mxu0
        %v1478 = vadd.f32 %v1253, %v1477
        %v1479 = vpop.f32.mrb[0].mxu0
        %1480 = vmatprep.mubr.f32.mxu0 0.0
        %1481 = vmatmul.mubr.f32.gmra.mrb[0].mxu0 %v921
        %v1482 = vpop.f32.mrb[0].mxu0
        %v1483 = vadd.f32 %v1258, %v1482
        %v1484 = vpop.f32.mrb[0].mxu0
        %1485 = vmatprep.mubr.f32.mxu0 0.0
        %1486 = vmatmul.mubr.f32.gmra.mrb[0].mxu0 %v987
        %v1487 = vpop.f32.mrb[0].mxu0
        %v1488 = vadd.f32 %v1263, %v1487
        %v1489 = vpop.f32.mrb[0].mxu0
        %1490 = vmatprep.mubr.f32.mxu0 0.0
        %1491 = vmatmul.mubr.f32.gmra.mrb[0].mxu0 %v924
        %v1492 = vpop.f32.mrb[0].mxu0
        %v1493 = vadd.f32 %v1268, %v1492
        %v1494 = vpop.f32.mrb[0].mxu0
        %1495 = vmatprep.mubr.f32.mxu0 0.0
        %1496 = vmatmul.mubr.f32.gmra.mrb[0].mxu0 %v988
        %v1497 = vpop.f32.mrb[0].mxu0
        %v1498 = vadd.f32 %v1273, %v1497
        %v1499 = vpop.f32.mrb[0].mxu0
        %1500 = vmatprep.mubr.f32.mxu0 0.0
        %1501 = vmatmul.mubr.f32.gmra.mrb[0].mxu0 %v927
        %v1502 = vpop.f32.mrb[0].mxu0
        %v1503 = vadd.f32 %v1278, %v1502
        %v1504 = vpop.f32.mrb[0].mxu0
        %1505 = vmatprep.mubr.f32.mxu0 0.0
        %1506 = vmatmul.mubr.f32.gmra.mrb[0].mxu0 %v989
        %v1507 = vpop.f32.mrb[0].mxu0
        %v1508 = vadd.f32 %v1283, %v1507
        %v1509 = vpop.f32.mrb[0].mxu0
        %1510 = vmatprep.mubr.f32.mxu0 0.0
        %1511 = vmatmul.mubr.f32.gmra.mrb[0].mxu0 %v930
        %v1512 = vpop.f32.mrb[0].mxu0
        %v1513 = vadd.f32 %v1288, %v1512
        %v1514 = vpop.f32.mrb[0].mxu0
        %1515 = vmatprep.mubr.f32.mxu0 0.0
        %1516 = vmatmul.mubr.f32.gmra.mrb[0].mxu0 %v990
        %v1517 = vpop.f32.mrb[0].mxu0
        %v1518 = vadd.f32 %v1293, %v1517
        %v1519 = vpop.f32.mrb[0].mxu0
        %1520 = vmatprep.mubr.f32.mxu0 0.0
        %1521 = vmatmul.mubr.f32.gmra.mrb[0].mxu0 %v933
        %v1522 = vpop.f32.mrb[0].mxu0
        %v1523 = vadd.f32 %v1298, %v1522
        %v1524 = vpop.f32.mrb[0].mxu0
        %1525 = vmatprep.mubr.f32.mxu0 0.0
        %1526 = vmatmul.mubr.f32.gmra.mrb[0].mxu0 %v991
        %v1527 = vpop.f32.mrb[0].mxu0
        %v1528 = vadd.f32 %v1303, %v1527
        %v1529 = vpop.f32.mrb[0].mxu0
        %1530 = vmatprep.mubr.f32.mxu0 0.0
        %1531 = vmatmul.mubr.f32.gmra.mrb[0].mxu0 %v936
        %v1532 = vpop.f32.mrb[0].mxu0
        %v1533 = vadd.f32 %v1308, %v1532
        %v1534 = vpop.f32.mrb[0].mxu0
        %1535 = vmatprep.mubr.f32.mxu0 0.0
        %1536 = vmatmul.mubr.f32.gmra.mrb[0].mxu0 %v992
        %v1537 = vpop.f32.mrb[0].mxu0
        %v1538 = vadd.f32 %v1313, %v1537
        %v1539 = vpop.f32.mrb[0].mxu0
        %1540 = vdwg.mxu0
        %1541 = vmatprep.subr.mxu0 0.0
        %1542 = vmatpush1.msra.mxu0 %v994
        %1543 = vmatprep.subr.mxu0 0.0
        %1544 = vmatpush1.msra.mxu0 %v995
        %1545 = vmatprep.subr.mxu0 0.0
        %1546 = vmatpush1.msra.mxu0 %v996
        %1547 = vmatprep.subr.mxu0 0.0
        %1548 = vmatpush1.msra.mxu0 %v997
        %1549 = vmatprep.subr.mxu0 0.0
        %1550 = vmatpush1.msra.mxu0 %v998
        %1551 = vmatprep.subr.mxu0 0.0
        %1552 = vmatpush1.msra.mxu0 %v999
        %1553 = vmatprep.subr.mxu0 0.0
        %1554 = vmatpush1.msra.mxu0 %v1000
        %1555 = vmatprep.subr.mxu0 0.0
        %1556 = vmatpush1.msra.mxu0 %v1001
        %1557 = vmatprep.subr.mxu0 0.0
        %1558 = vmatpush1.msra.mxu0 %v1002
        %1559 = vmatprep.subr.mxu0 0.0
        %1560 = vmatpush1.msra.mxu0 %v1003
        %1561 = vmatprep.subr.mxu0 0.0
        %1562 = vmatpush1.msra.mxu0 %v1004
        %1563 = vmatprep.subr.mxu0 0.0
        %1564 = vmatpush1.msra.mxu0 %v1005
        %1565 = vmatprep.subr.mxu0 0.0
        %1566 = vmatpush1.msra.mxu0 %v1006
        %1567 = vmatprep.subr.mxu0 0.0
        %1568 = vmatpush1.msra.mxu0 %v1007
        %1569 = vmatprep.subr.mxu0 0.0
        %1570 = vmatpush1.msra.mxu0 %v1008
        %1571 = vmatprep.subr.mxu0 0.0
        %1572 = vmatpush1.msra.mxu0 %v1009
        %1573 = vmatprep.subr.mxu0 0.0
        %1574 = vmatpush1.msra.mxu0 %v1010
        %1575 = vmatprep.subr.mxu0 0.0
        %1576 = vmatpush1.msra.mxu0 %v1011
        %1577 = vmatprep.subr.mxu0 0.0
        %1578 = vmatpush1.msra.mxu0 %v1012
        %1579 = vmatprep.subr.mxu0 0.0
        %1580 = vmatpush1.msra.mxu0 %v1013
        %1581 = vmatprep.subr.mxu0 0.0
        %1582 = vmatpush1.msra.mxu0 %v1014
        %1583 = vmatprep.subr.mxu0 0.0
        %1584 = vmatpush1.msra.mxu0 %v1015
        %1585 = vmatprep.subr.mxu0 0.0
        %1586 = vmatpush1.msra.mxu0 %v1016
        %1587 = vmatprep.subr.mxu0 0.0
        %1588 = vmatpush1.msra.mxu0 %v1017
        %1589 = vmatprep.subr.mxu0 0.0
        %1590 = vmatpush1.msra.mxu0 %v1018
        %1591 = vmatprep.subr.mxu0 0.0
        %1592 = vmatpush1.msra.mxu0 %v1019
        %1593 = vmatprep.subr.mxu0 0.0
        %1594 = vmatpush1.msra.mxu0 %v1020
        %1595 = vmatprep.subr.mxu0 0.0
        %1596 = vmatpush1.msra.mxu0 %v1021
        %1597 = vmatprep.subr.mxu0 0.0
        %1598 = vmatpush1.msra.mxu0 %v1022
        %1599 = vmatprep.subr.mxu0 0.0
        %1600 = vmatpush1.msra.mxu0 %v1023
        %1601 = vmatprep.subr.mxu0 0.0
        %1602 = vmatpush1.msra.mxu0 %v1024
        %1603 = vmatprep.subr.mxu0 0.0
        %1604 = vmatpush1.msra.mxu0 %v1025
        %1605 = vmatprep.mubr.f32.mxu0 %v704
        %1606 = vmatmul.mubr.f32.gmra.mrb[0].mxu0 %v867
        %v1607 = vpop.f32.mrb[0].mxu0
        %v1608 = vadd.f32 %v1383, %v1607
        %v1609 = vpop.f32.mrb[0].mxu0
        %1610 = vmatprep.mubr.f32.mxu0 %v705
        %1611 = vmatmul.mubr.f32.gmra.mrb[0].mxu0 %v779
        %v1612 = vpop.f32.mrb[0].mxu0
        %v1613 = vadd.f32 %v1388, %v1612
        %v1614 = vpop.f32.mrb[0].mxu0
        %1615 = vmatprep.mubr.f32.mxu0 %v706
        %1616 = vmatmul.mubr.f32.gmra.mrb[0].mxu0 %v868
        %v1617 = vpop.f32.mrb[0].mxu0
        %v1618 = vadd.f32 %v1393, %v1617
        %v1619 = vpop.f32.mrb[0].mxu0
        %1620 = vmatprep.mubr.f32.mxu0 %v707
        %1621 = vmatmul.mubr.f32.gmra.mrb[0].mxu0 %v782
        %v1622 = vpop.f32.mrb[0].mxu0
        %v1623 = vadd.f32 %v1398, %v1622
        %v1624 = vpop.f32.mrb[0].mxu0
        %1625 = vmatprep.mubr.f32.mxu0 %v708
        %1626 = vmatmul.mubr.f32.gmra.mrb[0].mxu0 %v869
        %v1627 = vpop.f32.mrb[0].mxu0
        %v1628 = vadd.f32 %v1403, %v1627
        %v1629 = vpop.f32.mrb[0].mxu0
        %1630 = vmatprep.mubr.f32.mxu0 %v709
        %1631 = vmatmul.mubr.f32.gmra.mrb[0].mxu0 %v785
        %v1632 = vpop.f32.mrb[0].mxu0
        %v1633 = vadd.f32 %v1408, %v1632
        %v1634 = vpop.f32.mrb[0].mxu0
        %1635 = vmatprep.mubr.f32.mxu0 %v710
        %1636 = vmatmul.mubr.f32.gmra.mrb[0].mxu0 %v870
        %v1637 = vpop.f32.mrb[0].mxu0
        %v1638 = vadd.f32 %v1413, %v1637
        %v1639 = vpop.f32.mrb[0].mxu0
        %1640 = vmatprep.mubr.f32.mxu0 %v711
        %1641 = vmatmul.mubr.f32.gmra.mrb[0].mxu0 %v788
        %v1642 = vpop.f32.mrb[0].mxu0
        %v1643 = vadd.f32 %v1418, %v1642
        %v1644 = vpop.f32.mrb[0].mxu0
        %1645 = vmatprep.mubr.f32.mxu0 %v712
        %1646 = vmatmul.mubr.f32.gmra.mrb[0].mxu0 %v871
        %v1647 = vpop.f32.mrb[0].mxu0
        %v1648 = vadd.f32 %v1423, %v1647
        %v1649 = vpop.f32.mrb[0].mxu0
        %1650 = vmatprep.mubr.f32.mxu0 %v713
        %1651 = vmatmul.mubr.f32.gmra.mrb[0].mxu0 %v791
        %v1652 = vpop.f32.mrb[0].mxu0
        %v1653 = vadd.f32 %v1428, %v1652
        %v1654 = vpop.f32.mrb[0].mxu0
        %1655 = vmatprep.mubr.f32.mxu0 %v714
        %1656 = vmatmul.mubr.f32.gmra.mrb[0].mxu0 %v872
        %v1657 = vpop.f32.mrb[0].mxu0
        %v1658 = vadd.f32 %v1433, %v1657
        %v1659 = vpop.f32.mrb[0].mxu0
        %1660 = vmatprep.mubr.f32.mxu0 %v715
        %1661 = vmatmul.mubr.f32.gmra.mrb[0].mxu0 %v794
        %v1662 = vpop.f32.mrb[0].mxu0
        %v1663 = vadd.f32 %v1438, %v1662
        %v1664 = vpop.f32.mrb[0].mxu0
        %1665 = vmatprep.mubr.f32.mxu0 %v716
        %1666 = vmatmul.mubr.f32.gmra.mrb[0].mxu0 %v873
        %v1667 = vpop.f32.mrb[0].mxu0
        %v1668 = vadd.f32 %v1443, %v1667
        %v1669 = vpop.f32.mrb[0].mxu0
        %1670 = vmatprep.mubr.f32.mxu0 %v717
        %1671 = vmatmul.mubr.f32.gmra.mrb[0].mxu0 %v797
        %v1672 = vpop.f32.mrb[0].mxu0
        %v1673 = vadd.f32 %v1448, %v1672
        %v1674 = vpop.f32.mrb[0].mxu0
        %1675 = vmatprep.mubr.f32.mxu0 %v718
        %1676 = vmatmul.mubr.f32.gmra.mrb[0].mxu0 %v874
        %v1677 = vpop.f32.mrb[0].mxu0
        %v1678 = vadd.f32 %v1453, %v1677
        %v1679 = vpop.f32.mrb[0].mxu0
        %1680 = vmatprep.mubr.f32.mxu0 %v719
        %1681 = vmatmul.mubr.f32.gmra.mrb[0].mxu0 %v800
        %v1682 = vpop.f32.mrb[0].mxu0
        %v1683 = vadd.f32 %v1458, %v1682
        %v1684 = vpop.f32.mrb[0].mxu0
        %1685 = vmatprep.mubr.f32.mxu0 %v720
        %1686 = vmatmul.mubr.f32.gmra.mrb[0].mxu0 %v875
        %v1687 = vpop.f32.mrb[0].mxu0
        %v1688 = vadd.f32 %v1463, %v1687
        %v1689 = vpop.f32.mrb[0].mxu0
        %1690 = vmatprep.mubr.f32.mxu0 %v721
        %1691 = vmatmul.mubr.f32.gmra.mrb[0].mxu0 %v803
        %v1692 = vpop.f32.mrb[0].mxu0
        %v1693 = vadd.f32 %v1468, %v1692
        %v1694 = vpop.f32.mrb[0].mxu0
        %1695 = vmatprep.mubr.f32.mxu0 %v722
        %1696 = vmatmul.mubr.f32.gmra.mrb[0].mxu0 %v876
        %v1697 = vpop.f32.mrb[0].mxu0
        %v1698 = vadd.f32 %v1473, %v1697
        %v1699 = vpop.f32.mrb[0].mxu0
        %1700 = vmatprep.mubr.f32.mxu0 %v723
        %1701 = vmatmul.mubr.f32.gmra.mrb[0].mxu0 %v806
        %v1702 = vpop.f32.mrb[0].mxu0
        %v1703 = vadd.f32 %v1478, %v1702
        %v1704 = vpop.f32.mrb[0].mxu0
        %1705 = vmatprep.mubr.f32.mxu0 %v724
        %1706 = vmatmul.mubr.f32.gmra.mrb[0].mxu0 %v877
        %v1707 = vpop.f32.mrb[0].mxu0
        %v1708 = vadd.f32 %v1483, %v1707
        %v1709 = vpop.f32.mrb[0].mxu0
        %1710 = vmatprep.mubr.f32.mxu0 %v725
        %1711 = vmatmul.mubr.f32.gmra.mrb[0].mxu0 %v809
        %v1712 = vpop.f32.mrb[0].mxu0
        %v1713 = vadd.f32 %v1488, %v1712
        %v1714 = vpop.f32.mrb[0].mxu0
        %1715 = vmatprep.mubr.f32.mxu0 %v726
        %1716 = vmatmul.mubr.f32.gmra.mrb[0].mxu0 %v878
        %v1717 = vpop.f32.mrb[0].mxu0
        %v1718 = vadd.f32 %v1493, %v1717
        %v1719 = vpop.f32.mrb[0].mxu0
        %1720 = vmatprep.mubr.f32.mxu0 %v727
        %1721 = vmatmul.mubr.f32.gmra.mrb[0].mxu0 %v812
        %v1722 = vpop.f32.mrb[0].mxu0
        %v1723 = vadd.f32 %v1498, %v1722
        %v1724 = vpop.f32.mrb[0].mxu0
        %1725 = vmatprep.mubr.f32.mxu0 %v728
        %1726 = vmatmul.mubr.f32.gmra.mrb[0].mxu0 %v879
        %v1727 = vpop.f32.mrb[0].mxu0
        %v1728 = vadd.f32 %v1503, %v1727
        %v1729 = vpop.f32.mrb[0].mxu0
        %1730 = vmatprep.mubr.f32.mxu0 %v729
        %1731 = vmatmul.mubr.f32.gmra.mrb[0].mxu0 %v815
        %v1732 = vpop.f32.mrb[0].mxu0
        %v1733 = vadd.f32 %v1508, %v1732
        %v1734 = vpop.f32.mrb[0].mxu0
        %1735 = vmatprep.mubr.f32.mxu0 %v730
        %1736 = vmatmul.mubr.f32.gmra.mrb[0].mxu0 %v880
        %v1737 = vpop.f32.mrb[0].mxu0
        %v1738 = vadd.f32 %v1513, %v1737
        %v1739 = vpop.f32.mrb[0].mxu0
        %1740 = vmatprep.mubr.f32.mxu0 %v731
        %1741 = vmatmul.mubr.f32.gmra.mrb[0].mxu0 %v818
        %v1742 = vpop.f32.mrb[0].mxu0
        %v1743 = vadd.f32 %v1518, %v1742
        %v1744 = vpop.f32.mrb[0].mxu0
        %1745 = vmatprep.mubr.f32.mxu0 %v732
        %1746 = vmatmul.mubr.f32.gmra.mrb[0].mxu0 %v881
        %v1747 = vpop.f32.mrb[0].mxu0
        %v1748 = vadd.f32 %v1523, %v1747
        %v1749 = vpop.f32.mrb[0].mxu0
        %1750 = vmatprep.mubr.f32.mxu0 %v733
        %1751 = vmatmul.mubr.f32.gmra.mrb[0].mxu0 %v821
        %v1752 = vpop.f32.mrb[0].mxu0
        %v1753 = vadd.f32 %v1528, %v1752
        %v1754 = vpop.f32.mrb[0].mxu0
        %1755 = vmatprep.mubr.f32.mxu0 %v734
        %1756 = vmatmul.mubr.f32.gmra.mrb[0].mxu0 %v882
        %v1757 = vpop.f32.mrb[0].mxu0
        %v1758 = vadd.f32 %v1533, %v1757
        %v1759 = vpop.f32.mrb[0].mxu0
        %1760 = vmatprep.mubr.f32.mxu0 %v735
        %1761 = vmatmul.mubr.f32.gmra.mrb[0].mxu0 %v824
        %v1762 = vpop.f32.mrb[0].mxu0
        %v1763 = vadd.f32 %v1538, %v1762
        %v1764 = vpop.f32.mrb[0].mxu0
        %1765 = vdwg.mxu0
        %1766 = vmatprep.subr.mxu0 0.0
        %1767 = vmatpush1.msra.mxu0 %v1026
        %1768 = vmatprep.subr.mxu0 0.0
        %1769 = vmatpush1.msra.mxu0 %v1027
        %1770 = vmatprep.subr.mxu0 0.0
        %1771 = vmatpush1.msra.mxu0 %v1028
        %1772 = vmatprep.subr.mxu0 0.0
        %1773 = vmatpush1.msra.mxu0 %v1029
        %1774 = vmatprep.subr.mxu0 0.0
        %1775 = vmatpush1.msra.mxu0 %v1030
        %1776 = vmatprep.subr.mxu0 0.0
        %1777 = vmatpush1.msra.mxu0 %v1031
        %1778 = vmatprep.subr.mxu0 0.0
        %1779 = vmatpush1.msra.mxu0 %v1032
        %1780 = vmatprep.subr.mxu0 0.0
        %1781 = vmatpush1.msra.mxu0 %v1033
        %1782 = vmatprep.subr.mxu0 0.0
        %1783 = vmatpush1.msra.mxu0 %v1034
        %1784 = vmatprep.subr.mxu0 0.0
        %1785 = vmatpush1.msra.mxu0 %v1035
        %1786 = vmatprep.subr.mxu0 0.0
        %1787 = vmatpush1.msra.mxu0 %v1036
        %1788 = vmatprep.subr.mxu0 0.0
        %1789 = vmatpush1.msra.mxu0 %v1037
        %1790 = vmatprep.subr.mxu0 0.0
        %1791 = vmatpush1.msra.mxu0 %v1038
        %1792 = vmatprep.subr.mxu0 0.0
        %1793 = vmatpush1.msra.mxu0 %v1039
        %1794 = vmatprep.subr.mxu0 0.0
        %1795 = vmatpush1.msra.mxu0 %v1040
        %1796 = vmatprep.subr.mxu0 0.0
        %1797 = vmatpush1.msra.mxu0 %v1041
        %1798 = vmatprep.subr.mxu0 0.0
        %1799 = vmatpush1.msra.mxu0 0.0
        %1800 = vmatprep.subr.mxu0 0.0
        %1801 = vmatpush1.msra.mxu0 0.0
        %1802 = vmatprep.subr.mxu0 0.0
        %1803 = vmatpush1.msra.mxu0 0.0
        %1804 = vmatprep.subr.mxu0 0.0
        %1805 = vmatpush1.msra.mxu0 0.0
        %1806 = vmatprep.subr.mxu0 0.0
        %1807 = vmatpush1.msra.mxu0 0.0
        %1808 = vmatprep.subr.mxu0 0.0
        %1809 = vmatpush1.msra.mxu0 0.0
        %1810 = vmatprep.subr.mxu0 0.0
        %1811 = vmatpush1.msra.mxu0 0.0
        %1812 = vmatprep.subr.mxu0 0.0
        %1813 = vmatpush1.msra.mxu0 0.0
        %1814 = vmatprep.subr.mxu0 0.0
        %1815 = vmatpush1.msra.mxu0 0.0
        %1816 = vmatprep.subr.mxu0 0.0
        %1817 = vmatpush1.msra.mxu0 0.0
        %1818 = vmatprep.subr.mxu0 0.0
        %1819 = vmatpush1.msra.mxu0 0.0
        %1820 = vmatprep.subr.mxu0 0.0
        %1821 = vmatpush1.msra.mxu0 0.0
        %1822 = vmatprep.subr.mxu0 0.0
        %1823 = vmatpush1.msra.mxu0 0.0
        %1824 = vmatprep.subr.mxu0 0.0
        %1825 = vmatpush1.msra.mxu0 0.0
        %1826 = vmatprep.subr.mxu0 0.0
        %1827 = vmatpush1.msra.mxu0 0.0
        %1828 = vmatprep.subr.mxu0 0.0
        %1829 = vmatpush1.msra.mxu0 0.0
        %1830 = vmatprep.mubr.f32.mxu0 0.0
        %1831 = vmatmul.mubr.f32.gmra.mrb[0].mxu0 %v888
        %v1832 = vpop.f32.mrb[0].mxu0
        %v1833 = vadd.f32 %v1608, %v1832
        %v1834 = vpop.f32.mrb[0].mxu0
        %1835 = vmatprep.mubr.f32.mxu0 0.0
        %1836 = vmatmul.mubr.f32.gmra.mrb[0].mxu0 %v976
        %v1837 = vpop.f32.mrb[0].mxu0
        %v1838 = vadd.f32 %v1613, %v1837
        %v1839 = vpop.f32.mrb[0].mxu0
        %1840 = vmatprep.mubr.f32.mxu0 0.0
        %1841 = vmatmul.mubr.f32.gmra.mrb[0].mxu0 %v891
        %v1842 = vpop.f32.mrb[0].mxu0
        %v1843 = vadd.f32 %v1618, %v1842
        %v1844 = vpop.f32.mrb[0].mxu0
        %1845 = vmatprep.mubr.f32.mxu0 0.0
        %1846 = vmatmul.mubr.f32.gmra.mrb[0].mxu0 %v977
        %v1847 = vpop.f32.mrb[0].mxu0
        %v1848 = vadd.f32 %v1623, %v1847
        %v1849 = vpop.f32.mrb[0].mxu0
        %1850 = vmatprep.mubr.f32.mxu0 0.0
        %1851 = vmatmul.mubr.f32.gmra.mrb[0].mxu0 %v894
        %v1852 = vpop.f32.mrb[0].mxu0
        %v1853 = vadd.f32 %v1628, %v1852
        %v1854 = vpop.f32.mrb[0].mxu0
        %1855 = vmatprep.mubr.f32.mxu0 0.0
        %1856 = vmatmul.mubr.f32.gmra.mrb[0].mxu0 %v978
        %v1857 = vpop.f32.mrb[0].mxu0
        %v1858 = vadd.f32 %v1633, %v1857
        %v1859 = vpop.f32.mrb[0].mxu0
        %1860 = vmatprep.mubr.f32.mxu0 0.0
        %1861 = vmatmul.mubr.f32.gmra.mrb[0].mxu0 %v897
        %v1862 = vpop.f32.mrb[0].mxu0
        %v1863 = vadd.f32 %v1638, %v1862
        %v1864 = vpop.f32.mrb[0].mxu0
        %1865 = vmatprep.mubr.f32.mxu0 0.0
        %1866 = vmatmul.mubr.f32.gmra.mrb[0].mxu0 %v979
        %v1867 = vpop.f32.mrb[0].mxu0
        %v1868 = vadd.f32 %v1643, %v1867
        %v1869 = vpop.f32.mrb[0].mxu0
        %1870 = vmatprep.mubr.f32.mxu0 0.0
        %1871 = vmatmul.mubr.f32.gmra.mrb[0].mxu0 %v900
        %v1872 = vpop.f32.mrb[0].mxu0
        %v1873 = vadd.f32 %v1648, %v1872
        %v1874 = vpop.f32.mrb[0].mxu0
        %1875 = vmatprep.mubr.f32.mxu0 0.0
        %1876 = vmatmul.mubr.f32.gmra.mrb[0].mxu0 %v980
        %v1877 = vpop.f32.mrb[0].mxu0
        %v1878 = vadd.f32 %v1653, %v1877
        %v1879 = vpop.f32.mrb[0].mxu0
        %1880 = vmatprep.mubr.f32.mxu0 0.0
        %1881 = vmatmul.mubr.f32.gmra.mrb[0].mxu0 %v903
        %v1882 = vpop.f32.mrb[0].mxu0
        %v1883 = vadd.f32 %v1658, %v1882
        %v1884 = vpop.f32.mrb[0].mxu0
        %1885 = vmatprep.mubr.f32.mxu0 0.0
        %1886 = vmatmul.mubr.f32.gmra.mrb[0].mxu0 %v981
        %v1887 = vpop.f32.mrb[0].mxu0
        %v1888 = vadd.f32 %v1663, %v1887
        %v1889 = vpop.f32.mrb[0].mxu0
        %1890 = vmatprep.mubr.f32.mxu0 0.0
        %1891 = vmatmul.mubr.f32.gmra.mrb[0].mxu0 %v906
        %v1892 = vpop.f32.mrb[0].mxu0
        %v1893 = vadd.f32 %v1668, %v1892
        %v1894 = vpop.f32.mrb[0].mxu0
        %1895 = vmatprep.mubr.f32.mxu0 0.0
        %1896 = vmatmul.mubr.f32.gmra.mrb[0].mxu0 %v982
        %v1897 = vpop.f32.mrb[0].mxu0
        %v1898 = vadd.f32 %v1673, %v1897
        %v1899 = vpop.f32.mrb[0].mxu0
        %1900 = vmatprep.mubr.f32.mxu0 0.0
        %1901 = vmatmul.mubr.f32.gmra.mrb[0].mxu0 %v909
        %v1902 = vpop.f32.mrb[0].mxu0
        %v1903 = vadd.f32 %v1678, %v1902
        %v1904 = vpop.f32.mrb[0].mxu0
        %1905 = vmatprep.mubr.f32.mxu0 0.0
        %1906 = vmatmul.mubr.f32.gmra.mrb[0].mxu0 %v983
        %v1907 = vpop.f32.mrb[0].mxu0
        %v1908 = vadd.f32 %v1683, %v1907
        %v1909 = vpop.f32.mrb[0].mxu0
        %1910 = vmatprep.mubr.f32.mxu0 0.0
        %1911 = vmatmul.mubr.f32.gmra.mrb[0].mxu0 %v912
        %v1912 = vpop.f32.mrb[0].mxu0
        %v1913 = vadd.f32 %v1688, %v1912
        %v1914 = vpop.f32.mrb[0].mxu0
        %1915 = vmatprep.mubr.f32.mxu0 0.0
        %1916 = vmatmul.mubr.f32.gmra.mrb[0].mxu0 %v984
        %v1917 = vpop.f32.mrb[0].mxu0
        %v1918 = vadd.f32 %v1693, %v1917
        %v1919 = vpop.f32.mrb[0].mxu0
        %1920 = vmatprep.mubr.f32.mxu0 0.0
        %1921 = vmatmul.mubr.f32.gmra.mrb[0].mxu0 %v915
        %v1922 = vpop.f32.mrb[0].mxu0
        %v1923 = vadd.f32 %v1698, %v1922
        %v1924 = vpop.f32.mrb[0].mxu0
        %1925 = vmatprep.mubr.f32.mxu0 0.0
        %1926 = vmatmul.mubr.f32.gmra.mrb[0].mxu0 %v985
        %v1927 = vpop.f32.mrb[0].mxu0
        %v1928 = vadd.f32 %v1703, %v1927
        %v1929 = vpop.f32.mrb[0].mxu0
        %1930 = vmatprep.mubr.f32.mxu0 0.0
        %1931 = vmatmul.mubr.f32.gmra.mrb[0].mxu0 %v918
        %v1932 = vpop.f32.mrb[0].mxu0
        %v1933 = vadd.f32 %v1708, %v1932
        %v1934 = vpop.f32.mrb[0].mxu0
        %1935 = vmatprep.mubr.f32.mxu0 0.0
        %1936 = vmatmul.mubr.f32.gmra.mrb[0].mxu0 %v986
        %v1937 = vpop.f32.mrb[0].mxu0
        %v1938 = vadd.f32 %v1713, %v1937
        %v1939 = vpop.f32.mrb[0].mxu0
        %1940 = vmatprep.mubr.f32.mxu0 0.0
        %1941 = vmatmul.mubr.f32.gmra.mrb[0].mxu0 %v921
        %v1942 = vpop.f32.mrb[0].mxu0
        %v1943 = vadd.f32 %v1718, %v1942
        %v1944 = vpop.f32.mrb[0].mxu0
        %1945 = vmatprep.mubr.f32.mxu0 0.0
        %1946 = vmatmul.mubr.f32.gmra.mrb[0].mxu0 %v987
        %v1947 = vpop.f32.mrb[0].mxu0
        %v1948 = vadd.f32 %v1723, %v1947
        %v1949 = vpop.f32.mrb[0].mxu0
        %1950 = vmatprep.mubr.f32.mxu0 0.0
        %1951 = vmatmul.mubr.f32.gmra.mrb[0].mxu0 %v924
        %v1952 = vpop.f32.mrb[0].mxu0
        %v1953 = vadd.f32 %v1728, %v1952
        %v1954 = vpop.f32.mrb[0].mxu0
        %1955 = vmatprep.mubr.f32.mxu0 0.0
        %1956 = vmatmul.mubr.f32.gmra.mrb[0].mxu0 %v988
        %v1957 = vpop.f32.mrb[0].mxu0
        %v1958 = vadd.f32 %v1733, %v1957
        %v1959 = vpop.f32.mrb[0].mxu0
        %1960 = vmatprep.mubr.f32.mxu0 0.0
        %1961 = vmatmul.mubr.f32.gmra.mrb[0].mxu0 %v927
        %v1962 = vpop.f32.mrb[0].mxu0
        %v1963 = vadd.f32 %v1738, %v1962
        %v1964 = vpop.f32.mrb[0].mxu0
        %1965 = vmatprep.mubr.f32.mxu0 0.0
        %1966 = vmatmul.mubr.f32.gmra.mrb[0].mxu0 %v989
        %v1967 = vpop.f32.mrb[0].mxu0
        %v1968 = vadd.f32 %v1743, %v1967
        %v1969 = vpop.f32.mrb[0].mxu0
        %1970 = vmatprep.mubr.f32.mxu0 0.0
        %1971 = vmatmul.mubr.f32.gmra.mrb[0].mxu0 %v930
        %v1972 = vpop.f32.mrb[0].mxu0
        %v1973 = vadd.f32 %v1748, %v1972
        %v1974 = vpop.f32.mrb[0].mxu0
        %1975 = vmatprep.mubr.f32.mxu0 0.0
        %1976 = vmatmul.mubr.f32.gmra.mrb[0].mxu0 %v990
        %v1977 = vpop.f32.mrb[0].mxu0
        %v1978 = vadd.f32 %v1753, %v1977
        %v1979 = vpop.f32.mrb[0].mxu0
        %1980 = vmatprep.mubr.f32.mxu0 0.0
        %1981 = vmatmul.mubr.f32.gmra.mrb[0].mxu0 %v933
        %v1982 = vpop.f32.mrb[0].mxu0
        %v1983 = vadd.f32 %v1758, %v1982
        %v1984 = vpop.f32.mrb[0].mxu0
        %1985 = vmatprep.mubr.f32.mxu0 0.0
        %1986 = vmatmul.mubr.f32.gmra.mrb[0].mxu0 %v991
        %v1987 = vpop.f32.mrb[0].mxu0
        %v1988 = vadd.f32 %v1763, %v1987
        %v1989 = vpop.f32.mrb[0].mxu0
        %1990 = vdwg.mxu0
        %s1991 = scalar_lea.vmem [#allocation4], 768
        %v1992 = vld [vmem:[%s1991] sm:$0xff]
        %v1993 = vld [vmem:[%s1991 + $0x8] sm:$0xff]
        %v1994 = vld [vmem:[%s1991 + $0x10] sm:$0xff]
        %v1995 = vld [vmem:[%s1991 + $0x18] sm:$0xff]
        %v1996 = vld [vmem:[%s1991 + $0x20] sm:$0xff]
        %v1997 = vld [vmem:[%s1991 + $0x28] sm:$0xff]
        %v1998 = vld [vmem:[%s1991 + $0x30] sm:$0xff]
        %v1999 = vld [vmem:[%s1991 + $0x38] sm:$0xff]
        %v2000 = vld [vmem:[%s1991 + $0x40] sm:$0xff]
        %v2001 = vld [vmem:[%s1991 + $0x48] sm:$0xff]
        %v2002 = vld [vmem:[%s1991 + $0x50] sm:$0xff]
        %v2003 = vld [vmem:[%s1991 + $0x58] sm:$0xff]
        %v2004 = vld [vmem:[%s1991 + $0x60] sm:$0xff]
        %v2005 = vld [vmem:[%s1991 + $0x68] sm:$0xff]
        %v2006 = vld [vmem:[%s1991 + $0x70] sm:$0xff]
        %v2007 = vld [vmem:[%s1991 + $0x78] sm:$0xff]
        %v2008 = vld [vmem:[%s1991 + $0x80] sm:$0xff]
        %v2009 = vld [vmem:[%s1991 + $0x88] sm:$0xff]
        %v2010 = vld [vmem:[%s1991 + $0x90] sm:$0xff]
        %v2011 = vld [vmem:[%s1991 + $0x98] sm:$0xff]
        %v2012 = vld [vmem:[%s1991 + $0xa0] sm:$0xff]
        %v2013 = vld [vmem:[%s1991 + $0xa8] sm:$0xff]
        %v2014 = vld [vmem:[%s1991 + $0xb0] sm:$0xff]
        %v2015 = vld [vmem:[%s1991 + $0xb8] sm:$0xff]
        %v2016 = vld [vmem:[%s1991 + $0xc0] sm:$0xff]
        %v2017 = vld [vmem:[%s1991 + $0xc8] sm:$0xff]
        %v2018 = vld [vmem:[%s1991 + $0xd0] sm:$0xff]
        %v2019 = vld [vmem:[%s1991 + $0xd8] sm:$0xff]
        %v2020 = vld [vmem:[%s1991 + $0xe0] sm:$0xff]
        %v2021 = vld [vmem:[%s1991 + $0xe8] sm:$0xff]
        %v2022 = vld [vmem:[%s1991 + $0xf0] sm:$0xff]
        %v2023 = vld [vmem:[%s1991 + $0xf8] sm:$0xff]
        %v2024 = vld [vmem:[%s1991 + $0x100] sm:$0xff]
        %v2025 = vld [vmem:[%s1991 + $0x108] sm:$0xff]
        %v2026 = vld [vmem:[%s1991 + $0x110] sm:$0xff]
        %v2027 = vld [vmem:[%s1991 + $0x118] sm:$0xff]
        %v2028 = vld [vmem:[%s1991 + $0x120] sm:$0xff]
        %v2029 = vld [vmem:[%s1991 + $0x128] sm:$0xff]
        %v2030 = vld [vmem:[%s1991 + $0x130] sm:$0xff]
        %v2031 = vld [vmem:[%s1991 + $0x138] sm:$0xff]
        %v2032 = vld [vmem:[%s1991 + $0x140] sm:$0xff]
        %v2033 = vld [vmem:[%s1991 + $0x148] sm:$0xff]
        %v2034 = vld [vmem:[%s1991 + $0x150] sm:$0xff]
        %v2035 = vld [vmem:[%s1991 + $0x158] sm:$0xff]
        %v2036 = vld [vmem:[%s1991 + $0x160] sm:$0xff]
        %v2037 = vld [vmem:[%s1991 + $0x168] sm:$0xff]
        %v2038 = vld [vmem:[%s1991 + $0x170] sm:$0xff]
        %v2039 = vld [vmem:[%s1991 + $0x178] sm:$0xff]
        %2040 = vmatprep.subr.mxu0 0.0
        %2041 = vmatpush1.msra.mxu0 %v1992
        %2042 = vmatprep.subr.mxu0 0.0
        %2043 = vmatpush1.msra.mxu0 %v1993
        %2044 = vmatprep.subr.mxu0 0.0
        %2045 = vmatpush1.msra.mxu0 %v1994
        %2046 = vmatprep.subr.mxu0 0.0
        %2047 = vmatpush1.msra.mxu0 %v1995
        %2048 = vmatprep.subr.mxu0 0.0
        %2049 = vmatpush1.msra.mxu0 %v1996
        %2050 = vmatprep.subr.mxu0 0.0
        %2051 = vmatpush1.msra.mxu0 %v1997
        %2052 = vmatprep.subr.mxu0 0.0
        %2053 = vmatpush1.msra.mxu0 %v1998
        %2054 = vmatprep.subr.mxu0 0.0
        %2055 = vmatpush1.msra.mxu0 %v1999
        %2056 = vmatprep.subr.mxu0 0.0
        %2057 = vmatpush1.msra.mxu0 %v2000
        %2058 = vmatprep.subr.mxu0 0.0
        %2059 = vmatpush1.msra.mxu0 %v2001
        %2060 = vmatprep.subr.mxu0 0.0
        %2061 = vmatpush1.msra.mxu0 %v2002
        %2062 = vmatprep.subr.mxu0 0.0
        %2063 = vmatpush1.msra.mxu0 %v2003
        %2064 = vmatprep.subr.mxu0 0.0
        %2065 = vmatpush1.msra.mxu0 %v2004
        %2066 = vmatprep.subr.mxu0 0.0
        %2067 = vmatpush1.msra.mxu0 %v2005
        %2068 = vmatprep.subr.mxu0 0.0
        %2069 = vmatpush1.msra.mxu0 %v2006
        %2070 = vmatprep.subr.mxu0 0.0
        %2071 = vmatpush1.msra.mxu0 %v2007
        %2072 = vmatprep.subr.mxu0 0.0
        %2073 = vmatpush1.msra.mxu0 %v2008
        %2074 = vmatprep.subr.mxu0 0.0
        %2075 = vmatpush1.msra.mxu0 %v2009
        %2076 = vmatprep.subr.mxu0 0.0
        %2077 = vmatpush1.msra.mxu0 %v2010
        %2078 = vmatprep.subr.mxu0 0.0
        %2079 = vmatpush1.msra.mxu0 %v2011
        %2080 = vmatprep.subr.mxu0 0.0
        %2081 = vmatpush1.msra.mxu0 %v2012
        %2082 = vmatprep.subr.mxu0 0.0
        %2083 = vmatpush1.msra.mxu0 %v2013
        %2084 = vmatprep.subr.mxu0 0.0
        %2085 = vmatpush1.msra.mxu0 %v2014
        %2086 = vmatprep.subr.mxu0 0.0
        %2087 = vmatpush1.msra.mxu0 %v2015
        %2088 = vmatprep.subr.mxu0 0.0
        %2089 = vmatpush1.msra.mxu0 %v2016
        %2090 = vmatprep.subr.mxu0 0.0
        %2091 = vmatpush1.msra.mxu0 %v2017
        %2092 = vmatprep.subr.mxu0 0.0
        %2093 = vmatpush1.msra.mxu0 %v2018
        %2094 = vmatprep.subr.mxu0 0.0
        %2095 = vmatpush1.msra.mxu0 %v2019
        %2096 = vmatprep.subr.mxu0 0.0
        %2097 = vmatpush1.msra.mxu0 %v2020
        %2098 = vmatprep.subr.mxu0 0.0
        %2099 = vmatpush1.msra.mxu0 %v2021
        %2100 = vmatprep.subr.mxu0 0.0
        %2101 = vmatpush1.msra.mxu0 %v2022
        %2102 = vmatprep.subr.mxu0 0.0
        %2103 = vmatpush1.msra.mxu0 %v2023
        %2104 = vmatprep.mubr.f32.mxu0 %v708
        %2105 = vmatmul.mubr.f32.gmra.mrb[0].mxu0 %v869
        %v2106 = vpop.f32.mrb[0].mxu0
        %v2107 = vadd.f32 0.0, %v2106
        %v2108 = vpop.f32.mrb[0].mxu0
        %2109 = vmatprep.mubr.f32.mxu0 %v709
        %2110 = vmatmul.mubr.f32.gmra.mrb[0].mxu0 %v785
        %v2111 = vpop.f32.mrb[0].mxu0
        %v2112 = vadd.f32 0.0, %v2111
        %v2113 = vpop.f32.mrb[0].mxu0
        %2114 = vmatprep.mubr.f32.mxu0 %v710
        %2115 = vmatmul.mubr.f32.gmra.mrb[0].mxu0 %v870
        %v2116 = vpop.f32.mrb[0].mxu0
        %v2117 = vadd.f32 0.0, %v2116
        %v2118 = vpop.f32.mrb[0].mxu0
        %2119 = vmatprep.mubr.f32.mxu0 %v711
        %2120 = vmatmul.mubr.f32.gmra.mrb[0].mxu0 %v788
        %v2121 = vpop.f32.mrb[0].mxu0
        %v2122 = vadd.f32 0.0, %v2121
        %v2123 = vpop.f32.mrb[0].mxu0
        %2124 = vmatprep.mubr.f32.mxu0 %v712
        %2125 = vmatmul.mubr.f32.gmra.mrb[0].mxu0 %v871
        %v2126 = vpop.f32.mrb[0].mxu0
        %v2127 = vadd.f32 0.0, %v2126
        %v2128 = vpop.f32.mrb[0].mxu0
        %2129 = vmatprep.mubr.f32.mxu0 %v713
        %2130 = vmatmul.mubr.f32.gmra.mrb[0].mxu0 %v791
        %v2131 = vpop.f32.mrb[0].mxu0
        %v2132 = vadd.f32 0.0, %v2131
        %v2133 = vpop.f32.mrb[0].mxu0
        %2134 = vmatprep.mubr.f32.mxu0 %v714
        %2135 = vmatmul.mubr.f32.gmra.mrb[0].mxu0 %v872
        %v2136 = vpop.f32.mrb[0].mxu0
        %v2137 = vadd.f32 0.0, %v2136
        %v2138 = vpop.f32.mrb[0].mxu0
        %2139 = vmatprep.mubr.f32.mxu0 %v715
        %2140 = vmatmul.mubr.f32.gmra.mrb[0].mxu0 %v794
        %v2141 = vpop.f32.mrb[0].mxu0
        %v2142 = vadd.f32 0.0, %v2141
        %v2143 = vpop.f32.mrb[0].mxu0
        %2144 = vmatprep.mubr.f32.mxu0 %v716
        %2145 = vmatmul.mubr.f32.gmra.mrb[0].mxu0 %v873
        %v2146 = vpop.f32.mrb[0].mxu0
        %v2147 = vadd.f32 0.0, %v2146
        %v2148 = vpop.f32.mrb[0].mxu0
        %2149 = vmatprep.mubr.f32.mxu0 %v717
        %2150 = vmatmul.mubr.f32.gmra.mrb[0].mxu0 %v797
        %v2151 = vpop.f32.mrb[0].mxu0
        %v2152 = vadd.f32 0.0, %v2151
        %v2153 = vpop.f32.mrb[0].mxu0
        %2154 = vmatprep.mubr.f32.mxu0 %v718
        %2155 = vmatmul.mubr.f32.gmra.mrb[0].mxu0 %v874
        %v2156 = vpop.f32.mrb[0].mxu0
        %v2157 = vadd.f32 0.0, %v2156
        %v2158 = vpop.f32.mrb[0].mxu0
        %2159 = vmatprep.mubr.f32.mxu0 %v719
        %2160 = vmatmul.mubr.f32.gmra.mrb[0].mxu0 %v800
        %v2161 = vpop.f32.mrb[0].mxu0
        %v2162 = vadd.f32 0.0, %v2161
        %v2163 = vpop.f32.mrb[0].mxu0
        %2164 = vmatprep.mubr.f32.mxu0 %v720
        %2165 = vmatmul.mubr.f32.gmra.mrb[0].mxu0 %v875
        %v2166 = vpop.f32.mrb[0].mxu0
        %v2167 = vadd.f32 0.0, %v2166
        %v2168 = vpop.f32.mrb[0].mxu0
        %2169 = vmatprep.mubr.f32.mxu0 %v721
        %2170 = vmatmul.mubr.f32.gmra.mrb[0].mxu0 %v803
        %v2171 = vpop.f32.mrb[0].mxu0
        %v2172 = vadd.f32 0.0, %v2171
        %v2173 = vpop.f32.mrb[0].mxu0
        %2174 = vmatprep.mubr.f32.mxu0 %v722
        %2175 = vmatmul.mubr.f32.gmra.mrb[0].mxu0 %v876
        %v2176 = vpop.f32.mrb[0].mxu0
        %v2177 = vadd.f32 0.0, %v2176
        %v2178 = vpop.f32.mrb[0].mxu0
        %2179 = vmatprep.mubr.f32.mxu0 %v723
        %2180 = vmatmul.mubr.f32.gmra.mrb[0].mxu0 %v806
        %v2181 = vpop.f32.mrb[0].mxu0
        %v2182 = vadd.f32 0.0, %v2181
        %v2183 = vpop.f32.mrb[0].mxu0
        %2184 = vmatprep.mubr.f32.mxu0 %v724
        %2185 = vmatmul.mubr.f32.gmra.mrb[0].mxu0 %v877
        %v2186 = vpop.f32.mrb[0].mxu0
        %v2187 = vadd.f32 0.0, %v2186
        %v2188 = vpop.f32.mrb[0].mxu0
        %2189 = vmatprep.mubr.f32.mxu0 %v725
        %2190 = vmatmul.mubr.f32.gmra.mrb[0].mxu0 %v809
        %v2191 = vpop.f32.mrb[0].mxu0
        %v2192 = vadd.f32 0.0, %v2191
        %v2193 = vpop.f32.mrb[0].mxu0
        %2194 = vmatprep.mubr.f32.mxu0 %v726
        %2195 = vmatmul.mubr.f32.gmra.mrb[0].mxu0 %v878
        %v2196 = vpop.f32.mrb[0].mxu0
        %v2197 = vadd.f32 0.0, %v2196
        %v2198 = vpop.f32.mrb[0].mxu0
        %2199 = vmatprep.mubr.f32.mxu0 %v727
        %2200 = vmatmul.mubr.f32.gmra.mrb[0].mxu0 %v812
        %v2201 = vpop.f32.mrb[0].mxu0
        %v2202 = vadd.f32 0.0, %v2201
        %v2203 = vpop.f32.mrb[0].mxu0
        %2204 = vmatprep.mubr.f32.mxu0 %v728
        %2205 = vmatmul.mubr.f32.gmra.mrb[0].mxu0 %v879
        %v2206 = vpop.f32.mrb[0].mxu0
        %v2207 = vadd.f32 0.0, %v2206
        %v2208 = vpop.f32.mrb[0].mxu0
        %2209 = vmatprep.mubr.f32.mxu0 %v729
        %2210 = vmatmul.mubr.f32.gmra.mrb[0].mxu0 %v815
        %v2211 = vpop.f32.mrb[0].mxu0
        %v2212 = vadd.f32 0.0, %v2211
        %v2213 = vpop.f32.mrb[0].mxu0
        %2214 = vmatprep.mubr.f32.mxu0 %v730
        %2215 = vmatmul.mubr.f32.gmra.mrb[0].mxu0 %v880
        %v2216 = vpop.f32.mrb[0].mxu0
        %v2217 = vadd.f32 0.0, %v2216
        %v2218 = vpop.f32.mrb[0].mxu0
        %2219 = vmatprep.mubr.f32.mxu0 %v731
        %2220 = vmatmul.mubr.f32.gmra.mrb[0].mxu0 %v818
        %v2221 = vpop.f32.mrb[0].mxu0
        %v2222 = vadd.f32 0.0, %v2221
        %v2223 = vpop.f32.mrb[0].mxu0
        %2224 = vmatprep.mubr.f32.mxu0 %v732
        %2225 = vmatmul.mubr.f32.gmra.mrb[0].mxu0 %v881
        %v2226 = vpop.f32.mrb[0].mxu0
        %v2227 = vadd.f32 0.0, %v2226
        %v2228 = vpop.f32.mrb[0].mxu0
        %2229 = vmatprep.mubr.f32.mxu0 %v733
        %2230 = vmatmul.mubr.f32.gmra.mrb[0].mxu0 %v821
        %v2231 = vpop.f32.mrb[0].mxu0
        %v2232 = vadd.f32 0.0, %v2231
        %v2233 = vpop.f32.mrb[0].mxu0
        %2234 = vmatprep.mubr.f32.mxu0 %v734
        %2235 = vmatmul.mubr.f32.gmra.mrb[0].mxu0 %v882
        %v2236 = vpop.f32.mrb[0].mxu0
        %v2237 = vadd.f32 0.0, %v2236
        %v2238 = vpop.f32.mrb[0].mxu0
        %2239 = vmatprep.mubr.f32.mxu0 %v735
        %2240 = vmatmul.mubr.f32.gmra.mrb[0].mxu0 %v824
        %v2241 = vpop.f32.mrb[0].mxu0
        %v2242 = vadd.f32 0.0, %v2241
        %v2243 = vpop.f32.mrb[0].mxu0
        %2244 = vmatprep.mubr.f32.mxu0 %v736
        %2245 = vmatmul.mubr.f32.gmra.mrb[0].mxu0 %v883
        %v2246 = vpop.f32.mrb[0].mxu0
        %v2247 = vadd.f32 0.0, %v2246
        %v2248 = vpop.f32.mrb[0].mxu0
        %2249 = vmatprep.mubr.f32.mxu0 %v737
        %2250 = vmatmul.mubr.f32.gmra.mrb[0].mxu0 %v827
        %v2251 = vpop.f32.mrb[0].mxu0
        %v2252 = vadd.f32 0.0, %v2251
        %v2253 = vpop.f32.mrb[0].mxu0
        %2254 = vmatprep.mubr.f32.mxu0 %v738
        %2255 = vmatmul.mubr.f32.gmra.mrb[0].mxu0 %v884
        %v2256 = vpop.f32.mrb[0].mxu0
        %v2257 = vadd.f32 0.0, %v2256
        %v2258 = vpop.f32.mrb[0].mxu0
        %2259 = vmatprep.mubr.f32.mxu0 %v739
        %2260 = vmatmul.mubr.f32.gmra.mrb[0].mxu0 %v830
        %v2261 = vpop.f32.mrb[0].mxu0
        %v2262 = vadd.f32 0.0, %v2261
        %v2263 = vpop.f32.mrb[0].mxu0
        %2264 = vdwg.mxu0
        %2265 = vmatprep.subr.mxu0 0.0
        %2266 = vmatpush1.msra.mxu0 %v2024
        %2267 = vmatprep.subr.mxu0 0.0
        %2268 = vmatpush1.msra.mxu0 %v2025
        %2269 = vmatprep.subr.mxu0 0.0
        %2270 = vmatpush1.msra.mxu0 %v2026
        %2271 = vmatprep.subr.mxu0 0.0
        %2272 = vmatpush1.msra.mxu0 %v2027
        %2273 = vmatprep.subr.mxu0 0.0
        %2274 = vmatpush1.msra.mxu0 %v2028
        %2275 = vmatprep.subr.mxu0 0.0
        %2276 = vmatpush1.msra.mxu0 %v2029
        %2277 = vmatprep.subr.mxu0 0.0
        %2278 = vmatpush1.msra.mxu0 %v2030
        %2279 = vmatprep.subr.mxu0 0.0
        %2280 = vmatpush1.msra.mxu0 %v2031
        %2281 = vmatprep.subr.mxu0 0.0
        %2282 = vmatpush1.msra.mxu0 %v2032
        %2283 = vmatprep.subr.mxu0 0.0
        %2284 = vmatpush1.msra.mxu0 %v2033
        %2285 = vmatprep.subr.mxu0 0.0
        %2286 = vmatpush1.msra.mxu0 %v2034
        %2287 = vmatprep.subr.mxu0 0.0
        %2288 = vmatpush1.msra.mxu0 %v2035
        %2289 = vmatprep.subr.mxu0 0.0
        %2290 = vmatpush1.msra.mxu0 %v2036
        %2291 = vmatprep.subr.mxu0 0.0
        %2292 = vmatpush1.msra.mxu0 %v2037
        %2293 = vmatprep.subr.mxu0 0.0
        %2294 = vmatpush1.msra.mxu0 %v2038
        %2295 = vmatprep.subr.mxu0 0.0
        %2296 = vmatpush1.msra.mxu0 %v2039
        %2297 = vmatprep.subr.mxu0 0.0
        %2298 = vmatpush1.msra.mxu0 0.0
        %2299 = vmatprep.subr.mxu0 0.0
        %2300 = vmatpush1.msra.mxu0 0.0
        %2301 = vmatprep.subr.mxu0 0.0
        %2302 = vmatpush1.msra.mxu0 0.0
        %2303 = vmatprep.subr.mxu0 0.0
        %2304 = vmatpush1.msra.mxu0 0.0
        %2305 = vmatprep.subr.mxu0 0.0
        %2306 = vmatpush1.msra.mxu0 0.0
        %2307 = vmatprep.subr.mxu0 0.0
        %2308 = vmatpush1.msra.mxu0 0.0
        %2309 = vmatprep.subr.mxu0 0.0
        %2310 = vmatpush1.msra.mxu0 0.0
        %2311 = vmatprep.subr.mxu0 0.0
        %2312 = vmatpush1.msra.mxu0 0.0
        %2313 = vmatprep.subr.mxu0 0.0
        %2314 = vmatpush1.msra.mxu0 0.0
        %2315 = vmatprep.subr.mxu0 0.0
        %2316 = vmatpush1.msra.mxu0 0.0
        %2317 = vmatprep.subr.mxu0 0.0
        %2318 = vmatpush1.msra.mxu0 0.0
        %2319 = vmatprep.subr.mxu0 0.0
        %2320 = vmatpush1.msra.mxu0 0.0
        %2321 = vmatprep.subr.mxu0 0.0
        %2322 = vmatpush1.msra.mxu0 0.0
        %2323 = vmatprep.subr.mxu0 0.0
        %2324 = vmatpush1.msra.mxu0 0.0
        %2325 = vmatprep.subr.mxu0 0.0
        %2326 = vmatpush1.msra.mxu0 0.0
        %2327 = vmatprep.subr.mxu0 0.0
        %2328 = vmatpush1.msra.mxu0 0.0
        %2329 = vmatprep.mubr.f32.mxu0 0.0
        %2330 = vmatmul.mubr.f32.gmra.mrb[0].mxu0 %v894
        %v2331 = vpop.f32.mrb[0].mxu0
        %v2332 = vadd.f32 %v2107, %v2331
        %v2333 = vpop.f32.mrb[0].mxu0
        %2334 = vmatprep.mubr.f32.mxu0 0.0
        %2335 = vmatmul.mubr.f32.gmra.mrb[0].mxu0 %v978
        %v2336 = vpop.f32.mrb[0].mxu0
        %v2337 = vadd.f32 %v2112, %v2336
        %v2338 = vpop.f32.mrb[0].mxu0
        %2339 = vmatprep.mubr.f32.mxu0 0.0
        %2340 = vmatmul.mubr.f32.gmra.mrb[0].mxu0 %v897
        %v2341 = vpop.f32.mrb[0].mxu0
        %v2342 = vadd.f32 %v2117, %v2341
        %v2343 = vpop.f32.mrb[0].mxu0
        %2344 = vmatprep.mubr.f32.mxu0 0.0
        %2345 = vmatmul.mubr.f32.gmra.mrb[0].mxu0 %v979
        %v2346 = vpop.f32.mrb[0].mxu0
        %v2347 = vadd.f32 %v2122, %v2346
        %v2348 = vpop.f32.mrb[0].mxu0
        %2349 = vmatprep.mubr.f32.mxu0 0.0
        %2350 = vmatmul.mubr.f32.gmra.mrb[0].mxu0 %v900
        %v2351 = vpop.f32.mrb[0].mxu0
        %v2352 = vadd.f32 %v2127, %v2351
        %v2353 = vpop.f32.mrb[0].mxu0
        %2354 = vmatprep.mubr.f32.mxu0 0.0
        %2355 = vmatmul.mubr.f32.gmra.mrb[0].mxu0 %v980
        %v2356 = vpop.f32.mrb[0].mxu0
        %v2357 = vadd.f32 %v2132, %v2356
        %v2358 = vpop.f32.mrb[0].mxu0
        %2359 = vmatprep.mubr.f32.mxu0 0.0
        %2360 = vmatmul.mubr.f32.gmra.mrb[0].mxu0 %v903
        %v2361 = vpop.f32.mrb[0].mxu0
        %v2362 = vadd.f32 %v2137, %v2361
        %v2363 = vpop.f32.mrb[0].mxu0
        %2364 = vmatprep.mubr.f32.mxu0 0.0
        %2365 = vmatmul.mubr.f32.gmra.mrb[0].mxu0 %v981
        %v2366 = vpop.f32.mrb[0].mxu0
        %v2367 = vadd.f32 %v2142, %v2366
        %v2368 = vpop.f32.mrb[0].mxu0
        %2369 = vmatprep.mubr.f32.mxu0 0.0
        %2370 = vmatmul.mubr.f32.gmra.mrb[0].mxu0 %v906
        %v2371 = vpop.f32.mrb[0].mxu0
        %v2372 = vadd.f32 %v2147, %v2371
        %v2373 = vpop.f32.mrb[0].mxu0
        %2374 = vmatprep.mubr.f32.mxu0 0.0
        %2375 = vmatmul.mubr.f32.gmra.mrb[0].mxu0 %v982
        %v2376 = vpop.f32.mrb[0].mxu0
        %v2377 = vadd.f32 %v2152, %v2376
        %v2378 = vpop.f32.mrb[0].mxu0
        %2379 = vmatprep.mubr.f32.mxu0 0.0
        %2380 = vmatmul.mubr.f32.gmra.mrb[0].mxu0 %v909
        %v2381 = vpop.f32.mrb[0].mxu0
        %v2382 = vadd.f32 %v2157, %v2381
        %v2383 = vpop.f32.mrb[0].mxu0
        %2384 = vmatprep.mubr.f32.mxu0 0.0
        %2385 = vmatmul.mubr.f32.gmra.mrb[0].mxu0 %v983
        %v2386 = vpop.f32.mrb[0].mxu0
        %v2387 = vadd.f32 %v2162, %v2386
        %v2388 = vpop.f32.mrb[0].mxu0
        %2389 = vmatprep.mubr.f32.mxu0 0.0
        %2390 = vmatmul.mubr.f32.gmra.mrb[0].mxu0 %v912
        %v2391 = vpop.f32.mrb[0].mxu0
        %v2392 = vadd.f32 %v2167, %v2391
        %v2393 = vpop.f32.mrb[0].mxu0
        %2394 = vmatprep.mubr.f32.mxu0 0.0
        %2395 = vmatmul.mubr.f32.gmra.mrb[0].mxu0 %v984
        %v2396 = vpop.f32.mrb[0].mxu0
        %v2397 = vadd.f32 %v2172, %v2396
        %v2398 = vpop.f32.mrb[0].mxu0
        %2399 = vmatprep.mubr.f32.mxu0 0.0
        %2400 = vmatmul.mubr.f32.gmra.mrb[0].mxu0 %v915
        %v2401 = vpop.f32.mrb[0].mxu0
        %v2402 = vadd.f32 %v2177, %v2401
        %v2403 = vpop.f32.mrb[0].mxu0
        %2404 = vmatprep.mubr.f32.mxu0 0.0
        %2405 = vmatmul.mubr.f32.gmra.mrb[0].mxu0 %v985
        %v2406 = vpop.f32.mrb[0].mxu0
        %v2407 = vadd.f32 %v2182, %v2406
        %v2408 = vpop.f32.mrb[0].mxu0
        %2409 = vmatprep.mubr.f32.mxu0 0.0
        %2410 = vmatmul.mubr.f32.gmra.mrb[0].mxu0 %v918
        %v2411 = vpop.f32.mrb[0].mxu0
        %v2412 = vadd.f32 %v2187, %v2411
        %v2413 = vpop.f32.mrb[0].mxu0
        %2414 = vmatprep.mubr.f32.mxu0 0.0
        %2415 = vmatmul.mubr.f32.gmra.mrb[0].mxu0 %v986
        %v2416 = vpop.f32.mrb[0].mxu0
        %v2417 = vadd.f32 %v2192, %v2416
        %v2418 = vpop.f32.mrb[0].mxu0
        %2419 = vmatprep.mubr.f32.mxu0 0.0
        %2420 = vmatmul.mubr.f32.gmra.mrb[0].mxu0 %v921
        %v2421 = vpop.f32.mrb[0].mxu0
        %v2422 = vadd.f32 %v2197, %v2421
        %v2423 = vpop.f32.mrb[0].mxu0
        %2424 = vmatprep.mubr.f32.mxu0 0.0
        %2425 = vmatmul.mubr.f32.gmra.mrb[0].mxu0 %v987
        %v2426 = vpop.f32.mrb[0].mxu0
        %v2427 = vadd.f32 %v2202, %v2426
        %v2428 = vpop.f32.mrb[0].mxu0
        %2429 = vmatprep.mubr.f32.mxu0 0.0
        %2430 = vmatmul.mubr.f32.gmra.mrb[0].mxu0 %v924
        %v2431 = vpop.f32.mrb[0].mxu0
        %v2432 = vadd.f32 %v2207, %v2431
        %v2433 = vpop.f32.mrb[0].mxu0
        %2434 = vmatprep.mubr.f32.mxu0 0.0
        %2435 = vmatmul.mubr.f32.gmra.mrb[0].mxu0 %v988
        %v2436 = vpop.f32.mrb[0].mxu0
        %v2437 = vadd.f32 %v2212, %v2436
        %v2438 = vpop.f32.mrb[0].mxu0
        %2439 = vmatprep.mubr.f32.mxu0 0.0
        %2440 = vmatmul.mubr.f32.gmra.mrb[0].mxu0 %v927
        %v2441 = vpop.f32.mrb[0].mxu0
        %v2442 = vadd.f32 %v2217, %v2441
        %v2443 = vpop.f32.mrb[0].mxu0
        %2444 = vmatprep.mubr.f32.mxu0 0.0
        %2445 = vmatmul.mubr.f32.gmra.mrb[0].mxu0 %v989
        %v2446 = vpop.f32.mrb[0].mxu0
        %v2447 = vadd.f32 %v2222, %v2446
        %v2448 = vpop.f32.mrb[0].mxu0
        %2449 = vmatprep.mubr.f32.mxu0 0.0
        %2450 = vmatmul.mubr.f32.gmra.mrb[0].mxu0 %v930
        %v2451 = vpop.f32.mrb[0].mxu0
        %v2452 = vadd.f32 %v2227, %v2451
        %v2453 = vpop.f32.mrb[0].mxu0
        %2454 = vmatprep.mubr.f32.mxu0 0.0
        %2455 = vmatmul.mubr.f32.gmra.mrb[0].mxu0 %v990
        %v2456 = vpop.f32.mrb[0].mxu0
        %v2457 = vadd.f32 %v2232, %v2456
        %v2458 = vpop.f32.mrb[0].mxu0
        %2459 = vmatprep.mubr.f32.mxu0 0.0
        %2460 = vmatmul.mubr.f32.gmra.mrb[0].mxu0 %v933
        %v2461 = vpop.f32.mrb[0].mxu0
        %v2462 = vadd.f32 %v2237, %v2461
        %v2463 = vpop.f32.mrb[0].mxu0
        %2464 = vmatprep.mubr.f32.mxu0 0.0
        %2465 = vmatmul.mubr.f32.gmra.mrb[0].mxu0 %v991
        %v2466 = vpop.f32.mrb[0].mxu0
        %v2467 = vadd.f32 %v2242, %v2466
        %v2468 = vpop.f32.mrb[0].mxu0
        %2469 = vmatprep.mubr.f32.mxu0 0.0
        %2470 = vmatmul.mubr.f32.gmra.mrb[0].mxu0 %v936
        %v2471 = vpop.f32.mrb[0].mxu0
        %v2472 = vadd.f32 %v2247, %v2471
        %v2473 = vpop.f32.mrb[0].mxu0
        %2474 = vmatprep.mubr.f32.mxu0 0.0
        %2475 = vmatmul.mubr.f32.gmra.mrb[0].mxu0 %v992
        %v2476 = vpop.f32.mrb[0].mxu0
        %v2477 = vadd.f32 %v2252, %v2476
        %v2478 = vpop.f32.mrb[0].mxu0
        %2479 = vmatprep.mubr.f32.mxu0 0.0
        %2480 = vmatmul.mubr.f32.gmra.mrb[0].mxu0 %v939
        %v2481 = vpop.f32.mrb[0].mxu0
        %v2482 = vadd.f32 %v2257, %v2481
        %v2483 = vpop.f32.mrb[0].mxu0
        %2484 = vmatprep.mubr.f32.mxu0 0.0
        %2485 = vmatmul.mubr.f32.gmra.mrb[0].mxu0 %v993
        %v2486 = vpop.f32.mrb[0].mxu0
        %v2487 = vadd.f32 %v2262, %v2486
        %v2488 = vpop.f32.mrb[0].mxu0
        %2489 = vdwg.mxu0
        %v2490 = vadd.f32 %v1833, %v2332
        %v2491 = vadd.f32 %v1838, %v2337
        %v2492 = vadd.f32 %v1843, %v2342
        %v2493 = vadd.f32 %v1848, %v2347
        %v2494 = vadd.f32 %v1853, %v2352
        %v2495 = vadd.f32 %v1858, %v2357
        %v2496 = vadd.f32 %v1863, %v2362
        %v2497 = vadd.f32 %v1868, %v2367
        %v2498 = vadd.f32 %v1873, %v2372
        %v2499 = vadd.f32 %v1878, %v2377
        %v2500 = vadd.f32 %v1883, %v2382
        %v2501 = vadd.f32 %v1888, %v2387
        %v2502 = vadd.f32 %v1893, %v2392
        %v2503 = vadd.f32 %v1898, %v2397
        %v2504 = vadd.f32 %v1903, %v2402
        %v2505 = vadd.f32 %v1908, %v2407
        %v2506 = vadd.f32 %v1913, %v2412
        %v2507 = vadd.f32 %v1918, %v2417
        %v2508 = vadd.f32 %v1923, %v2422
        %v2509 = vadd.f32 %v1928, %v2427
        %v2510 = vadd.f32 %v1933, %v2432
        %v2511 = vadd.f32 %v1938, %v2437
        %v2512 = vadd.f32 %v1943, %v2442
        %v2513 = vadd.f32 %v1948, %v2447
        %v2514 = vadd.f32 %v1953, %v2452
        %v2515 = vadd.f32 %v1958, %v2457
        %v2516 = vadd.f32 %v1963, %v2462
        %v2517 = vadd.f32 %v1968, %v2467
        %v2518 = vadd.f32 %v1973, %v2472
        %v2519 = vadd.f32 %v1978, %v2477
        %v2520 = vadd.f32 %v1983, %v2482
        %v2521 = vadd.f32 %v1988, %v2487
        %2522 = vst [vmem:[%s265] sm:$0xff] %v2490
        %2523 = vst [vmem:[%s265 + $0x8] sm:$0xff] %v2491
        %2524 = vst [vmem:[%s265 + $0x10] sm:$0xff] %v2492
        %2525 = vst [vmem:[%s265 + $0x18] sm:$0xff] %v2493
        %2526 = vst [vmem:[%s265 + $0x20] sm:$0xff] %v2494
        %2527 = vst [vmem:[%s265 + $0x28] sm:$0xff] %v2495
        %2528 = vst [vmem:[%s265 + $0x30] sm:$0xff] %v2496
        %2529 = vst [vmem:[%s265 + $0x38] sm:$0xff] %v2497
        %2530 = vst [vmem:[%s265 + $0x40] sm:$0xff] %v2498
        %2531 = vst [vmem:[%s265 + $0x48] sm:$0xff] %v2499
        %2532 = vst [vmem:[%s265 + $0x50] sm:$0xff] %v2500
        %2533 = vst [vmem:[%s265 + $0x58] sm:$0xff] %v2501
        %2534 = vst [vmem:[%s265 + $0x60] sm:$0xff] %v2502
        %2535 = vst [vmem:[%s265 + $0x68] sm:$0xff] %v2503
        %2536 = vst [vmem:[%s265 + $0x70] sm:$0xff] %v2504
        %2537 = vst [vmem:[%s265 + $0x78] sm:$0xff] %v2505
        %2538 = vst [vmem:[%s265 + $0x80] sm:$0xff] %v2506
        %2539 = vst [vmem:[%s265 + $0x88] sm:$0xff] %v2507
        %2540 = vst [vmem:[%s265 + $0x90] sm:$0xff] %v2508
        %2541 = vst [vmem:[%s265 + $0x98] sm:$0xff] %v2509
        %2542 = vst [vmem:[%s265 + $0xa0] sm:$0xff] %v2510
        %2543 = vst [vmem:[%s265 + $0xa8] sm:$0xff] %v2511
        %2544 = vst [vmem:[%s265 + $0xb0] sm:$0xff] %v2512
        %2545 = vst [vmem:[%s265 + $0xb8] sm:$0xff] %v2513
        %2546 = vst [vmem:[%s265 + $0xc0] sm:$0xff] %v2514
        %2547 = vst [vmem:[%s265 + $0xc8] sm:$0xff] %v2515
        %2548 = vst [vmem:[%s265 + $0xd0] sm:$0xff] %v2516
        %2549 = vst [vmem:[%s265 + $0xd8] sm:$0xff] %v2517
        %2550 = vst [vmem:[%s265 + $0xe0] sm:$0xff] %v2518
        %2551 = vst [vmem:[%s265 + $0xe8] sm:$0xff] %v2519
        %2552 = vst [vmem:[%s265 + $0xf0] sm:$0xff] %v2520
        %2553 = vst [vmem:[%s265 + $0xf8] sm:$0xff] %v2521
        %v2554 = vadd.f32 %v2490, %v2491
        %v2555 = vadd.f32 %v2554, %v2492
        %v2556 = vadd.f32 %v2555, %v2493
        %v2557 = vadd.f32 %v2556, %v2494
        %v2558 = vadd.f32 %v2557, %v2495
        %v2559 = vadd.f32 %v2558, %v2496
        %v2560 = vadd.f32 %v2559, %v2497
        %v2561 = vadd.f32 %v2560, %v2498
        %v2562 = vadd.f32 %v2561, %v2499
        %v2563 = vadd.f32 %v2562, %v2500
        %v2564 = vadd.f32 %v2563, %v2501
        %v2565 = vadd.f32 %v2564, %v2502
        %v2566 = vadd.f32 %v2565, %v2503
        %v2567 = vadd.f32 %v2566, %v2504
        %v2568 = vadd.f32 %v2567, %v2505
        %v2569 = vadd.f32 %v2568, %v2506
        %v2570 = vadd.f32 %v2569, %v2507
        %v2571 = vadd.f32 %v2570, %v2508
        %v2572 = vadd.f32 %v2571, %v2509
        %v2573 = vadd.f32 %v2572, %v2510
        %v2574 = vadd.f32 %v2573, %v2511
        %v2575 = vadd.f32 %v2574, %v2512
        %v2576 = vadd.f32 %v2575, %v2513
        %v2577 = vadd.f32 %v2576, %v2514
        %v2578 = vadd.f32 %v2577, %v2515
        %v2579 = vadd.f32 %v2578, %v2516
        %v2580 = vadd.f32 %v2579, %v2517
        %v2581 = vadd.f32 %v2580, %v2518
        %v2582 = vadd.f32 %v2581, %v2519
        %v2583 = vadd.f32 %v2582, %v2520
        %v2584 = vadd.f32 %v2583, %v2521
        %v2585 = vrot.slane %v2584, 4
        %v2586 = vadd.f32 %v2584, %v2585
        %v2587 = vrot.slane %v2586, 2
        %v2588 = vadd.f32 %v2586, %v2587
        %v2589 = vrot.slane %v2588, 1
        %v2590 = vadd.f32 %v2588, %v2589
        %2591 = vst [vmem:[%s271] sm:$0x1] %v2590
        %v2592 = vmul.f32 %v2490, %v2490
        %v2593 = vmul.f32 %v2491, %v2491
        %v2594 = vmul.f32 %v2492, %v2492
        %v2595 = vmul.f32 %v2493, %v2493
        %v2596 = vmul.f32 %v2494, %v2494
        %v2597 = vmul.f32 %v2495, %v2495
        %v2598 = vmul.f32 %v2496, %v2496
        %v2599 = vmul.f32 %v2497, %v2497
        %v2600 = vmul.f32 %v2498, %v2498
        %v2601 = vmul.f32 %v2499, %v2499
        %v2602 = vmul.f32 %v2500, %v2500
        %v2603 = vmul.f32 %v2501, %v2501
        %v2604 = vmul.f32 %v2502, %v2502
        %v2605 = vmul.f32 %v2503, %v2503
        %v2606 = vmul.f32 %v2504, %v2504
        %v2607 = vmul.f32 %v2505, %v2505
        %v2608 = vmul.f32 %v2506, %v2506
        %v2609 = vmul.f32 %v2507, %v2507
        %v2610 = vmul.f32 %v2508, %v2508
        %v2611 = vmul.f32 %v2509, %v2509
        %v2612 = vmul.f32 %v2510, %v2510
        %v2613 = vmul.f32 %v2511, %v2511
        %v2614 = vmul.f32 %v2512, %v2512
        %v2615 = vmul.f32 %v2513, %v2513
        %v2616 = vmul.f32 %v2514, %v2514
        %v2617 = vmul.f32 %v2515, %v2515
        %v2618 = vmul.f32 %v2516, %v2516
        %v2619 = vmul.f32 %v2517, %v2517
        %v2620 = vmul.f32 %v2518, %v2518
        %v2621 = vmul.f32 %v2519, %v2519
        %v2622 = vmul.f32 %v2520, %v2520
        %v2623 = vmul.f32 %v2521, %v2521
        %v2624 = vadd.f32 %v2592, %v2593
        %v2625 = vadd.f32 %v2624, %v2594
        %v2626 = vadd.f32 %v2625, %v2595
        %v2627 = vadd.f32 %v2626, %v2596
        %v2628 = vadd.f32 %v2627, %v2597
        %v2629 = vadd.f32 %v2628, %v2598
        %v2630 = vadd.f32 %v2629, %v2599
        %v2631 = vadd.f32 %v2630, %v2600
        %v2632 = vadd.f32 %v2631, %v2601
        %v2633 = vadd.f32 %v2632, %v2602
        %v2634 = vadd.f32 %v2633, %v2603
        %v2635 = vadd.f32 %v2634, %v2604
        %v2636 = vadd.f32 %v2635, %v2605
        %v2637 = vadd.f32 %v2636, %v2606
        %v2638 = vadd.f32 %v2637, %v2607
        %v2639 = vadd.f32 %v2638, %v2608
        %v2640 = vadd.f32 %v2639, %v2609
        %v2641 = vadd.f32 %v2640, %v2610
        %v2642 = vadd.f32 %v2641, %v2611
        %v2643 = vadd.f32 %v2642, %v2612
        %v2644 = vadd.f32 %v2643, %v2613
        %v2645 = vadd.f32 %v2644, %v2614
        %v2646 = vadd.f32 %v2645, %v2615
        %v2647 = vadd.f32 %v2646, %v2616
        %v2648 = vadd.f32 %v2647, %v2617
        %v2649 = vadd.f32 %v2648, %v2618
        %v2650 = vadd.f32 %v2649, %v2619
        %v2651 = vadd.f32 %v2650, %v2620
        %v2652 = vadd.f32 %v2651, %v2621
        %v2653 = vadd.f32 %v2652, %v2622
        %v2654 = vadd.f32 %v2653, %v2623
        %v2655 = vrot.slane %v2654, 4
        %v2656 = vadd.f32 %v2654, %v2655
        %v2657 = vrot.slane %v2656, 2
        %v2658 = vadd.f32 %v2656, %v2657
        %v2659 = vrot.slane %v2658, 1
        %v2660 = vadd.f32 %v2658, %v2659
        %2661 = vst [vmem:[%s277] sm:$0x1] %v2660
        %s2662 = sand.u32 %s111, 1
        %s2663 = scalar_lea.sflag [#allocation6], %s2662
        %s2664 = sand.u32 %s111, 1
        %s2665 = smul.addr %s2664, 256
        %s2666 = scalar_lea.vmem [#allocation10], %s2665
        %s2667 = sand.u32 %s26, 1
        %s2668 = scalar_lea.sflag [#allocation12], %s2667
        %s2669 = sand.u32 %s139, 1
        %s2670 = scalar_lea.vmem [#allocation11], %s2669
        %s2671 = sand.u32 %s26, 1
        %s2672 = scalar_lea.sflag [#allocation12], %s2671
        %s2673 = sand.u32 %s167, 1
        %s2674 = scalar_lea.vmem [#allocation13], %s2673
        // Predicated region
        $region77: #{unet_encoding_block.4} parent=31 // pred_check
          %p2675 = pneg %p121
        $region78: #{unet_encoding_block.4} parent=31 // pred_check_branch
          %2677 = sbr.rel (%p2675) target = $region80
        $region79: #{unet_encoding_block.4} parent=31 // pred_region
          %s2678 = sadd.s32 %s30, %s31
          %s2679 = smul.u32 32, %s2678
          %s2681 = ssub.s32 4096, 4096
          %2682 = vsyncadd %s2663, %s2681
          %s2683 = smul.addr %s2679, 128
          %s2684 = scalar_lea.hbm %s4, %s2683
          %s2685 = sshll.u32 %s2666, 4
          %s2686 = int_to_ptr.vmem [resolvable:$true] %s2685
          %2691 = dma.vmem_to_hbm [thread:$0]  %s2686, 4096, %s2684, %s2663, 128, 128, 8
        $region80: #{unet_encoding_block.4} parent=31 // pred_fallthru
          _
        // Predicated region
        $region81: #{unet_encoding_block.4} parent=31 // pred_check
          %p2692 = pneg %p149
        $region82: #{unet_encoding_block.4} parent=31 // pred_check_branch
          %2694 = sbr.rel (%p2692) target = $region84
        $region83: #{unet_encoding_block.4} parent=31 // pred_region
          %s2695 = sadd.s32 %s30, %s31
          %s2697 = ssub.s32 16, 16
          %2698 = vsyncadd %s2668, %s2697
          %s2699 = smul.addr %s2695, 16
          %s2700 = scalar_lea.hbm %s5, %s2699
          %s2702 = sshll.u32 %s2670, 4
          %s2703 = int_to_ptr.vmem [resolvable:$true] %s2702
          %2705 = dma.vmem_to_hbm [thread:$0]  %s2703, 16, %s2700, %s2668
        $region84: #{unet_encoding_block.4} parent=31 // pred_fallthru
          _
        // Predicated region
        $region85: #{unet_encoding_block.4} parent=31 // pred_check
          %p2706 = pneg %p177
        $region86: #{unet_encoding_block.4} parent=31 // pred_check_branch
          %2708 = sbr.rel (%p2706) target = $region88
        $region87: #{unet_encoding_block.4} parent=31 // pred_region
          %s2709 = sadd.s32 %s30, %s31
          %s2711 = ssub.s32 16, 16
          %2712 = vsyncadd %s2672, %s2711
          %s2713 = smul.addr %s2709, 16
          %s2714 = scalar_lea.hbm %s6, %s2713
          %s2716 = sshll.u32 %s2674, 4
          %s2717 = int_to_ptr.vmem [resolvable:$true] %s2716
          %2719 = dma.vmem_to_hbm [thread:$0]  %s2717, 16, %s2714, %s2672
        $region88: #{unet_encoding_block.4} parent=31 // pred_fallthru
          _
      $region32: #{unet_encoding_block.4} parent=5 // pred_fallthru
        _
      %p2720 = scmp.le.s32.totalorder 2, %s21
      // Predicated region
      $region89: #{unet_encoding_block.4} parent=5 // pred_check
        %p2721 = pneg %p2720
      $region90: #{unet_encoding_block.4} parent=5 // pred_check_branch
        %2723 = sbr.rel (%p2721) target = $region92
      $region91: #{unet_encoding_block.4} parent=5 // pred_region
        %s2724 = ssub.s32 %s21, 2
        // Predicated region
        $region93: #{unet_encoding_block.4} parent=91 // pred_check
          %p2725 = pneg %p127
        $region94: #{unet_encoding_block.4} parent=91 // pred_check_branch
          %2727 = sbr.rel (%p2725) target = $region96
        $region95: #{unet_encoding_block.4} parent=91 // pred_region
          %s2728 = sand.u32 %s112, 1
          %s2729 = scalar_lea.sflag [#allocation6], %s2728
          %s2730 = sand.u32 %s112, 1
          %s2731 = smul.addr %s2730, 256
          %s2732 = scalar_lea.vmem [#allocation10], %s2731
          %2733 = dma.done %s2729, 4096
        $region96: #{unet_encoding_block.4} parent=91 // pred_fallthru
          _
        // Predicated region
        $region97: #{unet_encoding_block.4} parent=91 // pred_check
          %p2734 = pneg %p155
        $region98: #{unet_encoding_block.4} parent=91 // pred_check_branch
          %2736 = sbr.rel (%p2734) target = $region100
        $region99: #{unet_encoding_block.4} parent=91 // pred_region
          %s2737 = sand.u32 %s27, 1
          %s2738 = scalar_lea.sflag [#allocation12], %s2737
          %s2739 = sand.u32 %s140, 1
          %s2740 = scalar_lea.vmem [#allocation11], %s2739
          %2741 = dma.done %s2738, 16
        $region100: #{unet_encoding_block.4} parent=91 // pred_fallthru
          _
        // Predicated region
        $region101: #{unet_encoding_block.4} parent=91 // pred_check
          %p2742 = pneg %p183
        $region102: #{unet_encoding_block.4} parent=91 // pred_check_branch
          %2744 = sbr.rel (%p2742) target = $region104
        $region103: #{unet_encoding_block.4} parent=91 // pred_region
          %s2745 = sand.u32 %s27, 1
          %s2746 = scalar_lea.sflag [#allocation12], %s2745
          %s2747 = sand.u32 %s168, 1
          %s2748 = scalar_lea.vmem [#allocation13], %s2747
          %2749 = dma.done %s2746, 16
        $region104: #{unet_encoding_block.4} parent=91 // pred_fallthru
          _
      $region92: #{unet_encoding_block.4} parent=5 // pred_fallthru
        _
    $region6: #{unet_encoding_block.4} parent=1 // loop_footer
      %s25 = sadd.s32 1, %s21
    $region7: #{unet_encoding_block.4} parent=1 // loop_footer_branch
      %20 = sbr.rel target = $region3
    $region8: #{unet_encoding_block.4} parent=1 // loop_exit
      _
    %2750 = vsyncpa [#allocation5], 1
    %s2751 = scalar_lea.sflag [#allocation5], 1
    %2752 = vsyncpa %s2751, 1
    %2753 = vsyncpa [#allocation8], 1
    %2754 = vsyncpa [#allocation6], 1
    %s2755 = scalar_lea.sflag [#allocation6], 1
    %2756 = vsyncpa %s2755, 1
    %2757 = vsyncpa [#allocation12], 1
    %s2758 = scalar_lea.sflag [#allocation12], 1
    %2759 = vsyncpa %s2758, 1
  %2760 = vsyncmov [#allocation3]
  %s2761 = vpop.sfrf %2760
  %p2762 = scmp.eq.s32.totalorder %s2761, 0
  %p2763 = pneg %p2762
  %2765 = shalt.err (%p2763)
  %s2766 = scalar_lea.sflag [#allocation3], 1
  %2767 = vsyncmov %s2766
  %s2768 = vpop.sfrf %2767
  %p2769 = scmp.eq.s32.totalorder %s2768, 0
  %p2770 = pneg %p2769
  %2772 = shalt.err (%p2770)
  %s2773 = scalar_lea.sflag [#allocation3], 2
  %2774 = vsyncmov %s2773
  %s2775 = vpop.sfrf %2774
  %p2776 = scmp.eq.s32.totalorder %s2775, 0
  %p2777 = pneg %p2776
  %2779 = shalt.err (%p2777)
  %s2780 = scalar_lea.sflag [#allocation3], 3
  %2781 = vsyncmov %s2780
  %s2782 = vpop.sfrf %2781
  %p2783 = scmp.eq.s32.totalorder %s2782, 0
  %p2784 = pneg %p2783
  %2786 = shalt.err (%p2784)
  %s2787 = scalar_lea.sflag [#allocation3], 4
  %2788 = vsyncmov %s2787
  %s2789 = vpop.sfrf %2788
  %p2790 = scmp.eq.s32.totalorder %s2789, 0
  %p2791 = pneg %p2790
  %2793 = shalt.err (%p2791)
  %s2794 = scalar_lea.sflag [#allocation3], 5
  %2795 = vsyncmov %s2794
  %s2796 = vpop.sfrf %2795
  %p2797 = scmp.eq.s32.totalorder %s2796, 0
  %p2798 = pneg %p2797
  %2800 = shalt.err (%p2798)

</llo_original>
